<compile_context>
chip_gen: v7x
topology: tpu7x:2x2x1
jax: 0.10.0
libtpu: 0.0.40
codegen_flags: <defaults>
</compile_context>

<pallas_src>
import functools

import numpy as np
import jax
import jax.numpy as jnp
from jax.experimental import pallas as pl
from jax.experimental.pallas import tpu as pltpu  # noqa: F401  (TPU backend / params)

_BN_EPS = 1e-5


# -----------------------------------------------------------------------------
# Host-side constant builders (run once at parameter-prep time, plain numpy).
# -----------------------------------------------------------------------------
def _upsample_mat(size):
    """(2*size, size) bilinear 2x interpolation matrix (align_corners=False)."""
    out = np.arange(2 * size, dtype=np.float64)
    src = np.clip((out + 0.5) / 2.0 - 0.5, 0.0, float(size - 1))
    lo = np.floor(src).astype(np.int64)
    hi = np.minimum(lo + 1, size - 1)
    frac = src - lo
    U = np.zeros((2 * size, size), np.float32)
    rows = np.arange(2 * size)
    np.add.at(U, (rows, lo), (1.0 - frac).astype(np.float32))
    np.add.at(U, (rows, hi), frac.astype(np.float32))
    return U


def _encoder_taps_T(H, W, k=4, stride=2, pad=1):
    """Per-sample TRANSPOSED im2col selectors for conv(k, stride, pad).

    Returns (k*k, H*W, Ho*Wo): column m of tap j selects the input pixel read by
    output position m for kernel tap j (zero column where the tap hits the pad).
    """
    Ho = (H + 2 * pad - k) // stride + 1
    Wo = (W + 2 * pad - k) // stride + 1
    mats = np.zeros((k * k, Ho * Wo, H * W), np.float32)
    for dy in range(k):
        for dx in range(k):
            j = dy * k + dx
            for ho in range(Ho):
                h = ho * stride + dy - pad
                if h < 0 or h >= H:
                    continue
                for wo in range(Wo):
                    w = wo * stride + dx - pad
                    if w < 0 or w >= W:
                        continue
                    mats[j, ho * Wo + wo, h * W + w] = 1.0
    return np.transpose(mats, (0, 2, 1))


def _decoder_taps_T(H, W, k=3, pad=1):
    """Per-sample TRANSPOSED operators = (bilinear 2x upsample) o (conv k/s1/p1 tap).

    Returns (k*k, H*W, 4*H*W): input lanes index the pre-upsample map, output
    lanes the 2x-upsampled conv output -- the upsample never materializes.
    """
    Hu, Wu = 2 * H, 2 * W
    Uh, Uw = _upsample_mat(H), _upsample_mat(W)
    mats = np.zeros((k * k, Hu * Wu, H * W), np.float32)
    for dy in range(k):
        for dx in range(k):
            j = dy * k + dx
            for ho in range(Hu):
                hu = ho + dy - pad
                if hu < 0 or hu >= Hu:
                    continue
                for wo in range(Wu):
                    wu = wo + dx - pad
                    if wu < 0 or wu >= Wu:
                        continue
                    mats[j, ho * Wu + wo, :] = np.outer(Uh[hu], Uw[wu]).reshape(-1)
    return np.transpose(mats, (0, 2, 1))


def _stack_weight(w):
    """torch conv weight (Cout, Cin, kH, kW) -> (Cout, kH*kW*Cin), tap-major columns."""
    cout, cin, kh, kw = w.shape
    return jnp.transpose(w, (0, 2, 3, 1)).reshape(cout, kh * kw * cin)


# -----------------------------------------------------------------------------
# Fused Pallas kernel: the whole U-Net forward, all activations VMEM/vreg-resident.
# -----------------------------------------------------------------------------
def _conv_bn_act(xt, a_ref, w_ref, *, gmat_ref=None, gamma_ref=None, beta_ref=None,
                 bias_ref=None, act):
    """One fused layer:  act(BN( Wexp @ stack_j(X @ A_j^T) )).

    xt   : (Cin*N, M_in)  f32, rows ordered (channel, batch), lanes = per-sample (h,w)
    a_ref: (T, M_in, M_out) bf16 per-sample spatial operators (transposed)
    w_ref: (Cout*N, T*Cin*N) f32 kron(W, I_N)-expanded weights
    """
    n_taps = a_ref.shape[0]
    # T per-tap spatial matmuls, stacked along the contraction dim so the channel
    # mix below is a single wide matmul.  A is bf16-stored (exact) -> upcast here.
    taps = [jnp.dot(xt, a_ref[j].astype(jnp.float32),
                    preferred_element_type=jnp.float32) for j in range(n_taps)]
    p = jnp.concatenate(taps, axis=0)                                # (T*Cin*N, M_out)
    y = jnp.dot(w_ref[...], p, preferred_element_type=jnp.float32)   # (Cout*N, M_out)

    if bias_ref is not None:                       # only the final (no-BN) layer
        y = y + bias_ref[...]

    if gmat_ref is not None:
        # Train-mode BatchNorm (biased variance, eps=1e-5).  Per-row lane sums are
        # turned into per-CHANNEL means over the (batch, spatial) group with one
        # tiny constant matmul gmat = kron(I_C, 1_{NxN}) / (N*H*W).  The conv bias
        # is omitted for BN layers (cancelled exactly by the mean subtraction).
        s = jnp.concatenate([jnp.sum(y, axis=1, keepdims=True),
                             jnp.sum(y * y, axis=1, keepdims=True)], axis=1)
        stats = jnp.dot(gmat_ref[...], s, preferred_element_type=jnp.float32)
        mean = stats[:, 0:1]
        msq = stats[:, 1:2]
        var = jnp.maximum(msq - mean * mean, 0.0)
        y = (y - mean) * jax.lax.rsqrt(var + _BN_EPS)
        y = y * gamma_ref[...] + beta_ref[...]

    if act == "relu":
        y = jnp.maximum(y, 0.0)
    elif act == "tanh":
        y = jnp.tanh(y)
    return y


def _unet_kernel(x_ref,
                 a1_ref, w1_ref, m1_ref, g1_ref, be1_ref,
                 a2_ref, w2_ref, m2_ref, g2_ref, be2_ref,
                 a3_ref, w3_ref, m3_ref, g3_ref, be3_ref,
                 a4_ref, w4_ref, m4_ref, g4_ref, be4_ref,
                 a5_ref, w5_ref, m5_ref, g5_ref, be5_ref,
                 a6_ref, w6_ref, bias6_ref,
                 o_ref):
    # TODO(synk): the three encoder selector matmuls could become strided slices
    # of an (N,H,W)-resident activation; kept as (small, bf16) matmuls here for
    # lowering robustness at this problem size.
    x = x_ref[...]                                                    # (N, S*S)
    e1 = _conv_bn_act(x, a1_ref, w1_ref, gmat_ref=m1_ref,
                      gamma_ref=g1_ref, beta_ref=be1_ref, act="relu")   # (F*N,  (S/2)^2)
    e2 = _conv_bn_act(e1, a2_ref, w2_ref, gmat_ref=m2_ref,
                      gamma_ref=g2_ref, beta_ref=be2_ref, act="relu")   # (2F*N, (S/4)^2)
    bt = _conv_bn_act(e2, a3_ref, w3_ref, gmat_ref=m3_ref,
                      gamma_ref=g3_ref, beta_ref=be3_ref, act="relu")   # (4F*N, (S/8)^2)
    d2 = _conv_bn_act(bt, a4_ref, w4_ref, gmat_ref=m4_ref,
                      gamma_ref=g4_ref, beta_ref=be4_ref, act="relu")   # (2F*N, (S/4)^2)
    d2c = jnp.concatenate([d2, e2], axis=0)                             # skip concat
    d1 = _conv_bn_act(d2c, a5_ref, w5_ref, gmat_ref=m5_ref,
                      gamma_ref=g5_ref, beta_ref=be5_ref, act="relu")   # (F*N,  (S/2)^2)
    d1c = jnp.concatenate([d1, e1], axis=0)                             # skip concat
    g = _conv_bn_act(d1c, a6_ref, w6_ref, bias_ref=bias6_ref, act="tanh")  # (N, S^2)
    o_ref[...] = g


# -----------------------------------------------------------------------------
# Parameter prep (once, outside the per-forward trace) and the forward wrapper.
# -----------------------------------------------------------------------------
def prepare_generator(params, *, image_size, batch):
    """Build all constant kernel operands (per-sample operators + expanded weights)."""
    assert image_size % 8 == 0, "image_size must be divisible by 8"
    s0, s1, s2, s3 = image_size, image_size // 2, image_size // 4, image_size // 8
    N = batch
    eye_n = jnp.eye(N, dtype=jnp.float32)

    # Per-sample spatial operators, stored bf16 (0/1 selectors and bilinear
    # fractions k/16 are exactly representable -> the downcast is lossless).
    a1 = jnp.asarray(_encoder_taps_T(s0, s0), jnp.bfloat16)   # (16, s0^2, s1^2)
    a2 = jnp.asarray(_encoder_taps_T(s1, s1), jnp.bfloat16)   # (16, s1^2, s2^2)
    a3 = jnp.asarray(_encoder_taps_T(s2, s2), jnp.bfloat16)   # (16, s2^2, s3^2)
    a4 = jnp.asarray(_decoder_taps_T(s3, s3), jnp.bfloat16)   # (9,  s3^2, s2^2)
    a5 = jnp.asarray(_decoder_taps_T(s2, s2), jnp.bfloat16)   # (9,  s2^2, s1^2)
    a6 = jnp.asarray(_decoder_taps_T(s1, s1), jnp.bfloat16)   # (9,  s1^2, s0^2)

    def bn_layer(name, out_hw):
        w, _bias_dropped, gamma, beta = params[name]   # conv bias cancelled by BN mean
        cout = w.shape[0]
        w_exp = jnp.kron(_stack_weight(w), eye_n)                   # (Cout*N, T*Cin*N)
        gmat = jnp.asarray(np.kron(np.eye(cout, dtype=np.float32),
                                   np.ones((N, N), np.float32)) / float(N * out_hw))
        g_exp = jnp.repeat(gamma, N).reshape(-1, 1)                 # (Cout*N, 1)
        b_exp = jnp.repeat(beta, N).reshape(-1, 1)
        return w_exp, gmat, g_exp, b_exp

    w1, m1, g1, b1 = bn_layer("enc1", s1 * s1)
    w2, m2, g2, b2 = bn_layer("enc2", s2 * s2)
    w3, m3, g3, b3 = bn_layer("bottleneck", s3 * s3)
    w4, m4, g4, b4 = bn_layer("dec2", s2 * s2)
    w5, m5, g5, b5 = bn_layer("dec1", s1 * s1)

    w6_t, bias6, _, _ = params["final"]
    w6 = jnp.kron(_stack_weight(w6_t), eye_n)                       # (N, 9*2F*N)
    b6 = jnp.repeat(bias6, N).reshape(-1, 1)                        # (N, 1)

    return (a1, w1, m1, g1, b1,
            a2, w2, m2, g2, b2,
            a3, w3, m3, g3, b3,
            a4, w4, m4, g4, b4,
            a5, w5, m5, g5, b5,
            a6, w6, b6)


def _full_spec(shape):
    nd = len(shape)
    return pl.BlockSpec(shape, lambda *_: (0,) * nd)


def generator_forward(operands, x_nchw, *, image_size):
    n = x_nchw.shape[0]
    hw = image_size * image_size
    # NCHW with C == 1: (N, H*W) is a pure reshape.  Rows = batch (channel 0),
    # lanes = per-sample (h, w) -- the kernel's activation layout.
    x_rows = x_nchw.reshape(n, hw)

    all_inputs = (x_rows,) + tuple(operands)
    out = pl.pallas_call(
        _unet_kernel,
        out_shape=jax.ShapeDtypeStruct((n, hw), jnp.float32),   # lane-dense output
        in_specs=[_full_spec(a.shape) for a in all_inputs],
        out_specs=_full_spec((n, hw)),
        # Resident operand footprint is ~1.2 MiB (bf16 operators + f32 weights),
        # far inside the default scoped-VMEM limit on v5e/v6e/v7x, so no
        # vmem_limit override is requested.
    )(*all_inputs)
    # TODO(synk): for large image_size/batch, add an output-row grid axis with
    # two-phase BatchNorm, prefetch the decoder operators from HBM with
    # pltpu.make_async_copy double-buffering, and mark that axis "parallel" so
    # v7x's two TensorCores split the work.
    return out.reshape(n, 1, image_size, image_size)


# -----------------------------------------------------------------------------
# Deterministic synthetic parameters (torch-style init) and a pure-JAX reference.
# -----------------------------------------------------------------------------
def init_params(key, base_filters=8):
    """Conv: uniform(+-1/sqrt(fan_in)); BN: gamma=1, beta=0 (torch defaults)."""
    F = base_filters
    layer_defs = {
        "enc1": (F, 1, 4),
        "enc2": (2 * F, F, 4),
        "bottleneck": (4 * F, 2 * F, 4),
        "dec2": (2 * F, 4 * F, 3),
        "dec1": (F, 4 * F, 3),        # input: 2F (dec2) + 2F (e2) skip
        "final": (1, 2 * F, 3),       # input: F (dec1) + F (e1) skip
    }
    params = {}
    for i, (name, (cout, cin, k)) in enumerate(layer_defs.items()):
        kw, kb = jax.random.split(jax.random.fold_in(key, i))
        fan_in = cin * k * k
        bound = 1.0 / (fan_in ** 0.5)
        w = jax.random.uniform(kw, (cout, cin, k, k), jnp.float32, -bound, bound)
        b = jax.random.uniform(kb, (cout,), jnp.float32, -bound, bound)
        gamma = jnp.ones((cout,), jnp.float32)
        beta = jnp.zeros((cout,), jnp.float32)
        params[name] = (w, b, gamma, beta)
    return params


def _reference_forward(params, x, *, image_size):
    """Pure-JAX (XLA) reference matching the PyTorch module in train() mode."""
    hp = jax.lax.Precision.HIGHEST

    def conv(z, w, b, stride, pad):
        y = jax.lax.conv_general_dilated(
            z, w, window_strides=(stride, stride),
            padding=[(pad, pad), (pad, pad)],
            dimension_numbers=("NCHW", "OIHW", "NCHW"), precision=hp)
        return y + b.reshape(1, -1, 1, 1)

    def bn_relu(y, gamma, beta):
        mean = jnp.mean(y, axis=(0, 2, 3), keepdims=True)
        var = jnp.mean(jnp.square(y - mean), axis=(0, 2, 3), keepdims=True)
        y = (y - mean) * jax.lax.rsqrt(var + _BN_EPS)
        y = y * gamma.reshape(1, -1, 1, 1) + beta.reshape(1, -1, 1, 1)
        return jnp.maximum(y, 0.0)

    def upsample2x(z):
        _, _, h, w = z.shape

        def idx(size):
            out = jnp.arange(2 * size, dtype=jnp.float32)
            src = jnp.clip((out + 0.5) / 2.0 - 0.5, 0.0, float(size - 1))
            lo = jnp.floor(src).astype(jnp.int32)
            hi = jnp.minimum(lo + 1, size - 1)
            return lo, hi, src - lo

        lo_h, hi_h, fh = idx(h)
        lo_w, hi_w, fw = idx(w)
        top = (z[:, :, lo_h, :] * (1.0 - fh)[None, None, :, None]
               + z[:, :, hi_h, :] * fh[None, None, :, None])
        return (top[:, :, :, lo_w] * (1.0 - fw)[None, None, None, :]
                + top[:, :, :, hi_w] * fw[None, None, None, :])

    w1, b1, g1, be1 = params["enc1"]
    w2, b2, g2, be2 = params["enc2"]
    w3, b3, g3, be3 = params["bottleneck"]
    w4, b4, g4, be4 = params["dec2"]
    w5, b5, g5, be5 = params["dec1"]
    w6, b6, _, _ = params["final"]

    e1 = bn_relu(conv(x, w1, b1, 2, 1), g1, be1)
    e2 = bn_relu(conv(e1, w2, b2, 2, 1), g2, be2)
    bt = bn_relu(conv(e2, w3, b3, 2, 1), g3, be3)
    d2 = bn_relu(conv(upsample2x(bt), w4, b4, 1, 1), g4, be4)
    d2c = jnp.concatenate([d2, e2], axis=1)
    d1 = bn_relu(conv(upsample2x(d2c), w5, b5, 1, 1), g5, be5)
    d1c = jnp.concatenate([d1, e1], axis=1)
    g = jnp.tanh(conv(upsample2x(d1c), w6, b6, 1, 1))
    return g.reshape(-1, 1, image_size, image_size)


if __name__ == "__main__":
    IMAGE_SIZE = 16
    BASE_FILTERS = 8
    BATCH = 2

    key = jax.random.PRNGKey(0)
    params = init_params(jax.random.fold_in(key, 100), BASE_FILTERS)
    x = jax.random.normal(jax.random.fold_in(key, 200),
                          (BATCH, 1, IMAGE_SIZE, IMAGE_SIZE), jnp.float32)

    # One-time prep: per-sample spatial operators + expanded weights (outside jit).
    operands = prepare_generator(params, image_size=IMAGE_SIZE, batch=BATCH)

    fwd = jax.jit(functools.partial(generator_forward, image_size=IMAGE_SIZE))
    out = jax.block_until_ready(fwd(operands, x))

    assert out.shape == (BATCH, 1, IMAGE_SIZE, IMAGE_SIZE), out.shape
    assert out.dtype == jnp.float32
    assert bool(jnp.all(jnp.isfinite(out)))
    assert bool(jnp.all(jnp.abs(out) <= 1.0 + 1e-6))   # tanh output range

    # Correctness against a pure-JAX reference of the PyTorch module (train mode).
    # All kernel arithmetic is f32 (the bf16-stored operators are exact), so the
    # tolerance only has to absorb MXU vs HIGHEST-precision XLA rounding; genuine
    # layout/indexing bugs would be orders of magnitude larger.
    ref = _reference_forward(params, x, image_size=IMAGE_SIZE)
    max_err = float(jnp.max(jnp.abs(out - ref)))
    assert max_err < 2e-2, f"max abs error vs reference: {max_err}"

    print("KERNEL_OK")
</pallas_src>

<mosaic_0001>
module attributes {stable_mosaic.version = 11 : i64} {
  func.func @_unet_kernel(%arg0: memref<2x256xf32, #tpu.memory_space<vmem>>, %arg1: memref<16x256x64xbf16, #tpu.memory_space<vmem>>, %arg2: memref<16x32xf32, #tpu.memory_space<vmem>>, %arg3: memref<16x16xf32, #tpu.memory_space<vmem>>, %arg4: memref<16x1xf32, #tpu.memory_space<vmem>>, %arg5: memref<16x1xf32, #tpu.memory_space<vmem>>, %arg6: memref<16x64x16xbf16, #tpu.memory_space<vmem>>, %arg7: memref<32x256xf32, #tpu.memory_space<vmem>>, %arg8: memref<32x32xf32, #tpu.memory_space<vmem>>, %arg9: memref<32x1xf32, #tpu.memory_space<vmem>>, %arg10: memref<32x1xf32, #tpu.memory_space<vmem>>, %arg11: memref<16x16x4xbf16, #tpu.memory_space<vmem>>, %arg12: memref<64x512xf32, #tpu.memory_space<vmem>>, %arg13: memref<64x64xf32, #tpu.memory_space<vmem>>, %arg14: memref<64x1xf32, #tpu.memory_space<vmem>>, %arg15: memref<64x1xf32, #tpu.memory_space<vmem>>, %arg16: memref<9x4x16xbf16, #tpu.memory_space<vmem>>, %arg17: memref<32x576xf32, #tpu.memory_space<vmem>>, %arg18: memref<32x32xf32, #tpu.memory_space<vmem>>, %arg19: memref<32x1xf32, #tpu.memory_space<vmem>>, %arg20: memref<32x1xf32, #tpu.memory_space<vmem>>, %arg21: memref<9x16x64xbf16, #tpu.memory_space<vmem>>, %arg22: memref<16x576xf32, #tpu.memory_space<vmem>>, %arg23: memref<16x16xf32, #tpu.memory_space<vmem>>, %arg24: memref<16x1xf32, #tpu.memory_space<vmem>>, %arg25: memref<16x1xf32, #tpu.memory_space<vmem>>, %arg26: memref<9x64x256xbf16, #tpu.memory_space<vmem>>, %arg27: memref<2x288xf32, #tpu.memory_space<vmem>>, %arg28: memref<2x1xf32, #tpu.memory_space<vmem>>, %arg29: memref<2x256xf32, #tpu.memory_space<vmem>>) attributes {dimension_semantics = [], scalar_prefetch = 0 : i64, scratch_operands = 0 : i64, tpu.core_type = #tpu.core_type<tc>} {
    %c0 = arith.constant 0 : index
    %c0_0 = arith.constant 0 : index
    %0 = vector.load %arg0[%c0, %c0_0] : memref<2x256xf32, #tpu.memory_space<vmem>>, vector<2x256xf32>
    %c0_1 = arith.constant 0 : index
    %c0_2 = arith.constant 0 : index
    %c0_3 = arith.constant 0 : index
    %1 = vector.load %arg1[%c0_1, %c0_2, %c0_3] : memref<16x256x64xbf16, #tpu.memory_space<vmem>>, vector<1x256x64xbf16>
    %2 = vector.shape_cast %1 : vector<1x256x64xbf16> to vector<256x64xbf16>
    %3 = arith.extf %2 : vector<256x64xbf16> to vector<256x64xf32>
    %cst = arith.constant dense<0.000000e+00> : vector<2x64xf32>
    %4 = tpu.matmul %0, %3, %cst {dimension_numbers = #tpu.dot_dimension_numbers<[1], [0], [0], [1], [0, 0, 1, 1], [], []>} : vector<2x256xf32>, vector<256x64xf32>, vector<2x64xf32> -> vector<2x64xf32>
    %c1 = arith.constant 1 : index
    %c0_4 = arith.constant 0 : index
    %c0_5 = arith.constant 0 : index
    %5 = vector.load %arg1[%c1, %c0_4, %c0_5] : memref<16x256x64xbf16, #tpu.memory_space<vmem>>, vector<1x256x64xbf16>
    %6 = vector.shape_cast %5 : vector<1x256x64xbf16> to vector<256x64xbf16>
    %7 = arith.extf %6 : vector<256x64xbf16> to vector<256x64xf32>
    %cst_6 = arith.constant dense<0.000000e+00> : vector<2x64xf32>
    %8 = tpu.matmul %0, %7, %cst_6 {dimension_numbers = #tpu.dot_dimension_numbers<[1], [0], [0], [1], [0, 0, 1, 1], [], []>} : vector<2x256xf32>, vector<256x64xf32>, vector<2x64xf32> -> vector<2x64xf32>
    %c2 = arith.constant 2 : index
    %c0_7 = arith.constant 0 : index
    %c0_8 = arith.constant 0 : index
    %9 = vector.load %arg1[%c2, %c0_7, %c0_8] : memref<16x256x64xbf16, #tpu.memory_space<vmem>>, vector<1x256x64xbf16>
    %10 = vector.shape_cast %9 : vector<1x256x64xbf16> to vector<256x64xbf16>
    %11 = arith.extf %10 : vector<256x64xbf16> to vector<256x64xf32>
    %cst_9 = arith.constant dense<0.000000e+00> : vector<2x64xf32>
    %12 = tpu.matmul %0, %11, %cst_9 {dimension_numbers = #tpu.dot_dimension_numbers<[1], [0], [0], [1], [0, 0, 1, 1], [], []>} : vector<2x256xf32>, vector<256x64xf32>, vector<2x64xf32> -> vector<2x64xf32>
    %c3 = arith.constant 3 : index
    %c0_10 = arith.constant 0 : index
    %c0_11 = arith.constant 0 : index
    %13 = vector.load %arg1[%c3, %c0_10, %c0_11] : memref<16x256x64xbf16, #tpu.memory_space<vmem>>, vector<1x256x64xbf16>
    %14 = vector.shape_cast %13 : vector<1x256x64xbf16> to vector<256x64xbf16>
    %15 = arith.extf %14 : vector<256x64xbf16> to vector<256x64xf32>
    %cst_12 = arith.constant dense<0.000000e+00> : vector<2x64xf32>
    %16 = tpu.matmul %0, %15, %cst_12 {dimension_numbers = #tpu.dot_dimension_numbers<[1], [0], [0], [1], [0, 0, 1, 1], [], []>} : vector<2x256xf32>, vector<256x64xf32>, vector<2x64xf32> -> vector<2x64xf32>
    %c4 = arith.constant 4 : index
    %c0_13 = arith.constant 0 : index
    %c0_14 = arith.constant 0 : index
    %17 = vector.load %arg1[%c4, %c0_13, %c0_14] : memref<16x256x64xbf16, #tpu.memory_space<vmem>>, vector<1x256x64xbf16>
    %18 = vector.shape_cast %17 : vector<1x256x64xbf16> to vector<256x64xbf16>
    %19 = arith.extf %18 : vector<256x64xbf16> to vector<256x64xf32>
    %cst_15 = arith.constant dense<0.000000e+00> : vector<2x64xf32>
    %20 = tpu.matmul %0, %19, %cst_15 {dimension_numbers = #tpu.dot_dimension_numbers<[1], [0], [0], [1], [0, 0, 1, 1], [], []>} : vector<2x256xf32>, vector<256x64xf32>, vector<2x64xf32> -> vector<2x64xf32>
    %c5 = arith.constant 5 : index
    %c0_16 = arith.constant 0 : index
    %c0_17 = arith.constant 0 : index
    %21 = vector.load %arg1[%c5, %c0_16, %c0_17] : memref<16x256x64xbf16, #tpu.memory_space<vmem>>, vector<1x256x64xbf16>
    %22 = vector.shape_cast %21 : vector<1x256x64xbf16> to vector<256x64xbf16>
    %23 = arith.extf %22 : vector<256x64xbf16> to vector<256x64xf32>
    %cst_18 = arith.constant dense<0.000000e+00> : vector<2x64xf32>
    %24 = tpu.matmul %0, %23, %cst_18 {dimension_numbers = #tpu.dot_dimension_numbers<[1], [0], [0], [1], [0, 0, 1, 1], [], []>} : vector<2x256xf32>, vector<256x64xf32>, vector<2x64xf32> -> vector<2x64xf32>
    %c6 = arith.constant 6 : index
    %c0_19 = arith.constant 0 : index
    %c0_20 = arith.constant 0 : index
    %25 = vector.load %arg1[%c6, %c0_19, %c0_20] : memref<16x256x64xbf16, #tpu.memory_space<vmem>>, vector<1x256x64xbf16>
    %26 = vector.shape_cast %25 : vector<1x256x64xbf16> to vector<256x64xbf16>
    %27 = arith.extf %26 : vector<256x64xbf16> to vector<256x64xf32>
    %cst_21 = arith.constant dense<0.000000e+00> : vector<2x64xf32>
    %28 = tpu.matmul %0, %27, %cst_21 {dimension_numbers = #tpu.dot_dimension_numbers<[1], [0], [0], [1], [0, 0, 1, 1], [], []>} : vector<2x256xf32>, vector<256x64xf32>, vector<2x64xf32> -> vector<2x64xf32>
    %c7 = arith.constant 7 : index
    %c0_22 = arith.constant 0 : index
    %c0_23 = arith.constant 0 : index
    %29 = vector.load %arg1[%c7, %c0_22, %c0_23] : memref<16x256x64xbf16, #tpu.memory_space<vmem>>, vector<1x256x64xbf16>
    %30 = vector.shape_cast %29 : vector<1x256x64xbf16> to vector<256x64xbf16>
    %31 = arith.extf %30 : vector<256x64xbf16> to vector<256x64xf32>
    %cst_24 = arith.constant dense<0.000000e+00> : vector<2x64xf32>
    %32 = tpu.matmul %0, %31, %cst_24 {dimension_numbers = #tpu.dot_dimension_numbers<[1], [0], [0], [1], [0, 0, 1, 1], [], []>} : vector<2x256xf32>, vector<256x64xf32>, vector<2x64xf32> -> vector<2x64xf32>
    %c8 = arith.constant 8 : index
    %c0_25 = arith.constant 0 : index
    %c0_26 = arith.constant 0 : index
    %33 = vector.load %arg1[%c8, %c0_25, %c0_26] : memref<16x256x64xbf16, #tpu.memory_space<vmem>>, vector<1x256x64xbf16>
    %34 = vector.shape_cast %33 : vector<1x256x64xbf16> to vector<256x64xbf16>
    %35 = arith.extf %34 : vector<256x64xbf16> to vector<256x64xf32>
    %cst_27 = arith.constant dense<0.000000e+00> : vector<2x64xf32>
    %36 = tpu.matmul %0, %35, %cst_27 {dimension_numbers = #tpu.dot_dimension_numbers<[1], [0], [0], [1], [0, 0, 1, 1], [], []>} : vector<2x256xf32>, vector<256x64xf32>, vector<2x64xf32> -> vector<2x64xf32>
    %c9 = arith.constant 9 : index
    %c0_28 = arith.constant 0 : index
    %c0_29 = arith.constant 0 : index
    %37 = vector.load %arg1[%c9, %c0_28, %c0_29] : memref<16x256x64xbf16, #tpu.memory_space<vmem>>, vector<1x256x64xbf16>
    %38 = vector.shape_cast %37 : vector<1x256x64xbf16> to vector<256x64xbf16>
    %39 = arith.extf %38 : vector<256x64xbf16> to vector<256x64xf32>
    %cst_30 = arith.constant dense<0.000000e+00> : vector<2x64xf32>
    %40 = tpu.matmul %0, %39, %cst_30 {dimension_numbers = #tpu.dot_dimension_numbers<[1], [0], [0], [1], [0, 0, 1, 1], [], []>} : vector<2x256xf32>, vector<256x64xf32>, vector<2x64xf32> -> vector<2x64xf32>
    %c10 = arith.constant 10 : index
    %c0_31 = arith.constant 0 : index
    %c0_32 = arith.constant 0 : index
    %41 = vector.load %arg1[%c10, %c0_31, %c0_32] : memref<16x256x64xbf16, #tpu.memory_space<vmem>>, vector<1x256x64xbf16>
    %42 = vector.shape_cast %41 : vector<1x256x64xbf16> to vector<256x64xbf16>
    %43 = arith.extf %42 : vector<256x64xbf16> to vector<256x64xf32>
    %cst_33 = arith.constant dense<0.000000e+00> : vector<2x64xf32>
    %44 = tpu.matmul %0, %43, %cst_33 {dimension_numbers = #tpu.dot_dimension_numbers<[1], [0], [0], [1], [0, 0, 1, 1], [], []>} : vector<2x256xf32>, vector<256x64xf32>, vector<2x64xf32> -> vector<2x64xf32>
    %c11 = arith.constant 11 : index
    %c0_34 = arith.constant 0 : index
    %c0_35 = arith.constant 0 : index
    %45 = vector.load %arg1[%c11, %c0_34, %c0_35] : memref<16x256x64xbf16, #tpu.memory_space<vmem>>, vector<1x256x64xbf16>
    %46 = vector.shape_cast %45 : vector<1x256x64xbf16> to vector<256x64xbf16>
    %47 = arith.extf %46 : vector<256x64xbf16> to vector<256x64xf32>
    %cst_36 = arith.constant dense<0.000000e+00> : vector<2x64xf32>
    %48 = tpu.matmul %0, %47, %cst_36 {dimension_numbers = #tpu.dot_dimension_numbers<[1], [0], [0], [1], [0, 0, 1, 1], [], []>} : vector<2x256xf32>, vector<256x64xf32>, vector<2x64xf32> -> vector<2x64xf32>
    %c12 = arith.constant 12 : index
    %c0_37 = arith.constant 0 : index
    %c0_38 = arith.constant 0 : index
    %49 = vector.load %arg1[%c12, %c0_37, %c0_38] : memref<16x256x64xbf16, #tpu.memory_space<vmem>>, vector<1x256x64xbf16>
    %50 = vector.shape_cast %49 : vector<1x256x64xbf16> to vector<256x64xbf16>
    %51 = arith.extf %50 : vector<256x64xbf16> to vector<256x64xf32>
    %cst_39 = arith.constant dense<0.000000e+00> : vector<2x64xf32>
    %52 = tpu.matmul %0, %51, %cst_39 {dimension_numbers = #tpu.dot_dimension_numbers<[1], [0], [0], [1], [0, 0, 1, 1], [], []>} : vector<2x256xf32>, vector<256x64xf32>, vector<2x64xf32> -> vector<2x64xf32>
    %c13 = arith.constant 13 : index
    %c0_40 = arith.constant 0 : index
    %c0_41 = arith.constant 0 : index
    %53 = vector.load %arg1[%c13, %c0_40, %c0_41] : memref<16x256x64xbf16, #tpu.memory_space<vmem>>, vector<1x256x64xbf16>
    %54 = vector.shape_cast %53 : vector<1x256x64xbf16> to vector<256x64xbf16>
    %55 = arith.extf %54 : vector<256x64xbf16> to vector<256x64xf32>
    %cst_42 = arith.constant dense<0.000000e+00> : vector<2x64xf32>
    %56 = tpu.matmul %0, %55, %cst_42 {dimension_numbers = #tpu.dot_dimension_numbers<[1], [0], [0], [1], [0, 0, 1, 1], [], []>} : vector<2x256xf32>, vector<256x64xf32>, vector<2x64xf32> -> vector<2x64xf32>
    %c14 = arith.constant 14 : index
    %c0_43 = arith.constant 0 : index
    %c0_44 = arith.constant 0 : index
    %57 = vector.load %arg1[%c14, %c0_43, %c0_44] : memref<16x256x64xbf16, #tpu.memory_space<vmem>>, vector<1x256x64xbf16>
    %58 = vector.shape_cast %57 : vector<1x256x64xbf16> to vector<256x64xbf16>
    %59 = arith.extf %58 : vector<256x64xbf16> to vector<256x64xf32>
    %cst_45 = arith.constant dense<0.000000e+00> : vector<2x64xf32>
    %60 = tpu.matmul %0, %59, %cst_45 {dimension_numbers = #tpu.dot_dimension_numbers<[1], [0], [0], [1], [0, 0, 1, 1], [], []>} : vector<2x256xf32>, vector<256x64xf32>, vector<2x64xf32> -> vector<2x64xf32>
    %c15 = arith.constant 15 : index
    %c0_46 = arith.constant 0 : index
    %c0_47 = arith.constant 0 : index
    %61 = vector.load %arg1[%c15, %c0_46, %c0_47] : memref<16x256x64xbf16, #tpu.memory_space<vmem>>, vector<1x256x64xbf16>
    %62 = vector.shape_cast %61 : vector<1x256x64xbf16> to vector<256x64xbf16>
    %63 = arith.extf %62 : vector<256x64xbf16> to vector<256x64xf32>
    %cst_48 = arith.constant dense<0.000000e+00> : vector<2x64xf32>
    %64 = tpu.matmul %0, %63, %cst_48 {dimension_numbers = #tpu.dot_dimension_numbers<[1], [0], [0], [1], [0, 0, 1, 1], [], []>} : vector<2x256xf32>, vector<256x64xf32>, vector<2x64xf32> -> vector<2x64xf32>
    %65 = tpu.concatenate %4, %8, %12, %16, %20, %24, %28, %32, %36, %40, %44, %48, %52, %56, %60, %64 in 0 : vector<2x64xf32>, vector<2x64xf32>, vector<2x64xf32>, vector<2x64xf32>, vector<2x64xf32>, vector<2x64xf32>, vector<2x64xf32>, vector<2x64xf32>, vector<2x64xf32>, vector<2x64xf32>, vector<2x64xf32>, vector<2x64xf32>, vector<2x64xf32>, vector<2x64xf32>, vector<2x64xf32>, vector<2x64xf32> -> vector<32x64xf32>
    %c0_49 = arith.constant 0 : index
    %c0_50 = arith.constant 0 : index
    %66 = vector.load %arg2[%c0_49, %c0_50] : memref<16x32xf32, #tpu.memory_space<vmem>>, vector<16x32xf32>
    %cst_51 = arith.constant dense<0.000000e+00> : vector<16x64xf32>
    %67 = tpu.matmul %66, %65, %cst_51 {dimension_numbers = #tpu.dot_dimension_numbers<[1], [0], [0], [1], [0, 0, 1, 1], [], []>} : vector<16x32xf32>, vector<32x64xf32>, vector<16x64xf32> -> vector<16x64xf32>
    %cst_52 = arith.constant dense<0.000000e+00> : vector<16xf32>
    %68 = vector.multi_reduction <add>, %67, %cst_52 [1] : vector<16x64xf32> to vector<16xf32>
    %69 = vector.shape_cast %68 : vector<16xf32> to vector<16x1xf32>
    %70 = arith.mulf %67, %67 : vector<16x64xf32>
    %cst_53 = arith.constant dense<0.000000e+00> : vector<16xf32>
    %71 = vector.multi_reduction <add>, %70, %cst_53 [1] : vector<16x64xf32> to vector<16xf32>
    %72 = vector.shape_cast %71 : vector<16xf32> to vector<16x1xf32>
    %73 = tpu.concatenate %69, %72 in 1 : vector<16x1xf32>, vector<16x1xf32> -> vector<16x2xf32>
    %c0_54 = arith.constant 0 : index
    %c0_55 = arith.constant 0 : index
    %74 = vector.load %arg3[%c0_54, %c0_55] : memref<16x16xf32, #tpu.memory_space<vmem>>, vector<16x16xf32>
    %cst_56 = arith.constant dense<0.000000e+00> : vector<16x2xf32>
    %75 = tpu.matmul %74, %73, %cst_56 {dimension_numbers = #tpu.dot_dimension_numbers<[1], [0], [0], [1], [0, 0, 1, 1], [], []>} : vector<16x16xf32>, vector<16x2xf32>, vector<16x2xf32> -> vector<16x2xf32>
    %76 = vector.extract_strided_slice %75 {offsets = [0, 0], sizes = [16, 1], strides = [1, 1]} : vector<16x2xf32> to vector<16x1xf32>
    %77 = vector.extract_strided_slice %75 {offsets = [0, 1], sizes = [16, 1], strides = [1, 1]} : vector<16x2xf32> to vector<16x1xf32>
    %78 = arith.mulf %76, %76 : vector<16x1xf32>
    %79 = arith.subf %77, %78 : vector<16x1xf32>
    %cst_57 = arith.constant 0.000000e+00 : f32
    %80 = vector.broadcast %cst_57 : f32 to vector<16x1xf32>
    %81 = arith.maximumf %79, %80 : vector<16x1xf32>
    %82 = vector.broadcast %76 : vector<16x1xf32> to vector<16x64xf32>
    %83 = arith.subf %67, %82 : vector<16x64xf32>
    %cst_58 = arith.constant 9.99999974E-6 : f32
    %84 = vector.broadcast %cst_58 : f32 to vector<16x1xf32>
    %85 = arith.addf %81, %84 : vector<16x1xf32>
    %86 = math.rsqrt %85 : vector<16x1xf32>
    %87 = vector.broadcast %86 : vector<16x1xf32> to vector<16x64xf32>
    %88 = arith.mulf %83, %87 : vector<16x64xf32>
    %c0_59 = arith.constant 0 : index
    %c0_60 = arith.constant 0 : index
    %89 = vector.load %arg4[%c0_59, %c0_60] : memref<16x1xf32, #tpu.memory_space<vmem>>, vector<16x1xf32>
    %90 = vector.broadcast %89 : vector<16x1xf32> to vector<16x64xf32>
    %91 = arith.mulf %88, %90 : vector<16x64xf32>
    %c0_61 = arith.constant 0 : index
    %c0_62 = arith.constant 0 : index
    %92 = vector.load %arg5[%c0_61, %c0_62] : memref<16x1xf32, #tpu.memory_space<vmem>>, vector<16x1xf32>
    %93 = vector.broadcast %92 : vector<16x1xf32> to vector<16x64xf32>
    %94 = arith.addf %91, %93 : vector<16x64xf32>
    %cst_63 = arith.constant 0.000000e+00 : f32
    %95 = vector.broadcast %cst_63 : f32 to vector<16x64xf32>
    %96 = arith.maximumf %94, %95 : vector<16x64xf32>
    %c0_64 = arith.constant 0 : index
    %c0_65 = arith.constant 0 : index
    %c0_66 = arith.constant 0 : index
    %97 = vector.load %arg6[%c0_64, %c0_65, %c0_66] : memref<16x64x16xbf16, #tpu.memory_space<vmem>>, vector<1x64x16xbf16>
    %98 = vector.shape_cast %97 : vector<1x64x16xbf16> to vector<64x16xbf16>
    %99 = arith.extf %98 : vector<64x16xbf16> to vector<64x16xf32>
    %cst_67 = arith.constant dense<0.000000e+00> : vector<16x16xf32>
    %100 = tpu.matmul %96, %99, %cst_67 {dimension_numbers = #tpu.dot_dimension_numbers<[1], [0], [0], [1], [0, 0, 1, 1], [], []>} : vector<16x64xf32>, vector<64x16xf32>, vector<16x16xf32> -> vector<16x16xf32>
    %c1_68 = arith.constant 1 : index
    %c0_69 = arith.constant 0 : index
    %c0_70 = arith.constant 0 : index
    %101 = vector.load %arg6[%c1_68, %c0_69, %c0_70] : memref<16x64x16xbf16, #tpu.memory_space<vmem>>, vector<1x64x16xbf16>
    %102 = vector.shape_cast %101 : vector<1x64x16xbf16> to vector<64x16xbf16>
    %103 = arith.extf %102 : vector<64x16xbf16> to vector<64x16xf32>
    %cst_71 = arith.constant dense<0.000000e+00> : vector<16x16xf32>
    %104 = tpu.matmul %96, %103, %cst_71 {dimension_numbers = #tpu.dot_dimension_numbers<[1], [0], [0], [1], [0, 0, 1, 1], [], []>} : vector<16x64xf32>, vector<64x16xf32>, vector<16x16xf32> -> vector<16x16xf32>
    %c2_72 = arith.constant 2 : index
    %c0_73 = arith.constant 0 : index
    %c0_74 = arith.constant 0 : index
    %105 = vector.load %arg6[%c2_72, %c0_73, %c0_74] : memref<16x64x16xbf16, #tpu.memory_space<vmem>>, vector<1x64x16xbf16>
    %106 = vector.shape_cast %105 : vector<1x64x16xbf16> to vector<64x16xbf16>
    %107 = arith.extf %106 : vector<64x16xbf16> to vector<64x16xf32>
    %cst_75 = arith.constant dense<0.000000e+00> : vector<16x16xf32>
    %108 = tpu.matmul %96, %107, %cst_75 {dimension_numbers = #tpu.dot_dimension_numbers<[1], [0], [0], [1], [0, 0, 1, 1], [], []>} : vector<16x64xf32>, vector<64x16xf32>, vector<16x16xf32> -> vector<16x16xf32>
    %c3_76 = arith.constant 3 : index
    %c0_77 = arith.constant 0 : index
    %c0_78 = arith.constant 0 : index
    %109 = vector.load %arg6[%c3_76, %c0_77, %c0_78] : memref<16x64x16xbf16, #tpu.memory_space<vmem>>, vector<1x64x16xbf16>
    %110 = vector.shape_cast %109 : vector<1x64x16xbf16> to vector<64x16xbf16>
    %111 = arith.extf %110 : vector<64x16xbf16> to vector<64x16xf32>
    %cst_79 = arith.constant dense<0.000000e+00> : vector<16x16xf32>
    %112 = tpu.matmul %96, %111, %cst_79 {dimension_numbers = #tpu.dot_dimension_numbers<[1], [0], [0], [1], [0, 0, 1, 1], [], []>} : vector<16x64xf32>, vector<64x16xf32>, vector<16x16xf32> -> vector<16x16xf32>
    %c4_80 = arith.constant 4 : index
    %c0_81 = arith.constant 0 : index
    %c0_82 = arith.constant 0 : index
    %113 = vector.load %arg6[%c4_80, %c0_81, %c0_82] : memref<16x64x16xbf16, #tpu.memory_space<vmem>>, vector<1x64x16xbf16>
    %114 = vector.shape_cast %113 : vector<1x64x16xbf16> to vector<64x16xbf16>
    %115 = arith.extf %114 : vector<64x16xbf16> to vector<64x16xf32>
    %cst_83 = arith.constant dense<0.000000e+00> : vector<16x16xf32>
    %116 = tpu.matmul %96, %115, %cst_83 {dimension_numbers = #tpu.dot_dimension_numbers<[1], [0], [0], [1], [0, 0, 1, 1], [], []>} : vector<16x64xf32>, vector<64x16xf32>, vector<16x16xf32> -> vector<16x16xf32>
    %c5_84 = arith.constant 5 : index
    %c0_85 = arith.constant 0 : index
    %c0_86 = arith.constant 0 : index
    %117 = vector.load %arg6[%c5_84, %c0_85, %c0_86] : memref<16x64x16xbf16, #tpu.memory_space<vmem>>, vector<1x64x16xbf16>
    %118 = vector.shape_cast %117 : vector<1x64x16xbf16> to vector<64x16xbf16>
    %119 = arith.extf %118 : vector<64x16xbf16> to vector<64x16xf32>
    %cst_87 = arith.constant dense<0.000000e+00> : vector<16x16xf32>
    %120 = tpu.matmul %96, %119, %cst_87 {dimension_numbers = #tpu.dot_dimension_numbers<[1], [0], [0], [1], [0, 0, 1, 1], [], []>} : vector<16x64xf32>, vector<64x16xf32>, vector<16x16xf32> -> vector<16x16xf32>
    %c6_88 = arith.constant 6 : index
    %c0_89 = arith.constant 0 : index
    %c0_90 = arith.constant 0 : index
    %121 = vector.load %arg6[%c6_88, %c0_89, %c0_90] : memref<16x64x16xbf16, #tpu.memory_space<vmem>>, vector<1x64x16xbf16>
    %122 = vector.shape_cast %121 : vector<1x64x16xbf16> to vector<64x16xbf16>
    %123 = arith.extf %122 : vector<64x16xbf16> to vector<64x16xf32>
    %cst_91 = arith.constant dense<0.000000e+00> : vector<16x16xf32>
    %124 = tpu.matmul %96, %123, %cst_91 {dimension_numbers = #tpu.dot_dimension_numbers<[1], [0], [0], [1], [0, 0, 1, 1], [], []>} : vector<16x64xf32>, vector<64x16xf32>, vector<16x16xf32> -> vector<16x16xf32>
    %c7_92 = arith.constant 7 : index
    %c0_93 = arith.constant 0 : index
    %c0_94 = arith.constant 0 : index
    %125 = vector.load %arg6[%c7_92, %c0_93, %c0_94] : memref<16x64x16xbf16, #tpu.memory_space<vmem>>, vector<1x64x16xbf16>
    %126 = vector.shape_cast %125 : vector<1x64x16xbf16> to vector<64x16xbf16>
    %127 = arith.extf %126 : vector<64x16xbf16> to vector<64x16xf32>
    %cst_95 = arith.constant dense<0.000000e+00> : vector<16x16xf32>
    %128 = tpu.matmul %96, %127, %cst_95 {dimension_numbers = #tpu.dot_dimension_numbers<[1], [0], [0], [1], [0, 0, 1, 1], [], []>} : vector<16x64xf32>, vector<64x16xf32>, vector<16x16xf32> -> vector<16x16xf32>
    %c8_96 = arith.constant 8 : index
    %c0_97 = arith.constant 0 : index
    %c0_98 = arith.constant 0 : index
    %129 = vector.load %arg6[%c8_96, %c0_97, %c0_98] : memref<16x64x16xbf16, #tpu.memory_space<vmem>>, vector<1x64x16xbf16>
    %130 = vector.shape_cast %129 : vector<1x64x16xbf16> to vector<64x16xbf16>
    %131 = arith.extf %130 : vector<64x16xbf16> to vector<64x16xf32>
    %cst_99 = arith.constant dense<0.000000e+00> : vector<16x16xf32>
    %132 = tpu.matmul %96, %131, %cst_99 {dimension_numbers = #tpu.dot_dimension_numbers<[1], [0], [0], [1], [0, 0, 1, 1], [], []>} : vector<16x64xf32>, vector<64x16xf32>, vector<16x16xf32> -> vector<16x16xf32>
    %c9_100 = arith.constant 9 : index
    %c0_101 = arith.constant 0 : index
    %c0_102 = arith.constant 0 : index
    %133 = vector.load %arg6[%c9_100, %c0_101, %c0_102] : memref<16x64x16xbf16, #tpu.memory_space<vmem>>, vector<1x64x16xbf16>
    %134 = vector.shape_cast %133 : vector<1x64x16xbf16> to vector<64x16xbf16>
    %135 = arith.extf %134 : vector<64x16xbf16> to vector<64x16xf32>
    %cst_103 = arith.constant dense<0.000000e+00> : vector<16x16xf32>
    %136 = tpu.matmul %96, %135, %cst_103 {dimension_numbers = #tpu.dot_dimension_numbers<[1], [0], [0], [1], [0, 0, 1, 1], [], []>} : vector<16x64xf32>, vector<64x16xf32>, vector<16x16xf32> -> vector<16x16xf32>
    %c10_104 = arith.constant 10 : index
    %c0_105 = arith.constant 0 : index
    %c0_106 = arith.constant 0 : index
    %137 = vector.load %arg6[%c10_104, %c0_105, %c0_106] : memref<16x64x16xbf16, #tpu.memory_space<vmem>>, vector<1x64x16xbf16>
    %138 = vector.shape_cast %137 : vector<1x64x16xbf16> to vector<64x16xbf16>
    %139 = arith.extf %138 : vector<64x16xbf16> to vector<64x16xf32>
    %cst_107 = arith.constant dense<0.000000e+00> : vector<16x16xf32>
    %140 = tpu.matmul %96, %139, %cst_107 {dimension_numbers = #tpu.dot_dimension_numbers<[1], [0], [0], [1], [0, 0, 1, 1], [], []>} : vector<16x64xf32>, vector<64x16xf32>, vector<16x16xf32> -> vector<16x16xf32>
    %c11_108 = arith.constant 11 : index
    %c0_109 = arith.constant 0 : index
    %c0_110 = arith.constant 0 : index
    %141 = vector.load %arg6[%c11_108, %c0_109, %c0_110] : memref<16x64x16xbf16, #tpu.memory_space<vmem>>, vector<1x64x16xbf16>
    %142 = vector.shape_cast %141 : vector<1x64x16xbf16> to vector<64x16xbf16>
    %143 = arith.extf %142 : vector<64x16xbf16> to vector<64x16xf32>
    %cst_111 = arith.constant dense<0.000000e+00> : vector<16x16xf32>
    %144 = tpu.matmul %96, %143, %cst_111 {dimension_numbers = #tpu.dot_dimension_numbers<[1], [0], [0], [1], [0, 0, 1, 1], [], []>} : vector<16x64xf32>, vector<64x16xf32>, vector<16x16xf32> -> vector<16x16xf32>
    %c12_112 = arith.constant 12 : index
    %c0_113 = arith.constant 0 : index
    %c0_114 = arith.constant 0 : index
    %145 = vector.load %arg6[%c12_112, %c0_113, %c0_114] : memref<16x64x16xbf16, #tpu.memory_space<vmem>>, vector<1x64x16xbf16>
    %146 = vector.shape_cast %145 : vector<1x64x16xbf16> to vector<64x16xbf16>
    %147 = arith.extf %146 : vector<64x16xbf16> to vector<64x16xf32>
    %cst_115 = arith.constant dense<0.000000e+00> : vector<16x16xf32>
    %148 = tpu.matmul %96, %147, %cst_115 {dimension_numbers = #tpu.dot_dimension_numbers<[1], [0], [0], [1], [0, 0, 1, 1], [], []>} : vector<16x64xf32>, vector<64x16xf32>, vector<16x16xf32> -> vector<16x16xf32>
    %c13_116 = arith.constant 13 : index
    %c0_117 = arith.constant 0 : index
    %c0_118 = arith.constant 0 : index
    %149 = vector.load %arg6[%c13_116, %c0_117, %c0_118] : memref<16x64x16xbf16, #tpu.memory_space<vmem>>, vector<1x64x16xbf16>
    %150 = vector.shape_cast %149 : vector<1x64x16xbf16> to vector<64x16xbf16>
    %151 = arith.extf %150 : vector<64x16xbf16> to vector<64x16xf32>
    %cst_119 = arith.constant dense<0.000000e+00> : vector<16x16xf32>
    %152 = tpu.matmul %96, %151, %cst_119 {dimension_numbers = #tpu.dot_dimension_numbers<[1], [0], [0], [1], [0, 0, 1, 1], [], []>} : vector<16x64xf32>, vector<64x16xf32>, vector<16x16xf32> -> vector<16x16xf32>
    %c14_120 = arith.constant 14 : index
    %c0_121 = arith.constant 0 : index
    %c0_122 = arith.constant 0 : index
    %153 = vector.load %arg6[%c14_120, %c0_121, %c0_122] : memref<16x64x16xbf16, #tpu.memory_space<vmem>>, vector<1x64x16xbf16>
    %154 = vector.shape_cast %153 : vector<1x64x16xbf16> to vector<64x16xbf16>
    %155 = arith.extf %154 : vector<64x16xbf16> to vector<64x16xf32>
    %cst_123 = arith.constant dense<0.000000e+00> : vector<16x16xf32>
    %156 = tpu.matmul %96, %155, %cst_123 {dimension_numbers = #tpu.dot_dimension_numbers<[1], [0], [0], [1], [0, 0, 1, 1], [], []>} : vector<16x64xf32>, vector<64x16xf32>, vector<16x16xf32> -> vector<16x16xf32>
    %c15_124 = arith.constant 15 : index
    %c0_125 = arith.constant 0 : index
    %c0_126 = arith.constant 0 : index
    %157 = vector.load %arg6[%c15_124, %c0_125, %c0_126] : memref<16x64x16xbf16, #tpu.memory_space<vmem>>, vector<1x64x16xbf16>
    %158 = vector.shape_cast %157 : vector<1x64x16xbf16> to vector<64x16xbf16>
    %159 = arith.extf %158 : vector<64x16xbf16> to vector<64x16xf32>
    %cst_127 = arith.constant dense<0.000000e+00> : vector<16x16xf32>
    %160 = tpu.matmul %96, %159, %cst_127 {dimension_numbers = #tpu.dot_dimension_numbers<[1], [0], [0], [1], [0, 0, 1, 1], [], []>} : vector<16x64xf32>, vector<64x16xf32>, vector<16x16xf32> -> vector<16x16xf32>
    %161 = tpu.concatenate %100, %104, %108, %112, %116, %120, %124, %128, %132, %136, %140, %144, %148, %152, %156, %160 in 0 : vector<16x16xf32>, vector<16x16xf32>, vector<16x16xf32>, vector<16x16xf32>, vector<16x16xf32>, vector<16x16xf32>, vector<16x16xf32>, vector<16x16xf32>, vector<16x16xf32>, vector<16x16xf32>, vector<16x16xf32>, vector<16x16xf32>, vector<16x16xf32>, vector<16x16xf32>, vector<16x16xf32>, vector<16x16xf32> -> vector<256x16xf32>
    %c0_128 = arith.constant 0 : index
    %c0_129 = arith.constant 0 : index
    %162 = vector.load %arg7[%c0_128, %c0_129] : memref<32x256xf32, #tpu.memory_space<vmem>>, vector<32x256xf32>
    %cst_130 = arith.constant dense<0.000000e+00> : vector<32x16xf32>
    %163 = tpu.matmul %162, %161, %cst_130 {dimension_numbers = #tpu.dot_dimension_numbers<[1], [0], [0], [1], [0, 0, 1, 1], [], []>} : vector<32x256xf32>, vector<256x16xf32>, vector<32x16xf32> -> vector<32x16xf32>
    %cst_131 = arith.constant dense<0.000000e+00> : vector<32xf32>
    %164 = vector.multi_reduction <add>, %163, %cst_131 [1] : vector<32x16xf32> to vector<32xf32>
    %165 = vector.shape_cast %164 : vector<32xf32> to vector<32x1xf32>
    %166 = arith.mulf %163, %163 : vector<32x16xf32>
    %cst_132 = arith.constant dense<0.000000e+00> : vector<32xf32>
    %167 = vector.multi_reduction <add>, %166, %cst_132 [1] : vector<32x16xf32> to vector<32xf32>
    %168 = vector.shape_cast %167 : vector<32xf32> to vector<32x1xf32>
    %169 = tpu.concatenate %165, %168 in 1 : vector<32x1xf32>, vector<32x1xf32> -> vector<32x2xf32>
    %c0_133 = arith.constant 0 : index
    %c0_134 = arith.constant 0 : index
    %170 = vector.load %arg8[%c0_133, %c0_134] : memref<32x32xf32, #tpu.memory_space<vmem>>, vector<32x32xf32>
    %cst_135 = arith.constant dense<0.000000e+00> : vector<32x2xf32>
    %171 = tpu.matmul %170, %169, %cst_135 {dimension_numbers = #tpu.dot_dimension_numbers<[1], [0], [0], [1], [0, 0, 1, 1], [], []>} : vector<32x32xf32>, vector<32x2xf32>, vector<32x2xf32> -> vector<32x2xf32>
    %172 = vector.extract_strided_slice %171 {offsets = [0, 0], sizes = [32, 1], strides = [1, 1]} : vector<32x2xf32> to vector<32x1xf32>
    %173 = vector.extract_strided_slice %171 {offsets = [0, 1], sizes = [32, 1], strides = [1, 1]} : vector<32x2xf32> to vector<32x1xf32>
    %174 = arith.mulf %172, %172 : vector<32x1xf32>
    %175 = arith.subf %173, %174 : vector<32x1xf32>
    %cst_136 = arith.constant 0.000000e+00 : f32
    %176 = vector.broadcast %cst_136 : f32 to vector<32x1xf32>
    %177 = arith.maximumf %175, %176 : vector<32x1xf32>
    %178 = vector.broadcast %172 : vector<32x1xf32> to vector<32x16xf32>
    %179 = arith.subf %163, %178 : vector<32x16xf32>
    %cst_137 = arith.constant 9.99999974E-6 : f32
    %180 = vector.broadcast %cst_137 : f32 to vector<32x1xf32>
    %181 = arith.addf %177, %180 : vector<32x1xf32>
    %182 = math.rsqrt %181 : vector<32x1xf32>
    %183 = vector.broadcast %182 : vector<32x1xf32> to vector<32x16xf32>
    %184 = arith.mulf %179, %183 : vector<32x16xf32>
    %c0_138 = arith.constant 0 : index
    %c0_139 = arith.constant 0 : index
    %185 = vector.load %arg9[%c0_138, %c0_139] : memref<32x1xf32, #tpu.memory_space<vmem>>, vector<32x1xf32>
    %186 = vector.broadcast %185 : vector<32x1xf32> to vector<32x16xf32>
    %187 = arith.mulf %184, %186 : vector<32x16xf32>
    %c0_140 = arith.constant 0 : index
    %c0_141 = arith.constant 0 : index
    %188 = vector.load %arg10[%c0_140, %c0_141] : memref<32x1xf32, #tpu.memory_space<vmem>>, vector<32x1xf32>
    %189 = vector.broadcast %188 : vector<32x1xf32> to vector<32x16xf32>
    %190 = arith.addf %187, %189 : vector<32x16xf32>
    %cst_142 = arith.constant 0.000000e+00 : f32
    %191 = vector.broadcast %cst_142 : f32 to vector<32x16xf32>
    %192 = arith.maximumf %190, %191 : vector<32x16xf32>
    %c0_143 = arith.constant 0 : index
    %c0_144 = arith.constant 0 : index
    %c0_145 = arith.constant 0 : index
    %193 = vector.load %arg11[%c0_143, %c0_144, %c0_145] : memref<16x16x4xbf16, #tpu.memory_space<vmem>>, vector<1x16x4xbf16>
    %194 = vector.shape_cast %193 : vector<1x16x4xbf16> to vector<16x4xbf16>
    %195 = arith.extf %194 : vector<16x4xbf16> to vector<16x4xf32>
    %cst_146 = arith.constant dense<0.000000e+00> : vector<32x4xf32>
    %196 = tpu.matmul %192, %195, %cst_146 {dimension_numbers = #tpu.dot_dimension_numbers<[1], [0], [0], [1], [0, 0, 1, 1], [], []>} : vector<32x16xf32>, vector<16x4xf32>, vector<32x4xf32> -> vector<32x4xf32>
    %c1_147 = arith.constant 1 : index
    %c0_148 = arith.constant 0 : index
    %c0_149 = arith.constant 0 : index
    %197 = vector.load %arg11[%c1_147, %c0_148, %c0_149] : memref<16x16x4xbf16, #tpu.memory_space<vmem>>, vector<1x16x4xbf16>
    %198 = vector.shape_cast %197 : vector<1x16x4xbf16> to vector<16x4xbf16>
    %199 = arith.extf %198 : vector<16x4xbf16> to vector<16x4xf32>
    %cst_150 = arith.constant dense<0.000000e+00> : vector<32x4xf32>
    %200 = tpu.matmul %192, %199, %cst_150 {dimension_numbers = #tpu.dot_dimension_numbers<[1], [0], [0], [1], [0, 0, 1, 1], [], []>} : vector<32x16xf32>, vector<16x4xf32>, vector<32x4xf32> -> vector<32x4xf32>
    %c2_151 = arith.constant 2 : index
    %c0_152 = arith.constant 0 : index
    %c0_153 = arith.constant 0 : index
    %201 = vector.load %arg11[%c2_151, %c0_152, %c0_153] : memref<16x16x4xbf16, #tpu.memory_space<vmem>>, vector<1x16x4xbf16>
    %202 = vector.shape_cast %201 : vector<1x16x4xbf16> to vector<16x4xbf16>
    %203 = arith.extf %202 : vector<16x4xbf16> to vector<16x4xf32>
    %cst_154 = arith.constant dense<0.000000e+00> : vector<32x4xf32>
    %204 = tpu.matmul %192, %203, %cst_154 {dimension_numbers = #tpu.dot_dimension_numbers<[1], [0], [0], [1], [0, 0, 1, 1], [], []>} : vector<32x16xf32>, vector<16x4xf32>, vector<32x4xf32> -> vector<32x4xf32>
    %c3_155 = arith.constant 3 : index
    %c0_156 = arith.constant 0 : index
    %c0_157 = arith.constant 0 : index
    %205 = vector.load %arg11[%c3_155, %c0_156, %c0_157] : memref<16x16x4xbf16, #tpu.memory_space<vmem>>, vector<1x16x4xbf16>
    %206 = vector.shape_cast %205 : vector<1x16x4xbf16> to vector<16x4xbf16>
    %207 = arith.extf %206 : vector<16x4xbf16> to vector<16x4xf32>
    %cst_158 = arith.constant dense<0.000000e+00> : vector<32x4xf32>
    %208 = tpu.matmul %192, %207, %cst_158 {dimension_numbers = #tpu.dot_dimension_numbers<[1], [0], [0], [1], [0, 0, 1, 1], [], []>} : vector<32x16xf32>, vector<16x4xf32>, vector<32x4xf32> -> vector<32x4xf32>
    %c4_159 = arith.constant 4 : index
    %c0_160 = arith.constant 0 : index
    %c0_161 = arith.constant 0 : index
    %209 = vector.load %arg11[%c4_159, %c0_160, %c0_161] : memref<16x16x4xbf16, #tpu.memory_space<vmem>>, vector<1x16x4xbf16>
    %210 = vector.shape_cast %209 : vector<1x16x4xbf16> to vector<16x4xbf16>
    %211 = arith.extf %210 : vector<16x4xbf16> to vector<16x4xf32>
    %cst_162 = arith.constant dense<0.000000e+00> : vector<32x4xf32>
    %212 = tpu.matmul %192, %211, %cst_162 {dimension_numbers = #tpu.dot_dimension_numbers<[1], [0], [0], [1], [0, 0, 1, 1], [], []>} : vector<32x16xf32>, vector<16x4xf32>, vector<32x4xf32> -> vector<32x4xf32>
    %c5_163 = arith.constant 5 : index
    %c0_164 = arith.constant 0 : index
    %c0_165 = arith.constant 0 : index
    %213 = vector.load %arg11[%c5_163, %c0_164, %c0_165] : memref<16x16x4xbf16, #tpu.memory_space<vmem>>, vector<1x16x4xbf16>
    %214 = vector.shape_cast %213 : vector<1x16x4xbf16> to vector<16x4xbf16>
    %215 = arith.extf %214 : vector<16x4xbf16> to vector<16x4xf32>
    %cst_166 = arith.constant dense<0.000000e+00> : vector<32x4xf32>
    %216 = tpu.matmul %192, %215, %cst_166 {dimension_numbers = #tpu.dot_dimension_numbers<[1], [0], [0], [1], [0, 0, 1, 1], [], []>} : vector<32x16xf32>, vector<16x4xf32>, vector<32x4xf32> -> vector<32x4xf32>
    %c6_167 = arith.constant 6 : index
    %c0_168 = arith.constant 0 : index
    %c0_169 = arith.constant 0 : index
    %217 = vector.load %arg11[%c6_167, %c0_168, %c0_169] : memref<16x16x4xbf16, #tpu.memory_space<vmem>>, vector<1x16x4xbf16>
    %218 = vector.shape_cast %217 : vector<1x16x4xbf16> to vector<16x4xbf16>
    %219 = arith.extf %218 : vector<16x4xbf16> to vector<16x4xf32>
    %cst_170 = arith.constant dense<0.000000e+00> : vector<32x4xf32>
    %220 = tpu.matmul %192, %219, %cst_170 {dimension_numbers = #tpu.dot_dimension_numbers<[1], [0], [0], [1], [0, 0, 1, 1], [], []>} : vector<32x16xf32>, vector<16x4xf32>, vector<32x4xf32> -> vector<32x4xf32>
    %c7_171 = arith.constant 7 : index
    %c0_172 = arith.constant 0 : index
    %c0_173 = arith.constant 0 : index
    %221 = vector.load %arg11[%c7_171, %c0_172, %c0_173] : memref<16x16x4xbf16, #tpu.memory_space<vmem>>, vector<1x16x4xbf16>
    %222 = vector.shape_cast %221 : vector<1x16x4xbf16> to vector<16x4xbf16>
    %223 = arith.extf %222 : vector<16x4xbf16> to vector<16x4xf32>
    %cst_174 = arith.constant dense<0.000000e+00> : vector<32x4xf32>
    %224 = tpu.matmul %192, %223, %cst_174 {dimension_numbers = #tpu.dot_dimension_numbers<[1], [0], [0], [1], [0, 0, 1, 1], [], []>} : vector<32x16xf32>, vector<16x4xf32>, vector<32x4xf32> -> vector<32x4xf32>
    %c8_175 = arith.constant 8 : index
    %c0_176 = arith.constant 0 : index
    %c0_177 = arith.constant 0 : index
    %225 = vector.load %arg11[%c8_175, %c0_176, %c0_177] : memref<16x16x4xbf16, #tpu.memory_space<vmem>>, vector<1x16x4xbf16>
    %226 = vector.shape_cast %225 : vector<1x16x4xbf16> to vector<16x4xbf16>
    %227 = arith.extf %226 : vector<16x4xbf16> to vector<16x4xf32>
    %cst_178 = arith.constant dense<0.000000e+00> : vector<32x4xf32>
    %228 = tpu.matmul %192, %227, %cst_178 {dimension_numbers = #tpu.dot_dimension_numbers<[1], [0], [0], [1], [0, 0, 1, 1], [], []>} : vector<32x16xf32>, vector<16x4xf32>, vector<32x4xf32> -> vector<32x4xf32>
    %c9_179 = arith.constant 9 : index
    %c0_180 = arith.constant 0 : index
    %c0_181 = arith.constant 0 : index
    %229 = vector.load %arg11[%c9_179, %c0_180, %c0_181] : memref<16x16x4xbf16, #tpu.memory_space<vmem>>, vector<1x16x4xbf16>
    %230 = vector.shape_cast %229 : vector<1x16x4xbf16> to vector<16x4xbf16>
    %231 = arith.extf %230 : vector<16x4xbf16> to vector<16x4xf32>
    %cst_182 = arith.constant dense<0.000000e+00> : vector<32x4xf32>
    %232 = tpu.matmul %192, %231, %cst_182 {dimension_numbers = #tpu.dot_dimension_numbers<[1], [0], [0], [1], [0, 0, 1, 1], [], []>} : vector<32x16xf32>, vector<16x4xf32>, vector<32x4xf32> -> vector<32x4xf32>
    %c10_183 = arith.constant 10 : index
    %c0_184 = arith.constant 0 : index
    %c0_185 = arith.constant 0 : index
    %233 = vector.load %arg11[%c10_183, %c0_184, %c0_185] : memref<16x16x4xbf16, #tpu.memory_space<vmem>>, vector<1x16x4xbf16>
    %234 = vector.shape_cast %233 : vector<1x16x4xbf16> to vector<16x4xbf16>
    %235 = arith.extf %234 : vector<16x4xbf16> to vector<16x4xf32>
    %cst_186 = arith.constant dense<0.000000e+00> : vector<32x4xf32>
    %236 = tpu.matmul %192, %235, %cst_186 {dimension_numbers = #tpu.dot_dimension_numbers<[1], [0], [0], [1], [0, 0, 1, 1], [], []>} : vector<32x16xf32>, vector<16x4xf32>, vector<32x4xf32> -> vector<32x4xf32>
    %c11_187 = arith.constant 11 : index
    %c0_188 = arith.constant 0 : index
    %c0_189 = arith.constant 0 : index
    %237 = vector.load %arg11[%c11_187, %c0_188, %c0_189] : memref<16x16x4xbf16, #tpu.memory_space<vmem>>, vector<1x16x4xbf16>
    %238 = vector.shape_cast %237 : vector<1x16x4xbf16> to vector<16x4xbf16>
    %239 = arith.extf %238 : vector<16x4xbf16> to vector<16x4xf32>
    %cst_190 = arith.constant dense<0.000000e+00> : vector<32x4xf32>
    %240 = tpu.matmul %192, %239, %cst_190 {dimension_numbers = #tpu.dot_dimension_numbers<[1], [0], [0], [1], [0, 0, 1, 1], [], []>} : vector<32x16xf32>, vector<16x4xf32>, vector<32x4xf32> -> vector<32x4xf32>
    %c12_191 = arith.constant 12 : index
    %c0_192 = arith.constant 0 : index
    %c0_193 = arith.constant 0 : index
    %241 = vector.load %arg11[%c12_191, %c0_192, %c0_193] : memref<16x16x4xbf16, #tpu.memory_space<vmem>>, vector<1x16x4xbf16>
    %242 = vector.shape_cast %241 : vector<1x16x4xbf16> to vector<16x4xbf16>
    %243 = arith.extf %242 : vector<16x4xbf16> to vector<16x4xf32>
    %cst_194 = arith.constant dense<0.000000e+00> : vector<32x4xf32>
    %244 = tpu.matmul %192, %243, %cst_194 {dimension_numbers = #tpu.dot_dimension_numbers<[1], [0], [0], [1], [0, 0, 1, 1], [], []>} : vector<32x16xf32>, vector<16x4xf32>, vector<32x4xf32> -> vector<32x4xf32>
    %c13_195 = arith.constant 13 : index
    %c0_196 = arith.constant 0 : index
    %c0_197 = arith.constant 0 : index
    %245 = vector.load %arg11[%c13_195, %c0_196, %c0_197] : memref<16x16x4xbf16, #tpu.memory_space<vmem>>, vector<1x16x4xbf16>
    %246 = vector.shape_cast %245 : vector<1x16x4xbf16> to vector<16x4xbf16>
    %247 = arith.extf %246 : vector<16x4xbf16> to vector<16x4xf32>
    %cst_198 = arith.constant dense<0.000000e+00> : vector<32x4xf32>
    %248 = tpu.matmul %192, %247, %cst_198 {dimension_numbers = #tpu.dot_dimension_numbers<[1], [0], [0], [1], [0, 0, 1, 1], [], []>} : vector<32x16xf32>, vector<16x4xf32>, vector<32x4xf32> -> vector<32x4xf32>
    %c14_199 = arith.constant 14 : index
    %c0_200 = arith.constant 0 : index
    %c0_201 = arith.constant 0 : index
    %249 = vector.load %arg11[%c14_199, %c0_200, %c0_201] : memref<16x16x4xbf16, #tpu.memory_space<vmem>>, vector<1x16x4xbf16>
    %250 = vector.shape_cast %249 : vector<1x16x4xbf16> to vector<16x4xbf16>
    %251 = arith.extf %250 : vector<16x4xbf16> to vector<16x4xf32>
    %cst_202 = arith.constant dense<0.000000e+00> : vector<32x4xf32>
    %252 = tpu.matmul %192, %251, %cst_202 {dimension_numbers = #tpu.dot_dimension_numbers<[1], [0], [0], [1], [0, 0, 1, 1], [], []>} : vector<32x16xf32>, vector<16x4xf32>, vector<32x4xf32> -> vector<32x4xf32>
    %c15_203 = arith.constant 15 : index
    %c0_204 = arith.constant 0 : index
    %c0_205 = arith.constant 0 : index
    %253 = vector.load %arg11[%c15_203, %c0_204, %c0_205] : memref<16x16x4xbf16, #tpu.memory_space<vmem>>, vector<1x16x4xbf16>
    %254 = vector.shape_cast %253 : vector<1x16x4xbf16> to vector<16x4xbf16>
    %255 = arith.extf %254 : vector<16x4xbf16> to vector<16x4xf32>
    %cst_206 = arith.constant dense<0.000000e+00> : vector<32x4xf32>
    %256 = tpu.matmul %192, %255, %cst_206 {dimension_numbers = #tpu.dot_dimension_numbers<[1], [0], [0], [1], [0, 0, 1, 1], [], []>} : vector<32x16xf32>, vector<16x4xf32>, vector<32x4xf32> -> vector<32x4xf32>
    %257 = tpu.concatenate %196, %200, %204, %208, %212, %216, %220, %224, %228, %232, %236, %240, %244, %248, %252, %256 in 0 : vector<32x4xf32>, vector<32x4xf32>, vector<32x4xf32>, vector<32x4xf32>, vector<32x4xf32>, vector<32x4xf32>, vector<32x4xf32>, vector<32x4xf32>, vector<32x4xf32>, vector<32x4xf32>, vector<32x4xf32>, vector<32x4xf32>, vector<32x4xf32>, vector<32x4xf32>, vector<32x4xf32>, vector<32x4xf32> -> vector<512x4xf32>
    %c0_207 = arith.constant 0 : index
    %c0_208 = arith.constant 0 : index
    %258 = vector.load %arg12[%c0_207, %c0_208] : memref<64x512xf32, #tpu.memory_space<vmem>>, vector<64x512xf32>
    %cst_209 = arith.constant dense<0.000000e+00> : vector<64x4xf32>
    %259 = tpu.matmul %258, %257, %cst_209 {dimension_numbers = #tpu.dot_dimension_numbers<[1], [0], [0], [1], [0, 0, 1, 1], [], []>} : vector<64x512xf32>, vector<512x4xf32>, vector<64x4xf32> -> vector<64x4xf32>
    %cst_210 = arith.constant dense<0.000000e+00> : vector<64xf32>
    %260 = vector.multi_reduction <add>, %259, %cst_210 [1] : vector<64x4xf32> to vector<64xf32>
    %261 = vector.shape_cast %260 : vector<64xf32> to vector<64x1xf32>
    %262 = arith.mulf %259, %259 : vector<64x4xf32>
    %cst_211 = arith.constant dense<0.000000e+00> : vector<64xf32>
    %263 = vector.multi_reduction <add>, %262, %cst_211 [1] : vector<64x4xf32> to vector<64xf32>
    %264 = vector.shape_cast %263 : vector<64xf32> to vector<64x1xf32>
    %265 = tpu.concatenate %261, %264 in 1 : vector<64x1xf32>, vector<64x1xf32> -> vector<64x2xf32>
    %c0_212 = arith.constant 0 : index
    %c0_213 = arith.constant 0 : index
    %266 = vector.load %arg13[%c0_212, %c0_213] : memref<64x64xf32, #tpu.memory_space<vmem>>, vector<64x64xf32>
    %cst_214 = arith.constant dense<0.000000e+00> : vector<64x2xf32>
    %267 = tpu.matmul %266, %265, %cst_214 {dimension_numbers = #tpu.dot_dimension_numbers<[1], [0], [0], [1], [0, 0, 1, 1], [], []>} : vector<64x64xf32>, vector<64x2xf32>, vector<64x2xf32> -> vector<64x2xf32>
    %268 = vector.extract_strided_slice %267 {offsets = [0, 0], sizes = [64, 1], strides = [1, 1]} : vector<64x2xf32> to vector<64x1xf32>
    %269 = vector.extract_strided_slice %267 {offsets = [0, 1], sizes = [64, 1], strides = [1, 1]} : vector<64x2xf32> to vector<64x1xf32>
    %270 = arith.mulf %268, %268 : vector<64x1xf32>
    %271 = arith.subf %269, %270 : vector<64x1xf32>
    %cst_215 = arith.constant 0.000000e+00 : f32
    %272 = vector.broadcast %cst_215 : f32 to vector<64x1xf32>
    %273 = arith.maximumf %271, %272 : vector<64x1xf32>
    %274 = vector.broadcast %268 : vector<64x1xf32> to vector<64x4xf32>
    %275 = arith.subf %259, %274 : vector<64x4xf32>
    %cst_216 = arith.constant 9.99999974E-6 : f32
    %276 = vector.broadcast %cst_216 : f32 to vector<64x1xf32>
    %277 = arith.addf %273, %276 : vector<64x1xf32>
    %278 = math.rsqrt %277 : vector<64x1xf32>
    %279 = vector.broadcast %278 : vector<64x1xf32> to vector<64x4xf32>
    %280 = arith.mulf %275, %279 : vector<64x4xf32>
    %c0_217 = arith.constant 0 : index
    %c0_218 = arith.constant 0 : index
    %281 = vector.load %arg14[%c0_217, %c0_218] : memref<64x1xf32, #tpu.memory_space<vmem>>, vector<64x1xf32>
    %282 = vector.broadcast %281 : vector<64x1xf32> to vector<64x4xf32>
    %283 = arith.mulf %280, %282 : vector<64x4xf32>
    %c0_219 = arith.constant 0 : index
    %c0_220 = arith.constant 0 : index
    %284 = vector.load %arg15[%c0_219, %c0_220] : memref<64x1xf32, #tpu.memory_space<vmem>>, vector<64x1xf32>
    %285 = vector.broadcast %284 : vector<64x1xf32> to vector<64x4xf32>
    %286 = arith.addf %283, %285 : vector<64x4xf32>
    %cst_221 = arith.constant 0.000000e+00 : f32
    %287 = vector.broadcast %cst_221 : f32 to vector<64x4xf32>
    %288 = arith.maximumf %286, %287 : vector<64x4xf32>
    %c0_222 = arith.constant 0 : index
    %c0_223 = arith.constant 0 : index
    %c0_224 = arith.constant 0 : index
    %289 = vector.load %arg16[%c0_222, %c0_223, %c0_224] : memref<9x4x16xbf16, #tpu.memory_space<vmem>>, vector<1x4x16xbf16>
    %290 = vector.shape_cast %289 : vector<1x4x16xbf16> to vector<4x16xbf16>
    %291 = arith.extf %290 : vector<4x16xbf16> to vector<4x16xf32>
    %cst_225 = arith.constant dense<0.000000e+00> : vector<64x16xf32>
    %292 = tpu.matmul %288, %291, %cst_225 {dimension_numbers = #tpu.dot_dimension_numbers<[1], [0], [0], [1], [0, 0, 1, 1], [], []>} : vector<64x4xf32>, vector<4x16xf32>, vector<64x16xf32> -> vector<64x16xf32>
    %c1_226 = arith.constant 1 : index
    %c0_227 = arith.constant 0 : index
    %c0_228 = arith.constant 0 : index
    %293 = vector.load %arg16[%c1_226, %c0_227, %c0_228] : memref<9x4x16xbf16, #tpu.memory_space<vmem>>, vector<1x4x16xbf16>
    %294 = vector.shape_cast %293 : vector<1x4x16xbf16> to vector<4x16xbf16>
    %295 = arith.extf %294 : vector<4x16xbf16> to vector<4x16xf32>
    %cst_229 = arith.constant dense<0.000000e+00> : vector<64x16xf32>
    %296 = tpu.matmul %288, %295, %cst_229 {dimension_numbers = #tpu.dot_dimension_numbers<[1], [0], [0], [1], [0, 0, 1, 1], [], []>} : vector<64x4xf32>, vector<4x16xf32>, vector<64x16xf32> -> vector<64x16xf32>
    %c2_230 = arith.constant 2 : index
    %c0_231 = arith.constant 0 : index
    %c0_232 = arith.constant 0 : index
    %297 = vector.load %arg16[%c2_230, %c0_231, %c0_232] : memref<9x4x16xbf16, #tpu.memory_space<vmem>>, vector<1x4x16xbf16>
    %298 = vector.shape_cast %297 : vector<1x4x16xbf16> to vector<4x16xbf16>
    %299 = arith.extf %298 : vector<4x16xbf16> to vector<4x16xf32>
    %cst_233 = arith.constant dense<0.000000e+00> : vector<64x16xf32>
    %300 = tpu.matmul %288, %299, %cst_233 {dimension_numbers = #tpu.dot_dimension_numbers<[1], [0], [0], [1], [0, 0, 1, 1], [], []>} : vector<64x4xf32>, vector<4x16xf32>, vector<64x16xf32> -> vector<64x16xf32>
    %c3_234 = arith.constant 3 : index
    %c0_235 = arith.constant 0 : index
    %c0_236 = arith.constant 0 : index
    %301 = vector.load %arg16[%c3_234, %c0_235, %c0_236] : memref<9x4x16xbf16, #tpu.memory_space<vmem>>, vector<1x4x16xbf16>
    %302 = vector.shape_cast %301 : vector<1x4x16xbf16> to vector<4x16xbf16>
    %303 = arith.extf %302 : vector<4x16xbf16> to vector<4x16xf32>
    %cst_237 = arith.constant dense<0.000000e+00> : vector<64x16xf32>
    %304 = tpu.matmul %288, %303, %cst_237 {dimension_numbers = #tpu.dot_dimension_numbers<[1], [0], [0], [1], [0, 0, 1, 1], [], []>} : vector<64x4xf32>, vector<4x16xf32>, vector<64x16xf32> -> vector<64x16xf32>
    %c4_238 = arith.constant 4 : index
    %c0_239 = arith.constant 0 : index
    %c0_240 = arith.constant 0 : index
    %305 = vector.load %arg16[%c4_238, %c0_239, %c0_240] : memref<9x4x16xbf16, #tpu.memory_space<vmem>>, vector<1x4x16xbf16>
    %306 = vector.shape_cast %305 : vector<1x4x16xbf16> to vector<4x16xbf16>
    %307 = arith.extf %306 : vector<4x16xbf16> to vector<4x16xf32>
    %cst_241 = arith.constant dense<0.000000e+00> : vector<64x16xf32>
    %308 = tpu.matmul %288, %307, %cst_241 {dimension_numbers = #tpu.dot_dimension_numbers<[1], [0], [0], [1], [0, 0, 1, 1], [], []>} : vector<64x4xf32>, vector<4x16xf32>, vector<64x16xf32> -> vector<64x16xf32>
    %c5_242 = arith.constant 5 : index
    %c0_243 = arith.constant 0 : index
    %c0_244 = arith.constant 0 : index
    %309 = vector.load %arg16[%c5_242, %c0_243, %c0_244] : memref<9x4x16xbf16, #tpu.memory_space<vmem>>, vector<1x4x16xbf16>
    %310 = vector.shape_cast %309 : vector<1x4x16xbf16> to vector<4x16xbf16>
    %311 = arith.extf %310 : vector<4x16xbf16> to vector<4x16xf32>
    %cst_245 = arith.constant dense<0.000000e+00> : vector<64x16xf32>
    %312 = tpu.matmul %288, %311, %cst_245 {dimension_numbers = #tpu.dot_dimension_numbers<[1], [0], [0], [1], [0, 0, 1, 1], [], []>} : vector<64x4xf32>, vector<4x16xf32>, vector<64x16xf32> -> vector<64x16xf32>
    %c6_246 = arith.constant 6 : index
    %c0_247 = arith.constant 0 : index
    %c0_248 = arith.constant 0 : index
    %313 = vector.load %arg16[%c6_246, %c0_247, %c0_248] : memref<9x4x16xbf16, #tpu.memory_space<vmem>>, vector<1x4x16xbf16>
    %314 = vector.shape_cast %313 : vector<1x4x16xbf16> to vector<4x16xbf16>
    %315 = arith.extf %314 : vector<4x16xbf16> to vector<4x16xf32>
    %cst_249 = arith.constant dense<0.000000e+00> : vector<64x16xf32>
    %316 = tpu.matmul %288, %315, %cst_249 {dimension_numbers = #tpu.dot_dimension_numbers<[1], [0], [0], [1], [0, 0, 1, 1], [], []>} : vector<64x4xf32>, vector<4x16xf32>, vector<64x16xf32> -> vector<64x16xf32>
    %c7_250 = arith.constant 7 : index
    %c0_251 = arith.constant 0 : index
    %c0_252 = arith.constant 0 : index
    %317 = vector.load %arg16[%c7_250, %c0_251, %c0_252] : memref<9x4x16xbf16, #tpu.memory_space<vmem>>, vector<1x4x16xbf16>
    %318 = vector.shape_cast %317 : vector<1x4x16xbf16> to vector<4x16xbf16>
    %319 = arith.extf %318 : vector<4x16xbf16> to vector<4x16xf32>
    %cst_253 = arith.constant dense<0.000000e+00> : vector<64x16xf32>
    %320 = tpu.matmul %288, %319, %cst_253 {dimension_numbers = #tpu.dot_dimension_numbers<[1], [0], [0], [1], [0, 0, 1, 1], [], []>} : vector<64x4xf32>, vector<4x16xf32>, vector<64x16xf32> -> vector<64x16xf32>
    %c8_254 = arith.constant 8 : index
    %c0_255 = arith.constant 0 : index
    %c0_256 = arith.constant 0 : index
    %321 = vector.load %arg16[%c8_254, %c0_255, %c0_256] : memref<9x4x16xbf16, #tpu.memory_space<vmem>>, vector<1x4x16xbf16>
    %322 = vector.shape_cast %321 : vector<1x4x16xbf16> to vector<4x16xbf16>
    %323 = arith.extf %322 : vector<4x16xbf16> to vector<4x16xf32>
    %cst_257 = arith.constant dense<0.000000e+00> : vector<64x16xf32>
    %324 = tpu.matmul %288, %323, %cst_257 {dimension_numbers = #tpu.dot_dimension_numbers<[1], [0], [0], [1], [0, 0, 1, 1], [], []>} : vector<64x4xf32>, vector<4x16xf32>, vector<64x16xf32> -> vector<64x16xf32>
    %325 = tpu.concatenate %292, %296, %300, %304, %308, %312, %316, %320, %324 in 0 : vector<64x16xf32>, vector<64x16xf32>, vector<64x16xf32>, vector<64x16xf32>, vector<64x16xf32>, vector<64x16xf32>, vector<64x16xf32>, vector<64x16xf32>, vector<64x16xf32> -> vector<576x16xf32>
    %c0_258 = arith.constant 0 : index
    %c0_259 = arith.constant 0 : index
    %326 = vector.load %arg17[%c0_258, %c0_259] : memref<32x576xf32, #tpu.memory_space<vmem>>, vector<32x576xf32>
    %cst_260 = arith.constant dense<0.000000e+00> : vector<32x16xf32>
    %327 = tpu.matmul %326, %325, %cst_260 {dimension_numbers = #tpu.dot_dimension_numbers<[1], [0], [0], [1], [0, 0, 1, 1], [], []>} : vector<32x576xf32>, vector<576x16xf32>, vector<32x16xf32> -> vector<32x16xf32>
    %cst_261 = arith.constant dense<0.000000e+00> : vector<32xf32>
    %328 = vector.multi_reduction <add>, %327, %cst_261 [1] : vector<32x16xf32> to vector<32xf32>
    %329 = vector.shape_cast %328 : vector<32xf32> to vector<32x1xf32>
    %330 = arith.mulf %327, %327 : vector<32x16xf32>
    %cst_262 = arith.constant dense<0.000000e+00> : vector<32xf32>
    %331 = vector.multi_reduction <add>, %330, %cst_262 [1] : vector<32x16xf32> to vector<32xf32>
    %332 = vector.shape_cast %331 : vector<32xf32> to vector<32x1xf32>
    %333 = tpu.concatenate %329, %332 in 1 : vector<32x1xf32>, vector<32x1xf32> -> vector<32x2xf32>
    %c0_263 = arith.constant 0 : index
    %c0_264 = arith.constant 0 : index
    %334 = vector.load %arg18[%c0_263, %c0_264] : memref<32x32xf32, #tpu.memory_space<vmem>>, vector<32x32xf32>
    %cst_265 = arith.constant dense<0.000000e+00> : vector<32x2xf32>
    %335 = tpu.matmul %334, %333, %cst_265 {dimension_numbers = #tpu.dot_dimension_numbers<[1], [0], [0], [1], [0, 0, 1, 1], [], []>} : vector<32x32xf32>, vector<32x2xf32>, vector<32x2xf32> -> vector<32x2xf32>
    %336 = vector.extract_strided_slice %335 {offsets = [0, 0], sizes = [32, 1], strides = [1, 1]} : vector<32x2xf32> to vector<32x1xf32>
    %337 = vector.extract_strided_slice %335 {offsets = [0, 1], sizes = [32, 1], strides = [1, 1]} : vector<32x2xf32> to vector<32x1xf32>
    %338 = arith.mulf %336, %336 : vector<32x1xf32>
    %339 = arith.subf %337, %338 : vector<32x1xf32>
    %cst_266 = arith.constant 0.000000e+00 : f32
    %340 = vector.broadcast %cst_266 : f32 to vector<32x1xf32>
    %341 = arith.maximumf %339, %340 : vector<32x1xf32>
    %342 = vector.broadcast %336 : vector<32x1xf32> to vector<32x16xf32>
    %343 = arith.subf %327, %342 : vector<32x16xf32>
    %cst_267 = arith.constant 9.99999974E-6 : f32
    %344 = vector.broadcast %cst_267 : f32 to vector<32x1xf32>
    %345 = arith.addf %341, %344 : vector<32x1xf32>
    %346 = math.rsqrt %345 : vector<32x1xf32>
    %347 = vector.broadcast %346 : vector<32x1xf32> to vector<32x16xf32>
    %348 = arith.mulf %343, %347 : vector<32x16xf32>
    %c0_268 = arith.constant 0 : index
    %c0_269 = arith.constant 0 : index
    %349 = vector.load %arg19[%c0_268, %c0_269] : memref<32x1xf32, #tpu.memory_space<vmem>>, vector<32x1xf32>
    %350 = vector.broadcast %349 : vector<32x1xf32> to vector<32x16xf32>
    %351 = arith.mulf %348, %350 : vector<32x16xf32>
    %c0_270 = arith.constant 0 : index
    %c0_271 = arith.constant 0 : index
    %352 = vector.load %arg20[%c0_270, %c0_271] : memref<32x1xf32, #tpu.memory_space<vmem>>, vector<32x1xf32>
    %353 = vector.broadcast %352 : vector<32x1xf32> to vector<32x16xf32>
    %354 = arith.addf %351, %353 : vector<32x16xf32>
    %cst_272 = arith.constant 0.000000e+00 : f32
    %355 = vector.broadcast %cst_272 : f32 to vector<32x16xf32>
    %356 = arith.maximumf %354, %355 : vector<32x16xf32>
    %357 = tpu.concatenate %356, %192 in 0 : vector<32x16xf32>, vector<32x16xf32> -> vector<64x16xf32>
    %c0_273 = arith.constant 0 : index
    %c0_274 = arith.constant 0 : index
    %c0_275 = arith.constant 0 : index
    %358 = vector.load %arg21[%c0_273, %c0_274, %c0_275] : memref<9x16x64xbf16, #tpu.memory_space<vmem>>, vector<1x16x64xbf16>
    %359 = vector.shape_cast %358 : vector<1x16x64xbf16> to vector<16x64xbf16>
    %360 = arith.extf %359 : vector<16x64xbf16> to vector<16x64xf32>
    %cst_276 = arith.constant dense<0.000000e+00> : vector<64x64xf32>
    %361 = tpu.matmul %357, %360, %cst_276 {dimension_numbers = #tpu.dot_dimension_numbers<[1], [0], [0], [1], [0, 0, 1, 1], [], []>} : vector<64x16xf32>, vector<16x64xf32>, vector<64x64xf32> -> vector<64x64xf32>
    %c1_277 = arith.constant 1 : index
    %c0_278 = arith.constant 0 : index
    %c0_279 = arith.constant 0 : index
    %362 = vector.load %arg21[%c1_277, %c0_278, %c0_279] : memref<9x16x64xbf16, #tpu.memory_space<vmem>>, vector<1x16x64xbf16>
    %363 = vector.shape_cast %362 : vector<1x16x64xbf16> to vector<16x64xbf16>
    %364 = arith.extf %363 : vector<16x64xbf16> to vector<16x64xf32>
    %cst_280 = arith.constant dense<0.000000e+00> : vector<64x64xf32>
    %365 = tpu.matmul %357, %364, %cst_280 {dimension_numbers = #tpu.dot_dimension_numbers<[1], [0], [0], [1], [0, 0, 1, 1], [], []>} : vector<64x16xf32>, vector<16x64xf32>, vector<64x64xf32> -> vector<64x64xf32>
    %c2_281 = arith.constant 2 : index
    %c0_282 = arith.constant 0 : index
    %c0_283 = arith.constant 0 : index
    %366 = vector.load %arg21[%c2_281, %c0_282, %c0_283] : memref<9x16x64xbf16, #tpu.memory_space<vmem>>, vector<1x16x64xbf16>
    %367 = vector.shape_cast %366 : vector<1x16x64xbf16> to vector<16x64xbf16>
    %368 = arith.extf %367 : vector<16x64xbf16> to vector<16x64xf32>
    %cst_284 = arith.constant dense<0.000000e+00> : vector<64x64xf32>
    %369 = tpu.matmul %357, %368, %cst_284 {dimension_numbers = #tpu.dot_dimension_numbers<[1], [0], [0], [1], [0, 0, 1, 1], [], []>} : vector<64x16xf32>, vector<16x64xf32>, vector<64x64xf32> -> vector<64x64xf32>
    %c3_285 = arith.constant 3 : index
    %c0_286 = arith.constant 0 : index
    %c0_287 = arith.constant 0 : index
    %370 = vector.load %arg21[%c3_285, %c0_286, %c0_287] : memref<9x16x64xbf16, #tpu.memory_space<vmem>>, vector<1x16x64xbf16>
    %371 = vector.shape_cast %370 : vector<1x16x64xbf16> to vector<16x64xbf16>
    %372 = arith.extf %371 : vector<16x64xbf16> to vector<16x64xf32>
    %cst_288 = arith.constant dense<0.000000e+00> : vector<64x64xf32>
    %373 = tpu.matmul %357, %372, %cst_288 {dimension_numbers = #tpu.dot_dimension_numbers<[1], [0], [0], [1], [0, 0, 1, 1], [], []>} : vector<64x16xf32>, vector<16x64xf32>, vector<64x64xf32> -> vector<64x64xf32>
    %c4_289 = arith.constant 4 : index
    %c0_290 = arith.constant 0 : index
    %c0_291 = arith.constant 0 : index
    %374 = vector.load %arg21[%c4_289, %c0_290, %c0_291] : memref<9x16x64xbf16, #tpu.memory_space<vmem>>, vector<1x16x64xbf16>
    %375 = vector.shape_cast %374 : vector<1x16x64xbf16> to vector<16x64xbf16>
    %376 = arith.extf %375 : vector<16x64xbf16> to vector<16x64xf32>
    %cst_292 = arith.constant dense<0.000000e+00> : vector<64x64xf32>
    %377 = tpu.matmul %357, %376, %cst_292 {dimension_numbers = #tpu.dot_dimension_numbers<[1], [0], [0], [1], [0, 0, 1, 1], [], []>} : vector<64x16xf32>, vector<16x64xf32>, vector<64x64xf32> -> vector<64x64xf32>
    %c5_293 = arith.constant 5 : index
    %c0_294 = arith.constant 0 : index
    %c0_295 = arith.constant 0 : index
    %378 = vector.load %arg21[%c5_293, %c0_294, %c0_295] : memref<9x16x64xbf16, #tpu.memory_space<vmem>>, vector<1x16x64xbf16>
    %379 = vector.shape_cast %378 : vector<1x16x64xbf16> to vector<16x64xbf16>
    %380 = arith.extf %379 : vector<16x64xbf16> to vector<16x64xf32>
    %cst_296 = arith.constant dense<0.000000e+00> : vector<64x64xf32>
    %381 = tpu.matmul %357, %380, %cst_296 {dimension_numbers = #tpu.dot_dimension_numbers<[1], [0], [0], [1], [0, 0, 1, 1], [], []>} : vector<64x16xf32>, vector<16x64xf32>, vector<64x64xf32> -> vector<64x64xf32>
    %c6_297 = arith.constant 6 : index
    %c0_298 = arith.constant 0 : index
    %c0_299 = arith.constant 0 : index
    %382 = vector.load %arg21[%c6_297, %c0_298, %c0_299] : memref<9x16x64xbf16, #tpu.memory_space<vmem>>, vector<1x16x64xbf16>
    %383 = vector.shape_cast %382 : vector<1x16x64xbf16> to vector<16x64xbf16>
    %384 = arith.extf %383 : vector<16x64xbf16> to vector<16x64xf32>
    %cst_300 = arith.constant dense<0.000000e+00> : vector<64x64xf32>
    %385 = tpu.matmul %357, %384, %cst_300 {dimension_numbers = #tpu.dot_dimension_numbers<[1], [0], [0], [1], [0, 0, 1, 1], [], []>} : vector<64x16xf32>, vector<16x64xf32>, vector<64x64xf32> -> vector<64x64xf32>
    %c7_301 = arith.constant 7 : index
    %c0_302 = arith.constant 0 : index
    %c0_303 = arith.constant 0 : index
    %386 = vector.load %arg21[%c7_301, %c0_302, %c0_303] : memref<9x16x64xbf16, #tpu.memory_space<vmem>>, vector<1x16x64xbf16>
    %387 = vector.shape_cast %386 : vector<1x16x64xbf16> to vector<16x64xbf16>
    %388 = arith.extf %387 : vector<16x64xbf16> to vector<16x64xf32>
    %cst_304 = arith.constant dense<0.000000e+00> : vector<64x64xf32>
    %389 = tpu.matmul %357, %388, %cst_304 {dimension_numbers = #tpu.dot_dimension_numbers<[1], [0], [0], [1], [0, 0, 1, 1], [], []>} : vector<64x16xf32>, vector<16x64xf32>, vector<64x64xf32> -> vector<64x64xf32>
    %c8_305 = arith.constant 8 : index
    %c0_306 = arith.constant 0 : index
    %c0_307 = arith.constant 0 : index
    %390 = vector.load %arg21[%c8_305, %c0_306, %c0_307] : memref<9x16x64xbf16, #tpu.memory_space<vmem>>, vector<1x16x64xbf16>
    %391 = vector.shape_cast %390 : vector<1x16x64xbf16> to vector<16x64xbf16>
    %392 = arith.extf %391 : vector<16x64xbf16> to vector<16x64xf32>
    %cst_308 = arith.constant dense<0.000000e+00> : vector<64x64xf32>
    %393 = tpu.matmul %357, %392, %cst_308 {dimension_numbers = #tpu.dot_dimension_numbers<[1], [0], [0], [1], [0, 0, 1, 1], [], []>} : vector<64x16xf32>, vector<16x64xf32>, vector<64x64xf32> -> vector<64x64xf32>
    %394 = tpu.concatenate %361, %365, %369, %373, %377, %381, %385, %389, %393 in 0 : vector<64x64xf32>, vector<64x64xf32>, vector<64x64xf32>, vector<64x64xf32>, vector<64x64xf32>, vector<64x64xf32>, vector<64x64xf32>, vector<64x64xf32>, vector<64x64xf32> -> vector<576x64xf32>
    %c0_309 = arith.constant 0 : index
    %c0_310 = arith.constant 0 : index
    %395 = vector.load %arg22[%c0_309, %c0_310] : memref<16x576xf32, #tpu.memory_space<vmem>>, vector<16x576xf32>
    %cst_311 = arith.constant dense<0.000000e+00> : vector<16x64xf32>
    %396 = tpu.matmul %395, %394, %cst_311 {dimension_numbers = #tpu.dot_dimension_numbers<[1], [0], [0], [1], [0, 0, 1, 1], [], []>} : vector<16x576xf32>, vector<576x64xf32>, vector<16x64xf32> -> vector<16x64xf32>
    %cst_312 = arith.constant dense<0.000000e+00> : vector<16xf32>
    %397 = vector.multi_reduction <add>, %396, %cst_312 [1] : vector<16x64xf32> to vector<16xf32>
    %398 = vector.shape_cast %397 : vector<16xf32> to vector<16x1xf32>
    %399 = arith.mulf %396, %396 : vector<16x64xf32>
    %cst_313 = arith.constant dense<0.000000e+00> : vector<16xf32>
    %400 = vector.multi_reduction <add>, %399, %cst_313 [1] : vector<16x64xf32> to vector<16xf32>
    %401 = vector.shape_cast %400 : vector<16xf32> to vector<16x1xf32>
    %402 = tpu.concatenate %398, %401 in 1 : vector<16x1xf32>, vector<16x1xf32> -> vector<16x2xf32>
    %c0_314 = arith.constant 0 : index
    %c0_315 = arith.constant 0 : index
    %403 = vector.load %arg23[%c0_314, %c0_315] : memref<16x16xf32, #tpu.memory_space<vmem>>, vector<16x16xf32>
    %cst_316 = arith.constant dense<0.000000e+00> : vector<16x2xf32>
    %404 = tpu.matmul %403, %402, %cst_316 {dimension_numbers = #tpu.dot_dimension_numbers<[1], [0], [0], [1], [0, 0, 1, 1], [], []>} : vector<16x16xf32>, vector<16x2xf32>, vector<16x2xf32> -> vector<16x2xf32>
    %405 = vector.extract_strided_slice %404 {offsets = [0, 0], sizes = [16, 1], strides = [1, 1]} : vector<16x2xf32> to vector<16x1xf32>
    %406 = vector.extract_strided_slice %404 {offsets = [0, 1], sizes = [16, 1], strides = [1, 1]} : vector<16x2xf32> to vector<16x1xf32>
    %407 = arith.mulf %405, %405 : vector<16x1xf32>
    %408 = arith.subf %406, %407 : vector<16x1xf32>
    %cst_317 = arith.constant 0.000000e+00 : f32
    %409 = vector.broadcast %cst_317 : f32 to vector<16x1xf32>
    %410 = arith.maximumf %408, %409 : vector<16x1xf32>
    %411 = vector.broadcast %405 : vector<16x1xf32> to vector<16x64xf32>
    %412 = arith.subf %396, %411 : vector<16x64xf32>
    %cst_318 = arith.constant 9.99999974E-6 : f32
    %413 = vector.broadcast %cst_318 : f32 to vector<16x1xf32>
    %414 = arith.addf %410, %413 : vector<16x1xf32>
    %415 = math.rsqrt %414 : vector<16x1xf32>
    %416 = vector.broadcast %415 : vector<16x1xf32> to vector<16x64xf32>
    %417 = arith.mulf %412, %416 : vector<16x64xf32>
    %c0_319 = arith.constant 0 : index
    %c0_320 = arith.constant 0 : index
    %418 = vector.load %arg24[%c0_319, %c0_320] : memref<16x1xf32, #tpu.memory_space<vmem>>, vector<16x1xf32>
    %419 = vector.broadcast %418 : vector<16x1xf32> to vector<16x64xf32>
    %420 = arith.mulf %417, %419 : vector<16x64xf32>
    %c0_321 = arith.constant 0 : index
    %c0_322 = arith.constant 0 : index
    %421 = vector.load %arg25[%c0_321, %c0_322] : memref<16x1xf32, #tpu.memory_space<vmem>>, vector<16x1xf32>
    %422 = vector.broadcast %421 : vector<16x1xf32> to vector<16x64xf32>
    %423 = arith.addf %420, %422 : vector<16x64xf32>
    %cst_323 = arith.constant 0.000000e+00 : f32
    %424 = vector.broadcast %cst_323 : f32 to vector<16x64xf32>
    %425 = arith.maximumf %423, %424 : vector<16x64xf32>
    %426 = tpu.concatenate %425, %96 in 0 : vector<16x64xf32>, vector<16x64xf32> -> vector<32x64xf32>
    %c0_324 = arith.constant 0 : index
    %c0_325 = arith.constant 0 : index
    %c0_326 = arith.constant 0 : index
    %427 = vector.load %arg26[%c0_324, %c0_325, %c0_326] : memref<9x64x256xbf16, #tpu.memory_space<vmem>>, vector<1x64x256xbf16>
    %428 = vector.shape_cast %427 : vector<1x64x256xbf16> to vector<64x256xbf16>
    %429 = arith.extf %428 : vector<64x256xbf16> to vector<64x256xf32>
    %cst_327 = arith.constant dense<0.000000e+00> : vector<32x256xf32>
    %430 = tpu.matmul %426, %429, %cst_327 {dimension_numbers = #tpu.dot_dimension_numbers<[1], [0], [0], [1], [0, 0, 1, 1], [], []>} : vector<32x64xf32>, vector<64x256xf32>, vector<32x256xf32> -> vector<32x256xf32>
    %c1_328 = arith.constant 1 : index
    %c0_329 = arith.constant 0 : index
    %c0_330 = arith.constant 0 : index
    %431 = vector.load %arg26[%c1_328, %c0_329, %c0_330] : memref<9x64x256xbf16, #tpu.memory_space<vmem>>, vector<1x64x256xbf16>
    %432 = vector.shape_cast %431 : vector<1x64x256xbf16> to vector<64x256xbf16>
    %433 = arith.extf %432 : vector<64x256xbf16> to vector<64x256xf32>
    %cst_331 = arith.constant dense<0.000000e+00> : vector<32x256xf32>
    %434 = tpu.matmul %426, %433, %cst_331 {dimension_numbers = #tpu.dot_dimension_numbers<[1], [0], [0], [1], [0, 0, 1, 1], [], []>} : vector<32x64xf32>, vector<64x256xf32>, vector<32x256xf32> -> vector<32x256xf32>
    %c2_332 = arith.constant 2 : index
    %c0_333 = arith.constant 0 : index
    %c0_334 = arith.constant 0 : index
    %435 = vector.load %arg26[%c2_332, %c0_333, %c0_334] : memref<9x64x256xbf16, #tpu.memory_space<vmem>>, vector<1x64x256xbf16>
    %436 = vector.shape_cast %435 : vector<1x64x256xbf16> to vector<64x256xbf16>
    %437 = arith.extf %436 : vector<64x256xbf16> to vector<64x256xf32>
    %cst_335 = arith.constant dense<0.000000e+00> : vector<32x256xf32>
    %438 = tpu.matmul %426, %437, %cst_335 {dimension_numbers = #tpu.dot_dimension_numbers<[1], [0], [0], [1], [0, 0, 1, 1], [], []>} : vector<32x64xf32>, vector<64x256xf32>, vector<32x256xf32> -> vector<32x256xf32>
    %c3_336 = arith.constant 3 : index
    %c0_337 = arith.constant 0 : index
    %c0_338 = arith.constant 0 : index
    %439 = vector.load %arg26[%c3_336, %c0_337, %c0_338] : memref<9x64x256xbf16, #tpu.memory_space<vmem>>, vector<1x64x256xbf16>
    %440 = vector.shape_cast %439 : vector<1x64x256xbf16> to vector<64x256xbf16>
    %441 = arith.extf %440 : vector<64x256xbf16> to vector<64x256xf32>
    %cst_339 = arith.constant dense<0.000000e+00> : vector<32x256xf32>
    %442 = tpu.matmul %426, %441, %cst_339 {dimension_numbers = #tpu.dot_dimension_numbers<[1], [0], [0], [1], [0, 0, 1, 1], [], []>} : vector<32x64xf32>, vector<64x256xf32>, vector<32x256xf32> -> vector<32x256xf32>
    %c4_340 = arith.constant 4 : index
    %c0_341 = arith.constant 0 : index
    %c0_342 = arith.constant 0 : index
    %443 = vector.load %arg26[%c4_340, %c0_341, %c0_342] : memref<9x64x256xbf16, #tpu.memory_space<vmem>>, vector<1x64x256xbf16>
    %444 = vector.shape_cast %443 : vector<1x64x256xbf16> to vector<64x256xbf16>
    %445 = arith.extf %444 : vector<64x256xbf16> to vector<64x256xf32>
    %cst_343 = arith.constant dense<0.000000e+00> : vector<32x256xf32>
    %446 = tpu.matmul %426, %445, %cst_343 {dimension_numbers = #tpu.dot_dimension_numbers<[1], [0], [0], [1], [0, 0, 1, 1], [], []>} : vector<32x64xf32>, vector<64x256xf32>, vector<32x256xf32> -> vector<32x256xf32>
    %c5_344 = arith.constant 5 : index
    %c0_345 = arith.constant 0 : index
    %c0_346 = arith.constant 0 : index
    %447 = vector.load %arg26[%c5_344, %c0_345, %c0_346] : memref<9x64x256xbf16, #tpu.memory_space<vmem>>, vector<1x64x256xbf16>
    %448 = vector.shape_cast %447 : vector<1x64x256xbf16> to vector<64x256xbf16>
    %449 = arith.extf %448 : vector<64x256xbf16> to vector<64x256xf32>
    %cst_347 = arith.constant dense<0.000000e+00> : vector<32x256xf32>
    %450 = tpu.matmul %426, %449, %cst_347 {dimension_numbers = #tpu.dot_dimension_numbers<[1], [0], [0], [1], [0, 0, 1, 1], [], []>} : vector<32x64xf32>, vector<64x256xf32>, vector<32x256xf32> -> vector<32x256xf32>
    %c6_348 = arith.constant 6 : index
    %c0_349 = arith.constant 0 : index
    %c0_350 = arith.constant 0 : index
    %451 = vector.load %arg26[%c6_348, %c0_349, %c0_350] : memref<9x64x256xbf16, #tpu.memory_space<vmem>>, vector<1x64x256xbf16>
    %452 = vector.shape_cast %451 : vector<1x64x256xbf16> to vector<64x256xbf16>
    %453 = arith.extf %452 : vector<64x256xbf16> to vector<64x256xf32>
    %cst_351 = arith.constant dense<0.000000e+00> : vector<32x256xf32>
    %454 = tpu.matmul %426, %453, %cst_351 {dimension_numbers = #tpu.dot_dimension_numbers<[1], [0], [0], [1], [0, 0, 1, 1], [], []>} : vector<32x64xf32>, vector<64x256xf32>, vector<32x256xf32> -> vector<32x256xf32>
    %c7_352 = arith.constant 7 : index
    %c0_353 = arith.constant 0 : index
    %c0_354 = arith.constant 0 : index
    %455 = vector.load %arg26[%c7_352, %c0_353, %c0_354] : memref<9x64x256xbf16, #tpu.memory_space<vmem>>, vector<1x64x256xbf16>
    %456 = vector.shape_cast %455 : vector<1x64x256xbf16> to vector<64x256xbf16>
    %457 = arith.extf %456 : vector<64x256xbf16> to vector<64x256xf32>
    %cst_355 = arith.constant dense<0.000000e+00> : vector<32x256xf32>
    %458 = tpu.matmul %426, %457, %cst_355 {dimension_numbers = #tpu.dot_dimension_numbers<[1], [0], [0], [1], [0, 0, 1, 1], [], []>} : vector<32x64xf32>, vector<64x256xf32>, vector<32x256xf32> -> vector<32x256xf32>
    %c8_356 = arith.constant 8 : index
    %c0_357 = arith.constant 0 : index
    %c0_358 = arith.constant 0 : index
    %459 = vector.load %arg26[%c8_356, %c0_357, %c0_358] : memref<9x64x256xbf16, #tpu.memory_space<vmem>>, vector<1x64x256xbf16>
    %460 = vector.shape_cast %459 : vector<1x64x256xbf16> to vector<64x256xbf16>
    %461 = arith.extf %460 : vector<64x256xbf16> to vector<64x256xf32>
    %cst_359 = arith.constant dense<0.000000e+00> : vector<32x256xf32>
    %462 = tpu.matmul %426, %461, %cst_359 {dimension_numbers = #tpu.dot_dimension_numbers<[1], [0], [0], [1], [0, 0, 1, 1], [], []>} : vector<32x64xf32>, vector<64x256xf32>, vector<32x256xf32> -> vector<32x256xf32>
    %463 = tpu.concatenate %430, %434, %438, %442, %446, %450, %454, %458, %462 in 0 : vector<32x256xf32>, vector<32x256xf32>, vector<32x256xf32>, vector<32x256xf32>, vector<32x256xf32>, vector<32x256xf32>, vector<32x256xf32>, vector<32x256xf32>, vector<32x256xf32> -> vector<288x256xf32>
    %c0_360 = arith.constant 0 : index
    %c0_361 = arith.constant 0 : index
    %464 = vector.load %arg27[%c0_360, %c0_361] : memref<2x288xf32, #tpu.memory_space<vmem>>, vector<2x288xf32>
    %cst_362 = arith.constant dense<0.000000e+00> : vector<2x256xf32>
    %465 = tpu.matmul %464, %463, %cst_362 {dimension_numbers = #tpu.dot_dimension_numbers<[1], [0], [0], [1], [0, 0, 1, 1], [], []>} : vector<2x288xf32>, vector<288x256xf32>, vector<2x256xf32> -> vector<2x256xf32>
    %c0_363 = arith.constant 0 : index
    %c0_364 = arith.constant 0 : index
    %466 = vector.load %arg28[%c0_363, %c0_364] : memref<2x1xf32, #tpu.memory_space<vmem>>, vector<2x1xf32>
    %467 = vector.broadcast %466 : vector<2x1xf32> to vector<2x256xf32>
    %468 = arith.addf %465, %467 : vector<2x256xf32>
    %469 = math.tanh %468 : vector<2x256xf32>
    %c0_365 = arith.constant 0 : index
    %c0_366 = arith.constant 0 : index
    %470 = vector.load %arg29[%c0_365, %c0_366] : memref<2x256xf32, #tpu.memory_space<vmem>>, vector<2x256xf32>
    tpu.vector_store %arg29[%c0_365, %c0_366], %469 {strides = array<i32>} : memref<2x256xf32, #tpu.memory_space<vmem>>, vector<2x256xf32>,
    return
  }
}

</mosaic_0001>

<llo_original>
// kernel: generator_forward.1
$region0: #{generator_forward.1}
  #allocation0 [shape = 'u32[]', space=smem, size = 0x4, offset = 0x4, fixed_abs, tag = 'smem constant byte address 0x4 - core index']
  #allocation1 [shape = 'u32[144,128]{1,0:T(1,128)}', space=vmem, size = 0x12000, scoped, tag = 'internal scratch']
  %s0 = inlined_call_operand.smem [shape: u32[30], index: -1, kind: input, shape index: {}]
  %s1 = sld [smem:[%s0]]
  %s2 = scalar_lea.smem %s0, 1
  %s3 = sld [smem:[%s2]]
  %s4 = scalar_lea.smem %s0, 2
  %s5 = sld [smem:[%s4]]
  %s6 = scalar_lea.smem %s0, 3
  %s7 = sld [smem:[%s6]]
  %s8 = scalar_lea.smem %s0, 4
  %s9 = sld [smem:[%s8]]
  %s10 = scalar_lea.smem %s0, 5
  %s11 = sld [smem:[%s10]]
  %s12 = scalar_lea.smem %s0, 6
  %s13 = sld [smem:[%s12]]
  %s14 = scalar_lea.smem %s0, 7
  %s15 = sld [smem:[%s14]]
  %s16 = scalar_lea.smem %s0, 8
  %s17 = sld [smem:[%s16]]
  %s18 = scalar_lea.smem %s0, 9
  %s19 = sld [smem:[%s18]]
  %s20 = scalar_lea.smem %s0, 10
  %s21 = sld [smem:[%s20]]
  %s22 = scalar_lea.smem %s0, 11
  %s23 = sld [smem:[%s22]]
  %s24 = scalar_lea.smem %s0, 12
  %s25 = sld [smem:[%s24]]
  %s26 = scalar_lea.smem %s0, 13
  %s27 = sld [smem:[%s26]]
  %s28 = scalar_lea.smem %s0, 14
  %s29 = sld [smem:[%s28]]
  %s30 = scalar_lea.smem %s0, 15
  %s31 = sld [smem:[%s30]]
  %s32 = scalar_lea.smem %s0, 16
  %s33 = sld [smem:[%s32]]
  %s34 = scalar_lea.smem %s0, 17
  %s35 = sld [smem:[%s34]]
  %s36 = scalar_lea.smem %s0, 18
  %s37 = sld [smem:[%s36]]
  %s38 = scalar_lea.smem %s0, 19
  %s39 = sld [smem:[%s38]]
  %s40 = scalar_lea.smem %s0, 20
  %s41 = sld [smem:[%s40]]
  %s42 = scalar_lea.smem %s0, 21
  %s43 = sld [smem:[%s42]]
  %s44 = scalar_lea.smem %s0, 22
  %s45 = sld [smem:[%s44]]
  %s46 = scalar_lea.smem %s0, 23
  %s47 = sld [smem:[%s46]]
  %s48 = scalar_lea.smem %s0, 24
  %s49 = sld [smem:[%s48]]
  %s50 = scalar_lea.smem %s0, 25
  %s51 = sld [smem:[%s50]]
  %s52 = scalar_lea.smem %s0, 26
  %s53 = sld [smem:[%s52]]
  %s54 = scalar_lea.smem %s0, 27
  %s55 = sld [smem:[%s54]]
  %s56 = scalar_lea.smem %s0, 28
  %s57 = sld [smem:[%s56]]
  %s58 = scalar_lea.smem %s0, 29
  %s59 = sld [smem:[%s58]]
  %s60 = sld [smem:[#allocation0]]
  $region126: #{generator_forward.1} parent=0
    _
  %s62 = ssub.s32 1, %s60
  %s63 = scalar_select 0, %s62, %s60
  // Predicated region
  $region2: #{generator_forward.1} parent=0 // pred_check
    _
  $region3: #{generator_forward.1} parent=0 // pred_check_branch
    %65 = sbr.rel (0) target = $region5
  $region4: #{generator_forward.1} parent=0 // pred_region
    _
  $region5: #{generator_forward.1} parent=0 // pred_fallthru
    _
  // Predicated region
  $region6: #{generator_forward.1} parent=0 // pred_check
    _
  $region7: #{generator_forward.1} parent=0 // pred_check_branch
    %67 = sbr.rel (0) target = $region9
  $region8: #{generator_forward.1} parent=0 // pred_region
    _
  $region9: #{generator_forward.1} parent=0 // pred_fallthru
    _
  // Predicated region
  $region10: #{generator_forward.1} parent=0 // pred_check
    _
  $region11: #{generator_forward.1} parent=0 // pred_check_branch
    %69 = sbr.rel (0) target = $region13
  $region12: #{generator_forward.1} parent=0 // pred_region
    _
  $region13: #{generator_forward.1} parent=0 // pred_fallthru
    _
  // Predicated region
  $region14: #{generator_forward.1} parent=0 // pred_check
    _
  $region15: #{generator_forward.1} parent=0 // pred_check_branch
    %71 = sbr.rel (0) target = $region17
  $region16: #{generator_forward.1} parent=0 // pred_region
    _
  $region17: #{generator_forward.1} parent=0 // pred_fallthru
    _
  // Predicated region
  $region18: #{generator_forward.1} parent=0 // pred_check
    _
  $region19: #{generator_forward.1} parent=0 // pred_check_branch
    %73 = sbr.rel (0) target = $region21
  $region20: #{generator_forward.1} parent=0 // pred_region
    _
  $region21: #{generator_forward.1} parent=0 // pred_fallthru
    _
  // Predicated region
  $region22: #{generator_forward.1} parent=0 // pred_check
    _
  $region23: #{generator_forward.1} parent=0 // pred_check_branch
    %75 = sbr.rel (0) target = $region25
  $region24: #{generator_forward.1} parent=0 // pred_region
    _
  $region25: #{generator_forward.1} parent=0 // pred_fallthru
    _
  // Predicated region
  $region26: #{generator_forward.1} parent=0 // pred_check
    _
  $region27: #{generator_forward.1} parent=0 // pred_check_branch
    %77 = sbr.rel (0) target = $region29
  $region28: #{generator_forward.1} parent=0 // pred_region
    _
  $region29: #{generator_forward.1} parent=0 // pred_fallthru
    _
  // Predicated region
  $region30: #{generator_forward.1} parent=0 // pred_check
    _
  $region31: #{generator_forward.1} parent=0 // pred_check_branch
    %79 = sbr.rel (0) target = $region33
  $region32: #{generator_forward.1} parent=0 // pred_region
    _
  $region33: #{generator_forward.1} parent=0 // pred_fallthru
    _
  // Predicated region
  $region34: #{generator_forward.1} parent=0 // pred_check
    _
  $region35: #{generator_forward.1} parent=0 // pred_check_branch
    %81 = sbr.rel (0) target = $region37
  $region36: #{generator_forward.1} parent=0 // pred_region
    _
  $region37: #{generator_forward.1} parent=0 // pred_fallthru
    _
  // Predicated region
  $region38: #{generator_forward.1} parent=0 // pred_check
    _
  $region39: #{generator_forward.1} parent=0 // pred_check_branch
    %83 = sbr.rel (0) target = $region41
  $region40: #{generator_forward.1} parent=0 // pred_region
    _
  $region41: #{generator_forward.1} parent=0 // pred_fallthru
    _
  // Predicated region
  $region42: #{generator_forward.1} parent=0 // pred_check
    _
  $region43: #{generator_forward.1} parent=0 // pred_check_branch
    %85 = sbr.rel (0) target = $region45
  $region44: #{generator_forward.1} parent=0 // pred_region
    _
  $region45: #{generator_forward.1} parent=0 // pred_fallthru
    _
  // Predicated region
  $region46: #{generator_forward.1} parent=0 // pred_check
    _
  $region47: #{generator_forward.1} parent=0 // pred_check_branch
    %87 = sbr.rel (0) target = $region49
  $region48: #{generator_forward.1} parent=0 // pred_region
    _
  $region49: #{generator_forward.1} parent=0 // pred_fallthru
    _
  // Predicated region
  $region50: #{generator_forward.1} parent=0 // pred_check
    _
  $region51: #{generator_forward.1} parent=0 // pred_check_branch
    %89 = sbr.rel (0) target = $region53
  $region52: #{generator_forward.1} parent=0 // pred_region
    _
  $region53: #{generator_forward.1} parent=0 // pred_fallthru
    _
  // Predicated region
  $region54: #{generator_forward.1} parent=0 // pred_check
    _
  $region55: #{generator_forward.1} parent=0 // pred_check_branch
    %91 = sbr.rel (0) target = $region57
  $region56: #{generator_forward.1} parent=0 // pred_region
    _
  $region57: #{generator_forward.1} parent=0 // pred_fallthru
    _
  // Predicated region
  $region58: #{generator_forward.1} parent=0 // pred_check
    _
  $region59: #{generator_forward.1} parent=0 // pred_check_branch
    %93 = sbr.rel (0) target = $region61
  $region60: #{generator_forward.1} parent=0 // pred_region
    _
  $region61: #{generator_forward.1} parent=0 // pred_fallthru
    _
  // Predicated region
  $region62: #{generator_forward.1} parent=0 // pred_check
    _
  $region63: #{generator_forward.1} parent=0 // pred_check_branch
    %95 = sbr.rel (0) target = $region65
  $region64: #{generator_forward.1} parent=0 // pred_region
    _
  $region65: #{generator_forward.1} parent=0 // pred_fallthru
    _
  // Predicated region
  $region66: #{generator_forward.1} parent=0 // pred_check
    _
  $region67: #{generator_forward.1} parent=0 // pred_check_branch
    %97 = sbr.rel (0) target = $region69
  $region68: #{generator_forward.1} parent=0 // pred_region
    _
  $region69: #{generator_forward.1} parent=0 // pred_fallthru
    _
  // Predicated region
  $region70: #{generator_forward.1} parent=0 // pred_check
    _
  $region71: #{generator_forward.1} parent=0 // pred_check_branch
    %99 = sbr.rel (0) target = $region73
  $region72: #{generator_forward.1} parent=0 // pred_region
    _
  $region73: #{generator_forward.1} parent=0 // pred_fallthru
    _
  // Predicated region
  $region74: #{generator_forward.1} parent=0 // pred_check
    _
  $region75: #{generator_forward.1} parent=0 // pred_check_branch
    %101 = sbr.rel (0) target = $region77
  $region76: #{generator_forward.1} parent=0 // pred_region
    _
  $region77: #{generator_forward.1} parent=0 // pred_fallthru
    _
  // Predicated region
  $region78: #{generator_forward.1} parent=0 // pred_check
    _
  $region79: #{generator_forward.1} parent=0 // pred_check_branch
    %103 = sbr.rel (0) target = $region81
  $region80: #{generator_forward.1} parent=0 // pred_region
    _
  $region81: #{generator_forward.1} parent=0 // pred_fallthru
    _
  // Predicated region
  $region82: #{generator_forward.1} parent=0 // pred_check
    _
  $region83: #{generator_forward.1} parent=0 // pred_check_branch
    %105 = sbr.rel (0) target = $region85
  $region84: #{generator_forward.1} parent=0 // pred_region
    _
  $region85: #{generator_forward.1} parent=0 // pred_fallthru
    _
  // Predicated region
  $region86: #{generator_forward.1} parent=0 // pred_check
    _
  $region87: #{generator_forward.1} parent=0 // pred_check_branch
    %107 = sbr.rel (0) target = $region89
  $region88: #{generator_forward.1} parent=0 // pred_region
    _
  $region89: #{generator_forward.1} parent=0 // pred_fallthru
    _
  // Predicated region
  $region90: #{generator_forward.1} parent=0 // pred_check
    _
  $region91: #{generator_forward.1} parent=0 // pred_check_branch
    %109 = sbr.rel (0) target = $region93
  $region92: #{generator_forward.1} parent=0 // pred_region
    _
  $region93: #{generator_forward.1} parent=0 // pred_fallthru
    _
  // Predicated region
  $region94: #{generator_forward.1} parent=0 // pred_check
    _
  $region95: #{generator_forward.1} parent=0 // pred_check_branch
    %111 = sbr.rel (0) target = $region97
  $region96: #{generator_forward.1} parent=0 // pred_region
    _
  $region97: #{generator_forward.1} parent=0 // pred_fallthru
    _
  // Predicated region
  $region98: #{generator_forward.1} parent=0 // pred_check
    _
  $region99: #{generator_forward.1} parent=0 // pred_check_branch
    %113 = sbr.rel (0) target = $region101
  $region100: #{generator_forward.1} parent=0 // pred_region
    _
  $region101: #{generator_forward.1} parent=0 // pred_fallthru
    _
  // Predicated region
  $region102: #{generator_forward.1} parent=0 // pred_check
    _
  $region103: #{generator_forward.1} parent=0 // pred_check_branch
    %115 = sbr.rel (0) target = $region105
  $region104: #{generator_forward.1} parent=0 // pred_region
    _
  $region105: #{generator_forward.1} parent=0 // pred_fallthru
    _
  // Predicated region
  $region106: #{generator_forward.1} parent=0 // pred_check
    _
  $region107: #{generator_forward.1} parent=0 // pred_check_branch
    %117 = sbr.rel (0) target = $region109
  $region108: #{generator_forward.1} parent=0 // pred_region
    _
  $region109: #{generator_forward.1} parent=0 // pred_fallthru
    _
  // Predicated region
  $region110: #{generator_forward.1} parent=0 // pred_check
    _
  $region111: #{generator_forward.1} parent=0 // pred_check_branch
    %119 = sbr.rel (0) target = $region113
  $region112: #{generator_forward.1} parent=0 // pred_region
    _
  $region113: #{generator_forward.1} parent=0 // pred_fallthru
    _
  // Predicated region
  $region114: #{generator_forward.1} parent=0 // pred_check
    _
  $region115: #{generator_forward.1} parent=0 // pred_check_branch
    %121 = sbr.rel (0) target = $region117
  $region116: #{generator_forward.1} parent=0 // pred_region
    _
  $region117: #{generator_forward.1} parent=0 // pred_fallthru
    _
  %v122 = vld [vmem:[%s1] sm:$0xf]
  %v123 = vld [vmem:[%s3] sm:$0xf]
  %v124 = vld [vmem:[%s3 + $0x4] sm:$0xf]
  %v125 = vld [vmem:[%s3 + $0x8] sm:$0xf]
  %v126 = vld [vmem:[%s3 + $0xc] sm:$0xf]
  %v127 = vld [vmem:[%s3 + $0x10] sm:$0xf]
  %v128 = vld [vmem:[%s3 + $0x14] sm:$0xf]
  %v129 = vld [vmem:[%s3 + $0x18] sm:$0xf]
  %v130 = vld [vmem:[%s3 + $0x1c] sm:$0xf]
  %v131 = vld [vmem:[%s3 + $0x20] sm:$0xf]
  %v132 = vld [vmem:[%s3 + $0x24] sm:$0xf]
  %v133 = vld [vmem:[%s3 + $0x28] sm:$0xf]
  %v134 = vld [vmem:[%s3 + $0x2c] sm:$0xf]
  %v135 = vld [vmem:[%s3 + $0x30] sm:$0xf]
  %v136 = vld [vmem:[%s3 + $0x34] sm:$0xf]
  %v137 = vld [vmem:[%s3 + $0x38] sm:$0xf]
  %v138 = vld [vmem:[%s3 + $0x3c] sm:$0xf]
  %v139 = vld [vmem:[%s3 + $0x40] sm:$0xf]
  %v140 = vld [vmem:[%s3 + $0x44] sm:$0xf]
  %v141 = vld [vmem:[%s3 + $0x48] sm:$0xf]
  %v142 = vld [vmem:[%s3 + $0x4c] sm:$0xf]
  %v143 = vld [vmem:[%s3 + $0x50] sm:$0xf]
  %v144 = vld [vmem:[%s3 + $0x54] sm:$0xf]
  %v145 = vld [vmem:[%s3 + $0x58] sm:$0xf]
  %v146 = vld [vmem:[%s3 + $0x5c] sm:$0xf]
  %v147 = vld [vmem:[%s3 + $0x60] sm:$0xf]
  %v148 = vld [vmem:[%s3 + $0x64] sm:$0xf]
  %v149 = vld [vmem:[%s3 + $0x68] sm:$0xf]
  %v150 = vld [vmem:[%s3 + $0x6c] sm:$0xf]
  %v151 = vld [vmem:[%s3 + $0x70] sm:$0xf]
  %v152 = vld [vmem:[%s3 + $0x74] sm:$0xf]
  %v153 = vld [vmem:[%s3 + $0x78] sm:$0xf]
  %v154 = vld [vmem:[%s3 + $0x7c] sm:$0xf]
  %v155 = vunpack.c.l.bf16 %v123
  %v156 = vunpack.c.l.bf16 %v124
  %v157 = vunpack.c.l.bf16 %v125
  %v158 = vunpack.c.l.bf16 %v126
  %v159 = vunpack.c.l.bf16 %v127
  %v160 = vunpack.c.l.bf16 %v128
  %v161 = vunpack.c.l.bf16 %v129
  %v162 = vunpack.c.l.bf16 %v130
  %v163 = vunpack.c.l.bf16 %v131
  %v164 = vunpack.c.l.bf16 %v132
  %v165 = vunpack.c.l.bf16 %v133
  %v166 = vunpack.c.l.bf16 %v134
  %v167 = vunpack.c.l.bf16 %v135
  %v168 = vunpack.c.l.bf16 %v136
  %v169 = vunpack.c.l.bf16 %v137
  %v170 = vunpack.c.l.bf16 %v138
  %v171 = vunpack.c.l.bf16 %v139
  %v172 = vunpack.c.l.bf16 %v140
  %v173 = vunpack.c.l.bf16 %v141
  %v174 = vunpack.c.l.bf16 %v142
  %v175 = vunpack.c.l.bf16 %v143
  %v176 = vunpack.c.l.bf16 %v144
  %v177 = vunpack.c.l.bf16 %v145
  %v178 = vunpack.c.l.bf16 %v146
  %v179 = vunpack.c.l.bf16 %v147
  %v180 = vunpack.c.l.bf16 %v148
  %v181 = vunpack.c.l.bf16 %v149
  %v182 = vunpack.c.l.bf16 %v150
  %v183 = vunpack.c.l.bf16 %v151
  %v184 = vunpack.c.l.bf16 %v152
  %v185 = vunpack.c.l.bf16 %v153
  %v186 = vunpack.c.l.bf16 %v154
  %v189 = vunpack.c.l.s4 1983009808
  %v190 = vunpack.c.0.s8 %v189
  %v191 = vlaneseq
  %v192 = vshrl.u32 %v191, 7
  %v193 = vsub.s32 %v190, %v192
  %v194 = vrot.slane %v122, %v193
  %v195 = vcombine.high %v194, %v194
  %198 = vmatprep.subr.mxu0 0.0
  %199 = vmatpush1.msra.mxu0 %v155
  %200 = vmatprep.subr.mxu0 0.0
  %201 = vmatpush1.msra.mxu0 %v156
  %202 = vmatprep.subr.mxu0 0.0
  %203 = vmatpush1.msra.mxu0 %v157
  %204 = vmatprep.subr.mxu0 0.0
  %205 = vmatpush1.msra.mxu0 %v158
  %206 = vmatprep.subr.mxu0 0.0
  %207 = vmatpush1.msra.mxu0 %v159
  %208 = vmatprep.subr.mxu0 0.0
  %209 = vmatpush1.msra.mxu0 %v160
  %210 = vmatprep.subr.mxu0 0.0
  %211 = vmatpush1.msra.mxu0 %v161
  %212 = vmatprep.subr.mxu0 0.0
  %213 = vmatpush1.msra.mxu0 %v162
  %214 = vmatprep.subr.mxu0 0.0
  %215 = vmatpush1.msra.mxu0 %v163
  %216 = vmatprep.subr.mxu0 0.0
  %217 = vmatpush1.msra.mxu0 %v164
  %218 = vmatprep.subr.mxu0 0.0
  %219 = vmatpush1.msra.mxu0 %v165
  %220 = vmatprep.subr.mxu0 0.0
  %221 = vmatpush1.msra.mxu0 %v166
  %222 = vmatprep.subr.mxu0 0.0
  %223 = vmatpush1.msra.mxu0 %v167
  %224 = vmatprep.subr.mxu0 0.0
  %225 = vmatpush1.msra.mxu0 %v168
  %226 = vmatprep.subr.mxu0 0.0
  %227 = vmatpush1.msra.mxu0 %v169
  %228 = vmatprep.subr.mxu0 0.0
  %229 = vmatpush1.msra.mxu0 %v170
  %230 = vmatprep.subr.mxu0 0.0
  %231 = vmatpush1.msra.mxu0 %v171
  %232 = vmatprep.subr.mxu0 0.0
  %233 = vmatpush1.msra.mxu0 %v172
  %234 = vmatprep.subr.mxu0 0.0
  %235 = vmatpush1.msra.mxu0 %v173
  %236 = vmatprep.subr.mxu0 0.0
  %237 = vmatpush1.msra.mxu0 %v174
  %238 = vmatprep.subr.mxu0 0.0
  %239 = vmatpush1.msra.mxu0 %v175
  %240 = vmatprep.subr.mxu0 0.0
  %241 = vmatpush1.msra.mxu0 %v176
  %242 = vmatprep.subr.mxu0 0.0
  %243 = vmatpush1.msra.mxu0 %v177
  %244 = vmatprep.subr.mxu0 0.0
  %245 = vmatpush1.msra.mxu0 %v178
  %246 = vmatprep.subr.mxu0 0.0
  %247 = vmatpush1.msra.mxu0 %v179
  %248 = vmatprep.subr.mxu0 0.0
  %249 = vmatpush1.msra.mxu0 %v180
  %250 = vmatprep.subr.mxu0 0.0
  %251 = vmatpush1.msra.mxu0 %v181
  %252 = vmatprep.subr.mxu0 0.0
  %253 = vmatpush1.msra.mxu0 %v182
  %254 = vmatprep.subr.mxu0 0.0
  %255 = vmatpush1.msra.mxu0 %v183
  %256 = vmatprep.subr.mxu0 0.0
  %257 = vmatpush1.msra.mxu0 %v184
  %258 = vmatprep.subr.mxu0 0.0
  %259 = vmatpush1.msra.mxu0 %v185
  %260 = vmatprep.subr.mxu0 0.0
  %261 = vmatpush1.msra.mxu0 %v186
  %262 = vmatprep.mubr.f32.mxu0 %v195
  %263 = vmatmul.mubr.f32.gmra.mrb[0].mxu0 %v194
  %v264 = vpop.f32.mrb[0].mxu0
  %v265 = vadd.f32 0.0, %v264
  %v266 = vpop.f32.mrb[0].mxu0
  %267 = vdwg.mxu0
  %s268 = scalar_lea.vmem %s3, 128
  %v269 = vld [vmem:[%s268] sm:$0xf]
  %v270 = vld [vmem:[%s268 + $0x4] sm:$0xf]
  %v271 = vld [vmem:[%s268 + $0x8] sm:$0xf]
  %v272 = vld [vmem:[%s268 + $0xc] sm:$0xf]
  %v273 = vld [vmem:[%s268 + $0x10] sm:$0xf]
  %v274 = vld [vmem:[%s268 + $0x14] sm:$0xf]
  %v275 = vld [vmem:[%s268 + $0x18] sm:$0xf]
  %v276 = vld [vmem:[%s268 + $0x1c] sm:$0xf]
  %v277 = vld [vmem:[%s268 + $0x20] sm:$0xf]
  %v278 = vld [vmem:[%s268 + $0x24] sm:$0xf]
  %v279 = vld [vmem:[%s268 + $0x28] sm:$0xf]
  %v280 = vld [vmem:[%s268 + $0x2c] sm:$0xf]
  %v281 = vld [vmem:[%s268 + $0x30] sm:$0xf]
  %v282 = vld [vmem:[%s268 + $0x34] sm:$0xf]
  %v283 = vld [vmem:[%s268 + $0x38] sm:$0xf]
  %v284 = vld [vmem:[%s268 + $0x3c] sm:$0xf]
  %v285 = vld [vmem:[%s268 + $0x40] sm:$0xf]
  %v286 = vld [vmem:[%s268 + $0x44] sm:$0xf]
  %v287 = vld [vmem:[%s268 + $0x48] sm:$0xf]
  %v288 = vld [vmem:[%s268 + $0x4c] sm:$0xf]
  %v289 = vld [vmem:[%s268 + $0x50] sm:$0xf]
  %v290 = vld [vmem:[%s268 + $0x54] sm:$0xf]
  %v291 = vld [vmem:[%s268 + $0x58] sm:$0xf]
  %v292 = vld [vmem:[%s268 + $0x5c] sm:$0xf]
  %v293 = vld [vmem:[%s268 + $0x60] sm:$0xf]
  %v294 = vld [vmem:[%s268 + $0x64] sm:$0xf]
  %v295 = vld [vmem:[%s268 + $0x68] sm:$0xf]
  %v296 = vld [vmem:[%s268 + $0x6c] sm:$0xf]
  %v297 = vld [vmem:[%s268 + $0x70] sm:$0xf]
  %v298 = vld [vmem:[%s268 + $0x74] sm:$0xf]
  %v299 = vld [vmem:[%s268 + $0x78] sm:$0xf]
  %v300 = vld [vmem:[%s268 + $0x7c] sm:$0xf]
  %v301 = vunpack.c.l.bf16 %v269
  %v302 = vunpack.c.l.bf16 %v270
  %v303 = vunpack.c.l.bf16 %v271
  %v304 = vunpack.c.l.bf16 %v272
  %v305 = vunpack.c.l.bf16 %v273
  %v306 = vunpack.c.l.bf16 %v274
  %v307 = vunpack.c.l.bf16 %v275
  %v308 = vunpack.c.l.bf16 %v276
  %v309 = vunpack.c.l.bf16 %v277
  %v310 = vunpack.c.l.bf16 %v278
  %v311 = vunpack.c.l.bf16 %v279
  %v312 = vunpack.c.l.bf16 %v280
  %v313 = vunpack.c.l.bf16 %v281
  %v314 = vunpack.c.l.bf16 %v282
  %v315 = vunpack.c.l.bf16 %v283
  %v316 = vunpack.c.l.bf16 %v284
  %v317 = vunpack.c.l.bf16 %v285
  %v318 = vunpack.c.l.bf16 %v286
  %v319 = vunpack.c.l.bf16 %v287
  %v320 = vunpack.c.l.bf16 %v288
  %v321 = vunpack.c.l.bf16 %v289
  %v322 = vunpack.c.l.bf16 %v290
  %v323 = vunpack.c.l.bf16 %v291
  %v324 = vunpack.c.l.bf16 %v292
  %v325 = vunpack.c.l.bf16 %v293
  %v326 = vunpack.c.l.bf16 %v294
  %v327 = vunpack.c.l.bf16 %v295
  %v328 = vunpack.c.l.bf16 %v296
  %v329 = vunpack.c.l.bf16 %v297
  %v330 = vunpack.c.l.bf16 %v298
  %v331 = vunpack.c.l.bf16 %v299
  %v332 = vunpack.c.l.bf16 %v300
  %333 = vmatprep.subr.mxu0 0.0
  %334 = vmatpush1.msra.mxu0 %v301
  %335 = vmatprep.subr.mxu0 0.0
  %336 = vmatpush1.msra.mxu0 %v302
  %337 = vmatprep.subr.mxu0 0.0
  %338 = vmatpush1.msra.mxu0 %v303
  %339 = vmatprep.subr.mxu0 0.0
  %340 = vmatpush1.msra.mxu0 %v304
  %341 = vmatprep.subr.mxu0 0.0
  %342 = vmatpush1.msra.mxu0 %v305
  %343 = vmatprep.subr.mxu0 0.0
  %344 = vmatpush1.msra.mxu0 %v306
  %345 = vmatprep.subr.mxu0 0.0
  %346 = vmatpush1.msra.mxu0 %v307
  %347 = vmatprep.subr.mxu0 0.0
  %348 = vmatpush1.msra.mxu0 %v308
  %349 = vmatprep.subr.mxu0 0.0
  %350 = vmatpush1.msra.mxu0 %v309
  %351 = vmatprep.subr.mxu0 0.0
  %352 = vmatpush1.msra.mxu0 %v310
  %353 = vmatprep.subr.mxu0 0.0
  %354 = vmatpush1.msra.mxu0 %v311
  %355 = vmatprep.subr.mxu0 0.0
  %356 = vmatpush1.msra.mxu0 %v312
  %357 = vmatprep.subr.mxu0 0.0
  %358 = vmatpush1.msra.mxu0 %v313
  %359 = vmatprep.subr.mxu0 0.0
  %360 = vmatpush1.msra.mxu0 %v314
  %361 = vmatprep.subr.mxu0 0.0
  %362 = vmatpush1.msra.mxu0 %v315
  %363 = vmatprep.subr.mxu0 0.0
  %364 = vmatpush1.msra.mxu0 %v316
  %365 = vmatprep.subr.mxu0 0.0
  %366 = vmatpush1.msra.mxu0 %v317
  %367 = vmatprep.subr.mxu0 0.0
  %368 = vmatpush1.msra.mxu0 %v318
  %369 = vmatprep.subr.mxu0 0.0
  %370 = vmatpush1.msra.mxu0 %v319
  %371 = vmatprep.subr.mxu0 0.0
  %372 = vmatpush1.msra.mxu0 %v320
  %373 = vmatprep.subr.mxu0 0.0
  %374 = vmatpush1.msra.mxu0 %v321
  %375 = vmatprep.subr.mxu0 0.0
  %376 = vmatpush1.msra.mxu0 %v322
  %377 = vmatprep.subr.mxu0 0.0
  %378 = vmatpush1.msra.mxu0 %v323
  %379 = vmatprep.subr.mxu0 0.0
  %380 = vmatpush1.msra.mxu0 %v324
  %381 = vmatprep.subr.mxu0 0.0
  %382 = vmatpush1.msra.mxu0 %v325
  %383 = vmatprep.subr.mxu0 0.0
  %384 = vmatpush1.msra.mxu0 %v326
  %385 = vmatprep.subr.mxu0 0.0
  %386 = vmatpush1.msra.mxu0 %v327
  %387 = vmatprep.subr.mxu0 0.0
  %388 = vmatpush1.msra.mxu0 %v328
  %389 = vmatprep.subr.mxu0 0.0
  %390 = vmatpush1.msra.mxu0 %v329
  %391 = vmatprep.subr.mxu0 0.0
  %392 = vmatpush1.msra.mxu0 %v330
  %393 = vmatprep.subr.mxu0 0.0
  %394 = vmatpush1.msra.mxu0 %v331
  %395 = vmatprep.subr.mxu0 0.0
  %396 = vmatpush1.msra.mxu0 %v332
  %397 = vmatprep.mubr.f32.mxu0 %v195
  %398 = vmatmul.mubr.f32.gmra.mrb[0].mxu0 %v194
  %v399 = vpop.f32.mrb[0].mxu0
  %v400 = vadd.f32 0.0, %v399
  %v401 = vpop.f32.mrb[0].mxu0
  %402 = vdwg.mxu0
  %s403 = scalar_lea.vmem %s3, 256
  %v404 = vld [vmem:[%s403] sm:$0xf]
  %v405 = vld [vmem:[%s403 + $0x4] sm:$0xf]
  %v406 = vld [vmem:[%s403 + $0x8] sm:$0xf]
  %v407 = vld [vmem:[%s403 + $0xc] sm:$0xf]
  %v408 = vld [vmem:[%s403 + $0x10] sm:$0xf]
  %v409 = vld [vmem:[%s403 + $0x14] sm:$0xf]
  %v410 = vld [vmem:[%s403 + $0x18] sm:$0xf]
  %v411 = vld [vmem:[%s403 + $0x1c] sm:$0xf]
  %v412 = vld [vmem:[%s403 + $0x20] sm:$0xf]
  %v413 = vld [vmem:[%s403 + $0x24] sm:$0xf]
  %v414 = vld [vmem:[%s403 + $0x28] sm:$0xf]
  %v415 = vld [vmem:[%s403 + $0x2c] sm:$0xf]
  %v416 = vld [vmem:[%s403 + $0x30] sm:$0xf]
  %v417 = vld [vmem:[%s403 + $0x34] sm:$0xf]
  %v418 = vld [vmem:[%s403 + $0x38] sm:$0xf]
  %v419 = vld [vmem:[%s403 + $0x3c] sm:$0xf]
  %v420 = vld [vmem:[%s403 + $0x40] sm:$0xf]
  %v421 = vld [vmem:[%s403 + $0x44] sm:$0xf]
  %v422 = vld [vmem:[%s403 + $0x48] sm:$0xf]
  %v423 = vld [vmem:[%s403 + $0x4c] sm:$0xf]
  %v424 = vld [vmem:[%s403 + $0x50] sm:$0xf]
  %v425 = vld [vmem:[%s403 + $0x54] sm:$0xf]
  %v426 = vld [vmem:[%s403 + $0x58] sm:$0xf]
  %v427 = vld [vmem:[%s403 + $0x5c] sm:$0xf]
  %v428 = vld [vmem:[%s403 + $0x60] sm:$0xf]
  %v429 = vld [vmem:[%s403 + $0x64] sm:$0xf]
  %v430 = vld [vmem:[%s403 + $0x68] sm:$0xf]
  %v431 = vld [vmem:[%s403 + $0x6c] sm:$0xf]
  %v432 = vld [vmem:[%s403 + $0x70] sm:$0xf]
  %v433 = vld [vmem:[%s403 + $0x74] sm:$0xf]
  %v434 = vld [vmem:[%s403 + $0x78] sm:$0xf]
  %v435 = vld [vmem:[%s403 + $0x7c] sm:$0xf]
  %v436 = vunpack.c.l.bf16 %v404
  %v437 = vunpack.c.l.bf16 %v405
  %v438 = vunpack.c.l.bf16 %v406
  %v439 = vunpack.c.l.bf16 %v407
  %v440 = vunpack.c.l.bf16 %v408
  %v441 = vunpack.c.l.bf16 %v409
  %v442 = vunpack.c.l.bf16 %v410
  %v443 = vunpack.c.l.bf16 %v411
  %v444 = vunpack.c.l.bf16 %v412
  %v445 = vunpack.c.l.bf16 %v413
  %v446 = vunpack.c.l.bf16 %v414
  %v447 = vunpack.c.l.bf16 %v415
  %v448 = vunpack.c.l.bf16 %v416
  %v449 = vunpack.c.l.bf16 %v417
  %v450 = vunpack.c.l.bf16 %v418
  %v451 = vunpack.c.l.bf16 %v419
  %v452 = vunpack.c.l.bf16 %v420
  %v453 = vunpack.c.l.bf16 %v421
  %v454 = vunpack.c.l.bf16 %v422
  %v455 = vunpack.c.l.bf16 %v423
  %v456 = vunpack.c.l.bf16 %v424
  %v457 = vunpack.c.l.bf16 %v425
  %v458 = vunpack.c.l.bf16 %v426
  %v459 = vunpack.c.l.bf16 %v427
  %v460 = vunpack.c.l.bf16 %v428
  %v461 = vunpack.c.l.bf16 %v429
  %v462 = vunpack.c.l.bf16 %v430
  %v463 = vunpack.c.l.bf16 %v431
  %v464 = vunpack.c.l.bf16 %v432
  %v465 = vunpack.c.l.bf16 %v433
  %v466 = vunpack.c.l.bf16 %v434
  %v467 = vunpack.c.l.bf16 %v435
  %468 = vmatprep.subr.mxu0 0.0
  %469 = vmatpush1.msra.mxu0 %v436
  %470 = vmatprep.subr.mxu0 0.0
  %471 = vmatpush1.msra.mxu0 %v437
  %472 = vmatprep.subr.mxu0 0.0
  %473 = vmatpush1.msra.mxu0 %v438
  %474 = vmatprep.subr.mxu0 0.0
  %475 = vmatpush1.msra.mxu0 %v439
  %476 = vmatprep.subr.mxu0 0.0
  %477 = vmatpush1.msra.mxu0 %v440
  %478 = vmatprep.subr.mxu0 0.0
  %479 = vmatpush1.msra.mxu0 %v441
  %480 = vmatprep.subr.mxu0 0.0
  %481 = vmatpush1.msra.mxu0 %v442
  %482 = vmatprep.subr.mxu0 0.0
  %483 = vmatpush1.msra.mxu0 %v443
  %484 = vmatprep.subr.mxu0 0.0
  %485 = vmatpush1.msra.mxu0 %v444
  %486 = vmatprep.subr.mxu0 0.0
  %487 = vmatpush1.msra.mxu0 %v445
  %488 = vmatprep.subr.mxu0 0.0
  %489 = vmatpush1.msra.mxu0 %v446
  %490 = vmatprep.subr.mxu0 0.0
  %491 = vmatpush1.msra.mxu0 %v447
  %492 = vmatprep.subr.mxu0 0.0
  %493 = vmatpush1.msra.mxu0 %v448
  %494 = vmatprep.subr.mxu0 0.0
  %495 = vmatpush1.msra.mxu0 %v449
  %496 = vmatprep.subr.mxu0 0.0
  %497 = vmatpush1.msra.mxu0 %v450
  %498 = vmatprep.subr.mxu0 0.0
  %499 = vmatpush1.msra.mxu0 %v451
  %500 = vmatprep.subr.mxu0 0.0
  %501 = vmatpush1.msra.mxu0 %v452
  %502 = vmatprep.subr.mxu0 0.0
  %503 = vmatpush1.msra.mxu0 %v453
  %504 = vmatprep.subr.mxu0 0.0
  %505 = vmatpush1.msra.mxu0 %v454
  %506 = vmatprep.subr.mxu0 0.0
  %507 = vmatpush1.msra.mxu0 %v455
  %508 = vmatprep.subr.mxu0 0.0
  %509 = vmatpush1.msra.mxu0 %v456
  %510 = vmatprep.subr.mxu0 0.0
  %511 = vmatpush1.msra.mxu0 %v457
  %512 = vmatprep.subr.mxu0 0.0
  %513 = vmatpush1.msra.mxu0 %v458
  %514 = vmatprep.subr.mxu0 0.0
  %515 = vmatpush1.msra.mxu0 %v459
  %516 = vmatprep.subr.mxu0 0.0
  %517 = vmatpush1.msra.mxu0 %v460
  %518 = vmatprep.subr.mxu0 0.0
  %519 = vmatpush1.msra.mxu0 %v461
  %520 = vmatprep.subr.mxu0 0.0
  %521 = vmatpush1.msra.mxu0 %v462
  %522 = vmatprep.subr.mxu0 0.0
  %523 = vmatpush1.msra.mxu0 %v463
  %524 = vmatprep.subr.mxu0 0.0
  %525 = vmatpush1.msra.mxu0 %v464
  %526 = vmatprep.subr.mxu0 0.0
  %527 = vmatpush1.msra.mxu0 %v465
  %528 = vmatprep.subr.mxu0 0.0
  %529 = vmatpush1.msra.mxu0 %v466
  %530 = vmatprep.subr.mxu0 0.0
  %531 = vmatpush1.msra.mxu0 %v467
  %532 = vmatprep.mubr.f32.mxu0 %v195
  %533 = vmatmul.mubr.f32.gmra.mrb[0].mxu0 %v194
  %v534 = vpop.f32.mrb[0].mxu0
  %v535 = vadd.f32 0.0, %v534
  %v536 = vpop.f32.mrb[0].mxu0
  %537 = vdwg.mxu0
  %s538 = scalar_lea.vmem %s3, 384
  %v539 = vld [vmem:[%s538] sm:$0xf]
  %v540 = vld [vmem:[%s538 + $0x4] sm:$0xf]
  %v541 = vld [vmem:[%s538 + $0x8] sm:$0xf]
  %v542 = vld [vmem:[%s538 + $0xc] sm:$0xf]
  %v543 = vld [vmem:[%s538 + $0x10] sm:$0xf]
  %v544 = vld [vmem:[%s538 + $0x14] sm:$0xf]
  %v545 = vld [vmem:[%s538 + $0x18] sm:$0xf]
  %v546 = vld [vmem:[%s538 + $0x1c] sm:$0xf]
  %v547 = vld [vmem:[%s538 + $0x20] sm:$0xf]
  %v548 = vld [vmem:[%s538 + $0x24] sm:$0xf]
  %v549 = vld [vmem:[%s538 + $0x28] sm:$0xf]
  %v550 = vld [vmem:[%s538 + $0x2c] sm:$0xf]
  %v551 = vld [vmem:[%s538 + $0x30] sm:$0xf]
  %v552 = vld [vmem:[%s538 + $0x34] sm:$0xf]
  %v553 = vld [vmem:[%s538 + $0x38] sm:$0xf]
  %v554 = vld [vmem:[%s538 + $0x3c] sm:$0xf]
  %v555 = vld [vmem:[%s538 + $0x40] sm:$0xf]
  %v556 = vld [vmem:[%s538 + $0x44] sm:$0xf]
  %v557 = vld [vmem:[%s538 + $0x48] sm:$0xf]
  %v558 = vld [vmem:[%s538 + $0x4c] sm:$0xf]
  %v559 = vld [vmem:[%s538 + $0x50] sm:$0xf]
  %v560 = vld [vmem:[%s538 + $0x54] sm:$0xf]
  %v561 = vld [vmem:[%s538 + $0x58] sm:$0xf]
  %v562 = vld [vmem:[%s538 + $0x5c] sm:$0xf]
  %v563 = vld [vmem:[%s538 + $0x60] sm:$0xf]
  %v564 = vld [vmem:[%s538 + $0x64] sm:$0xf]
  %v565 = vld [vmem:[%s538 + $0x68] sm:$0xf]
  %v566 = vld [vmem:[%s538 + $0x6c] sm:$0xf]
  %v567 = vld [vmem:[%s538 + $0x70] sm:$0xf]
  %v568 = vld [vmem:[%s538 + $0x74] sm:$0xf]
  %v569 = vld [vmem:[%s538 + $0x78] sm:$0xf]
  %v570 = vld [vmem:[%s538 + $0x7c] sm:$0xf]
  %v571 = vunpack.c.l.bf16 %v539
  %v572 = vunpack.c.l.bf16 %v540
  %v573 = vunpack.c.l.bf16 %v541
  %v574 = vunpack.c.l.bf16 %v542
  %v575 = vunpack.c.l.bf16 %v543
  %v576 = vunpack.c.l.bf16 %v544
  %v577 = vunpack.c.l.bf16 %v545
  %v578 = vunpack.c.l.bf16 %v546
  %v579 = vunpack.c.l.bf16 %v547
  %v580 = vunpack.c.l.bf16 %v548
  %v581 = vunpack.c.l.bf16 %v549
  %v582 = vunpack.c.l.bf16 %v550
  %v583 = vunpack.c.l.bf16 %v551
  %v584 = vunpack.c.l.bf16 %v552
  %v585 = vunpack.c.l.bf16 %v553
  %v586 = vunpack.c.l.bf16 %v554
  %v587 = vunpack.c.l.bf16 %v555
  %v588 = vunpack.c.l.bf16 %v556
  %v589 = vunpack.c.l.bf16 %v557
  %v590 = vunpack.c.l.bf16 %v558
  %v591 = vunpack.c.l.bf16 %v559
  %v592 = vunpack.c.l.bf16 %v560
  %v593 = vunpack.c.l.bf16 %v561
  %v594 = vunpack.c.l.bf16 %v562
  %v595 = vunpack.c.l.bf16 %v563
  %v596 = vunpack.c.l.bf16 %v564
  %v597 = vunpack.c.l.bf16 %v565
  %v598 = vunpack.c.l.bf16 %v566
  %v599 = vunpack.c.l.bf16 %v567
  %v600 = vunpack.c.l.bf16 %v568
  %v601 = vunpack.c.l.bf16 %v569
  %v602 = vunpack.c.l.bf16 %v570
  %603 = vmatprep.subr.mxu0 0.0
  %604 = vmatpush1.msra.mxu0 %v571
  %605 = vmatprep.subr.mxu0 0.0
  %606 = vmatpush1.msra.mxu0 %v572
  %607 = vmatprep.subr.mxu0 0.0
  %608 = vmatpush1.msra.mxu0 %v573
  %609 = vmatprep.subr.mxu0 0.0
  %610 = vmatpush1.msra.mxu0 %v574
  %611 = vmatprep.subr.mxu0 0.0
  %612 = vmatpush1.msra.mxu0 %v575
  %613 = vmatprep.subr.mxu0 0.0
  %614 = vmatpush1.msra.mxu0 %v576
  %615 = vmatprep.subr.mxu0 0.0
  %616 = vmatpush1.msra.mxu0 %v577
  %617 = vmatprep.subr.mxu0 0.0
  %618 = vmatpush1.msra.mxu0 %v578
  %619 = vmatprep.subr.mxu0 0.0
  %620 = vmatpush1.msra.mxu0 %v579
  %621 = vmatprep.subr.mxu0 0.0
  %622 = vmatpush1.msra.mxu0 %v580
  %623 = vmatprep.subr.mxu0 0.0
  %624 = vmatpush1.msra.mxu0 %v581
  %625 = vmatprep.subr.mxu0 0.0
  %626 = vmatpush1.msra.mxu0 %v582
  %627 = vmatprep.subr.mxu0 0.0
  %628 = vmatpush1.msra.mxu0 %v583
  %629 = vmatprep.subr.mxu0 0.0
  %630 = vmatpush1.msra.mxu0 %v584
  %631 = vmatprep.subr.mxu0 0.0
  %632 = vmatpush1.msra.mxu0 %v585
  %633 = vmatprep.subr.mxu0 0.0
  %634 = vmatpush1.msra.mxu0 %v586
  %635 = vmatprep.subr.mxu0 0.0
  %636 = vmatpush1.msra.mxu0 %v587
  %637 = vmatprep.subr.mxu0 0.0
  %638 = vmatpush1.msra.mxu0 %v588
  %639 = vmatprep.subr.mxu0 0.0
  %640 = vmatpush1.msra.mxu0 %v589
  %641 = vmatprep.subr.mxu0 0.0
  %642 = vmatpush1.msra.mxu0 %v590
  %643 = vmatprep.subr.mxu0 0.0
  %644 = vmatpush1.msra.mxu0 %v591
  %645 = vmatprep.subr.mxu0 0.0
  %646 = vmatpush1.msra.mxu0 %v592
  %647 = vmatprep.subr.mxu0 0.0
  %648 = vmatpush1.msra.mxu0 %v593
  %649 = vmatprep.subr.mxu0 0.0
  %650 = vmatpush1.msra.mxu0 %v594
  %651 = vmatprep.subr.mxu0 0.0
  %652 = vmatpush1.msra.mxu0 %v595
  %653 = vmatprep.subr.mxu0 0.0
  %654 = vmatpush1.msra.mxu0 %v596
  %655 = vmatprep.subr.mxu0 0.0
  %656 = vmatpush1.msra.mxu0 %v597
  %657 = vmatprep.subr.mxu0 0.0
  %658 = vmatpush1.msra.mxu0 %v598
  %659 = vmatprep.subr.mxu0 0.0
  %660 = vmatpush1.msra.mxu0 %v599
  %661 = vmatprep.subr.mxu0 0.0
  %662 = vmatpush1.msra.mxu0 %v600
  %663 = vmatprep.subr.mxu0 0.0
  %664 = vmatpush1.msra.mxu0 %v601
  %665 = vmatprep.subr.mxu0 0.0
  %666 = vmatpush1.msra.mxu0 %v602
  %667 = vmatprep.mubr.f32.mxu0 %v195
  %668 = vmatmul.mubr.f32.gmra.mrb[0].mxu0 %v194
  %v669 = vpop.f32.mrb[0].mxu0
  %v670 = vadd.f32 0.0, %v669
  %v671 = vpop.f32.mrb[0].mxu0
  %672 = vdwg.mxu0
  %s673 = scalar_lea.vmem %s3, 512
  %v674 = vld [vmem:[%s673] sm:$0xf]
  %v675 = vld [vmem:[%s673 + $0x4] sm:$0xf]
  %v676 = vld [vmem:[%s673 + $0x8] sm:$0xf]
  %v677 = vld [vmem:[%s673 + $0xc] sm:$0xf]
  %v678 = vld [vmem:[%s673 + $0x10] sm:$0xf]
  %v679 = vld [vmem:[%s673 + $0x14] sm:$0xf]
  %v680 = vld [vmem:[%s673 + $0x18] sm:$0xf]
  %v681 = vld [vmem:[%s673 + $0x1c] sm:$0xf]
  %v682 = vld [vmem:[%s673 + $0x20] sm:$0xf]
  %v683 = vld [vmem:[%s673 + $0x24] sm:$0xf]
  %v684 = vld [vmem:[%s673 + $0x28] sm:$0xf]
  %v685 = vld [vmem:[%s673 + $0x2c] sm:$0xf]
  %v686 = vld [vmem:[%s673 + $0x30] sm:$0xf]
  %v687 = vld [vmem:[%s673 + $0x34] sm:$0xf]
  %v688 = vld [vmem:[%s673 + $0x38] sm:$0xf]
  %v689 = vld [vmem:[%s673 + $0x3c] sm:$0xf]
  %v690 = vld [vmem:[%s673 + $0x40] sm:$0xf]
  %v691 = vld [vmem:[%s673 + $0x44] sm:$0xf]
  %v692 = vld [vmem:[%s673 + $0x48] sm:$0xf]
  %v693 = vld [vmem:[%s673 + $0x4c] sm:$0xf]
  %v694 = vld [vmem:[%s673 + $0x50] sm:$0xf]
  %v695 = vld [vmem:[%s673 + $0x54] sm:$0xf]
  %v696 = vld [vmem:[%s673 + $0x58] sm:$0xf]
  %v697 = vld [vmem:[%s673 + $0x5c] sm:$0xf]
  %v698 = vld [vmem:[%s673 + $0x60] sm:$0xf]
  %v699 = vld [vmem:[%s673 + $0x64] sm:$0xf]
  %v700 = vld [vmem:[%s673 + $0x68] sm:$0xf]
  %v701 = vld [vmem:[%s673 + $0x6c] sm:$0xf]
  %v702 = vld [vmem:[%s673 + $0x70] sm:$0xf]
  %v703 = vld [vmem:[%s673 + $0x74] sm:$0xf]
  %v704 = vld [vmem:[%s673 + $0x78] sm:$0xf]
  %v705 = vld [vmem:[%s673 + $0x7c] sm:$0xf]
  %v706 = vunpack.c.l.bf16 %v674
  %v707 = vunpack.c.l.bf16 %v675
  %v708 = vunpack.c.l.bf16 %v676
  %v709 = vunpack.c.l.bf16 %v677
  %v710 = vunpack.c.l.bf16 %v678
  %v711 = vunpack.c.l.bf16 %v679
  %v712 = vunpack.c.l.bf16 %v680
  %v713 = vunpack.c.l.bf16 %v681
  %v714 = vunpack.c.l.bf16 %v682
  %v715 = vunpack.c.l.bf16 %v683
  %v716 = vunpack.c.l.bf16 %v684
  %v717 = vunpack.c.l.bf16 %v685
  %v718 = vunpack.c.l.bf16 %v686
  %v719 = vunpack.c.l.bf16 %v687
  %v720 = vunpack.c.l.bf16 %v688
  %v721 = vunpack.c.l.bf16 %v689
  %v722 = vunpack.c.l.bf16 %v690
  %v723 = vunpack.c.l.bf16 %v691
  %v724 = vunpack.c.l.bf16 %v692
  %v725 = vunpack.c.l.bf16 %v693
  %v726 = vunpack.c.l.bf16 %v694
  %v727 = vunpack.c.l.bf16 %v695
  %v728 = vunpack.c.l.bf16 %v696
  %v729 = vunpack.c.l.bf16 %v697
  %v730 = vunpack.c.l.bf16 %v698
  %v731 = vunpack.c.l.bf16 %v699
  %v732 = vunpack.c.l.bf16 %v700
  %v733 = vunpack.c.l.bf16 %v701
  %v734 = vunpack.c.l.bf16 %v702
  %v735 = vunpack.c.l.bf16 %v703
  %v736 = vunpack.c.l.bf16 %v704
  %v737 = vunpack.c.l.bf16 %v705
  %738 = vmatprep.subr.mxu0 0.0
  %739 = vmatpush1.msra.mxu0 %v706
  %740 = vmatprep.subr.mxu0 0.0
  %741 = vmatpush1.msra.mxu0 %v707
  %742 = vmatprep.subr.mxu0 0.0
  %743 = vmatpush1.msra.mxu0 %v708
  %744 = vmatprep.subr.mxu0 0.0
  %745 = vmatpush1.msra.mxu0 %v709
  %746 = vmatprep.subr.mxu0 0.0
  %747 = vmatpush1.msra.mxu0 %v710
  %748 = vmatprep.subr.mxu0 0.0
  %749 = vmatpush1.msra.mxu0 %v711
  %750 = vmatprep.subr.mxu0 0.0
  %751 = vmatpush1.msra.mxu0 %v712
  %752 = vmatprep.subr.mxu0 0.0
  %753 = vmatpush1.msra.mxu0 %v713
  %754 = vmatprep.subr.mxu0 0.0
  %755 = vmatpush1.msra.mxu0 %v714
  %756 = vmatprep.subr.mxu0 0.0
  %757 = vmatpush1.msra.mxu0 %v715
  %758 = vmatprep.subr.mxu0 0.0
  %759 = vmatpush1.msra.mxu0 %v716
  %760 = vmatprep.subr.mxu0 0.0
  %761 = vmatpush1.msra.mxu0 %v717
  %762 = vmatprep.subr.mxu0 0.0
  %763 = vmatpush1.msra.mxu0 %v718
  %764 = vmatprep.subr.mxu0 0.0
  %765 = vmatpush1.msra.mxu0 %v719
  %766 = vmatprep.subr.mxu0 0.0
  %767 = vmatpush1.msra.mxu0 %v720
  %768 = vmatprep.subr.mxu0 0.0
  %769 = vmatpush1.msra.mxu0 %v721
  %770 = vmatprep.subr.mxu0 0.0
  %771 = vmatpush1.msra.mxu0 %v722
  %772 = vmatprep.subr.mxu0 0.0
  %773 = vmatpush1.msra.mxu0 %v723
  %774 = vmatprep.subr.mxu0 0.0
  %775 = vmatpush1.msra.mxu0 %v724
  %776 = vmatprep.subr.mxu0 0.0
  %777 = vmatpush1.msra.mxu0 %v725
  %778 = vmatprep.subr.mxu0 0.0
  %779 = vmatpush1.msra.mxu0 %v726
  %780 = vmatprep.subr.mxu0 0.0
  %781 = vmatpush1.msra.mxu0 %v727
  %782 = vmatprep.subr.mxu0 0.0
  %783 = vmatpush1.msra.mxu0 %v728
  %784 = vmatprep.subr.mxu0 0.0
  %785 = vmatpush1.msra.mxu0 %v729
  %786 = vmatprep.subr.mxu0 0.0
  %787 = vmatpush1.msra.mxu0 %v730
  %788 = vmatprep.subr.mxu0 0.0
  %789 = vmatpush1.msra.mxu0 %v731
  %790 = vmatprep.subr.mxu0 0.0
  %791 = vmatpush1.msra.mxu0 %v732
  %792 = vmatprep.subr.mxu0 0.0
  %793 = vmatpush1.msra.mxu0 %v733
  %794 = vmatprep.subr.mxu0 0.0
  %795 = vmatpush1.msra.mxu0 %v734
  %796 = vmatprep.subr.mxu0 0.0
  %797 = vmatpush1.msra.mxu0 %v735
  %798 = vmatprep.subr.mxu0 0.0
  %799 = vmatpush1.msra.mxu0 %v736
  %800 = vmatprep.subr.mxu0 0.0
  %801 = vmatpush1.msra.mxu0 %v737
  %802 = vmatprep.mubr.f32.mxu0 %v195
  %803 = vmatmul.mubr.f32.gmra.mrb[0].mxu0 %v194
  %v804 = vpop.f32.mrb[0].mxu0
  %v805 = vadd.f32 0.0, %v804
  %v806 = vpop.f32.mrb[0].mxu0
  %807 = vdwg.mxu0
  %s808 = scalar_lea.vmem %s3, 640
  %v809 = vld [vmem:[%s808] sm:$0xf]
  %v810 = vld [vmem:[%s808 + $0x4] sm:$0xf]
  %v811 = vld [vmem:[%s808 + $0x8] sm:$0xf]
  %v812 = vld [vmem:[%s808 + $0xc] sm:$0xf]
  %v813 = vld [vmem:[%s808 + $0x10] sm:$0xf]
  %v814 = vld [vmem:[%s808 + $0x14] sm:$0xf]
  %v815 = vld [vmem:[%s808 + $0x18] sm:$0xf]
  %v816 = vld [vmem:[%s808 + $0x1c] sm:$0xf]
  %v817 = vld [vmem:[%s808 + $0x20] sm:$0xf]
  %v818 = vld [vmem:[%s808 + $0x24] sm:$0xf]
  %v819 = vld [vmem:[%s808 + $0x28] sm:$0xf]
  %v820 = vld [vmem:[%s808 + $0x2c] sm:$0xf]
  %v821 = vld [vmem:[%s808 + $0x30] sm:$0xf]
  %v822 = vld [vmem:[%s808 + $0x34] sm:$0xf]
  %v823 = vld [vmem:[%s808 + $0x38] sm:$0xf]
  %v824 = vld [vmem:[%s808 + $0x3c] sm:$0xf]
  %v825 = vld [vmem:[%s808 + $0x40] sm:$0xf]
  %v826 = vld [vmem:[%s808 + $0x44] sm:$0xf]
  %v827 = vld [vmem:[%s808 + $0x48] sm:$0xf]
  %v828 = vld [vmem:[%s808 + $0x4c] sm:$0xf]
  %v829 = vld [vmem:[%s808 + $0x50] sm:$0xf]
  %v830 = vld [vmem:[%s808 + $0x54] sm:$0xf]
  %v831 = vld [vmem:[%s808 + $0x58] sm:$0xf]
  %v832 = vld [vmem:[%s808 + $0x5c] sm:$0xf]
  %v833 = vld [vmem:[%s808 + $0x60] sm:$0xf]
  %v834 = vld [vmem:[%s808 + $0x64] sm:$0xf]
  %v835 = vld [vmem:[%s808 + $0x68] sm:$0xf]
  %v836 = vld [vmem:[%s808 + $0x6c] sm:$0xf]
  %v837 = vld [vmem:[%s808 + $0x70] sm:$0xf]
  %v838 = vld [vmem:[%s808 + $0x74] sm:$0xf]
  %v839 = vld [vmem:[%s808 + $0x78] sm:$0xf]
  %v840 = vld [vmem:[%s808 + $0x7c] sm:$0xf]
  %v841 = vunpack.c.l.bf16 %v809
  %v842 = vunpack.c.l.bf16 %v810
  %v843 = vunpack.c.l.bf16 %v811
  %v844 = vunpack.c.l.bf16 %v812
  %v845 = vunpack.c.l.bf16 %v813
  %v846 = vunpack.c.l.bf16 %v814
  %v847 = vunpack.c.l.bf16 %v815
  %v848 = vunpack.c.l.bf16 %v816
  %v849 = vunpack.c.l.bf16 %v817
  %v850 = vunpack.c.l.bf16 %v818
  %v851 = vunpack.c.l.bf16 %v819
  %v852 = vunpack.c.l.bf16 %v820
  %v853 = vunpack.c.l.bf16 %v821
  %v854 = vunpack.c.l.bf16 %v822
  %v855 = vunpack.c.l.bf16 %v823
  %v856 = vunpack.c.l.bf16 %v824
  %v857 = vunpack.c.l.bf16 %v825
  %v858 = vunpack.c.l.bf16 %v826
  %v859 = vunpack.c.l.bf16 %v827
  %v860 = vunpack.c.l.bf16 %v828
  %v861 = vunpack.c.l.bf16 %v829
  %v862 = vunpack.c.l.bf16 %v830
  %v863 = vunpack.c.l.bf16 %v831
  %v864 = vunpack.c.l.bf16 %v832
  %v865 = vunpack.c.l.bf16 %v833
  %v866 = vunpack.c.l.bf16 %v834
  %v867 = vunpack.c.l.bf16 %v835
  %v868 = vunpack.c.l.bf16 %v836
  %v869 = vunpack.c.l.bf16 %v837
  %v870 = vunpack.c.l.bf16 %v838
  %v871 = vunpack.c.l.bf16 %v839
  %v872 = vunpack.c.l.bf16 %v840
  %873 = vmatprep.subr.mxu0 0.0
  %874 = vmatpush1.msra.mxu0 %v841
  %875 = vmatprep.subr.mxu0 0.0
  %876 = vmatpush1.msra.mxu0 %v842
  %877 = vmatprep.subr.mxu0 0.0
  %878 = vmatpush1.msra.mxu0 %v843
  %879 = vmatprep.subr.mxu0 0.0
  %880 = vmatpush1.msra.mxu0 %v844
  %881 = vmatprep.subr.mxu0 0.0
  %882 = vmatpush1.msra.mxu0 %v845
  %883 = vmatprep.subr.mxu0 0.0
  %884 = vmatpush1.msra.mxu0 %v846
  %885 = vmatprep.subr.mxu0 0.0
  %886 = vmatpush1.msra.mxu0 %v847
  %887 = vmatprep.subr.mxu0 0.0
  %888 = vmatpush1.msra.mxu0 %v848
  %889 = vmatprep.subr.mxu0 0.0
  %890 = vmatpush1.msra.mxu0 %v849
  %891 = vmatprep.subr.mxu0 0.0
  %892 = vmatpush1.msra.mxu0 %v850
  %893 = vmatprep.subr.mxu0 0.0
  %894 = vmatpush1.msra.mxu0 %v851
  %895 = vmatprep.subr.mxu0 0.0
  %896 = vmatpush1.msra.mxu0 %v852
  %897 = vmatprep.subr.mxu0 0.0
  %898 = vmatpush1.msra.mxu0 %v853
  %899 = vmatprep.subr.mxu0 0.0
  %900 = vmatpush1.msra.mxu0 %v854
  %901 = vmatprep.subr.mxu0 0.0
  %902 = vmatpush1.msra.mxu0 %v855
  %903 = vmatprep.subr.mxu0 0.0
  %904 = vmatpush1.msra.mxu0 %v856
  %905 = vmatprep.subr.mxu0 0.0
  %906 = vmatpush1.msra.mxu0 %v857
  %907 = vmatprep.subr.mxu0 0.0
  %908 = vmatpush1.msra.mxu0 %v858
  %909 = vmatprep.subr.mxu0 0.0
  %910 = vmatpush1.msra.mxu0 %v859
  %911 = vmatprep.subr.mxu0 0.0
  %912 = vmatpush1.msra.mxu0 %v860
  %913 = vmatprep.subr.mxu0 0.0
  %914 = vmatpush1.msra.mxu0 %v861
  %915 = vmatprep.subr.mxu0 0.0
  %916 = vmatpush1.msra.mxu0 %v862
  %917 = vmatprep.subr.mxu0 0.0
  %918 = vmatpush1.msra.mxu0 %v863
  %919 = vmatprep.subr.mxu0 0.0
  %920 = vmatpush1.msra.mxu0 %v864
  %921 = vmatprep.subr.mxu0 0.0
  %922 = vmatpush1.msra.mxu0 %v865
  %923 = vmatprep.subr.mxu0 0.0
  %924 = vmatpush1.msra.mxu0 %v866
  %925 = vmatprep.subr.mxu0 0.0
  %926 = vmatpush1.msra.mxu0 %v867
  %927 = vmatprep.subr.mxu0 0.0
  %928 = vmatpush1.msra.mxu0 %v868
  %929 = vmatprep.subr.mxu0 0.0
  %930 = vmatpush1.msra.mxu0 %v869
  %931 = vmatprep.subr.mxu0 0.0
  %932 = vmatpush1.msra.mxu0 %v870
  %933 = vmatprep.subr.mxu0 0.0
  %934 = vmatpush1.msra.mxu0 %v871
  %935 = vmatprep.subr.mxu0 0.0
  %936 = vmatpush1.msra.mxu0 %v872
  %937 = vmatprep.mubr.f32.mxu0 %v195
  %938 = vmatmul.mubr.f32.gmra.mrb[0].mxu0 %v194
  %v939 = vpop.f32.mrb[0].mxu0
  %v940 = vadd.f32 0.0, %v939
  %v941 = vpop.f32.mrb[0].mxu0
  %942 = vdwg.mxu0
  %s943 = scalar_lea.vmem %s3, 768
  %v944 = vld [vmem:[%s943] sm:$0xf]
  %v945 = vld [vmem:[%s943 + $0x4] sm:$0xf]
  %v946 = vld [vmem:[%s943 + $0x8] sm:$0xf]
  %v947 = vld [vmem:[%s943 + $0xc] sm:$0xf]
  %v948 = vld [vmem:[%s943 + $0x10] sm:$0xf]
  %v949 = vld [vmem:[%s943 + $0x14] sm:$0xf]
  %v950 = vld [vmem:[%s943 + $0x18] sm:$0xf]
  %v951 = vld [vmem:[%s943 + $0x1c] sm:$0xf]
  %v952 = vld [vmem:[%s943 + $0x20] sm:$0xf]
  %v953 = vld [vmem:[%s943 + $0x24] sm:$0xf]
  %v954 = vld [vmem:[%s943 + $0x28] sm:$0xf]
  %v955 = vld [vmem:[%s943 + $0x2c] sm:$0xf]
  %v956 = vld [vmem:[%s943 + $0x30] sm:$0xf]
  %v957 = vld [vmem:[%s943 + $0x34] sm:$0xf]
  %v958 = vld [vmem:[%s943 + $0x38] sm:$0xf]
  %v959 = vld [vmem:[%s943 + $0x3c] sm:$0xf]
  %v960 = vld [vmem:[%s943 + $0x40] sm:$0xf]
  %v961 = vld [vmem:[%s943 + $0x44] sm:$0xf]
  %v962 = vld [vmem:[%s943 + $0x48] sm:$0xf]
  %v963 = vld [vmem:[%s943 + $0x4c] sm:$0xf]
  %v964 = vld [vmem:[%s943 + $0x50] sm:$0xf]
  %v965 = vld [vmem:[%s943 + $0x54] sm:$0xf]
  %v966 = vld [vmem:[%s943 + $0x58] sm:$0xf]
  %v967 = vld [vmem:[%s943 + $0x5c] sm:$0xf]
  %v968 = vld [vmem:[%s943 + $0x60] sm:$0xf]
  %v969 = vld [vmem:[%s943 + $0x64] sm:$0xf]
  %v970 = vld [vmem:[%s943 + $0x68] sm:$0xf]
  %v971 = vld [vmem:[%s943 + $0x6c] sm:$0xf]
  %v972 = vld [vmem:[%s943 + $0x70] sm:$0xf]
  %v973 = vld [vmem:[%s943 + $0x74] sm:$0xf]
  %v974 = vld [vmem:[%s943 + $0x78] sm:$0xf]
  %v975 = vld [vmem:[%s943 + $0x7c] sm:$0xf]
  %v976 = vunpack.c.l.bf16 %v944
  %v977 = vunpack.c.l.bf16 %v945
  %v978 = vunpack.c.l.bf16 %v946
  %v979 = vunpack.c.l.bf16 %v947
  %v980 = vunpack.c.l.bf16 %v948
  %v981 = vunpack.c.l.bf16 %v949
  %v982 = vunpack.c.l.bf16 %v950
  %v983 = vunpack.c.l.bf16 %v951
  %v984 = vunpack.c.l.bf16 %v952
  %v985 = vunpack.c.l.bf16 %v953
  %v986 = vunpack.c.l.bf16 %v954
  %v987 = vunpack.c.l.bf16 %v955
  %v988 = vunpack.c.l.bf16 %v956
  %v989 = vunpack.c.l.bf16 %v957
  %v990 = vunpack.c.l.bf16 %v958
  %v991 = vunpack.c.l.bf16 %v959
  %v992 = vunpack.c.l.bf16 %v960
  %v993 = vunpack.c.l.bf16 %v961
  %v994 = vunpack.c.l.bf16 %v962
  %v995 = vunpack.c.l.bf16 %v963
  %v996 = vunpack.c.l.bf16 %v964
  %v997 = vunpack.c.l.bf16 %v965
  %v998 = vunpack.c.l.bf16 %v966
  %v999 = vunpack.c.l.bf16 %v967
  %v1000 = vunpack.c.l.bf16 %v968
  %v1001 = vunpack.c.l.bf16 %v969
  %v1002 = vunpack.c.l.bf16 %v970
  %v1003 = vunpack.c.l.bf16 %v971
  %v1004 = vunpack.c.l.bf16 %v972
  %v1005 = vunpack.c.l.bf16 %v973
  %v1006 = vunpack.c.l.bf16 %v974
  %v1007 = vunpack.c.l.bf16 %v975
  %1008 = vmatprep.subr.mxu0 0.0
  %1009 = vmatpush1.msra.mxu0 %v976
  %1010 = vmatprep.subr.mxu0 0.0
  %1011 = vmatpush1.msra.mxu0 %v977
  %1012 = vmatprep.subr.mxu0 0.0
  %1013 = vmatpush1.msra.mxu0 %v978
  %1014 = vmatprep.subr.mxu0 0.0
  %1015 = vmatpush1.msra.mxu0 %v979
  %1016 = vmatprep.subr.mxu0 0.0
  %1017 = vmatpush1.msra.mxu0 %v980
  %1018 = vmatprep.subr.mxu0 0.0
  %1019 = vmatpush1.msra.mxu0 %v981
  %1020 = vmatprep.subr.mxu0 0.0
  %1021 = vmatpush1.msra.mxu0 %v982
  %1022 = vmatprep.subr.mxu0 0.0
  %1023 = vmatpush1.msra.mxu0 %v983
  %1024 = vmatprep.subr.mxu0 0.0
  %1025 = vmatpush1.msra.mxu0 %v984
  %1026 = vmatprep.subr.mxu0 0.0
  %1027 = vmatpush1.msra.mxu0 %v985
  %1028 = vmatprep.subr.mxu0 0.0
  %1029 = vmatpush1.msra.mxu0 %v986
  %1030 = vmatprep.subr.mxu0 0.0
  %1031 = vmatpush1.msra.mxu0 %v987
  %1032 = vmatprep.subr.mxu0 0.0
  %1033 = vmatpush1.msra.mxu0 %v988
  %1034 = vmatprep.subr.mxu0 0.0
  %1035 = vmatpush1.msra.mxu0 %v989
  %1036 = vmatprep.subr.mxu0 0.0
  %1037 = vmatpush1.msra.mxu0 %v990
  %1038 = vmatprep.subr.mxu0 0.0
  %1039 = vmatpush1.msra.mxu0 %v991
  %1040 = vmatprep.subr.mxu0 0.0
  %1041 = vmatpush1.msra.mxu0 %v992
  %1042 = vmatprep.subr.mxu0 0.0
  %1043 = vmatpush1.msra.mxu0 %v993
  %1044 = vmatprep.subr.mxu0 0.0
  %1045 = vmatpush1.msra.mxu0 %v994
  %1046 = vmatprep.subr.mxu0 0.0
  %1047 = vmatpush1.msra.mxu0 %v995
  %1048 = vmatprep.subr.mxu0 0.0
  %1049 = vmatpush1.msra.mxu0 %v996
  %1050 = vmatprep.subr.mxu0 0.0
  %1051 = vmatpush1.msra.mxu0 %v997
  %1052 = vmatprep.subr.mxu0 0.0
  %1053 = vmatpush1.msra.mxu0 %v998
  %1054 = vmatprep.subr.mxu0 0.0
  %1055 = vmatpush1.msra.mxu0 %v999
  %1056 = vmatprep.subr.mxu0 0.0
  %1057 = vmatpush1.msra.mxu0 %v1000
  %1058 = vmatprep.subr.mxu0 0.0
  %1059 = vmatpush1.msra.mxu0 %v1001
  %1060 = vmatprep.subr.mxu0 0.0
  %1061 = vmatpush1.msra.mxu0 %v1002
  %1062 = vmatprep.subr.mxu0 0.0
  %1063 = vmatpush1.msra.mxu0 %v1003
  %1064 = vmatprep.subr.mxu0 0.0
  %1065 = vmatpush1.msra.mxu0 %v1004
  %1066 = vmatprep.subr.mxu0 0.0
  %1067 = vmatpush1.msra.mxu0 %v1005
  %1068 = vmatprep.subr.mxu0 0.0
  %1069 = vmatpush1.msra.mxu0 %v1006
  %1070 = vmatprep.subr.mxu0 0.0
  %1071 = vmatpush1.msra.mxu0 %v1007
  %1072 = vmatprep.mubr.f32.mxu0 %v195
  %1073 = vmatmul.mubr.f32.gmra.mrb[0].mxu0 %v194
  %v1074 = vpop.f32.mrb[0].mxu0
  %v1075 = vadd.f32 0.0, %v1074
  %v1076 = vpop.f32.mrb[0].mxu0
  %1077 = vdwg.mxu0
  %s1078 = scalar_lea.vmem %s3, 896
  %v1079 = vld [vmem:[%s1078] sm:$0xf]
  %v1080 = vld [vmem:[%s1078 + $0x4] sm:$0xf]
  %v1081 = vld [vmem:[%s1078 + $0x8] sm:$0xf]
  %v1082 = vld [vmem:[%s1078 + $0xc] sm:$0xf]
  %v1083 = vld [vmem:[%s1078 + $0x10] sm:$0xf]
  %v1084 = vld [vmem:[%s1078 + $0x14] sm:$0xf]
  %v1085 = vld [vmem:[%s1078 + $0x18] sm:$0xf]
  %v1086 = vld [vmem:[%s1078 + $0x1c] sm:$0xf]
  %v1087 = vld [vmem:[%s1078 + $0x20] sm:$0xf]
  %v1088 = vld [vmem:[%s1078 + $0x24] sm:$0xf]
  %v1089 = vld [vmem:[%s1078 + $0x28] sm:$0xf]
  %v1090 = vld [vmem:[%s1078 + $0x2c] sm:$0xf]
  %v1091 = vld [vmem:[%s1078 + $0x30] sm:$0xf]
  %v1092 = vld [vmem:[%s1078 + $0x34] sm:$0xf]
  %v1093 = vld [vmem:[%s1078 + $0x38] sm:$0xf]
  %v1094 = vld [vmem:[%s1078 + $0x3c] sm:$0xf]
  %v1095 = vld [vmem:[%s1078 + $0x40] sm:$0xf]
  %v1096 = vld [vmem:[%s1078 + $0x44] sm:$0xf]
  %v1097 = vld [vmem:[%s1078 + $0x48] sm:$0xf]
  %v1098 = vld [vmem:[%s1078 + $0x4c] sm:$0xf]
  %v1099 = vld [vmem:[%s1078 + $0x50] sm:$0xf]
  %v1100 = vld [vmem:[%s1078 + $0x54] sm:$0xf]
  %v1101 = vld [vmem:[%s1078 + $0x58] sm:$0xf]
  %v1102 = vld [vmem:[%s1078 + $0x5c] sm:$0xf]
  %v1103 = vld [vmem:[%s1078 + $0x60] sm:$0xf]
  %v1104 = vld [vmem:[%s1078 + $0x64] sm:$0xf]
  %v1105 = vld [vmem:[%s1078 + $0x68] sm:$0xf]
  %v1106 = vld [vmem:[%s1078 + $0x6c] sm:$0xf]
  %v1107 = vld [vmem:[%s1078 + $0x70] sm:$0xf]
  %v1108 = vld [vmem:[%s1078 + $0x74] sm:$0xf]
  %v1109 = vld [vmem:[%s1078 + $0x78] sm:$0xf]
  %v1110 = vld [vmem:[%s1078 + $0x7c] sm:$0xf]
  %v1111 = vunpack.c.l.bf16 %v1079
  %v1112 = vunpack.c.l.bf16 %v1080
  %v1113 = vunpack.c.l.bf16 %v1081
  %v1114 = vunpack.c.l.bf16 %v1082
  %v1115 = vunpack.c.l.bf16 %v1083
  %v1116 = vunpack.c.l.bf16 %v1084
  %v1117 = vunpack.c.l.bf16 %v1085
  %v1118 = vunpack.c.l.bf16 %v1086
  %v1119 = vunpack.c.l.bf16 %v1087
  %v1120 = vunpack.c.l.bf16 %v1088
  %v1121 = vunpack.c.l.bf16 %v1089
  %v1122 = vunpack.c.l.bf16 %v1090
  %v1123 = vunpack.c.l.bf16 %v1091
  %v1124 = vunpack.c.l.bf16 %v1092
  %v1125 = vunpack.c.l.bf16 %v1093
  %v1126 = vunpack.c.l.bf16 %v1094
  %v1127 = vunpack.c.l.bf16 %v1095
  %v1128 = vunpack.c.l.bf16 %v1096
  %v1129 = vunpack.c.l.bf16 %v1097
  %v1130 = vunpack.c.l.bf16 %v1098
  %v1131 = vunpack.c.l.bf16 %v1099
  %v1132 = vunpack.c.l.bf16 %v1100
  %v1133 = vunpack.c.l.bf16 %v1101
  %v1134 = vunpack.c.l.bf16 %v1102
  %v1135 = vunpack.c.l.bf16 %v1103
  %v1136 = vunpack.c.l.bf16 %v1104
  %v1137 = vunpack.c.l.bf16 %v1105
  %v1138 = vunpack.c.l.bf16 %v1106
  %v1139 = vunpack.c.l.bf16 %v1107
  %v1140 = vunpack.c.l.bf16 %v1108
  %v1141 = vunpack.c.l.bf16 %v1109
  %v1142 = vunpack.c.l.bf16 %v1110
  %1143 = vmatprep.subr.mxu0 0.0
  %1144 = vmatpush1.msra.mxu0 %v1111
  %1145 = vmatprep.subr.mxu0 0.0
  %1146 = vmatpush1.msra.mxu0 %v1112
  %1147 = vmatprep.subr.mxu0 0.0
  %1148 = vmatpush1.msra.mxu0 %v1113
  %1149 = vmatprep.subr.mxu0 0.0
  %1150 = vmatpush1.msra.mxu0 %v1114
  %1151 = vmatprep.subr.mxu0 0.0
  %1152 = vmatpush1.msra.mxu0 %v1115
  %1153 = vmatprep.subr.mxu0 0.0
  %1154 = vmatpush1.msra.mxu0 %v1116
  %1155 = vmatprep.subr.mxu0 0.0
  %1156 = vmatpush1.msra.mxu0 %v1117
  %1157 = vmatprep.subr.mxu0 0.0
  %1158 = vmatpush1.msra.mxu0 %v1118
  %1159 = vmatprep.subr.mxu0 0.0
  %1160 = vmatpush1.msra.mxu0 %v1119
  %1161 = vmatprep.subr.mxu0 0.0
  %1162 = vmatpush1.msra.mxu0 %v1120
  %1163 = vmatprep.subr.mxu0 0.0
  %1164 = vmatpush1.msra.mxu0 %v1121
  %1165 = vmatprep.subr.mxu0 0.0
  %1166 = vmatpush1.msra.mxu0 %v1122
  %1167 = vmatprep.subr.mxu0 0.0
  %1168 = vmatpush1.msra.mxu0 %v1123
  %1169 = vmatprep.subr.mxu0 0.0
  %1170 = vmatpush1.msra.mxu0 %v1124
  %1171 = vmatprep.subr.mxu0 0.0
  %1172 = vmatpush1.msra.mxu0 %v1125
  %1173 = vmatprep.subr.mxu0 0.0
  %1174 = vmatpush1.msra.mxu0 %v1126
  %1175 = vmatprep.subr.mxu0 0.0
  %1176 = vmatpush1.msra.mxu0 %v1127
  %1177 = vmatprep.subr.mxu0 0.0
  %1178 = vmatpush1.msra.mxu0 %v1128
  %1179 = vmatprep.subr.mxu0 0.0
  %1180 = vmatpush1.msra.mxu0 %v1129
  %1181 = vmatprep.subr.mxu0 0.0
  %1182 = vmatpush1.msra.mxu0 %v1130
  %1183 = vmatprep.subr.mxu0 0.0
  %1184 = vmatpush1.msra.mxu0 %v1131
  %1185 = vmatprep.subr.mxu0 0.0
  %1186 = vmatpush1.msra.mxu0 %v1132
  %1187 = vmatprep.subr.mxu0 0.0
  %1188 = vmatpush1.msra.mxu0 %v1133
  %1189 = vmatprep.subr.mxu0 0.0
  %1190 = vmatpush1.msra.mxu0 %v1134
  %1191 = vmatprep.subr.mxu0 0.0
  %1192 = vmatpush1.msra.mxu0 %v1135
  %1193 = vmatprep.subr.mxu0 0.0
  %1194 = vmatpush1.msra.mxu0 %v1136
  %1195 = vmatprep.subr.mxu0 0.0
  %1196 = vmatpush1.msra.mxu0 %v1137
  %1197 = vmatprep.subr.mxu0 0.0
  %1198 = vmatpush1.msra.mxu0 %v1138
  %1199 = vmatprep.subr.mxu0 0.0
  %1200 = vmatpush1.msra.mxu0 %v1139
  %1201 = vmatprep.subr.mxu0 0.0
  %1202 = vmatpush1.msra.mxu0 %v1140
  %1203 = vmatprep.subr.mxu0 0.0
  %1204 = vmatpush1.msra.mxu0 %v1141
  %1205 = vmatprep.subr.mxu0 0.0
  %1206 = vmatpush1.msra.mxu0 %v1142
  %1207 = vmatprep.mubr.f32.mxu0 %v195
  %1208 = vmatmul.mubr.f32.gmra.mrb[0].mxu0 %v194
  %v1209 = vpop.f32.mrb[0].mxu0
  %v1210 = vadd.f32 0.0, %v1209
  %v1211 = vpop.f32.mrb[0].mxu0
  %1212 = vdwg.mxu0
  %s1213 = scalar_lea.vmem %s3, 1024
  %v1214 = vld [vmem:[%s1213] sm:$0xf]
  %v1215 = vld [vmem:[%s1213 + $0x4] sm:$0xf]
  %v1216 = vld [vmem:[%s1213 + $0x8] sm:$0xf]
  %v1217 = vld [vmem:[%s1213 + $0xc] sm:$0xf]
  %v1218 = vld [vmem:[%s1213 + $0x10] sm:$0xf]
  %v1219 = vld [vmem:[%s1213 + $0x14] sm:$0xf]
  %v1220 = vld [vmem:[%s1213 + $0x18] sm:$0xf]
  %v1221 = vld [vmem:[%s1213 + $0x1c] sm:$0xf]
  %v1222 = vld [vmem:[%s1213 + $0x20] sm:$0xf]
  %v1223 = vld [vmem:[%s1213 + $0x24] sm:$0xf]
  %v1224 = vld [vmem:[%s1213 + $0x28] sm:$0xf]
  %v1225 = vld [vmem:[%s1213 + $0x2c] sm:$0xf]
  %v1226 = vld [vmem:[%s1213 + $0x30] sm:$0xf]
  %v1227 = vld [vmem:[%s1213 + $0x34] sm:$0xf]
  %v1228 = vld [vmem:[%s1213 + $0x38] sm:$0xf]
  %v1229 = vld [vmem:[%s1213 + $0x3c] sm:$0xf]
  %v1230 = vld [vmem:[%s1213 + $0x40] sm:$0xf]
  %v1231 = vld [vmem:[%s1213 + $0x44] sm:$0xf]
  %v1232 = vld [vmem:[%s1213 + $0x48] sm:$0xf]
  %v1233 = vld [vmem:[%s1213 + $0x4c] sm:$0xf]
  %v1234 = vld [vmem:[%s1213 + $0x50] sm:$0xf]
  %v1235 = vld [vmem:[%s1213 + $0x54] sm:$0xf]
  %v1236 = vld [vmem:[%s1213 + $0x58] sm:$0xf]
  %v1237 = vld [vmem:[%s1213 + $0x5c] sm:$0xf]
  %v1238 = vld [vmem:[%s1213 + $0x60] sm:$0xf]
  %v1239 = vld [vmem:[%s1213 + $0x64] sm:$0xf]
  %v1240 = vld [vmem:[%s1213 + $0x68] sm:$0xf]
  %v1241 = vld [vmem:[%s1213 + $0x6c] sm:$0xf]
  %v1242 = vld [vmem:[%s1213 + $0x70] sm:$0xf]
  %v1243 = vld [vmem:[%s1213 + $0x74] sm:$0xf]
  %v1244 = vld [vmem:[%s1213 + $0x78] sm:$0xf]
  %v1245 = vld [vmem:[%s1213 + $0x7c] sm:$0xf]
  %v1246 = vunpack.c.l.bf16 %v1214
  %v1247 = vunpack.c.l.bf16 %v1215
  %v1248 = vunpack.c.l.bf16 %v1216
  %v1249 = vunpack.c.l.bf16 %v1217
  %v1250 = vunpack.c.l.bf16 %v1218
  %v1251 = vunpack.c.l.bf16 %v1219
  %v1252 = vunpack.c.l.bf16 %v1220
  %v1253 = vunpack.c.l.bf16 %v1221
  %v1254 = vunpack.c.l.bf16 %v1222
  %v1255 = vunpack.c.l.bf16 %v1223
  %v1256 = vunpack.c.l.bf16 %v1224
  %v1257 = vunpack.c.l.bf16 %v1225
  %v1258 = vunpack.c.l.bf16 %v1226
  %v1259 = vunpack.c.l.bf16 %v1227
  %v1260 = vunpack.c.l.bf16 %v1228
  %v1261 = vunpack.c.l.bf16 %v1229
  %v1262 = vunpack.c.l.bf16 %v1230
  %v1263 = vunpack.c.l.bf16 %v1231
  %v1264 = vunpack.c.l.bf16 %v1232
  %v1265 = vunpack.c.l.bf16 %v1233
  %v1266 = vunpack.c.l.bf16 %v1234
  %v1267 = vunpack.c.l.bf16 %v1235
  %v1268 = vunpack.c.l.bf16 %v1236
  %v1269 = vunpack.c.l.bf16 %v1237
  %v1270 = vunpack.c.l.bf16 %v1238
  %v1271 = vunpack.c.l.bf16 %v1239
  %v1272 = vunpack.c.l.bf16 %v1240
  %v1273 = vunpack.c.l.bf16 %v1241
  %v1274 = vunpack.c.l.bf16 %v1242
  %v1275 = vunpack.c.l.bf16 %v1243
  %v1276 = vunpack.c.l.bf16 %v1244
  %v1277 = vunpack.c.l.bf16 %v1245
  %1278 = vmatprep.subr.mxu0 0.0
  %1279 = vmatpush1.msra.mxu0 %v1246
  %1280 = vmatprep.subr.mxu0 0.0
  %1281 = vmatpush1.msra.mxu0 %v1247
  %1282 = vmatprep.subr.mxu0 0.0
  %1283 = vmatpush1.msra.mxu0 %v1248
  %1284 = vmatprep.subr.mxu0 0.0
  %1285 = vmatpush1.msra.mxu0 %v1249
  %1286 = vmatprep.subr.mxu0 0.0
  %1287 = vmatpush1.msra.mxu0 %v1250
  %1288 = vmatprep.subr.mxu0 0.0
  %1289 = vmatpush1.msra.mxu0 %v1251
  %1290 = vmatprep.subr.mxu0 0.0
  %1291 = vmatpush1.msra.mxu0 %v1252
  %1292 = vmatprep.subr.mxu0 0.0
  %1293 = vmatpush1.msra.mxu0 %v1253
  %1294 = vmatprep.subr.mxu0 0.0
  %1295 = vmatpush1.msra.mxu0 %v1254
  %1296 = vmatprep.subr.mxu0 0.0
  %1297 = vmatpush1.msra.mxu0 %v1255
  %1298 = vmatprep.subr.mxu0 0.0
  %1299 = vmatpush1.msra.mxu0 %v1256
  %1300 = vmatprep.subr.mxu0 0.0
  %1301 = vmatpush1.msra.mxu0 %v1257
  %1302 = vmatprep.subr.mxu0 0.0
  %1303 = vmatpush1.msra.mxu0 %v1258
  %1304 = vmatprep.subr.mxu0 0.0
  %1305 = vmatpush1.msra.mxu0 %v1259
  %1306 = vmatprep.subr.mxu0 0.0
  %1307 = vmatpush1.msra.mxu0 %v1260
  %1308 = vmatprep.subr.mxu0 0.0
  %1309 = vmatpush1.msra.mxu0 %v1261
  %1310 = vmatprep.subr.mxu0 0.0
  %1311 = vmatpush1.msra.mxu0 %v1262
  %1312 = vmatprep.subr.mxu0 0.0
  %1313 = vmatpush1.msra.mxu0 %v1263
  %1314 = vmatprep.subr.mxu0 0.0
  %1315 = vmatpush1.msra.mxu0 %v1264
  %1316 = vmatprep.subr.mxu0 0.0
  %1317 = vmatpush1.msra.mxu0 %v1265
  %1318 = vmatprep.subr.mxu0 0.0
  %1319 = vmatpush1.msra.mxu0 %v1266
  %1320 = vmatprep.subr.mxu0 0.0
  %1321 = vmatpush1.msra.mxu0 %v1267
  %1322 = vmatprep.subr.mxu0 0.0
  %1323 = vmatpush1.msra.mxu0 %v1268
  %1324 = vmatprep.subr.mxu0 0.0
  %1325 = vmatpush1.msra.mxu0 %v1269
  %1326 = vmatprep.subr.mxu0 0.0
  %1327 = vmatpush1.msra.mxu0 %v1270
  %1328 = vmatprep.subr.mxu0 0.0
  %1329 = vmatpush1.msra.mxu0 %v1271
  %1330 = vmatprep.subr.mxu0 0.0
  %1331 = vmatpush1.msra.mxu0 %v1272
  %1332 = vmatprep.subr.mxu0 0.0
  %1333 = vmatpush1.msra.mxu0 %v1273
  %1334 = vmatprep.subr.mxu0 0.0
  %1335 = vmatpush1.msra.mxu0 %v1274
  %1336 = vmatprep.subr.mxu0 0.0
  %1337 = vmatpush1.msra.mxu0 %v1275
  %1338 = vmatprep.subr.mxu0 0.0
  %1339 = vmatpush1.msra.mxu0 %v1276
  %1340 = vmatprep.subr.mxu0 0.0
  %1341 = vmatpush1.msra.mxu0 %v1277
  %1342 = vmatprep.mubr.f32.mxu0 %v195
  %1343 = vmatmul.mubr.f32.gmra.mrb[0].mxu0 %v194
  %v1344 = vpop.f32.mrb[0].mxu0
  %v1345 = vadd.f32 0.0, %v1344
  %v1346 = vpop.f32.mrb[0].mxu0
  %1347 = vdwg.mxu0
  %s1348 = scalar_lea.vmem %s3, 1152
  %v1349 = vld [vmem:[%s1348] sm:$0xf]
  %v1350 = vld [vmem:[%s1348 + $0x4] sm:$0xf]
  %v1351 = vld [vmem:[%s1348 + $0x8] sm:$0xf]
  %v1352 = vld [vmem:[%s1348 + $0xc] sm:$0xf]
  %v1353 = vld [vmem:[%s1348 + $0x10] sm:$0xf]
  %v1354 = vld [vmem:[%s1348 + $0x14] sm:$0xf]
  %v1355 = vld [vmem:[%s1348 + $0x18] sm:$0xf]
  %v1356 = vld [vmem:[%s1348 + $0x1c] sm:$0xf]
  %v1357 = vld [vmem:[%s1348 + $0x20] sm:$0xf]
  %v1358 = vld [vmem:[%s1348 + $0x24] sm:$0xf]
  %v1359 = vld [vmem:[%s1348 + $0x28] sm:$0xf]
  %v1360 = vld [vmem:[%s1348 + $0x2c] sm:$0xf]
  %v1361 = vld [vmem:[%s1348 + $0x30] sm:$0xf]
  %v1362 = vld [vmem:[%s1348 + $0x34] sm:$0xf]
  %v1363 = vld [vmem:[%s1348 + $0x38] sm:$0xf]
  %v1364 = vld [vmem:[%s1348 + $0x3c] sm:$0xf]
  %v1365 = vld [vmem:[%s1348 + $0x40] sm:$0xf]
  %v1366 = vld [vmem:[%s1348 + $0x44] sm:$0xf]
  %v1367 = vld [vmem:[%s1348 + $0x48] sm:$0xf]
  %v1368 = vld [vmem:[%s1348 + $0x4c] sm:$0xf]
  %v1369 = vld [vmem:[%s1348 + $0x50] sm:$0xf]
  %v1370 = vld [vmem:[%s1348 + $0x54] sm:$0xf]
  %v1371 = vld [vmem:[%s1348 + $0x58] sm:$0xf]
  %v1372 = vld [vmem:[%s1348 + $0x5c] sm:$0xf]
  %v1373 = vld [vmem:[%s1348 + $0x60] sm:$0xf]
  %v1374 = vld [vmem:[%s1348 + $0x64] sm:$0xf]
  %v1375 = vld [vmem:[%s1348 + $0x68] sm:$0xf]
  %v1376 = vld [vmem:[%s1348 + $0x6c] sm:$0xf]
  %v1377 = vld [vmem:[%s1348 + $0x70] sm:$0xf]
  %v1378 = vld [vmem:[%s1348 + $0x74] sm:$0xf]
  %v1379 = vld [vmem:[%s1348 + $0x78] sm:$0xf]
  %v1380 = vld [vmem:[%s1348 + $0x7c] sm:$0xf]
  %v1381 = vunpack.c.l.bf16 %v1349
  %v1382 = vunpack.c.l.bf16 %v1350
  %v1383 = vunpack.c.l.bf16 %v1351
  %v1384 = vunpack.c.l.bf16 %v1352
  %v1385 = vunpack.c.l.bf16 %v1353
  %v1386 = vunpack.c.l.bf16 %v1354
  %v1387 = vunpack.c.l.bf16 %v1355
  %v1388 = vunpack.c.l.bf16 %v1356
  %v1389 = vunpack.c.l.bf16 %v1357
  %v1390 = vunpack.c.l.bf16 %v1358
  %v1391 = vunpack.c.l.bf16 %v1359
  %v1392 = vunpack.c.l.bf16 %v1360
  %v1393 = vunpack.c.l.bf16 %v1361
  %v1394 = vunpack.c.l.bf16 %v1362
  %v1395 = vunpack.c.l.bf16 %v1363
  %v1396 = vunpack.c.l.bf16 %v1364
  %v1397 = vunpack.c.l.bf16 %v1365
  %v1398 = vunpack.c.l.bf16 %v1366
  %v1399 = vunpack.c.l.bf16 %v1367
  %v1400 = vunpack.c.l.bf16 %v1368
  %v1401 = vunpack.c.l.bf16 %v1369
  %v1402 = vunpack.c.l.bf16 %v1370
  %v1403 = vunpack.c.l.bf16 %v1371
  %v1404 = vunpack.c.l.bf16 %v1372
  %v1405 = vunpack.c.l.bf16 %v1373
  %v1406 = vunpack.c.l.bf16 %v1374
  %v1407 = vunpack.c.l.bf16 %v1375
  %v1408 = vunpack.c.l.bf16 %v1376
  %v1409 = vunpack.c.l.bf16 %v1377
  %v1410 = vunpack.c.l.bf16 %v1378
  %v1411 = vunpack.c.l.bf16 %v1379
  %v1412 = vunpack.c.l.bf16 %v1380
  %1413 = vmatprep.subr.mxu0 0.0
  %1414 = vmatpush1.msra.mxu0 %v1381
  %1415 = vmatprep.subr.mxu0 0.0
  %1416 = vmatpush1.msra.mxu0 %v1382
  %1417 = vmatprep.subr.mxu0 0.0
  %1418 = vmatpush1.msra.mxu0 %v1383
  %1419 = vmatprep.subr.mxu0 0.0
  %1420 = vmatpush1.msra.mxu0 %v1384
  %1421 = vmatprep.subr.mxu0 0.0
  %1422 = vmatpush1.msra.mxu0 %v1385
  %1423 = vmatprep.subr.mxu0 0.0
  %1424 = vmatpush1.msra.mxu0 %v1386
  %1425 = vmatprep.subr.mxu0 0.0
  %1426 = vmatpush1.msra.mxu0 %v1387
  %1427 = vmatprep.subr.mxu0 0.0
  %1428 = vmatpush1.msra.mxu0 %v1388
  %1429 = vmatprep.subr.mxu0 0.0
  %1430 = vmatpush1.msra.mxu0 %v1389
  %1431 = vmatprep.subr.mxu0 0.0
  %1432 = vmatpush1.msra.mxu0 %v1390
  %1433 = vmatprep.subr.mxu0 0.0
  %1434 = vmatpush1.msra.mxu0 %v1391
  %1435 = vmatprep.subr.mxu0 0.0
  %1436 = vmatpush1.msra.mxu0 %v1392
  %1437 = vmatprep.subr.mxu0 0.0
  %1438 = vmatpush1.msra.mxu0 %v1393
  %1439 = vmatprep.subr.mxu0 0.0
  %1440 = vmatpush1.msra.mxu0 %v1394
  %1441 = vmatprep.subr.mxu0 0.0
  %1442 = vmatpush1.msra.mxu0 %v1395
  %1443 = vmatprep.subr.mxu0 0.0
  %1444 = vmatpush1.msra.mxu0 %v1396
  %1445 = vmatprep.subr.mxu0 0.0
  %1446 = vmatpush1.msra.mxu0 %v1397
  %1447 = vmatprep.subr.mxu0 0.0
  %1448 = vmatpush1.msra.mxu0 %v1398
  %1449 = vmatprep.subr.mxu0 0.0
  %1450 = vmatpush1.msra.mxu0 %v1399
  %1451 = vmatprep.subr.mxu0 0.0
  %1452 = vmatpush1.msra.mxu0 %v1400
  %1453 = vmatprep.subr.mxu0 0.0
  %1454 = vmatpush1.msra.mxu0 %v1401
  %1455 = vmatprep.subr.mxu0 0.0
  %1456 = vmatpush1.msra.mxu0 %v1402
  %1457 = vmatprep.subr.mxu0 0.0
  %1458 = vmatpush1.msra.mxu0 %v1403
  %1459 = vmatprep.subr.mxu0 0.0
  %1460 = vmatpush1.msra.mxu0 %v1404
  %1461 = vmatprep.subr.mxu0 0.0
  %1462 = vmatpush1.msra.mxu0 %v1405
  %1463 = vmatprep.subr.mxu0 0.0
  %1464 = vmatpush1.msra.mxu0 %v1406
  %1465 = vmatprep.subr.mxu0 0.0
  %1466 = vmatpush1.msra.mxu0 %v1407
  %1467 = vmatprep.subr.mxu0 0.0
  %1468 = vmatpush1.msra.mxu0 %v1408
  %1469 = vmatprep.subr.mxu0 0.0
  %1470 = vmatpush1.msra.mxu0 %v1409
  %1471 = vmatprep.subr.mxu0 0.0
  %1472 = vmatpush1.msra.mxu0 %v1410
  %1473 = vmatprep.subr.mxu0 0.0
  %1474 = vmatpush1.msra.mxu0 %v1411
  %1475 = vmatprep.subr.mxu0 0.0
  %1476 = vmatpush1.msra.mxu0 %v1412
  %1477 = vmatprep.mubr.f32.mxu0 %v195
  %1478 = vmatmul.mubr.f32.gmra.mrb[0].mxu0 %v194
  %v1479 = vpop.f32.mrb[0].mxu0
  %v1480 = vadd.f32 0.0, %v1479
  %v1481 = vpop.f32.mrb[0].mxu0
  %1482 = vdwg.mxu0
  %s1483 = scalar_lea.vmem %s3, 1280
  %v1484 = vld [vmem:[%s1483] sm:$0xf]
  %v1485 = vld [vmem:[%s1483 + $0x4] sm:$0xf]
  %v1486 = vld [vmem:[%s1483 + $0x8] sm:$0xf]
  %v1487 = vld [vmem:[%s1483 + $0xc] sm:$0xf]
  %v1488 = vld [vmem:[%s1483 + $0x10] sm:$0xf]
  %v1489 = vld [vmem:[%s1483 + $0x14] sm:$0xf]
  %v1490 = vld [vmem:[%s1483 + $0x18] sm:$0xf]
  %v1491 = vld [vmem:[%s1483 + $0x1c] sm:$0xf]
  %v1492 = vld [vmem:[%s1483 + $0x20] sm:$0xf]
  %v1493 = vld [vmem:[%s1483 + $0x24] sm:$0xf]
  %v1494 = vld [vmem:[%s1483 + $0x28] sm:$0xf]
  %v1495 = vld [vmem:[%s1483 + $0x2c] sm:$0xf]
  %v1496 = vld [vmem:[%s1483 + $0x30] sm:$0xf]
  %v1497 = vld [vmem:[%s1483 + $0x34] sm:$0xf]
  %v1498 = vld [vmem:[%s1483 + $0x38] sm:$0xf]
  %v1499 = vld [vmem:[%s1483 + $0x3c] sm:$0xf]
  %v1500 = vld [vmem:[%s1483 + $0x40] sm:$0xf]
  %v1501 = vld [vmem:[%s1483 + $0x44] sm:$0xf]
  %v1502 = vld [vmem:[%s1483 + $0x48] sm:$0xf]
  %v1503 = vld [vmem:[%s1483 + $0x4c] sm:$0xf]
  %v1504 = vld [vmem:[%s1483 + $0x50] sm:$0xf]
  %v1505 = vld [vmem:[%s1483 + $0x54] sm:$0xf]
  %v1506 = vld [vmem:[%s1483 + $0x58] sm:$0xf]
  %v1507 = vld [vmem:[%s1483 + $0x5c] sm:$0xf]
  %v1508 = vld [vmem:[%s1483 + $0x60] sm:$0xf]
  %v1509 = vld [vmem:[%s1483 + $0x64] sm:$0xf]
  %v1510 = vld [vmem:[%s1483 + $0x68] sm:$0xf]
  %v1511 = vld [vmem:[%s1483 + $0x6c] sm:$0xf]
  %v1512 = vld [vmem:[%s1483 + $0x70] sm:$0xf]
  %v1513 = vld [vmem:[%s1483 + $0x74] sm:$0xf]
  %v1514 = vld [vmem:[%s1483 + $0x78] sm:$0xf]
  %v1515 = vld [vmem:[%s1483 + $0x7c] sm:$0xf]
  %v1516 = vunpack.c.l.bf16 %v1484
  %v1517 = vunpack.c.l.bf16 %v1485
  %v1518 = vunpack.c.l.bf16 %v1486
  %v1519 = vunpack.c.l.bf16 %v1487
  %v1520 = vunpack.c.l.bf16 %v1488
  %v1521 = vunpack.c.l.bf16 %v1489
  %v1522 = vunpack.c.l.bf16 %v1490
  %v1523 = vunpack.c.l.bf16 %v1491
  %v1524 = vunpack.c.l.bf16 %v1492
  %v1525 = vunpack.c.l.bf16 %v1493
  %v1526 = vunpack.c.l.bf16 %v1494
  %v1527 = vunpack.c.l.bf16 %v1495
  %v1528 = vunpack.c.l.bf16 %v1496
  %v1529 = vunpack.c.l.bf16 %v1497
  %v1530 = vunpack.c.l.bf16 %v1498
  %v1531 = vunpack.c.l.bf16 %v1499
  %v1532 = vunpack.c.l.bf16 %v1500
  %v1533 = vunpack.c.l.bf16 %v1501
  %v1534 = vunpack.c.l.bf16 %v1502
  %v1535 = vunpack.c.l.bf16 %v1503
  %v1536 = vunpack.c.l.bf16 %v1504
  %v1537 = vunpack.c.l.bf16 %v1505
  %v1538 = vunpack.c.l.bf16 %v1506
  %v1539 = vunpack.c.l.bf16 %v1507
  %v1540 = vunpack.c.l.bf16 %v1508
  %v1541 = vunpack.c.l.bf16 %v1509
  %v1542 = vunpack.c.l.bf16 %v1510
  %v1543 = vunpack.c.l.bf16 %v1511
  %v1544 = vunpack.c.l.bf16 %v1512
  %v1545 = vunpack.c.l.bf16 %v1513
  %v1546 = vunpack.c.l.bf16 %v1514
  %v1547 = vunpack.c.l.bf16 %v1515
  %1548 = vmatprep.subr.mxu0 0.0
  %1549 = vmatpush1.msra.mxu0 %v1516
  %1550 = vmatprep.subr.mxu0 0.0
  %1551 = vmatpush1.msra.mxu0 %v1517
  %1552 = vmatprep.subr.mxu0 0.0
  %1553 = vmatpush1.msra.mxu0 %v1518
  %1554 = vmatprep.subr.mxu0 0.0
  %1555 = vmatpush1.msra.mxu0 %v1519
  %1556 = vmatprep.subr.mxu0 0.0
  %1557 = vmatpush1.msra.mxu0 %v1520
  %1558 = vmatprep.subr.mxu0 0.0
  %1559 = vmatpush1.msra.mxu0 %v1521
  %1560 = vmatprep.subr.mxu0 0.0
  %1561 = vmatpush1.msra.mxu0 %v1522
  %1562 = vmatprep.subr.mxu0 0.0
  %1563 = vmatpush1.msra.mxu0 %v1523
  %1564 = vmatprep.subr.mxu0 0.0
  %1565 = vmatpush1.msra.mxu0 %v1524
  %1566 = vmatprep.subr.mxu0 0.0
  %1567 = vmatpush1.msra.mxu0 %v1525
  %1568 = vmatprep.subr.mxu0 0.0
  %1569 = vmatpush1.msra.mxu0 %v1526
  %1570 = vmatprep.subr.mxu0 0.0
  %1571 = vmatpush1.msra.mxu0 %v1527
  %1572 = vmatprep.subr.mxu0 0.0
  %1573 = vmatpush1.msra.mxu0 %v1528
  %1574 = vmatprep.subr.mxu0 0.0
  %1575 = vmatpush1.msra.mxu0 %v1529
  %1576 = vmatprep.subr.mxu0 0.0
  %1577 = vmatpush1.msra.mxu0 %v1530
  %1578 = vmatprep.subr.mxu0 0.0
  %1579 = vmatpush1.msra.mxu0 %v1531
  %1580 = vmatprep.subr.mxu0 0.0
  %1581 = vmatpush1.msra.mxu0 %v1532
  %1582 = vmatprep.subr.mxu0 0.0
  %1583 = vmatpush1.msra.mxu0 %v1533
  %1584 = vmatprep.subr.mxu0 0.0
  %1585 = vmatpush1.msra.mxu0 %v1534
  %1586 = vmatprep.subr.mxu0 0.0
  %1587 = vmatpush1.msra.mxu0 %v1535
  %1588 = vmatprep.subr.mxu0 0.0
  %1589 = vmatpush1.msra.mxu0 %v1536
  %1590 = vmatprep.subr.mxu0 0.0
  %1591 = vmatpush1.msra.mxu0 %v1537
  %1592 = vmatprep.subr.mxu0 0.0
  %1593 = vmatpush1.msra.mxu0 %v1538
  %1594 = vmatprep.subr.mxu0 0.0
  %1595 = vmatpush1.msra.mxu0 %v1539
  %1596 = vmatprep.subr.mxu0 0.0
  %1597 = vmatpush1.msra.mxu0 %v1540
  %1598 = vmatprep.subr.mxu0 0.0
  %1599 = vmatpush1.msra.mxu0 %v1541
  %1600 = vmatprep.subr.mxu0 0.0
  %1601 = vmatpush1.msra.mxu0 %v1542
  %1602 = vmatprep.subr.mxu0 0.0
  %1603 = vmatpush1.msra.mxu0 %v1543
  %1604 = vmatprep.subr.mxu0 0.0
  %1605 = vmatpush1.msra.mxu0 %v1544
  %1606 = vmatprep.subr.mxu0 0.0
  %1607 = vmatpush1.msra.mxu0 %v1545
  %1608 = vmatprep.subr.mxu0 0.0
  %1609 = vmatpush1.msra.mxu0 %v1546
  %1610 = vmatprep.subr.mxu0 0.0
  %1611 = vmatpush1.msra.mxu0 %v1547
  %1612 = vmatprep.mubr.f32.mxu0 %v195
  %1613 = vmatmul.mubr.f32.gmra.mrb[0].mxu0 %v194
  %v1614 = vpop.f32.mrb[0].mxu0
  %v1615 = vadd.f32 0.0, %v1614
  %v1616 = vpop.f32.mrb[0].mxu0
  %1617 = vdwg.mxu0
  %s1618 = scalar_lea.vmem %s3, 1408
  %v1619 = vld [vmem:[%s1618] sm:$0xf]
  %v1620 = vld [vmem:[%s1618 + $0x4] sm:$0xf]
  %v1621 = vld [vmem:[%s1618 + $0x8] sm:$0xf]
  %v1622 = vld [vmem:[%s1618 + $0xc] sm:$0xf]
  %v1623 = vld [vmem:[%s1618 + $0x10] sm:$0xf]
  %v1624 = vld [vmem:[%s1618 + $0x14] sm:$0xf]
  %v1625 = vld [vmem:[%s1618 + $0x18] sm:$0xf]
  %v1626 = vld [vmem:[%s1618 + $0x1c] sm:$0xf]
  %v1627 = vld [vmem:[%s1618 + $0x20] sm:$0xf]
  %v1628 = vld [vmem:[%s1618 + $0x24] sm:$0xf]
  %v1629 = vld [vmem:[%s1618 + $0x28] sm:$0xf]
  %v1630 = vld [vmem:[%s1618 + $0x2c] sm:$0xf]
  %v1631 = vld [vmem:[%s1618 + $0x30] sm:$0xf]
  %v1632 = vld [vmem:[%s1618 + $0x34] sm:$0xf]
  %v1633 = vld [vmem:[%s1618 + $0x38] sm:$0xf]
  %v1634 = vld [vmem:[%s1618 + $0x3c] sm:$0xf]
  %v1635 = vld [vmem:[%s1618 + $0x40] sm:$0xf]
  %v1636 = vld [vmem:[%s1618 + $0x44] sm:$0xf]
  %v1637 = vld [vmem:[%s1618 + $0x48] sm:$0xf]
  %v1638 = vld [vmem:[%s1618 + $0x4c] sm:$0xf]
  %v1639 = vld [vmem:[%s1618 + $0x50] sm:$0xf]
  %v1640 = vld [vmem:[%s1618 + $0x54] sm:$0xf]
  %v1641 = vld [vmem:[%s1618 + $0x58] sm:$0xf]
  %v1642 = vld [vmem:[%s1618 + $0x5c] sm:$0xf]
  %v1643 = vld [vmem:[%s1618 + $0x60] sm:$0xf]
  %v1644 = vld [vmem:[%s1618 + $0x64] sm:$0xf]
  %v1645 = vld [vmem:[%s1618 + $0x68] sm:$0xf]
  %v1646 = vld [vmem:[%s1618 + $0x6c] sm:$0xf]
  %v1647 = vld [vmem:[%s1618 + $0x70] sm:$0xf]
  %v1648 = vld [vmem:[%s1618 + $0x74] sm:$0xf]
  %v1649 = vld [vmem:[%s1618 + $0x78] sm:$0xf]
  %v1650 = vld [vmem:[%s1618 + $0x7c] sm:$0xf]
  %v1651 = vunpack.c.l.bf16 %v1619
  %v1652 = vunpack.c.l.bf16 %v1620
  %v1653 = vunpack.c.l.bf16 %v1621
  %v1654 = vunpack.c.l.bf16 %v1622
  %v1655 = vunpack.c.l.bf16 %v1623
  %v1656 = vunpack.c.l.bf16 %v1624
  %v1657 = vunpack.c.l.bf16 %v1625
  %v1658 = vunpack.c.l.bf16 %v1626
  %v1659 = vunpack.c.l.bf16 %v1627
  %v1660 = vunpack.c.l.bf16 %v1628
  %v1661 = vunpack.c.l.bf16 %v1629
  %v1662 = vunpack.c.l.bf16 %v1630
  %v1663 = vunpack.c.l.bf16 %v1631
  %v1664 = vunpack.c.l.bf16 %v1632
  %v1665 = vunpack.c.l.bf16 %v1633
  %v1666 = vunpack.c.l.bf16 %v1634
  %v1667 = vunpack.c.l.bf16 %v1635
  %v1668 = vunpack.c.l.bf16 %v1636
  %v1669 = vunpack.c.l.bf16 %v1637
  %v1670 = vunpack.c.l.bf16 %v1638
  %v1671 = vunpack.c.l.bf16 %v1639
  %v1672 = vunpack.c.l.bf16 %v1640
  %v1673 = vunpack.c.l.bf16 %v1641
  %v1674 = vunpack.c.l.bf16 %v1642
  %v1675 = vunpack.c.l.bf16 %v1643
  %v1676 = vunpack.c.l.bf16 %v1644
  %v1677 = vunpack.c.l.bf16 %v1645
  %v1678 = vunpack.c.l.bf16 %v1646
  %v1679 = vunpack.c.l.bf16 %v1647
  %v1680 = vunpack.c.l.bf16 %v1648
  %v1681 = vunpack.c.l.bf16 %v1649
  %v1682 = vunpack.c.l.bf16 %v1650
  %1683 = vmatprep.subr.mxu0 0.0
  %1684 = vmatpush1.msra.mxu0 %v1651
  %1685 = vmatprep.subr.mxu0 0.0
  %1686 = vmatpush1.msra.mxu0 %v1652
  %1687 = vmatprep.subr.mxu0 0.0
  %1688 = vmatpush1.msra.mxu0 %v1653
  %1689 = vmatprep.subr.mxu0 0.0
  %1690 = vmatpush1.msra.mxu0 %v1654
  %1691 = vmatprep.subr.mxu0 0.0
  %1692 = vmatpush1.msra.mxu0 %v1655
  %1693 = vmatprep.subr.mxu0 0.0
  %1694 = vmatpush1.msra.mxu0 %v1656
  %1695 = vmatprep.subr.mxu0 0.0
  %1696 = vmatpush1.msra.mxu0 %v1657
  %1697 = vmatprep.subr.mxu0 0.0
  %1698 = vmatpush1.msra.mxu0 %v1658
  %1699 = vmatprep.subr.mxu0 0.0
  %1700 = vmatpush1.msra.mxu0 %v1659
  %1701 = vmatprep.subr.mxu0 0.0
  %1702 = vmatpush1.msra.mxu0 %v1660
  %1703 = vmatprep.subr.mxu0 0.0
  %1704 = vmatpush1.msra.mxu0 %v1661
  %1705 = vmatprep.subr.mxu0 0.0
  %1706 = vmatpush1.msra.mxu0 %v1662
  %1707 = vmatprep.subr.mxu0 0.0
  %1708 = vmatpush1.msra.mxu0 %v1663
  %1709 = vmatprep.subr.mxu0 0.0
  %1710 = vmatpush1.msra.mxu0 %v1664
  %1711 = vmatprep.subr.mxu0 0.0
  %1712 = vmatpush1.msra.mxu0 %v1665
  %1713 = vmatprep.subr.mxu0 0.0
  %1714 = vmatpush1.msra.mxu0 %v1666
  %1715 = vmatprep.subr.mxu0 0.0
  %1716 = vmatpush1.msra.mxu0 %v1667
  %1717 = vmatprep.subr.mxu0 0.0
  %1718 = vmatpush1.msra.mxu0 %v1668
  %1719 = vmatprep.subr.mxu0 0.0
  %1720 = vmatpush1.msra.mxu0 %v1669
  %1721 = vmatprep.subr.mxu0 0.0
  %1722 = vmatpush1.msra.mxu0 %v1670
  %1723 = vmatprep.subr.mxu0 0.0
  %1724 = vmatpush1.msra.mxu0 %v1671
  %1725 = vmatprep.subr.mxu0 0.0
  %1726 = vmatpush1.msra.mxu0 %v1672
  %1727 = vmatprep.subr.mxu0 0.0
  %1728 = vmatpush1.msra.mxu0 %v1673
  %1729 = vmatprep.subr.mxu0 0.0
  %1730 = vmatpush1.msra.mxu0 %v1674
  %1731 = vmatprep.subr.mxu0 0.0
  %1732 = vmatpush1.msra.mxu0 %v1675
  %1733 = vmatprep.subr.mxu0 0.0
  %1734 = vmatpush1.msra.mxu0 %v1676
  %1735 = vmatprep.subr.mxu0 0.0
  %1736 = vmatpush1.msra.mxu0 %v1677
  %1737 = vmatprep.subr.mxu0 0.0
  %1738 = vmatpush1.msra.mxu0 %v1678
  %1739 = vmatprep.subr.mxu0 0.0
  %1740 = vmatpush1.msra.mxu0 %v1679
  %1741 = vmatprep.subr.mxu0 0.0
  %1742 = vmatpush1.msra.mxu0 %v1680
  %1743 = vmatprep.subr.mxu0 0.0
  %1744 = vmatpush1.msra.mxu0 %v1681
  %1745 = vmatprep.subr.mxu0 0.0
  %1746 = vmatpush1.msra.mxu0 %v1682
  %1747 = vmatprep.mubr.f32.mxu0 %v195
  %1748 = vmatmul.mubr.f32.gmra.mrb[0].mxu0 %v194
  %v1749 = vpop.f32.mrb[0].mxu0
  %v1750 = vadd.f32 0.0, %v1749
  %v1751 = vpop.f32.mrb[0].mxu0
  %1752 = vdwg.mxu0
  %s1753 = scalar_lea.vmem %s3, 1536
  %v1754 = vld [vmem:[%s1753] sm:$0xf]
  %v1755 = vld [vmem:[%s1753 + $0x4] sm:$0xf]
  %v1756 = vld [vmem:[%s1753 + $0x8] sm:$0xf]
  %v1757 = vld [vmem:[%s1753 + $0xc] sm:$0xf]
  %v1758 = vld [vmem:[%s1753 + $0x10] sm:$0xf]
  %v1759 = vld [vmem:[%s1753 + $0x14] sm:$0xf]
  %v1760 = vld [vmem:[%s1753 + $0x18] sm:$0xf]
  %v1761 = vld [vmem:[%s1753 + $0x1c] sm:$0xf]
  %v1762 = vld [vmem:[%s1753 + $0x20] sm:$0xf]
  %v1763 = vld [vmem:[%s1753 + $0x24] sm:$0xf]
  %v1764 = vld [vmem:[%s1753 + $0x28] sm:$0xf]
  %v1765 = vld [vmem:[%s1753 + $0x2c] sm:$0xf]
  %v1766 = vld [vmem:[%s1753 + $0x30] sm:$0xf]
  %v1767 = vld [vmem:[%s1753 + $0x34] sm:$0xf]
  %v1768 = vld [vmem:[%s1753 + $0x38] sm:$0xf]
  %v1769 = vld [vmem:[%s1753 + $0x3c] sm:$0xf]
  %v1770 = vld [vmem:[%s1753 + $0x40] sm:$0xf]
  %v1771 = vld [vmem:[%s1753 + $0x44] sm:$0xf]
  %v1772 = vld [vmem:[%s1753 + $0x48] sm:$0xf]
  %v1773 = vld [vmem:[%s1753 + $0x4c] sm:$0xf]
  %v1774 = vld [vmem:[%s1753 + $0x50] sm:$0xf]
  %v1775 = vld [vmem:[%s1753 + $0x54] sm:$0xf]
  %v1776 = vld [vmem:[%s1753 + $0x58] sm:$0xf]
  %v1777 = vld [vmem:[%s1753 + $0x5c] sm:$0xf]
  %v1778 = vld [vmem:[%s1753 + $0x60] sm:$0xf]
  %v1779 = vld [vmem:[%s1753 + $0x64] sm:$0xf]
  %v1780 = vld [vmem:[%s1753 + $0x68] sm:$0xf]
  %v1781 = vld [vmem:[%s1753 + $0x6c] sm:$0xf]
  %v1782 = vld [vmem:[%s1753 + $0x70] sm:$0xf]
  %v1783 = vld [vmem:[%s1753 + $0x74] sm:$0xf]
  %v1784 = vld [vmem:[%s1753 + $0x78] sm:$0xf]
  %v1785 = vld [vmem:[%s1753 + $0x7c] sm:$0xf]
  %v1786 = vunpack.c.l.bf16 %v1754
  %v1787 = vunpack.c.l.bf16 %v1755
  %v1788 = vunpack.c.l.bf16 %v1756
  %v1789 = vunpack.c.l.bf16 %v1757
  %v1790 = vunpack.c.l.bf16 %v1758
  %v1791 = vunpack.c.l.bf16 %v1759
  %v1792 = vunpack.c.l.bf16 %v1760
  %v1793 = vunpack.c.l.bf16 %v1761
  %v1794 = vunpack.c.l.bf16 %v1762
  %v1795 = vunpack.c.l.bf16 %v1763
  %v1796 = vunpack.c.l.bf16 %v1764
  %v1797 = vunpack.c.l.bf16 %v1765
  %v1798 = vunpack.c.l.bf16 %v1766
  %v1799 = vunpack.c.l.bf16 %v1767
  %v1800 = vunpack.c.l.bf16 %v1768
  %v1801 = vunpack.c.l.bf16 %v1769
  %v1802 = vunpack.c.l.bf16 %v1770
  %v1803 = vunpack.c.l.bf16 %v1771
  %v1804 = vunpack.c.l.bf16 %v1772
  %v1805 = vunpack.c.l.bf16 %v1773
  %v1806 = vunpack.c.l.bf16 %v1774
  %v1807 = vunpack.c.l.bf16 %v1775
  %v1808 = vunpack.c.l.bf16 %v1776
  %v1809 = vunpack.c.l.bf16 %v1777
  %v1810 = vunpack.c.l.bf16 %v1778
  %v1811 = vunpack.c.l.bf16 %v1779
  %v1812 = vunpack.c.l.bf16 %v1780
  %v1813 = vunpack.c.l.bf16 %v1781
  %v1814 = vunpack.c.l.bf16 %v1782
  %v1815 = vunpack.c.l.bf16 %v1783
  %v1816 = vunpack.c.l.bf16 %v1784
  %v1817 = vunpack.c.l.bf16 %v1785
  %1818 = vmatprep.subr.mxu0 0.0
  %1819 = vmatpush1.msra.mxu0 %v1786
  %1820 = vmatprep.subr.mxu0 0.0
  %1821 = vmatpush1.msra.mxu0 %v1787
  %1822 = vmatprep.subr.mxu0 0.0
  %1823 = vmatpush1.msra.mxu0 %v1788
  %1824 = vmatprep.subr.mxu0 0.0
  %1825 = vmatpush1.msra.mxu0 %v1789
  %1826 = vmatprep.subr.mxu0 0.0
  %1827 = vmatpush1.msra.mxu0 %v1790
  %1828 = vmatprep.subr.mxu0 0.0
  %1829 = vmatpush1.msra.mxu0 %v1791
  %1830 = vmatprep.subr.mxu0 0.0
  %1831 = vmatpush1.msra.mxu0 %v1792
  %1832 = vmatprep.subr.mxu0 0.0
  %1833 = vmatpush1.msra.mxu0 %v1793
  %1834 = vmatprep.subr.mxu0 0.0
  %1835 = vmatpush1.msra.mxu0 %v1794
  %1836 = vmatprep.subr.mxu0 0.0
  %1837 = vmatpush1.msra.mxu0 %v1795
  %1838 = vmatprep.subr.mxu0 0.0
  %1839 = vmatpush1.msra.mxu0 %v1796
  %1840 = vmatprep.subr.mxu0 0.0
  %1841 = vmatpush1.msra.mxu0 %v1797
  %1842 = vmatprep.subr.mxu0 0.0
  %1843 = vmatpush1.msra.mxu0 %v1798
  %1844 = vmatprep.subr.mxu0 0.0
  %1845 = vmatpush1.msra.mxu0 %v1799
  %1846 = vmatprep.subr.mxu0 0.0
  %1847 = vmatpush1.msra.mxu0 %v1800
  %1848 = vmatprep.subr.mxu0 0.0
  %1849 = vmatpush1.msra.mxu0 %v1801
  %1850 = vmatprep.subr.mxu0 0.0
  %1851 = vmatpush1.msra.mxu0 %v1802
  %1852 = vmatprep.subr.mxu0 0.0
  %1853 = vmatpush1.msra.mxu0 %v1803
  %1854 = vmatprep.subr.mxu0 0.0
  %1855 = vmatpush1.msra.mxu0 %v1804
  %1856 = vmatprep.subr.mxu0 0.0
  %1857 = vmatpush1.msra.mxu0 %v1805
  %1858 = vmatprep.subr.mxu0 0.0
  %1859 = vmatpush1.msra.mxu0 %v1806
  %1860 = vmatprep.subr.mxu0 0.0
  %1861 = vmatpush1.msra.mxu0 %v1807
  %1862 = vmatprep.subr.mxu0 0.0
  %1863 = vmatpush1.msra.mxu0 %v1808
  %1864 = vmatprep.subr.mxu0 0.0
  %1865 = vmatpush1.msra.mxu0 %v1809
  %1866 = vmatprep.subr.mxu0 0.0
  %1867 = vmatpush1.msra.mxu0 %v1810
  %1868 = vmatprep.subr.mxu0 0.0
  %1869 = vmatpush1.msra.mxu0 %v1811
  %1870 = vmatprep.subr.mxu0 0.0
  %1871 = vmatpush1.msra.mxu0 %v1812
  %1872 = vmatprep.subr.mxu0 0.0
  %1873 = vmatpush1.msra.mxu0 %v1813
  %1874 = vmatprep.subr.mxu0 0.0
  %1875 = vmatpush1.msra.mxu0 %v1814
  %1876 = vmatprep.subr.mxu0 0.0
  %1877 = vmatpush1.msra.mxu0 %v1815
  %1878 = vmatprep.subr.mxu0 0.0
  %1879 = vmatpush1.msra.mxu0 %v1816
  %1880 = vmatprep.subr.mxu0 0.0
  %1881 = vmatpush1.msra.mxu0 %v1817
  %1882 = vmatprep.mubr.f32.mxu0 %v195
  %1883 = vmatmul.mubr.f32.gmra.mrb[0].mxu0 %v194
  %v1884 = vpop.f32.mrb[0].mxu0
  %v1885 = vadd.f32 0.0, %v1884
  %v1886 = vpop.f32.mrb[0].mxu0
  %1887 = vdwg.mxu0
  %s1888 = scalar_lea.vmem %s3, 1664
  %v1889 = vld [vmem:[%s1888] sm:$0xf]
  %v1890 = vld [vmem:[%s1888 + $0x4] sm:$0xf]
  %v1891 = vld [vmem:[%s1888 + $0x8] sm:$0xf]
  %v1892 = vld [vmem:[%s1888 + $0xc] sm:$0xf]
  %v1893 = vld [vmem:[%s1888 + $0x10] sm:$0xf]
  %v1894 = vld [vmem:[%s1888 + $0x14] sm:$0xf]
  %v1895 = vld [vmem:[%s1888 + $0x18] sm:$0xf]
  %v1896 = vld [vmem:[%s1888 + $0x1c] sm:$0xf]
  %v1897 = vld [vmem:[%s1888 + $0x20] sm:$0xf]
  %v1898 = vld [vmem:[%s1888 + $0x24] sm:$0xf]
  %v1899 = vld [vmem:[%s1888 + $0x28] sm:$0xf]
  %v1900 = vld [vmem:[%s1888 + $0x2c] sm:$0xf]
  %v1901 = vld [vmem:[%s1888 + $0x30] sm:$0xf]
  %v1902 = vld [vmem:[%s1888 + $0x34] sm:$0xf]
  %v1903 = vld [vmem:[%s1888 + $0x38] sm:$0xf]
  %v1904 = vld [vmem:[%s1888 + $0x3c] sm:$0xf]
  %v1905 = vld [vmem:[%s1888 + $0x40] sm:$0xf]
  %v1906 = vld [vmem:[%s1888 + $0x44] sm:$0xf]
  %v1907 = vld [vmem:[%s1888 + $0x48] sm:$0xf]
  %v1908 = vld [vmem:[%s1888 + $0x4c] sm:$0xf]
  %v1909 = vld [vmem:[%s1888 + $0x50] sm:$0xf]
  %v1910 = vld [vmem:[%s1888 + $0x54] sm:$0xf]
  %v1911 = vld [vmem:[%s1888 + $0x58] sm:$0xf]
  %v1912 = vld [vmem:[%s1888 + $0x5c] sm:$0xf]
  %v1913 = vld [vmem:[%s1888 + $0x60] sm:$0xf]
  %v1914 = vld [vmem:[%s1888 + $0x64] sm:$0xf]
  %v1915 = vld [vmem:[%s1888 + $0x68] sm:$0xf]
  %v1916 = vld [vmem:[%s1888 + $0x6c] sm:$0xf]
  %v1917 = vld [vmem:[%s1888 + $0x70] sm:$0xf]
  %v1918 = vld [vmem:[%s1888 + $0x74] sm:$0xf]
  %v1919 = vld [vmem:[%s1888 + $0x78] sm:$0xf]
  %v1920 = vld [vmem:[%s1888 + $0x7c] sm:$0xf]
  %v1921 = vunpack.c.l.bf16 %v1889
  %v1922 = vunpack.c.l.bf16 %v1890
  %v1923 = vunpack.c.l.bf16 %v1891
  %v1924 = vunpack.c.l.bf16 %v1892
  %v1925 = vunpack.c.l.bf16 %v1893
  %v1926 = vunpack.c.l.bf16 %v1894
  %v1927 = vunpack.c.l.bf16 %v1895
  %v1928 = vunpack.c.l.bf16 %v1896
  %v1929 = vunpack.c.l.bf16 %v1897
  %v1930 = vunpack.c.l.bf16 %v1898
  %v1931 = vunpack.c.l.bf16 %v1899
  %v1932 = vunpack.c.l.bf16 %v1900
  %v1933 = vunpack.c.l.bf16 %v1901
  %v1934 = vunpack.c.l.bf16 %v1902
  %v1935 = vunpack.c.l.bf16 %v1903
  %v1936 = vunpack.c.l.bf16 %v1904
  %v1937 = vunpack.c.l.bf16 %v1905
  %v1938 = vunpack.c.l.bf16 %v1906
  %v1939 = vunpack.c.l.bf16 %v1907
  %v1940 = vunpack.c.l.bf16 %v1908
  %v1941 = vunpack.c.l.bf16 %v1909
  %v1942 = vunpack.c.l.bf16 %v1910
  %v1943 = vunpack.c.l.bf16 %v1911
  %v1944 = vunpack.c.l.bf16 %v1912
  %v1945 = vunpack.c.l.bf16 %v1913
  %v1946 = vunpack.c.l.bf16 %v1914
  %v1947 = vunpack.c.l.bf16 %v1915
  %v1948 = vunpack.c.l.bf16 %v1916
  %v1949 = vunpack.c.l.bf16 %v1917
  %v1950 = vunpack.c.l.bf16 %v1918
  %v1951 = vunpack.c.l.bf16 %v1919
  %v1952 = vunpack.c.l.bf16 %v1920
  %1953 = vmatprep.subr.mxu0 0.0
  %1954 = vmatpush1.msra.mxu0 %v1921
  %1955 = vmatprep.subr.mxu0 0.0
  %1956 = vmatpush1.msra.mxu0 %v1922
  %1957 = vmatprep.subr.mxu0 0.0
  %1958 = vmatpush1.msra.mxu0 %v1923
  %1959 = vmatprep.subr.mxu0 0.0
  %1960 = vmatpush1.msra.mxu0 %v1924
  %1961 = vmatprep.subr.mxu0 0.0
  %1962 = vmatpush1.msra.mxu0 %v1925
  %1963 = vmatprep.subr.mxu0 0.0
  %1964 = vmatpush1.msra.mxu0 %v1926
  %1965 = vmatprep.subr.mxu0 0.0
  %1966 = vmatpush1.msra.mxu0 %v1927
  %1967 = vmatprep.subr.mxu0 0.0
  %1968 = vmatpush1.msra.mxu0 %v1928
  %1969 = vmatprep.subr.mxu0 0.0
  %1970 = vmatpush1.msra.mxu0 %v1929
  %1971 = vmatprep.subr.mxu0 0.0
  %1972 = vmatpush1.msra.mxu0 %v1930
  %1973 = vmatprep.subr.mxu0 0.0
  %1974 = vmatpush1.msra.mxu0 %v1931
  %1975 = vmatprep.subr.mxu0 0.0
  %1976 = vmatpush1.msra.mxu0 %v1932
  %1977 = vmatprep.subr.mxu0 0.0
  %1978 = vmatpush1.msra.mxu0 %v1933
  %1979 = vmatprep.subr.mxu0 0.0
  %1980 = vmatpush1.msra.mxu0 %v1934
  %1981 = vmatprep.subr.mxu0 0.0
  %1982 = vmatpush1.msra.mxu0 %v1935
  %1983 = vmatprep.subr.mxu0 0.0
  %1984 = vmatpush1.msra.mxu0 %v1936
  %1985 = vmatprep.subr.mxu0 0.0
  %1986 = vmatpush1.msra.mxu0 %v1937
  %1987 = vmatprep.subr.mxu0 0.0
  %1988 = vmatpush1.msra.mxu0 %v1938
  %1989 = vmatprep.subr.mxu0 0.0
  %1990 = vmatpush1.msra.mxu0 %v1939
  %1991 = vmatprep.subr.mxu0 0.0
  %1992 = vmatpush1.msra.mxu0 %v1940
  %1993 = vmatprep.subr.mxu0 0.0
  %1994 = vmatpush1.msra.mxu0 %v1941
  %1995 = vmatprep.subr.mxu0 0.0
  %1996 = vmatpush1.msra.mxu0 %v1942
  %1997 = vmatprep.subr.mxu0 0.0
  %1998 = vmatpush1.msra.mxu0 %v1943
  %1999 = vmatprep.subr.mxu0 0.0
  %2000 = vmatpush1.msra.mxu0 %v1944
  %2001 = vmatprep.subr.mxu0 0.0
  %2002 = vmatpush1.msra.mxu0 %v1945
  %2003 = vmatprep.subr.mxu0 0.0
  %2004 = vmatpush1.msra.mxu0 %v1946
  %2005 = vmatprep.subr.mxu0 0.0
  %2006 = vmatpush1.msra.mxu0 %v1947
  %2007 = vmatprep.subr.mxu0 0.0
  %2008 = vmatpush1.msra.mxu0 %v1948
  %2009 = vmatprep.subr.mxu0 0.0
  %2010 = vmatpush1.msra.mxu0 %v1949
  %2011 = vmatprep.subr.mxu0 0.0
  %2012 = vmatpush1.msra.mxu0 %v1950
  %2013 = vmatprep.subr.mxu0 0.0
  %2014 = vmatpush1.msra.mxu0 %v1951
  %2015 = vmatprep.subr.mxu0 0.0
  %2016 = vmatpush1.msra.mxu0 %v1952
  %2017 = vmatprep.mubr.f32.mxu0 %v195
  %2018 = vmatmul.mubr.f32.gmra.mrb[0].mxu0 %v194
  %v2019 = vpop.f32.mrb[0].mxu0
  %v2020 = vadd.f32 0.0, %v2019
  %v2021 = vpop.f32.mrb[0].mxu0
  %2022 = vdwg.mxu0
  %s2023 = scalar_lea.vmem %s3, 1792
  %v2024 = vld [vmem:[%s2023] sm:$0xf]
  %v2025 = vld [vmem:[%s2023 + $0x4] sm:$0xf]
  %v2026 = vld [vmem:[%s2023 + $0x8] sm:$0xf]
  %v2027 = vld [vmem:[%s2023 + $0xc] sm:$0xf]
  %v2028 = vld [vmem:[%s2023 + $0x10] sm:$0xf]
  %v2029 = vld [vmem:[%s2023 + $0x14] sm:$0xf]
  %v2030 = vld [vmem:[%s2023 + $0x18] sm:$0xf]
  %v2031 = vld [vmem:[%s2023 + $0x1c] sm:$0xf]
  %v2032 = vld [vmem:[%s2023 + $0x20] sm:$0xf]
  %v2033 = vld [vmem:[%s2023 + $0x24] sm:$0xf]
  %v2034 = vld [vmem:[%s2023 + $0x28] sm:$0xf]
  %v2035 = vld [vmem:[%s2023 + $0x2c] sm:$0xf]
  %v2036 = vld [vmem:[%s2023 + $0x30] sm:$0xf]
  %v2037 = vld [vmem:[%s2023 + $0x34] sm:$0xf]
  %v2038 = vld [vmem:[%s2023 + $0x38] sm:$0xf]
  %v2039 = vld [vmem:[%s2023 + $0x3c] sm:$0xf]
  %v2040 = vld [vmem:[%s2023 + $0x40] sm:$0xf]
  %v2041 = vld [vmem:[%s2023 + $0x44] sm:$0xf]
  %v2042 = vld [vmem:[%s2023 + $0x48] sm:$0xf]
  %v2043 = vld [vmem:[%s2023 + $0x4c] sm:$0xf]
  %v2044 = vld [vmem:[%s2023 + $0x50] sm:$0xf]
  %v2045 = vld [vmem:[%s2023 + $0x54] sm:$0xf]
  %v2046 = vld [vmem:[%s2023 + $0x58] sm:$0xf]
  %v2047 = vld [vmem:[%s2023 + $0x5c] sm:$0xf]
  %v2048 = vld [vmem:[%s2023 + $0x60] sm:$0xf]
  %v2049 = vld [vmem:[%s2023 + $0x64] sm:$0xf]
  %v2050 = vld [vmem:[%s2023 + $0x68] sm:$0xf]
  %v2051 = vld [vmem:[%s2023 + $0x6c] sm:$0xf]
  %v2052 = vld [vmem:[%s2023 + $0x70] sm:$0xf]
  %v2053 = vld [vmem:[%s2023 + $0x74] sm:$0xf]
  %v2054 = vld [vmem:[%s2023 + $0x78] sm:$0xf]
  %v2055 = vld [vmem:[%s2023 + $0x7c] sm:$0xf]
  %v2056 = vunpack.c.l.bf16 %v2024
  %v2057 = vunpack.c.l.bf16 %v2025
  %v2058 = vunpack.c.l.bf16 %v2026
  %v2059 = vunpack.c.l.bf16 %v2027
  %v2060 = vunpack.c.l.bf16 %v2028
  %v2061 = vunpack.c.l.bf16 %v2029
  %v2062 = vunpack.c.l.bf16 %v2030
  %v2063 = vunpack.c.l.bf16 %v2031
  %v2064 = vunpack.c.l.bf16 %v2032
  %v2065 = vunpack.c.l.bf16 %v2033
  %v2066 = vunpack.c.l.bf16 %v2034
  %v2067 = vunpack.c.l.bf16 %v2035
  %v2068 = vunpack.c.l.bf16 %v2036
  %v2069 = vunpack.c.l.bf16 %v2037
  %v2070 = vunpack.c.l.bf16 %v2038
  %v2071 = vunpack.c.l.bf16 %v2039
  %v2072 = vunpack.c.l.bf16 %v2040
  %v2073 = vunpack.c.l.bf16 %v2041
  %v2074 = vunpack.c.l.bf16 %v2042
  %v2075 = vunpack.c.l.bf16 %v2043
  %v2076 = vunpack.c.l.bf16 %v2044
  %v2077 = vunpack.c.l.bf16 %v2045
  %v2078 = vunpack.c.l.bf16 %v2046
  %v2079 = vunpack.c.l.bf16 %v2047
  %v2080 = vunpack.c.l.bf16 %v2048
  %v2081 = vunpack.c.l.bf16 %v2049
  %v2082 = vunpack.c.l.bf16 %v2050
  %v2083 = vunpack.c.l.bf16 %v2051
  %v2084 = vunpack.c.l.bf16 %v2052
  %v2085 = vunpack.c.l.bf16 %v2053
  %v2086 = vunpack.c.l.bf16 %v2054
  %v2087 = vunpack.c.l.bf16 %v2055
  %2088 = vmatprep.subr.mxu0 0.0
  %2089 = vmatpush1.msra.mxu0 %v2056
  %2090 = vmatprep.subr.mxu0 0.0
  %2091 = vmatpush1.msra.mxu0 %v2057
  %2092 = vmatprep.subr.mxu0 0.0
  %2093 = vmatpush1.msra.mxu0 %v2058
  %2094 = vmatprep.subr.mxu0 0.0
  %2095 = vmatpush1.msra.mxu0 %v2059
  %2096 = vmatprep.subr.mxu0 0.0
  %2097 = vmatpush1.msra.mxu0 %v2060
  %2098 = vmatprep.subr.mxu0 0.0
  %2099 = vmatpush1.msra.mxu0 %v2061
  %2100 = vmatprep.subr.mxu0 0.0
  %2101 = vmatpush1.msra.mxu0 %v2062
  %2102 = vmatprep.subr.mxu0 0.0
  %2103 = vmatpush1.msra.mxu0 %v2063
  %2104 = vmatprep.subr.mxu0 0.0
  %2105 = vmatpush1.msra.mxu0 %v2064
  %2106 = vmatprep.subr.mxu0 0.0
  %2107 = vmatpush1.msra.mxu0 %v2065
  %2108 = vmatprep.subr.mxu0 0.0
  %2109 = vmatpush1.msra.mxu0 %v2066
  %2110 = vmatprep.subr.mxu0 0.0
  %2111 = vmatpush1.msra.mxu0 %v2067
  %2112 = vmatprep.subr.mxu0 0.0
  %2113 = vmatpush1.msra.mxu0 %v2068
  %2114 = vmatprep.subr.mxu0 0.0
  %2115 = vmatpush1.msra.mxu0 %v2069
  %2116 = vmatprep.subr.mxu0 0.0
  %2117 = vmatpush1.msra.mxu0 %v2070
  %2118 = vmatprep.subr.mxu0 0.0
  %2119 = vmatpush1.msra.mxu0 %v2071
  %2120 = vmatprep.subr.mxu0 0.0
  %2121 = vmatpush1.msra.mxu0 %v2072
  %2122 = vmatprep.subr.mxu0 0.0
  %2123 = vmatpush1.msra.mxu0 %v2073
  %2124 = vmatprep.subr.mxu0 0.0
  %2125 = vmatpush1.msra.mxu0 %v2074
  %2126 = vmatprep.subr.mxu0 0.0
  %2127 = vmatpush1.msra.mxu0 %v2075
  %2128 = vmatprep.subr.mxu0 0.0
  %2129 = vmatpush1.msra.mxu0 %v2076
  %2130 = vmatprep.subr.mxu0 0.0
  %2131 = vmatpush1.msra.mxu0 %v2077
  %2132 = vmatprep.subr.mxu0 0.0
  %2133 = vmatpush1.msra.mxu0 %v2078
  %2134 = vmatprep.subr.mxu0 0.0
  %2135 = vmatpush1.msra.mxu0 %v2079
  %2136 = vmatprep.subr.mxu0 0.0
  %2137 = vmatpush1.msra.mxu0 %v2080
  %2138 = vmatprep.subr.mxu0 0.0
  %2139 = vmatpush1.msra.mxu0 %v2081
  %2140 = vmatprep.subr.mxu0 0.0
  %2141 = vmatpush1.msra.mxu0 %v2082
  %2142 = vmatprep.subr.mxu0 0.0
  %2143 = vmatpush1.msra.mxu0 %v2083
  %2144 = vmatprep.subr.mxu0 0.0
  %2145 = vmatpush1.msra.mxu0 %v2084
  %2146 = vmatprep.subr.mxu0 0.0
  %2147 = vmatpush1.msra.mxu0 %v2085
  %2148 = vmatprep.subr.mxu0 0.0
  %2149 = vmatpush1.msra.mxu0 %v2086
  %2150 = vmatprep.subr.mxu0 0.0
  %2151 = vmatpush1.msra.mxu0 %v2087
  %2152 = vmatprep.mubr.f32.mxu0 %v195
  %2153 = vmatmul.mubr.f32.gmra.mrb[0].mxu0 %v194
  %v2154 = vpop.f32.mrb[0].mxu0
  %v2155 = vadd.f32 0.0, %v2154
  %v2156 = vpop.f32.mrb[0].mxu0
  %2157 = vdwg.mxu0
  %s2158 = scalar_lea.vmem %s3, 1920
  %v2159 = vld [vmem:[%s2158] sm:$0xf]
  %v2160 = vld [vmem:[%s2158 + $0x4] sm:$0xf]
  %v2161 = vld [vmem:[%s2158 + $0x8] sm:$0xf]
  %v2162 = vld [vmem:[%s2158 + $0xc] sm:$0xf]
  %v2163 = vld [vmem:[%s2158 + $0x10] sm:$0xf]
  %v2164 = vld [vmem:[%s2158 + $0x14] sm:$0xf]
  %v2165 = vld [vmem:[%s2158 + $0x18] sm:$0xf]
  %v2166 = vld [vmem:[%s2158 + $0x1c] sm:$0xf]
  %v2167 = vld [vmem:[%s2158 + $0x20] sm:$0xf]
  %v2168 = vld [vmem:[%s2158 + $0x24] sm:$0xf]
  %v2169 = vld [vmem:[%s2158 + $0x28] sm:$0xf]
  %v2170 = vld [vmem:[%s2158 + $0x2c] sm:$0xf]
  %v2171 = vld [vmem:[%s2158 + $0x30] sm:$0xf]
  %v2172 = vld [vmem:[%s2158 + $0x34] sm:$0xf]
  %v2173 = vld [vmem:[%s2158 + $0x38] sm:$0xf]
  %v2174 = vld [vmem:[%s2158 + $0x3c] sm:$0xf]
  %v2175 = vld [vmem:[%s2158 + $0x40] sm:$0xf]
  %v2176 = vld [vmem:[%s2158 + $0x44] sm:$0xf]
  %v2177 = vld [vmem:[%s2158 + $0x48] sm:$0xf]
  %v2178 = vld [vmem:[%s2158 + $0x4c] sm:$0xf]
  %v2179 = vld [vmem:[%s2158 + $0x50] sm:$0xf]
  %v2180 = vld [vmem:[%s2158 + $0x54] sm:$0xf]
  %v2181 = vld [vmem:[%s2158 + $0x58] sm:$0xf]
  %v2182 = vld [vmem:[%s2158 + $0x5c] sm:$0xf]
  %v2183 = vld [vmem:[%s2158 + $0x60] sm:$0xf]
  %v2184 = vld [vmem:[%s2158 + $0x64] sm:$0xf]
  %v2185 = vld [vmem:[%s2158 + $0x68] sm:$0xf]
  %v2186 = vld [vmem:[%s2158 + $0x6c] sm:$0xf]
  %v2187 = vld [vmem:[%s2158 + $0x70] sm:$0xf]
  %v2188 = vld [vmem:[%s2158 + $0x74] sm:$0xf]
  %v2189 = vld [vmem:[%s2158 + $0x78] sm:$0xf]
  %v2190 = vld [vmem:[%s2158 + $0x7c] sm:$0xf]
  %v2191 = vunpack.c.l.bf16 %v2159
  %v2192 = vunpack.c.l.bf16 %v2160
  %v2193 = vunpack.c.l.bf16 %v2161
  %v2194 = vunpack.c.l.bf16 %v2162
  %v2195 = vunpack.c.l.bf16 %v2163
  %v2196 = vunpack.c.l.bf16 %v2164
  %v2197 = vunpack.c.l.bf16 %v2165
  %v2198 = vunpack.c.l.bf16 %v2166
  %v2199 = vunpack.c.l.bf16 %v2167
  %v2200 = vunpack.c.l.bf16 %v2168
  %v2201 = vunpack.c.l.bf16 %v2169
  %v2202 = vunpack.c.l.bf16 %v2170
  %v2203 = vunpack.c.l.bf16 %v2171
  %v2204 = vunpack.c.l.bf16 %v2172
  %v2205 = vunpack.c.l.bf16 %v2173
  %v2206 = vunpack.c.l.bf16 %v2174
  %v2207 = vunpack.c.l.bf16 %v2175
  %v2208 = vunpack.c.l.bf16 %v2176
  %v2209 = vunpack.c.l.bf16 %v2177
  %v2210 = vunpack.c.l.bf16 %v2178
  %v2211 = vunpack.c.l.bf16 %v2179
  %v2212 = vunpack.c.l.bf16 %v2180
  %v2213 = vunpack.c.l.bf16 %v2181
  %v2214 = vunpack.c.l.bf16 %v2182
  %v2215 = vunpack.c.l.bf16 %v2183
  %v2216 = vunpack.c.l.bf16 %v2184
  %v2217 = vunpack.c.l.bf16 %v2185
  %v2218 = vunpack.c.l.bf16 %v2186
  %v2219 = vunpack.c.l.bf16 %v2187
  %v2220 = vunpack.c.l.bf16 %v2188
  %v2221 = vunpack.c.l.bf16 %v2189
  %v2222 = vunpack.c.l.bf16 %v2190
  %2223 = vmatprep.subr.mxu0 0.0
  %2224 = vmatpush1.msra.mxu0 %v2191
  %2225 = vmatprep.subr.mxu0 0.0
  %2226 = vmatpush1.msra.mxu0 %v2192
  %2227 = vmatprep.subr.mxu0 0.0
  %2228 = vmatpush1.msra.mxu0 %v2193
  %2229 = vmatprep.subr.mxu0 0.0
  %2230 = vmatpush1.msra.mxu0 %v2194
  %2231 = vmatprep.subr.mxu0 0.0
  %2232 = vmatpush1.msra.mxu0 %v2195
  %2233 = vmatprep.subr.mxu0 0.0
  %2234 = vmatpush1.msra.mxu0 %v2196
  %2235 = vmatprep.subr.mxu0 0.0
  %2236 = vmatpush1.msra.mxu0 %v2197
  %2237 = vmatprep.subr.mxu0 0.0
  %2238 = vmatpush1.msra.mxu0 %v2198
  %2239 = vmatprep.subr.mxu0 0.0
  %2240 = vmatpush1.msra.mxu0 %v2199
  %2241 = vmatprep.subr.mxu0 0.0
  %2242 = vmatpush1.msra.mxu0 %v2200
  %2243 = vmatprep.subr.mxu0 0.0
  %2244 = vmatpush1.msra.mxu0 %v2201
  %2245 = vmatprep.subr.mxu0 0.0
  %2246 = vmatpush1.msra.mxu0 %v2202
  %2247 = vmatprep.subr.mxu0 0.0
  %2248 = vmatpush1.msra.mxu0 %v2203
  %2249 = vmatprep.subr.mxu0 0.0
  %2250 = vmatpush1.msra.mxu0 %v2204
  %2251 = vmatprep.subr.mxu0 0.0
  %2252 = vmatpush1.msra.mxu0 %v2205
  %2253 = vmatprep.subr.mxu0 0.0
  %2254 = vmatpush1.msra.mxu0 %v2206
  %2255 = vmatprep.subr.mxu0 0.0
  %2256 = vmatpush1.msra.mxu0 %v2207
  %2257 = vmatprep.subr.mxu0 0.0
  %2258 = vmatpush1.msra.mxu0 %v2208
  %2259 = vmatprep.subr.mxu0 0.0
  %2260 = vmatpush1.msra.mxu0 %v2209
  %2261 = vmatprep.subr.mxu0 0.0
  %2262 = vmatpush1.msra.mxu0 %v2210
  %2263 = vmatprep.subr.mxu0 0.0
  %2264 = vmatpush1.msra.mxu0 %v2211
  %2265 = vmatprep.subr.mxu0 0.0
  %2266 = vmatpush1.msra.mxu0 %v2212
  %2267 = vmatprep.subr.mxu0 0.0
  %2268 = vmatpush1.msra.mxu0 %v2213
  %2269 = vmatprep.subr.mxu0 0.0
  %2270 = vmatpush1.msra.mxu0 %v2214
  %2271 = vmatprep.subr.mxu0 0.0
  %2272 = vmatpush1.msra.mxu0 %v2215
  %2273 = vmatprep.subr.mxu0 0.0
  %2274 = vmatpush1.msra.mxu0 %v2216
  %2275 = vmatprep.subr.mxu0 0.0
  %2276 = vmatpush1.msra.mxu0 %v2217
  %2277 = vmatprep.subr.mxu0 0.0
  %2278 = vmatpush1.msra.mxu0 %v2218
  %2279 = vmatprep.subr.mxu0 0.0
  %2280 = vmatpush1.msra.mxu0 %v2219
  %2281 = vmatprep.subr.mxu0 0.0
  %2282 = vmatpush1.msra.mxu0 %v2220
  %2283 = vmatprep.subr.mxu0 0.0
  %2284 = vmatpush1.msra.mxu0 %v2221
  %2285 = vmatprep.subr.mxu0 0.0
  %2286 = vmatpush1.msra.mxu0 %v2222
  %2287 = vmatprep.mubr.f32.mxu0 %v195
  %2288 = vmatmul.mubr.f32.gmra.mrb[0].mxu0 %v194
  %v2289 = vpop.f32.mrb[0].mxu0
  %v2290 = vadd.f32 0.0, %v2289
  %v2291 = vpop.f32.mrb[0].mxu0
  %2292 = vdwg.mxu0
  %v2294 = vrot.slane %v400, 6
  %v2297 = vrot.slane %v535, 4
  %v2300 = vrot.slane %v670, 2
  %v2303 = vrot.slane %v940, 6
  %v2306 = vrot.slane %v1075, 4
  %v2309 = vrot.slane %v1210, 2
  %v2312 = vrot.slane %v1480, 6
  %v2315 = vrot.slane %v1615, 4
  %v2318 = vrot.slane %v1750, 2
  %v2321 = vrot.slane %v2020, 6
  %v2324 = vrot.slane %v2155, 4
  %v2327 = vrot.slane %v2290, 2
  %vm2329 = vcmask 1041408
  %v2330 = vsel %vm2329, %v265, %v2294
  %vm2331 = vcmask 1043456
  %v2332 = vsel %vm2331, %v2330, %v2297
  %vm2333 = vcmask 1045504
  %v2334 = vsel %vm2333, %v2332, %v2300
  %v2335 = vsel %vm2329, %v805, %v2303
  %v2336 = vsel %vm2331, %v2335, %v2306
  %v2337 = vsel %vm2333, %v2336, %v2309
  %v2338 = vsel %vm2329, %v1345, %v2312
  %v2339 = vsel %vm2331, %v2338, %v2315
  %v2340 = vsel %vm2333, %v2339, %v2318
  %v2341 = vsel %vm2329, %v1885, %v2321
  %v2342 = vsel %vm2331, %v2341, %v2324
  %v2343 = vsel %vm2333, %v2342, %v2327
  %v2344 = vld [vmem:[%s5] sm:$0xff]
  %v2345 = vld [vmem:[%s5 + $0x8] sm:$0xff]
  %vm2346 = vcmask 261120
  %v2348 = vsel %vm2346, %v2344, 0
  %v2351 = vsel %vm2346, %v2345, 0
  %2353 = vmatprep.subr.mxu0 0.0
  %2354 = vmatpush1.msra.mxu0 %v2334
  %2355 = vmatprep.subr.mxu0 0.0
  %2356 = vmatpush1.msra.mxu0 %v2337
  %2357 = vmatprep.subr.mxu0 0.0
  %2358 = vmatpush1.msra.mxu0 %v2340
  %2359 = vmatprep.subr.mxu0 0.0
  %2360 = vmatpush1.msra.mxu0 %v2343
  %2361 = vmatprep.subr.mxu0 0.0
  %2362 = vmatpush1.msra.mxu0 0.0
  %2363 = vmatprep.subr.mxu0 0.0
  %2364 = vmatpush1.msra.mxu0 0.0
  %2365 = vmatprep.subr.mxu0 0.0
  %2366 = vmatpush1.msra.mxu0 0.0
  %2367 = vmatprep.subr.mxu0 0.0
  %2368 = vmatpush1.msra.mxu0 0.0
  %2369 = vmatprep.subr.mxu0 0.0
  %2370 = vmatpush1.msra.mxu0 0.0
  %2371 = vmatprep.subr.mxu0 0.0
  %2372 = vmatpush1.msra.mxu0 0.0
  %2373 = vmatprep.subr.mxu0 0.0
  %2374 = vmatpush1.msra.mxu0 0.0
  %2375 = vmatprep.subr.mxu0 0.0
  %2376 = vmatpush1.msra.mxu0 0.0
  %2377 = vmatprep.subr.mxu0 0.0
  %2378 = vmatpush1.msra.mxu0 0.0
  %2379 = vmatprep.subr.mxu0 0.0
  %2380 = vmatpush1.msra.mxu0 0.0
  %2381 = vmatprep.subr.mxu0 0.0
  %2382 = vmatpush1.msra.mxu0 0.0
  %2383 = vmatprep.subr.mxu0 0.0
  %2384 = vmatpush1.msra.mxu0 0.0
  %2385 = vmatprep.subr.mxu0 0.0
  %2386 = vmatpush1.msra.mxu0 0.0
  %2387 = vmatprep.subr.mxu0 0.0
  %2388 = vmatpush1.msra.mxu0 0.0
  %2389 = vmatprep.subr.mxu0 0.0
  %2390 = vmatpush1.msra.mxu0 0.0
  %2391 = vmatprep.subr.mxu0 0.0
  %2392 = vmatpush1.msra.mxu0 0.0
  %2393 = vmatprep.subr.mxu0 0.0
  %2394 = vmatpush1.msra.mxu0 0.0
  %2395 = vmatprep.subr.mxu0 0.0
  %2396 = vmatpush1.msra.mxu0 0.0
  %2397 = vmatprep.subr.mxu0 0.0
  %2398 = vmatpush1.msra.mxu0 0.0
  %2399 = vmatprep.subr.mxu0 0.0
  %2400 = vmatpush1.msra.mxu0 0.0
  %2401 = vmatprep.subr.mxu0 0.0
  %2402 = vmatpush1.msra.mxu0 0.0
  %2403 = vmatprep.subr.mxu0 0.0
  %2404 = vmatpush1.msra.mxu0 0.0
  %2405 = vmatprep.subr.mxu0 0.0
  %2406 = vmatpush1.msra.mxu0 0.0
  %2407 = vmatprep.subr.mxu0 0.0
  %2408 = vmatpush1.msra.mxu0 0.0
  %2409 = vmatprep.subr.mxu0 0.0
  %2410 = vmatpush1.msra.mxu0 0.0
  %2411 = vmatprep.subr.mxu0 0.0
  %2412 = vmatpush1.msra.mxu0 0.0
  %2413 = vmatprep.subr.mxu0 0.0
  %2414 = vmatpush1.msra.mxu0 0.0
  %2415 = vmatprep.subr.mxu0 0.0
  %2416 = vmatpush1.msra.mxu0 0.0
  %2417 = vmatprep.mubr.f32.mxu0 0.0
  %2418 = vmatmul.mubr.f32.gmra.mrb[0].mxu0 %v2348
  %v2419 = vpop.f32.mrb[0].mxu0
  %v2420 = vadd.f32 0.0, %v2419
  %v2421 = vpop.f32.mrb[0].mxu0
  %2422 = vmatprep.mubr.f32.mxu0 0.0
  %2423 = vmatmul.mubr.f32.gmra.mrb[0].mxu0 %v2351
  %v2424 = vpop.f32.mrb[0].mxu0
  %v2425 = vadd.f32 0.0, %v2424
  %v2426 = vpop.f32.mrb[0].mxu0
  %2427 = vdwg.mxu0
  %vm2428 = vcmask 523264
  %v2429 = vsel %vm2428, %v2420, 0.0
  %2430 = vadd.xlane.f32.xlu0 %v2429
  %v2431 = vpop.xlane.xlu0 %2430
  %v2432 = vsel %vm2428, %v2425, 0.0
  %2433 = vadd.xlane.f32.xlu0 %v2432
  %v2434 = vpop.xlane.xlu0 %2433
  %v2435 = vmul.f32 %v2420, %v2420
  %v2436 = vmul.f32 %v2425, %v2425
  %v2437 = vsel %vm2428, %v2435, 0.0
  %2438 = vadd.xlane.f32.xlu0 %v2437
  %v2439 = vpop.xlane.xlu0 %2438
  %v2440 = vsel %vm2428, %v2436, 0.0
  %2441 = vadd.xlane.f32.xlu0 %v2440
  %v2442 = vpop.xlane.xlu0 %2441
  %vm2443 = vcmask 7168
  %v2444 = vsel %vm2443, %v2431, %v2439
  %v2445 = vsel %vm2443, %v2434, %v2442
  %v2446 = vld [vmem:[%s7] sm:$0xff]
  %v2447 = vld [vmem:[%s7 + $0x8] sm:$0xff]
  %vm2448 = vcmask 130048
  %v2450 = vsel %vm2448, %v2446, 0
  %v2453 = vsel %vm2448, %v2447, 0
  %2455 = vmatprep.subr.mxu0 0.0
  %2456 = vmatpush1.msra.mxu0 %v2444
  %2457 = vmatprep.subr.mxu0 0.0
  %2458 = vmatpush1.msra.mxu0 %v2445
  %2459 = vmatprep.subr.mxu0 0.0
  %2460 = vmatpush1.msra.mxu0 0.0
  %2461 = vmatprep.subr.mxu0 0.0
  %2462 = vmatpush1.msra.mxu0 0.0
  %2463 = vmatprep.subr.mxu0 0.0
  %2464 = vmatpush1.msra.mxu0 0.0
  %2465 = vmatprep.subr.mxu0 0.0
  %2466 = vmatpush1.msra.mxu0 0.0
  %2467 = vmatprep.subr.mxu0 0.0
  %2468 = vmatpush1.msra.mxu0 0.0
  %2469 = vmatprep.subr.mxu0 0.0
  %2470 = vmatpush1.msra.mxu0 0.0
  %2471 = vmatprep.subr.mxu0 0.0
  %2472 = vmatpush1.msra.mxu0 0.0
  %2473 = vmatprep.subr.mxu0 0.0
  %2474 = vmatpush1.msra.mxu0 0.0
  %2475 = vmatprep.subr.mxu0 0.0
  %2476 = vmatpush1.msra.mxu0 0.0
  %2477 = vmatprep.subr.mxu0 0.0
  %2478 = vmatpush1.msra.mxu0 0.0
  %2479 = vmatprep.subr.mxu0 0.0
  %2480 = vmatpush1.msra.mxu0 0.0
  %2481 = vmatprep.subr.mxu0 0.0
  %2482 = vmatpush1.msra.mxu0 0.0
  %2483 = vmatprep.subr.mxu0 0.0
  %2484 = vmatpush1.msra.mxu0 0.0
  %2485 = vmatprep.subr.mxu0 0.0
  %2486 = vmatpush1.msra.mxu0 0.0
  %2487 = vmatprep.subr.mxu0 0.0
  %2488 = vmatpush1.msra.mxu0 0.0
  %2489 = vmatprep.subr.mxu0 0.0
  %2490 = vmatpush1.msra.mxu0 0.0
  %2491 = vmatprep.subr.mxu0 0.0
  %2492 = vmatpush1.msra.mxu0 0.0
  %2493 = vmatprep.subr.mxu0 0.0
  %2494 = vmatpush1.msra.mxu0 0.0
  %2495 = vmatprep.subr.mxu0 0.0
  %2496 = vmatpush1.msra.mxu0 0.0
  %2497 = vmatprep.subr.mxu0 0.0
  %2498 = vmatpush1.msra.mxu0 0.0
  %2499 = vmatprep.subr.mxu0 0.0
  %2500 = vmatpush1.msra.mxu0 0.0
  %2501 = vmatprep.subr.mxu0 0.0
  %2502 = vmatpush1.msra.mxu0 0.0
  %2503 = vmatprep.subr.mxu0 0.0
  %2504 = vmatpush1.msra.mxu0 0.0
  %2505 = vmatprep.subr.mxu0 0.0
  %2506 = vmatpush1.msra.mxu0 0.0
  %2507 = vmatprep.subr.mxu0 0.0
  %2508 = vmatpush1.msra.mxu0 0.0
  %2509 = vmatprep.subr.mxu0 0.0
  %2510 = vmatpush1.msra.mxu0 0.0
  %2511 = vmatprep.subr.mxu0 0.0
  %2512 = vmatpush1.msra.mxu0 0.0
  %2513 = vmatprep.subr.mxu0 0.0
  %2514 = vmatpush1.msra.mxu0 0.0
  %2515 = vmatprep.subr.mxu0 0.0
  %2516 = vmatpush1.msra.mxu0 0.0
  %2517 = vmatprep.subr.mxu0 0.0
  %2518 = vmatpush1.msra.mxu0 0.0
  %2519 = vmatprep.mubr.f32.mxu0 0.0
  %2520 = vmatmul.mubr.f32.gmra.mrb[0].mxu0 %v2450
  %v2521 = vpop.f32.mrb[0].mxu0
  %v2522 = vadd.f32 0.0, %v2521
  %v2523 = vpop.f32.mrb[0].mxu0
  %2524 = vmatprep.mubr.f32.mxu0 0.0
  %2525 = vmatmul.mubr.f32.gmra.mrb[0].mxu0 %v2453
  %v2526 = vpop.f32.mrb[0].mxu0
  %v2527 = vadd.f32 0.0, %v2526
  %v2528 = vpop.f32.mrb[0].mxu0
  %2529 = vdwg.mxu0
  %v2530 = vmul.f32 %v2522, %v2522
  %v2531 = vmul.f32 %v2527, %v2527
  %2534 = vrot.lane.b32.xlu0 %v2530, 1
  %v2535 = vpop.permute.xlu0 %2534
  %2536 = vrot.lane.b32.xlu0 %v2531, 1
  %v2537 = vpop.permute.xlu0 %2536
  %v2540 = vsub.f32 %v2522, %v2535
  %v2541 = vsub.f32 %v2527, %v2537
  %v2542 = vmax.f32 %v2540, 0.0
  %v2543 = vmax.f32 %v2541, 0.0
  %2545 = vset.pattern.permute.xlu0 0
  %2546 = vperm.xlu0 %2545, %v2522
  %v2547 = vpop.permute.xlu0 %2546
  %2550 = vset.pattern.permute.xlu0 0
  %2551 = vperm.xlu0 %2550, %v2527
  %v2552 = vpop.permute.xlu0 %2551
  %v2554 = vsub.f32 %v2420, %v2547
  %v2555 = vsub.f32 %v2425, %v2552
  %v2556 = vadd.f32 %v2542, 1e-05
  %v2557 = vadd.f32 %v2543, 1e-05
  %v2558 = vrsqrt.pop %v2556
  %v2559 = vrsqrt.pop %v2557
  %2561 = vset.pattern.permute.xlu0 1
  %2562 = vperm.xlu0 %2561, %v2558
  %v2563 = vpop.permute.xlu0 %2562
  %2566 = vset.pattern.permute.xlu0 1
  %2567 = vperm.xlu0 %2566, %v2559
  %v2568 = vpop.permute.xlu0 %2567
  %v2570 = vmul.f32 %v2554, %v2563
  %v2571 = vmul.f32 %v2555, %v2568
  %v2572 = vld [vmem:[%s9] sm:$0xff]
  %v2573 = vld [vmem:[%s9 + $0x8] sm:$0xff]
  %2575 = vset.pattern.permute.xlu0 0
  %2576 = vperm.xlu0 %2575, %v2572
  %v2577 = vpop.permute.xlu0 %2576
  %2580 = vset.pattern.permute.xlu0 0
  %2581 = vperm.xlu0 %2580, %v2573
  %v2582 = vpop.permute.xlu0 %2581
  %v2584 = vmul.f32 %v2570, %v2577
  %v2585 = vmul.f32 %v2571, %v2582
  %v2586 = vld [vmem:[%s11] sm:$0xff]
  %v2587 = vld [vmem:[%s11 + $0x8] sm:$0xff]
  %2589 = vset.pattern.permute.xlu0 0
  %2590 = vperm.xlu0 %2589, %v2586
  %v2591 = vpop.permute.xlu0 %2590
  %2594 = vset.pattern.permute.xlu0 0
  %2595 = vperm.xlu0 %2594, %v2587
  %v2596 = vpop.permute.xlu0 %2595
  %v2598 = vadd.f32 %v2584, %v2591
  %v2599 = vadd.f32 %v2585, %v2596
  %v2600 = vmax.f32 %v2598, 0.0
  %v2601 = vmax.f32 %v2599, 0.0
  %v2602 = vld [vmem:[%s13] sm:$0xf]
  %v2603 = vld [vmem:[%s13 + $0x4] sm:$0xf]
  %v2604 = vld [vmem:[%s13 + $0x8] sm:$0xf]
  %v2605 = vld [vmem:[%s13 + $0xc] sm:$0xf]
  %v2606 = vld [vmem:[%s13 + $0x10] sm:$0xf]
  %v2607 = vld [vmem:[%s13 + $0x14] sm:$0xf]
  %v2608 = vld [vmem:[%s13 + $0x18] sm:$0xf]
  %v2609 = vld [vmem:[%s13 + $0x1c] sm:$0xf]
  %v2610 = vunpack.c.l.bf16 %v2602
  %v2611 = vunpack.c.l.bf16 %v2603
  %v2612 = vunpack.c.l.bf16 %v2604
  %v2613 = vunpack.c.l.bf16 %v2605
  %v2614 = vunpack.c.l.bf16 %v2606
  %v2615 = vunpack.c.l.bf16 %v2607
  %v2616 = vunpack.c.l.bf16 %v2608
  %v2617 = vunpack.c.l.bf16 %v2609
  %v2619 = vsel %vm2428, %v2600, 0
  %v2622 = vsel %vm2428, %v2601, 0
  %2624 = vmatprep.subr.mxu0 0.0
  %2625 = vmatpush1.msra.mxu0 %v2610
  %2626 = vmatprep.subr.mxu0 0.0
  %2627 = vmatpush1.msra.mxu0 %v2611
  %2628 = vmatprep.subr.mxu0 0.0
  %2629 = vmatpush1.msra.mxu0 %v2612
  %2630 = vmatprep.subr.mxu0 0.0
  %2631 = vmatpush1.msra.mxu0 %v2613
  %2632 = vmatprep.subr.mxu0 0.0
  %2633 = vmatpush1.msra.mxu0 %v2614
  %2634 = vmatprep.subr.mxu0 0.0
  %2635 = vmatpush1.msra.mxu0 %v2615
  %2636 = vmatprep.subr.mxu0 0.0
  %2637 = vmatpush1.msra.mxu0 %v2616
  %2638 = vmatprep.subr.mxu0 0.0
  %2639 = vmatpush1.msra.mxu0 %v2617
  %2640 = vmatprep.subr.mxu0 0.0
  %2641 = vmatpush1.msra.mxu0 0.0
  %2642 = vmatprep.subr.mxu0 0.0
  %2643 = vmatpush1.msra.mxu0 0.0
  %2644 = vmatprep.subr.mxu0 0.0
  %2645 = vmatpush1.msra.mxu0 0.0
  %2646 = vmatprep.subr.mxu0 0.0
  %2647 = vmatpush1.msra.mxu0 0.0
  %2648 = vmatprep.subr.mxu0 0.0
  %2649 = vmatpush1.msra.mxu0 0.0
  %2650 = vmatprep.subr.mxu0 0.0
  %2651 = vmatpush1.msra.mxu0 0.0
  %2652 = vmatprep.subr.mxu0 0.0
  %2653 = vmatpush1.msra.mxu0 0.0
  %2654 = vmatprep.subr.mxu0 0.0
  %2655 = vmatpush1.msra.mxu0 0.0
  %2656 = vmatprep.subr.mxu0 0.0
  %2657 = vmatpush1.msra.mxu0 0.0
  %2658 = vmatprep.subr.mxu0 0.0
  %2659 = vmatpush1.msra.mxu0 0.0
  %2660 = vmatprep.subr.mxu0 0.0
  %2661 = vmatpush1.msra.mxu0 0.0
  %2662 = vmatprep.subr.mxu0 0.0
  %2663 = vmatpush1.msra.mxu0 0.0
  %2664 = vmatprep.subr.mxu0 0.0
  %2665 = vmatpush1.msra.mxu0 0.0
  %2666 = vmatprep.subr.mxu0 0.0
  %2667 = vmatpush1.msra.mxu0 0.0
  %2668 = vmatprep.subr.mxu0 0.0
  %2669 = vmatpush1.msra.mxu0 0.0
  %2670 = vmatprep.subr.mxu0 0.0
  %2671 = vmatpush1.msra.mxu0 0.0
  %2672 = vmatprep.subr.mxu0 0.0
  %2673 = vmatpush1.msra.mxu0 0.0
  %2674 = vmatprep.subr.mxu0 0.0
  %2675 = vmatpush1.msra.mxu0 0.0
  %2676 = vmatprep.subr.mxu0 0.0
  %2677 = vmatpush1.msra.mxu0 0.0
  %2678 = vmatprep.subr.mxu0 0.0
  %2679 = vmatpush1.msra.mxu0 0.0
  %2680 = vmatprep.subr.mxu0 0.0
  %2681 = vmatpush1.msra.mxu0 0.0
  %2682 = vmatprep.subr.mxu0 0.0
  %2683 = vmatpush1.msra.mxu0 0.0
  %2684 = vmatprep.subr.mxu0 0.0
  %2685 = vmatpush1.msra.mxu0 0.0
  %2686 = vmatprep.subr.mxu0 0.0
  %2687 = vmatpush1.msra.mxu0 0.0
  %2688 = vmatprep.mubr.f32.mxu0 0.0
  %2689 = vmatmul.mubr.f32.gmra.mrb[0].mxu0 %v2619
  %v2690 = vpop.f32.mrb[0].mxu0
  %v2691 = vadd.f32 0.0, %v2690
  %v2692 = vpop.f32.mrb[0].mxu0
  %2693 = vmatprep.mubr.f32.mxu0 0.0
  %2694 = vmatmul.mubr.f32.gmra.mrb[0].mxu0 %v2622
  %v2695 = vpop.f32.mrb[0].mxu0
  %v2696 = vadd.f32 0.0, %v2695
  %v2697 = vpop.f32.mrb[0].mxu0
  %2698 = vdwg.mxu0
  %s2699 = scalar_lea.vmem %s13, 32
  %v2700 = vld [vmem:[%s2699] sm:$0xf]
  %v2701 = vld [vmem:[%s2699 + $0x4] sm:$0xf]
  %v2702 = vld [vmem:[%s2699 + $0x8] sm:$0xf]
  %v2703 = vld [vmem:[%s2699 + $0xc] sm:$0xf]
  %v2704 = vld [vmem:[%s2699 + $0x10] sm:$0xf]
  %v2705 = vld [vmem:[%s2699 + $0x14] sm:$0xf]
  %v2706 = vld [vmem:[%s2699 + $0x18] sm:$0xf]
  %v2707 = vld [vmem:[%s2699 + $0x1c] sm:$0xf]
  %v2708 = vunpack.c.l.bf16 %v2700
  %v2709 = vunpack.c.l.bf16 %v2701
  %v2710 = vunpack.c.l.bf16 %v2702
  %v2711 = vunpack.c.l.bf16 %v2703
  %v2712 = vunpack.c.l.bf16 %v2704
  %v2713 = vunpack.c.l.bf16 %v2705
  %v2714 = vunpack.c.l.bf16 %v2706
  %v2715 = vunpack.c.l.bf16 %v2707
  %2716 = vmatprep.subr.mxu0 0.0
  %2717 = vmatpush1.msra.mxu0 %v2708
  %2718 = vmatprep.subr.mxu0 0.0
  %2719 = vmatpush1.msra.mxu0 %v2709
  %2720 = vmatprep.subr.mxu0 0.0
  %2721 = vmatpush1.msra.mxu0 %v2710
  %2722 = vmatprep.subr.mxu0 0.0
  %2723 = vmatpush1.msra.mxu0 %v2711
  %2724 = vmatprep.subr.mxu0 0.0
  %2725 = vmatpush1.msra.mxu0 %v2712
  %2726 = vmatprep.subr.mxu0 0.0
  %2727 = vmatpush1.msra.mxu0 %v2713
  %2728 = vmatprep.subr.mxu0 0.0
  %2729 = vmatpush1.msra.mxu0 %v2714
  %2730 = vmatprep.subr.mxu0 0.0
  %2731 = vmatpush1.msra.mxu0 %v2715
  %2732 = vmatprep.subr.mxu0 0.0
  %2733 = vmatpush1.msra.mxu0 0.0
  %2734 = vmatprep.subr.mxu0 0.0
  %2735 = vmatpush1.msra.mxu0 0.0
  %2736 = vmatprep.subr.mxu0 0.0
  %2737 = vmatpush1.msra.mxu0 0.0
  %2738 = vmatprep.subr.mxu0 0.0
  %2739 = vmatpush1.msra.mxu0 0.0
  %2740 = vmatprep.subr.mxu0 0.0
  %2741 = vmatpush1.msra.mxu0 0.0
  %2742 = vmatprep.subr.mxu0 0.0
  %2743 = vmatpush1.msra.mxu0 0.0
  %2744 = vmatprep.subr.mxu0 0.0
  %2745 = vmatpush1.msra.mxu0 0.0
  %2746 = vmatprep.subr.mxu0 0.0
  %2747 = vmatpush1.msra.mxu0 0.0
  %2748 = vmatprep.subr.mxu0 0.0
  %2749 = vmatpush1.msra.mxu0 0.0
  %2750 = vmatprep.subr.mxu0 0.0
  %2751 = vmatpush1.msra.mxu0 0.0
  %2752 = vmatprep.subr.mxu0 0.0
  %2753 = vmatpush1.msra.mxu0 0.0
  %2754 = vmatprep.subr.mxu0 0.0
  %2755 = vmatpush1.msra.mxu0 0.0
  %2756 = vmatprep.subr.mxu0 0.0
  %2757 = vmatpush1.msra.mxu0 0.0
  %2758 = vmatprep.subr.mxu0 0.0
  %2759 = vmatpush1.msra.mxu0 0.0
  %2760 = vmatprep.subr.mxu0 0.0
  %2761 = vmatpush1.msra.mxu0 0.0
  %2762 = vmatprep.subr.mxu0 0.0
  %2763 = vmatpush1.msra.mxu0 0.0
  %2764 = vmatprep.subr.mxu0 0.0
  %2765 = vmatpush1.msra.mxu0 0.0
  %2766 = vmatprep.subr.mxu0 0.0
  %2767 = vmatpush1.msra.mxu0 0.0
  %2768 = vmatprep.subr.mxu0 0.0
  %2769 = vmatpush1.msra.mxu0 0.0
  %2770 = vmatprep.subr.mxu0 0.0
  %2771 = vmatpush1.msra.mxu0 0.0
  %2772 = vmatprep.subr.mxu0 0.0
  %2773 = vmatpush1.msra.mxu0 0.0
  %2774 = vmatprep.subr.mxu0 0.0
  %2775 = vmatpush1.msra.mxu0 0.0
  %2776 = vmatprep.subr.mxu0 0.0
  %2777 = vmatpush1.msra.mxu0 0.0
  %2778 = vmatprep.subr.mxu0 0.0
  %2779 = vmatpush1.msra.mxu0 0.0
  %2780 = vmatprep.mubr.f32.mxu0 0.0
  %2781 = vmatmul.mubr.f32.gmra.mrb[0].mxu0 %v2619
  %v2782 = vpop.f32.mrb[0].mxu0
  %v2783 = vadd.f32 0.0, %v2782
  %v2784 = vpop.f32.mrb[0].mxu0
  %2785 = vmatprep.mubr.f32.mxu0 0.0
  %2786 = vmatmul.mubr.f32.gmra.mrb[0].mxu0 %v2622
  %v2787 = vpop.f32.mrb[0].mxu0
  %v2788 = vadd.f32 0.0, %v2787
  %v2789 = vpop.f32.mrb[0].mxu0
  %2790 = vdwg.mxu0
  %s2791 = scalar_lea.vmem %s13, 64
  %v2792 = vld [vmem:[%s2791] sm:$0xf]
  %v2793 = vld [vmem:[%s2791 + $0x4] sm:$0xf]
  %v2794 = vld [vmem:[%s2791 + $0x8] sm:$0xf]
  %v2795 = vld [vmem:[%s2791 + $0xc] sm:$0xf]
  %v2796 = vld [vmem:[%s2791 + $0x10] sm:$0xf]
  %v2797 = vld [vmem:[%s2791 + $0x14] sm:$0xf]
  %v2798 = vld [vmem:[%s2791 + $0x18] sm:$0xf]
  %v2799 = vld [vmem:[%s2791 + $0x1c] sm:$0xf]
  %v2800 = vunpack.c.l.bf16 %v2792
  %v2801 = vunpack.c.l.bf16 %v2793
  %v2802 = vunpack.c.l.bf16 %v2794
  %v2803 = vunpack.c.l.bf16 %v2795
  %v2804 = vunpack.c.l.bf16 %v2796
  %v2805 = vunpack.c.l.bf16 %v2797
  %v2806 = vunpack.c.l.bf16 %v2798
  %v2807 = vunpack.c.l.bf16 %v2799
  %2808 = vmatprep.subr.mxu0 0.0
  %2809 = vmatpush1.msra.mxu0 %v2800
  %2810 = vmatprep.subr.mxu0 0.0
  %2811 = vmatpush1.msra.mxu0 %v2801
  %2812 = vmatprep.subr.mxu0 0.0
  %2813 = vmatpush1.msra.mxu0 %v2802
  %2814 = vmatprep.subr.mxu0 0.0
  %2815 = vmatpush1.msra.mxu0 %v2803
  %2816 = vmatprep.subr.mxu0 0.0
  %2817 = vmatpush1.msra.mxu0 %v2804
  %2818 = vmatprep.subr.mxu0 0.0
  %2819 = vmatpush1.msra.mxu0 %v2805
  %2820 = vmatprep.subr.mxu0 0.0
  %2821 = vmatpush1.msra.mxu0 %v2806
  %2822 = vmatprep.subr.mxu0 0.0
  %2823 = vmatpush1.msra.mxu0 %v2807
  %2824 = vmatprep.subr.mxu0 0.0
  %2825 = vmatpush1.msra.mxu0 0.0
  %2826 = vmatprep.subr.mxu0 0.0
  %2827 = vmatpush1.msra.mxu0 0.0
  %2828 = vmatprep.subr.mxu0 0.0
  %2829 = vmatpush1.msra.mxu0 0.0
  %2830 = vmatprep.subr.mxu0 0.0
  %2831 = vmatpush1.msra.mxu0 0.0
  %2832 = vmatprep.subr.mxu0 0.0
  %2833 = vmatpush1.msra.mxu0 0.0
  %2834 = vmatprep.subr.mxu0 0.0
  %2835 = vmatpush1.msra.mxu0 0.0
  %2836 = vmatprep.subr.mxu0 0.0
  %2837 = vmatpush1.msra.mxu0 0.0
  %2838 = vmatprep.subr.mxu0 0.0
  %2839 = vmatpush1.msra.mxu0 0.0
  %2840 = vmatprep.subr.mxu0 0.0
  %2841 = vmatpush1.msra.mxu0 0.0
  %2842 = vmatprep.subr.mxu0 0.0
  %2843 = vmatpush1.msra.mxu0 0.0
  %2844 = vmatprep.subr.mxu0 0.0
  %2845 = vmatpush1.msra.mxu0 0.0
  %2846 = vmatprep.subr.mxu0 0.0
  %2847 = vmatpush1.msra.mxu0 0.0
  %2848 = vmatprep.subr.mxu0 0.0
  %2849 = vmatpush1.msra.mxu0 0.0
  %2850 = vmatprep.subr.mxu0 0.0
  %2851 = vmatpush1.msra.mxu0 0.0
  %2852 = vmatprep.subr.mxu0 0.0
  %2853 = vmatpush1.msra.mxu0 0.0
  %2854 = vmatprep.subr.mxu0 0.0
  %2855 = vmatpush1.msra.mxu0 0.0
  %2856 = vmatprep.subr.mxu0 0.0
  %2857 = vmatpush1.msra.mxu0 0.0
  %2858 = vmatprep.subr.mxu0 0.0
  %2859 = vmatpush1.msra.mxu0 0.0
  %2860 = vmatprep.subr.mxu0 0.0
  %2861 = vmatpush1.msra.mxu0 0.0
  %2862 = vmatprep.subr.mxu0 0.0
  %2863 = vmatpush1.msra.mxu0 0.0
  %2864 = vmatprep.subr.mxu0 0.0
  %2865 = vmatpush1.msra.mxu0 0.0
  %2866 = vmatprep.subr.mxu0 0.0
  %2867 = vmatpush1.msra.mxu0 0.0
  %2868 = vmatprep.subr.mxu0 0.0
  %2869 = vmatpush1.msra.mxu0 0.0
  %2870 = vmatprep.subr.mxu0 0.0
  %2871 = vmatpush1.msra.mxu0 0.0
  %2872 = vmatprep.mubr.f32.mxu0 0.0
  %2873 = vmatmul.mubr.f32.gmra.mrb[0].mxu0 %v2619
  %v2874 = vpop.f32.mrb[0].mxu0
  %v2875 = vadd.f32 0.0, %v2874
  %v2876 = vpop.f32.mrb[0].mxu0
  %2877 = vmatprep.mubr.f32.mxu0 0.0
  %2878 = vmatmul.mubr.f32.gmra.mrb[0].mxu0 %v2622
  %v2879 = vpop.f32.mrb[0].mxu0
  %v2880 = vadd.f32 0.0, %v2879
  %v2881 = vpop.f32.mrb[0].mxu0
  %2882 = vdwg.mxu0
  %s2883 = scalar_lea.vmem %s13, 96
  %v2884 = vld [vmem:[%s2883] sm:$0xf]
  %v2885 = vld [vmem:[%s2883 + $0x4] sm:$0xf]
  %v2886 = vld [vmem:[%s2883 + $0x8] sm:$0xf]
  %v2887 = vld [vmem:[%s2883 + $0xc] sm:$0xf]
  %v2888 = vld [vmem:[%s2883 + $0x10] sm:$0xf]
  %v2889 = vld [vmem:[%s2883 + $0x14] sm:$0xf]
  %v2890 = vld [vmem:[%s2883 + $0x18] sm:$0xf]
  %v2891 = vld [vmem:[%s2883 + $0x1c] sm:$0xf]
  %v2892 = vunpack.c.l.bf16 %v2884
  %v2893 = vunpack.c.l.bf16 %v2885
  %v2894 = vunpack.c.l.bf16 %v2886
  %v2895 = vunpack.c.l.bf16 %v2887
  %v2896 = vunpack.c.l.bf16 %v2888
  %v2897 = vunpack.c.l.bf16 %v2889
  %v2898 = vunpack.c.l.bf16 %v2890
  %v2899 = vunpack.c.l.bf16 %v2891
  %2900 = vmatprep.subr.mxu0 0.0
  %2901 = vmatpush1.msra.mxu0 %v2892
  %2902 = vmatprep.subr.mxu0 0.0
  %2903 = vmatpush1.msra.mxu0 %v2893
  %2904 = vmatprep.subr.mxu0 0.0
  %2905 = vmatpush1.msra.mxu0 %v2894
  %2906 = vmatprep.subr.mxu0 0.0
  %2907 = vmatpush1.msra.mxu0 %v2895
  %2908 = vmatprep.subr.mxu0 0.0
  %2909 = vmatpush1.msra.mxu0 %v2896
  %2910 = vmatprep.subr.mxu0 0.0
  %2911 = vmatpush1.msra.mxu0 %v2897
  %2912 = vmatprep.subr.mxu0 0.0
  %2913 = vmatpush1.msra.mxu0 %v2898
  %2914 = vmatprep.subr.mxu0 0.0
  %2915 = vmatpush1.msra.mxu0 %v2899
  %2916 = vmatprep.subr.mxu0 0.0
  %2917 = vmatpush1.msra.mxu0 0.0
  %2918 = vmatprep.subr.mxu0 0.0
  %2919 = vmatpush1.msra.mxu0 0.0
  %2920 = vmatprep.subr.mxu0 0.0
  %2921 = vmatpush1.msra.mxu0 0.0
  %2922 = vmatprep.subr.mxu0 0.0
  %2923 = vmatpush1.msra.mxu0 0.0
  %2924 = vmatprep.subr.mxu0 0.0
  %2925 = vmatpush1.msra.mxu0 0.0
  %2926 = vmatprep.subr.mxu0 0.0
  %2927 = vmatpush1.msra.mxu0 0.0
  %2928 = vmatprep.subr.mxu0 0.0
  %2929 = vmatpush1.msra.mxu0 0.0
  %2930 = vmatprep.subr.mxu0 0.0
  %2931 = vmatpush1.msra.mxu0 0.0
  %2932 = vmatprep.subr.mxu0 0.0
  %2933 = vmatpush1.msra.mxu0 0.0
  %2934 = vmatprep.subr.mxu0 0.0
  %2935 = vmatpush1.msra.mxu0 0.0
  %2936 = vmatprep.subr.mxu0 0.0
  %2937 = vmatpush1.msra.mxu0 0.0
  %2938 = vmatprep.subr.mxu0 0.0
  %2939 = vmatpush1.msra.mxu0 0.0
  %2940 = vmatprep.subr.mxu0 0.0
  %2941 = vmatpush1.msra.mxu0 0.0
  %2942 = vmatprep.subr.mxu0 0.0
  %2943 = vmatpush1.msra.mxu0 0.0
  %2944 = vmatprep.subr.mxu0 0.0
  %2945 = vmatpush1.msra.mxu0 0.0
  %2946 = vmatprep.subr.mxu0 0.0
  %2947 = vmatpush1.msra.mxu0 0.0
  %2948 = vmatprep.subr.mxu0 0.0
  %2949 = vmatpush1.msra.mxu0 0.0
  %2950 = vmatprep.subr.mxu0 0.0
  %2951 = vmatpush1.msra.mxu0 0.0
  %2952 = vmatprep.subr.mxu0 0.0
  %2953 = vmatpush1.msra.mxu0 0.0
  %2954 = vmatprep.subr.mxu0 0.0
  %2955 = vmatpush1.msra.mxu0 0.0
  %2956 = vmatprep.subr.mxu0 0.0
  %2957 = vmatpush1.msra.mxu0 0.0
  %2958 = vmatprep.subr.mxu0 0.0
  %2959 = vmatpush1.msra.mxu0 0.0
  %2960 = vmatprep.subr.mxu0 0.0
  %2961 = vmatpush1.msra.mxu0 0.0
  %2962 = vmatprep.subr.mxu0 0.0
  %2963 = vmatpush1.msra.mxu0 0.0
  %2964 = vmatprep.mubr.f32.mxu0 0.0
  %2965 = vmatmul.mubr.f32.gmra.mrb[0].mxu0 %v2619
  %v2966 = vpop.f32.mrb[0].mxu0
  %v2967 = vadd.f32 0.0, %v2966
  %v2968 = vpop.f32.mrb[0].mxu0
  %2969 = vmatprep.mubr.f32.mxu0 0.0
  %2970 = vmatmul.mubr.f32.gmra.mrb[0].mxu0 %v2622
  %v2971 = vpop.f32.mrb[0].mxu0
  %v2972 = vadd.f32 0.0, %v2971
  %v2973 = vpop.f32.mrb[0].mxu0
  %2974 = vdwg.mxu0
  %s2975 = scalar_lea.vmem %s13, 128
  %v2976 = vld [vmem:[%s2975] sm:$0xf]
  %v2977 = vld [vmem:[%s2975 + $0x4] sm:$0xf]
  %v2978 = vld [vmem:[%s2975 + $0x8] sm:$0xf]
  %v2979 = vld [vmem:[%s2975 + $0xc] sm:$0xf]
  %v2980 = vld [vmem:[%s2975 + $0x10] sm:$0xf]
  %v2981 = vld [vmem:[%s2975 + $0x14] sm:$0xf]
  %v2982 = vld [vmem:[%s2975 + $0x18] sm:$0xf]
  %v2983 = vld [vmem:[%s2975 + $0x1c] sm:$0xf]
  %v2984 = vunpack.c.l.bf16 %v2976
  %v2985 = vunpack.c.l.bf16 %v2977
  %v2986 = vunpack.c.l.bf16 %v2978
  %v2987 = vunpack.c.l.bf16 %v2979
  %v2988 = vunpack.c.l.bf16 %v2980
  %v2989 = vunpack.c.l.bf16 %v2981
  %v2990 = vunpack.c.l.bf16 %v2982
  %v2991 = vunpack.c.l.bf16 %v2983
  %2992 = vmatprep.subr.mxu0 0.0
  %2993 = vmatpush1.msra.mxu0 %v2984
  %2994 = vmatprep.subr.mxu0 0.0
  %2995 = vmatpush1.msra.mxu0 %v2985
  %2996 = vmatprep.subr.mxu0 0.0
  %2997 = vmatpush1.msra.mxu0 %v2986
  %2998 = vmatprep.subr.mxu0 0.0
  %2999 = vmatpush1.msra.mxu0 %v2987
  %3000 = vmatprep.subr.mxu0 0.0
  %3001 = vmatpush1.msra.mxu0 %v2988
  %3002 = vmatprep.subr.mxu0 0.0
  %3003 = vmatpush1.msra.mxu0 %v2989
  %3004 = vmatprep.subr.mxu0 0.0
  %3005 = vmatpush1.msra.mxu0 %v2990
  %3006 = vmatprep.subr.mxu0 0.0
  %3007 = vmatpush1.msra.mxu0 %v2991
  %3008 = vmatprep.subr.mxu0 0.0
  %3009 = vmatpush1.msra.mxu0 0.0
  %3010 = vmatprep.subr.mxu0 0.0
  %3011 = vmatpush1.msra.mxu0 0.0
  %3012 = vmatprep.subr.mxu0 0.0
  %3013 = vmatpush1.msra.mxu0 0.0
  %3014 = vmatprep.subr.mxu0 0.0
  %3015 = vmatpush1.msra.mxu0 0.0
  %3016 = vmatprep.subr.mxu0 0.0
  %3017 = vmatpush1.msra.mxu0 0.0
  %3018 = vmatprep.subr.mxu0 0.0
  %3019 = vmatpush1.msra.mxu0 0.0
  %3020 = vmatprep.subr.mxu0 0.0
  %3021 = vmatpush1.msra.mxu0 0.0
  %3022 = vmatprep.subr.mxu0 0.0
  %3023 = vmatpush1.msra.mxu0 0.0
  %3024 = vmatprep.subr.mxu0 0.0
  %3025 = vmatpush1.msra.mxu0 0.0
  %3026 = vmatprep.subr.mxu0 0.0
  %3027 = vmatpush1.msra.mxu0 0.0
  %3028 = vmatprep.subr.mxu0 0.0
  %3029 = vmatpush1.msra.mxu0 0.0
  %3030 = vmatprep.subr.mxu0 0.0
  %3031 = vmatpush1.msra.mxu0 0.0
  %3032 = vmatprep.subr.mxu0 0.0
  %3033 = vmatpush1.msra.mxu0 0.0
  %3034 = vmatprep.subr.mxu0 0.0
  %3035 = vmatpush1.msra.mxu0 0.0
  %3036 = vmatprep.subr.mxu0 0.0
  %3037 = vmatpush1.msra.mxu0 0.0
  %3038 = vmatprep.subr.mxu0 0.0
  %3039 = vmatpush1.msra.mxu0 0.0
  %3040 = vmatprep.subr.mxu0 0.0
  %3041 = vmatpush1.msra.mxu0 0.0
  %3042 = vmatprep.subr.mxu0 0.0
  %3043 = vmatpush1.msra.mxu0 0.0
  %3044 = vmatprep.subr.mxu0 0.0
  %3045 = vmatpush1.msra.mxu0 0.0
  %3046 = vmatprep.subr.mxu0 0.0
  %3047 = vmatpush1.msra.mxu0 0.0
  %3048 = vmatprep.subr.mxu0 0.0
  %3049 = vmatpush1.msra.mxu0 0.0
  %3050 = vmatprep.subr.mxu0 0.0
  %3051 = vmatpush1.msra.mxu0 0.0
  %3052 = vmatprep.subr.mxu0 0.0
  %3053 = vmatpush1.msra.mxu0 0.0
  %3054 = vmatprep.subr.mxu0 0.0
  %3055 = vmatpush1.msra.mxu0 0.0
  %3056 = vmatprep.mubr.f32.mxu0 0.0
  %3057 = vmatmul.mubr.f32.gmra.mrb[0].mxu0 %v2619
  %v3058 = vpop.f32.mrb[0].mxu0
  %v3059 = vadd.f32 0.0, %v3058
  %v3060 = vpop.f32.mrb[0].mxu0
  %3061 = vmatprep.mubr.f32.mxu0 0.0
  %3062 = vmatmul.mubr.f32.gmra.mrb[0].mxu0 %v2622
  %v3063 = vpop.f32.mrb[0].mxu0
  %v3064 = vadd.f32 0.0, %v3063
  %v3065 = vpop.f32.mrb[0].mxu0
  %3066 = vdwg.mxu0
  %s3067 = scalar_lea.vmem %s13, 160
  %v3068 = vld [vmem:[%s3067] sm:$0xf]
  %v3069 = vld [vmem:[%s3067 + $0x4] sm:$0xf]
  %v3070 = vld [vmem:[%s3067 + $0x8] sm:$0xf]
  %v3071 = vld [vmem:[%s3067 + $0xc] sm:$0xf]
  %v3072 = vld [vmem:[%s3067 + $0x10] sm:$0xf]
  %v3073 = vld [vmem:[%s3067 + $0x14] sm:$0xf]
  %v3074 = vld [vmem:[%s3067 + $0x18] sm:$0xf]
  %v3075 = vld [vmem:[%s3067 + $0x1c] sm:$0xf]
  %v3076 = vunpack.c.l.bf16 %v3068
  %v3077 = vunpack.c.l.bf16 %v3069
  %v3078 = vunpack.c.l.bf16 %v3070
  %v3079 = vunpack.c.l.bf16 %v3071
  %v3080 = vunpack.c.l.bf16 %v3072
  %v3081 = vunpack.c.l.bf16 %v3073
  %v3082 = vunpack.c.l.bf16 %v3074
  %v3083 = vunpack.c.l.bf16 %v3075
  %3084 = vmatprep.subr.mxu0 0.0
  %3085 = vmatpush1.msra.mxu0 %v3076
  %3086 = vmatprep.subr.mxu0 0.0
  %3087 = vmatpush1.msra.mxu0 %v3077
  %3088 = vmatprep.subr.mxu0 0.0
  %3089 = vmatpush1.msra.mxu0 %v3078
  %3090 = vmatprep.subr.mxu0 0.0
  %3091 = vmatpush1.msra.mxu0 %v3079
  %3092 = vmatprep.subr.mxu0 0.0
  %3093 = vmatpush1.msra.mxu0 %v3080
  %3094 = vmatprep.subr.mxu0 0.0
  %3095 = vmatpush1.msra.mxu0 %v3081
  %3096 = vmatprep.subr.mxu0 0.0
  %3097 = vmatpush1.msra.mxu0 %v3082
  %3098 = vmatprep.subr.mxu0 0.0
  %3099 = vmatpush1.msra.mxu0 %v3083
  %3100 = vmatprep.subr.mxu0 0.0
  %3101 = vmatpush1.msra.mxu0 0.0
  %3102 = vmatprep.subr.mxu0 0.0
  %3103 = vmatpush1.msra.mxu0 0.0
  %3104 = vmatprep.subr.mxu0 0.0
  %3105 = vmatpush1.msra.mxu0 0.0
  %3106 = vmatprep.subr.mxu0 0.0
  %3107 = vmatpush1.msra.mxu0 0.0
  %3108 = vmatprep.subr.mxu0 0.0
  %3109 = vmatpush1.msra.mxu0 0.0
  %3110 = vmatprep.subr.mxu0 0.0
  %3111 = vmatpush1.msra.mxu0 0.0
  %3112 = vmatprep.subr.mxu0 0.0
  %3113 = vmatpush1.msra.mxu0 0.0
  %3114 = vmatprep.subr.mxu0 0.0
  %3115 = vmatpush1.msra.mxu0 0.0
  %3116 = vmatprep.subr.mxu0 0.0
  %3117 = vmatpush1.msra.mxu0 0.0
  %3118 = vmatprep.subr.mxu0 0.0
  %3119 = vmatpush1.msra.mxu0 0.0
  %3120 = vmatprep.subr.mxu0 0.0
  %3121 = vmatpush1.msra.mxu0 0.0
  %3122 = vmatprep.subr.mxu0 0.0
  %3123 = vmatpush1.msra.mxu0 0.0
  %3124 = vmatprep.subr.mxu0 0.0
  %3125 = vmatpush1.msra.mxu0 0.0
  %3126 = vmatprep.subr.mxu0 0.0
  %3127 = vmatpush1.msra.mxu0 0.0
  %3128 = vmatprep.subr.mxu0 0.0
  %3129 = vmatpush1.msra.mxu0 0.0
  %3130 = vmatprep.subr.mxu0 0.0
  %3131 = vmatpush1.msra.mxu0 0.0
  %3132 = vmatprep.subr.mxu0 0.0
  %3133 = vmatpush1.msra.mxu0 0.0
  %3134 = vmatprep.subr.mxu0 0.0
  %3135 = vmatpush1.msra.mxu0 0.0
  %3136 = vmatprep.subr.mxu0 0.0
  %3137 = vmatpush1.msra.mxu0 0.0
  %3138 = vmatprep.subr.mxu0 0.0
  %3139 = vmatpush1.msra.mxu0 0.0
  %3140 = vmatprep.subr.mxu0 0.0
  %3141 = vmatpush1.msra.mxu0 0.0
  %3142 = vmatprep.subr.mxu0 0.0
  %3143 = vmatpush1.msra.mxu0 0.0
  %3144 = vmatprep.subr.mxu0 0.0
  %3145 = vmatpush1.msra.mxu0 0.0
  %3146 = vmatprep.subr.mxu0 0.0
  %3147 = vmatpush1.msra.mxu0 0.0
  %3148 = vmatprep.mubr.f32.mxu0 0.0
  %3149 = vmatmul.mubr.f32.gmra.mrb[0].mxu0 %v2619
  %v3150 = vpop.f32.mrb[0].mxu0
  %v3151 = vadd.f32 0.0, %v3150
  %v3152 = vpop.f32.mrb[0].mxu0
  %3153 = vmatprep.mubr.f32.mxu0 0.0
  %3154 = vmatmul.mubr.f32.gmra.mrb[0].mxu0 %v2622
  %v3155 = vpop.f32.mrb[0].mxu0
  %v3156 = vadd.f32 0.0, %v3155
  %v3157 = vpop.f32.mrb[0].mxu0
  %3158 = vdwg.mxu0
  %s3159 = scalar_lea.vmem %s13, 192
  %v3160 = vld [vmem:[%s3159] sm:$0xf]
  %v3161 = vld [vmem:[%s3159 + $0x4] sm:$0xf]
  %v3162 = vld [vmem:[%s3159 + $0x8] sm:$0xf]
  %v3163 = vld [vmem:[%s3159 + $0xc] sm:$0xf]
  %v3164 = vld [vmem:[%s3159 + $0x10] sm:$0xf]
  %v3165 = vld [vmem:[%s3159 + $0x14] sm:$0xf]
  %v3166 = vld [vmem:[%s3159 + $0x18] sm:$0xf]
  %v3167 = vld [vmem:[%s3159 + $0x1c] sm:$0xf]
  %v3168 = vunpack.c.l.bf16 %v3160
  %v3169 = vunpack.c.l.bf16 %v3161
  %v3170 = vunpack.c.l.bf16 %v3162
  %v3171 = vunpack.c.l.bf16 %v3163
  %v3172 = vunpack.c.l.bf16 %v3164
  %v3173 = vunpack.c.l.bf16 %v3165
  %v3174 = vunpack.c.l.bf16 %v3166
  %v3175 = vunpack.c.l.bf16 %v3167
  %3176 = vmatprep.subr.mxu0 0.0
  %3177 = vmatpush1.msra.mxu0 %v3168
  %3178 = vmatprep.subr.mxu0 0.0
  %3179 = vmatpush1.msra.mxu0 %v3169
  %3180 = vmatprep.subr.mxu0 0.0
  %3181 = vmatpush1.msra.mxu0 %v3170
  %3182 = vmatprep.subr.mxu0 0.0
  %3183 = vmatpush1.msra.mxu0 %v3171
  %3184 = vmatprep.subr.mxu0 0.0
  %3185 = vmatpush1.msra.mxu0 %v3172
  %3186 = vmatprep.subr.mxu0 0.0
  %3187 = vmatpush1.msra.mxu0 %v3173
  %3188 = vmatprep.subr.mxu0 0.0
  %3189 = vmatpush1.msra.mxu0 %v3174
  %3190 = vmatprep.subr.mxu0 0.0
  %3191 = vmatpush1.msra.mxu0 %v3175
  %3192 = vmatprep.subr.mxu0 0.0
  %3193 = vmatpush1.msra.mxu0 0.0
  %3194 = vmatprep.subr.mxu0 0.0
  %3195 = vmatpush1.msra.mxu0 0.0
  %3196 = vmatprep.subr.mxu0 0.0
  %3197 = vmatpush1.msra.mxu0 0.0
  %3198 = vmatprep.subr.mxu0 0.0
  %3199 = vmatpush1.msra.mxu0 0.0
  %3200 = vmatprep.subr.mxu0 0.0
  %3201 = vmatpush1.msra.mxu0 0.0
  %3202 = vmatprep.subr.mxu0 0.0
  %3203 = vmatpush1.msra.mxu0 0.0
  %3204 = vmatprep.subr.mxu0 0.0
  %3205 = vmatpush1.msra.mxu0 0.0
  %3206 = vmatprep.subr.mxu0 0.0
  %3207 = vmatpush1.msra.mxu0 0.0
  %3208 = vmatprep.subr.mxu0 0.0
  %3209 = vmatpush1.msra.mxu0 0.0
  %3210 = vmatprep.subr.mxu0 0.0
  %3211 = vmatpush1.msra.mxu0 0.0
  %3212 = vmatprep.subr.mxu0 0.0
  %3213 = vmatpush1.msra.mxu0 0.0
  %3214 = vmatprep.subr.mxu0 0.0
  %3215 = vmatpush1.msra.mxu0 0.0
  %3216 = vmatprep.subr.mxu0 0.0
  %3217 = vmatpush1.msra.mxu0 0.0
  %3218 = vmatprep.subr.mxu0 0.0
  %3219 = vmatpush1.msra.mxu0 0.0
  %3220 = vmatprep.subr.mxu0 0.0
  %3221 = vmatpush1.msra.mxu0 0.0
  %3222 = vmatprep.subr.mxu0 0.0
  %3223 = vmatpush1.msra.mxu0 0.0
  %3224 = vmatprep.subr.mxu0 0.0
  %3225 = vmatpush1.msra.mxu0 0.0
  %3226 = vmatprep.subr.mxu0 0.0
  %3227 = vmatpush1.msra.mxu0 0.0
  %3228 = vmatprep.subr.mxu0 0.0
  %3229 = vmatpush1.msra.mxu0 0.0
  %3230 = vmatprep.subr.mxu0 0.0
  %3231 = vmatpush1.msra.mxu0 0.0
  %3232 = vmatprep.subr.mxu0 0.0
  %3233 = vmatpush1.msra.mxu0 0.0
  %3234 = vmatprep.subr.mxu0 0.0
  %3235 = vmatpush1.msra.mxu0 0.0
  %3236 = vmatprep.subr.mxu0 0.0
  %3237 = vmatpush1.msra.mxu0 0.0
  %3238 = vmatprep.subr.mxu0 0.0
  %3239 = vmatpush1.msra.mxu0 0.0
  %3240 = vmatprep.mubr.f32.mxu0 0.0
  %3241 = vmatmul.mubr.f32.gmra.mrb[0].mxu0 %v2619
  %v3242 = vpop.f32.mrb[0].mxu0
  %v3243 = vadd.f32 0.0, %v3242
  %v3244 = vpop.f32.mrb[0].mxu0
  %3245 = vmatprep.mubr.f32.mxu0 0.0
  %3246 = vmatmul.mubr.f32.gmra.mrb[0].mxu0 %v2622
  %v3247 = vpop.f32.mrb[0].mxu0
  %v3248 = vadd.f32 0.0, %v3247
  %v3249 = vpop.f32.mrb[0].mxu0
  %3250 = vdwg.mxu0
  %s3251 = scalar_lea.vmem %s13, 224
  %v3252 = vld [vmem:[%s3251] sm:$0xf]
  %v3253 = vld [vmem:[%s3251 + $0x4] sm:$0xf]
  %v3254 = vld [vmem:[%s3251 + $0x8] sm:$0xf]
  %v3255 = vld [vmem:[%s3251 + $0xc] sm:$0xf]
  %v3256 = vld [vmem:[%s3251 + $0x10] sm:$0xf]
  %v3257 = vld [vmem:[%s3251 + $0x14] sm:$0xf]
  %v3258 = vld [vmem:[%s3251 + $0x18] sm:$0xf]
  %v3259 = vld [vmem:[%s3251 + $0x1c] sm:$0xf]
  %v3260 = vunpack.c.l.bf16 %v3252
  %v3261 = vunpack.c.l.bf16 %v3253
  %v3262 = vunpack.c.l.bf16 %v3254
  %v3263 = vunpack.c.l.bf16 %v3255
  %v3264 = vunpack.c.l.bf16 %v3256
  %v3265 = vunpack.c.l.bf16 %v3257
  %v3266 = vunpack.c.l.bf16 %v3258
  %v3267 = vunpack.c.l.bf16 %v3259
  %3268 = vmatprep.subr.mxu0 0.0
  %3269 = vmatpush1.msra.mxu0 %v3260
  %3270 = vmatprep.subr.mxu0 0.0
  %3271 = vmatpush1.msra.mxu0 %v3261
  %3272 = vmatprep.subr.mxu0 0.0
  %3273 = vmatpush1.msra.mxu0 %v3262
  %3274 = vmatprep.subr.mxu0 0.0
  %3275 = vmatpush1.msra.mxu0 %v3263
  %3276 = vmatprep.subr.mxu0 0.0
  %3277 = vmatpush1.msra.mxu0 %v3264
  %3278 = vmatprep.subr.mxu0 0.0
  %3279 = vmatpush1.msra.mxu0 %v3265
  %3280 = vmatprep.subr.mxu0 0.0
  %3281 = vmatpush1.msra.mxu0 %v3266
  %3282 = vmatprep.subr.mxu0 0.0
  %3283 = vmatpush1.msra.mxu0 %v3267
  %3284 = vmatprep.subr.mxu0 0.0
  %3285 = vmatpush1.msra.mxu0 0.0
  %3286 = vmatprep.subr.mxu0 0.0
  %3287 = vmatpush1.msra.mxu0 0.0
  %3288 = vmatprep.subr.mxu0 0.0
  %3289 = vmatpush1.msra.mxu0 0.0
  %3290 = vmatprep.subr.mxu0 0.0
  %3291 = vmatpush1.msra.mxu0 0.0
  %3292 = vmatprep.subr.mxu0 0.0
  %3293 = vmatpush1.msra.mxu0 0.0
  %3294 = vmatprep.subr.mxu0 0.0
  %3295 = vmatpush1.msra.mxu0 0.0
  %3296 = vmatprep.subr.mxu0 0.0
  %3297 = vmatpush1.msra.mxu0 0.0
  %3298 = vmatprep.subr.mxu0 0.0
  %3299 = vmatpush1.msra.mxu0 0.0
  %3300 = vmatprep.subr.mxu0 0.0
  %3301 = vmatpush1.msra.mxu0 0.0
  %3302 = vmatprep.subr.mxu0 0.0
  %3303 = vmatpush1.msra.mxu0 0.0
  %3304 = vmatprep.subr.mxu0 0.0
  %3305 = vmatpush1.msra.mxu0 0.0
  %3306 = vmatprep.subr.mxu0 0.0
  %3307 = vmatpush1.msra.mxu0 0.0
  %3308 = vmatprep.subr.mxu0 0.0
  %3309 = vmatpush1.msra.mxu0 0.0
  %3310 = vmatprep.subr.mxu0 0.0
  %3311 = vmatpush1.msra.mxu0 0.0
  %3312 = vmatprep.subr.mxu0 0.0
  %3313 = vmatpush1.msra.mxu0 0.0
  %3314 = vmatprep.subr.mxu0 0.0
  %3315 = vmatpush1.msra.mxu0 0.0
  %3316 = vmatprep.subr.mxu0 0.0
  %3317 = vmatpush1.msra.mxu0 0.0
  %3318 = vmatprep.subr.mxu0 0.0
  %3319 = vmatpush1.msra.mxu0 0.0
  %3320 = vmatprep.subr.mxu0 0.0
  %3321 = vmatpush1.msra.mxu0 0.0
  %3322 = vmatprep.subr.mxu0 0.0
  %3323 = vmatpush1.msra.mxu0 0.0
  %3324 = vmatprep.subr.mxu0 0.0
  %3325 = vmatpush1.msra.mxu0 0.0
  %3326 = vmatprep.subr.mxu0 0.0
  %3327 = vmatpush1.msra.mxu0 0.0
  %3328 = vmatprep.subr.mxu0 0.0
  %3329 = vmatpush1.msra.mxu0 0.0
  %3330 = vmatprep.subr.mxu0 0.0
  %3331 = vmatpush1.msra.mxu0 0.0
  %3332 = vmatprep.mubr.f32.mxu0 0.0
  %3333 = vmatmul.mubr.f32.gmra.mrb[0].mxu0 %v2619
  %v3334 = vpop.f32.mrb[0].mxu0
  %v3335 = vadd.f32 0.0, %v3334
  %v3336 = vpop.f32.mrb[0].mxu0
  %3337 = vmatprep.mubr.f32.mxu0 0.0
  %3338 = vmatmul.mubr.f32.gmra.mrb[0].mxu0 %v2622
  %v3339 = vpop.f32.mrb[0].mxu0
  %v3340 = vadd.f32 0.0, %v3339
  %v3341 = vpop.f32.mrb[0].mxu0
  %3342 = vdwg.mxu0
  %s3343 = scalar_lea.vmem %s13, 256
  %v3344 = vld [vmem:[%s3343] sm:$0xf]
  %v3345 = vld [vmem:[%s3343 + $0x4] sm:$0xf]
  %v3346 = vld [vmem:[%s3343 + $0x8] sm:$0xf]
  %v3347 = vld [vmem:[%s3343 + $0xc] sm:$0xf]
  %v3348 = vld [vmem:[%s3343 + $0x10] sm:$0xf]
  %v3349 = vld [vmem:[%s3343 + $0x14] sm:$0xf]
  %v3350 = vld [vmem:[%s3343 + $0x18] sm:$0xf]
  %v3351 = vld [vmem:[%s3343 + $0x1c] sm:$0xf]
  %v3352 = vunpack.c.l.bf16 %v3344
  %v3353 = vunpack.c.l.bf16 %v3345
  %v3354 = vunpack.c.l.bf16 %v3346
  %v3355 = vunpack.c.l.bf16 %v3347
  %v3356 = vunpack.c.l.bf16 %v3348
  %v3357 = vunpack.c.l.bf16 %v3349
  %v3358 = vunpack.c.l.bf16 %v3350
  %v3359 = vunpack.c.l.bf16 %v3351
  %3360 = vmatprep.subr.mxu0 0.0
  %3361 = vmatpush1.msra.mxu0 %v3352
  %3362 = vmatprep.subr.mxu0 0.0
  %3363 = vmatpush1.msra.mxu0 %v3353
  %3364 = vmatprep.subr.mxu0 0.0
  %3365 = vmatpush1.msra.mxu0 %v3354
  %3366 = vmatprep.subr.mxu0 0.0
  %3367 = vmatpush1.msra.mxu0 %v3355
  %3368 = vmatprep.subr.mxu0 0.0
  %3369 = vmatpush1.msra.mxu0 %v3356
  %3370 = vmatprep.subr.mxu0 0.0
  %3371 = vmatpush1.msra.mxu0 %v3357
  %3372 = vmatprep.subr.mxu0 0.0
  %3373 = vmatpush1.msra.mxu0 %v3358
  %3374 = vmatprep.subr.mxu0 0.0
  %3375 = vmatpush1.msra.mxu0 %v3359
  %3376 = vmatprep.subr.mxu0 0.0
  %3377 = vmatpush1.msra.mxu0 0.0
  %3378 = vmatprep.subr.mxu0 0.0
  %3379 = vmatpush1.msra.mxu0 0.0
  %3380 = vmatprep.subr.mxu0 0.0
  %3381 = vmatpush1.msra.mxu0 0.0
  %3382 = vmatprep.subr.mxu0 0.0
  %3383 = vmatpush1.msra.mxu0 0.0
  %3384 = vmatprep.subr.mxu0 0.0
  %3385 = vmatpush1.msra.mxu0 0.0
  %3386 = vmatprep.subr.mxu0 0.0
  %3387 = vmatpush1.msra.mxu0 0.0
  %3388 = vmatprep.subr.mxu0 0.0
  %3389 = vmatpush1.msra.mxu0 0.0
  %3390 = vmatprep.subr.mxu0 0.0
  %3391 = vmatpush1.msra.mxu0 0.0
  %3392 = vmatprep.subr.mxu0 0.0
  %3393 = vmatpush1.msra.mxu0 0.0
  %3394 = vmatprep.subr.mxu0 0.0
  %3395 = vmatpush1.msra.mxu0 0.0
  %3396 = vmatprep.subr.mxu0 0.0
  %3397 = vmatpush1.msra.mxu0 0.0
  %3398 = vmatprep.subr.mxu0 0.0
  %3399 = vmatpush1.msra.mxu0 0.0
  %3400 = vmatprep.subr.mxu0 0.0
  %3401 = vmatpush1.msra.mxu0 0.0
  %3402 = vmatprep.subr.mxu0 0.0
  %3403 = vmatpush1.msra.mxu0 0.0
  %3404 = vmatprep.subr.mxu0 0.0
  %3405 = vmatpush1.msra.mxu0 0.0
  %3406 = vmatprep.subr.mxu0 0.0
  %3407 = vmatpush1.msra.mxu0 0.0
  %3408 = vmatprep.subr.mxu0 0.0
  %3409 = vmatpush1.msra.mxu0 0.0
  %3410 = vmatprep.subr.mxu0 0.0
  %3411 = vmatpush1.msra.mxu0 0.0
  %3412 = vmatprep.subr.mxu0 0.0
  %3413 = vmatpush1.msra.mxu0 0.0
  %3414 = vmatprep.subr.mxu0 0.0
  %3415 = vmatpush1.msra.mxu0 0.0
  %3416 = vmatprep.subr.mxu0 0.0
  %3417 = vmatpush1.msra.mxu0 0.0
  %3418 = vmatprep.subr.mxu0 0.0
  %3419 = vmatpush1.msra.mxu0 0.0
  %3420 = vmatprep.subr.mxu0 0.0
  %3421 = vmatpush1.msra.mxu0 0.0
  %3422 = vmatprep.subr.mxu0 0.0
  %3423 = vmatpush1.msra.mxu0 0.0
  %3424 = vmatprep.mubr.f32.mxu0 0.0
  %3425 = vmatmul.mubr.f32.gmra.mrb[0].mxu0 %v2619
  %v3426 = vpop.f32.mrb[0].mxu0
  %v3427 = vadd.f32 0.0, %v3426
  %v3428 = vpop.f32.mrb[0].mxu0
  %3429 = vmatprep.mubr.f32.mxu0 0.0
  %3430 = vmatmul.mubr.f32.gmra.mrb[0].mxu0 %v2622
  %v3431 = vpop.f32.mrb[0].mxu0
  %v3432 = vadd.f32 0.0, %v3431
  %v3433 = vpop.f32.mrb[0].mxu0
  %3434 = vdwg.mxu0
  %s3435 = scalar_lea.vmem %s13, 288
  %v3436 = vld [vmem:[%s3435] sm:$0xf]
  %v3437 = vld [vmem:[%s3435 + $0x4] sm:$0xf]
  %v3438 = vld [vmem:[%s3435 + $0x8] sm:$0xf]
  %v3439 = vld [vmem:[%s3435 + $0xc] sm:$0xf]
  %v3440 = vld [vmem:[%s3435 + $0x10] sm:$0xf]
  %v3441 = vld [vmem:[%s3435 + $0x14] sm:$0xf]
  %v3442 = vld [vmem:[%s3435 + $0x18] sm:$0xf]
  %v3443 = vld [vmem:[%s3435 + $0x1c] sm:$0xf]
  %v3444 = vunpack.c.l.bf16 %v3436
  %v3445 = vunpack.c.l.bf16 %v3437
  %v3446 = vunpack.c.l.bf16 %v3438
  %v3447 = vunpack.c.l.bf16 %v3439
  %v3448 = vunpack.c.l.bf16 %v3440
  %v3449 = vunpack.c.l.bf16 %v3441
  %v3450 = vunpack.c.l.bf16 %v3442
  %v3451 = vunpack.c.l.bf16 %v3443
  %3452 = vmatprep.subr.mxu0 0.0
  %3453 = vmatpush1.msra.mxu0 %v3444
  %3454 = vmatprep.subr.mxu0 0.0
  %3455 = vmatpush1.msra.mxu0 %v3445
  %3456 = vmatprep.subr.mxu0 0.0
  %3457 = vmatpush1.msra.mxu0 %v3446
  %3458 = vmatprep.subr.mxu0 0.0
  %3459 = vmatpush1.msra.mxu0 %v3447
  %3460 = vmatprep.subr.mxu0 0.0
  %3461 = vmatpush1.msra.mxu0 %v3448
  %3462 = vmatprep.subr.mxu0 0.0
  %3463 = vmatpush1.msra.mxu0 %v3449
  %3464 = vmatprep.subr.mxu0 0.0
  %3465 = vmatpush1.msra.mxu0 %v3450
  %3466 = vmatprep.subr.mxu0 0.0
  %3467 = vmatpush1.msra.mxu0 %v3451
  %3468 = vmatprep.subr.mxu0 0.0
  %3469 = vmatpush1.msra.mxu0 0.0
  %3470 = vmatprep.subr.mxu0 0.0
  %3471 = vmatpush1.msra.mxu0 0.0
  %3472 = vmatprep.subr.mxu0 0.0
  %3473 = vmatpush1.msra.mxu0 0.0
  %3474 = vmatprep.subr.mxu0 0.0
  %3475 = vmatpush1.msra.mxu0 0.0
  %3476 = vmatprep.subr.mxu0 0.0
  %3477 = vmatpush1.msra.mxu0 0.0
  %3478 = vmatprep.subr.mxu0 0.0
  %3479 = vmatpush1.msra.mxu0 0.0
  %3480 = vmatprep.subr.mxu0 0.0
  %3481 = vmatpush1.msra.mxu0 0.0
  %3482 = vmatprep.subr.mxu0 0.0
  %3483 = vmatpush1.msra.mxu0 0.0
  %3484 = vmatprep.subr.mxu0 0.0
  %3485 = vmatpush1.msra.mxu0 0.0
  %3486 = vmatprep.subr.mxu0 0.0
  %3487 = vmatpush1.msra.mxu0 0.0
  %3488 = vmatprep.subr.mxu0 0.0
  %3489 = vmatpush1.msra.mxu0 0.0
  %3490 = vmatprep.subr.mxu0 0.0
  %3491 = vmatpush1.msra.mxu0 0.0
  %3492 = vmatprep.subr.mxu0 0.0
  %3493 = vmatpush1.msra.mxu0 0.0
  %3494 = vmatprep.subr.mxu0 0.0
  %3495 = vmatpush1.msra.mxu0 0.0
  %3496 = vmatprep.subr.mxu0 0.0
  %3497 = vmatpush1.msra.mxu0 0.0
  %3498 = vmatprep.subr.mxu0 0.0
  %3499 = vmatpush1.msra.mxu0 0.0
  %3500 = vmatprep.subr.mxu0 0.0
  %3501 = vmatpush1.msra.mxu0 0.0
  %3502 = vmatprep.subr.mxu0 0.0
  %3503 = vmatpush1.msra.mxu0 0.0
  %3504 = vmatprep.subr.mxu0 0.0
  %3505 = vmatpush1.msra.mxu0 0.0
  %3506 = vmatprep.subr.mxu0 0.0
  %3507 = vmatpush1.msra.mxu0 0.0
  %3508 = vmatprep.subr.mxu0 0.0
  %3509 = vmatpush1.msra.mxu0 0.0
  %3510 = vmatprep.subr.mxu0 0.0
  %3511 = vmatpush1.msra.mxu0 0.0
  %3512 = vmatprep.subr.mxu0 0.0
  %3513 = vmatpush1.msra.mxu0 0.0
  %3514 = vmatprep.subr.mxu0 0.0
  %3515 = vmatpush1.msra.mxu0 0.0
  %3516 = vmatprep.mubr.f32.mxu0 0.0
  %3517 = vmatmul.mubr.f32.gmra.mrb[0].mxu0 %v2619
  %v3518 = vpop.f32.mrb[0].mxu0
  %v3519 = vadd.f32 0.0, %v3518
  %v3520 = vpop.f32.mrb[0].mxu0
  %3521 = vmatprep.mubr.f32.mxu0 0.0
  %3522 = vmatmul.mubr.f32.gmra.mrb[0].mxu0 %v2622
  %v3523 = vpop.f32.mrb[0].mxu0
  %v3524 = vadd.f32 0.0, %v3523
  %v3525 = vpop.f32.mrb[0].mxu0
  %3526 = vdwg.mxu0
  %s3527 = scalar_lea.vmem %s13, 320
  %v3528 = vld [vmem:[%s3527] sm:$0xf]
  %v3529 = vld [vmem:[%s3527 + $0x4] sm:$0xf]
  %v3530 = vld [vmem:[%s3527 + $0x8] sm:$0xf]
  %v3531 = vld [vmem:[%s3527 + $0xc] sm:$0xf]
  %v3532 = vld [vmem:[%s3527 + $0x10] sm:$0xf]
  %v3533 = vld [vmem:[%s3527 + $0x14] sm:$0xf]
  %v3534 = vld [vmem:[%s3527 + $0x18] sm:$0xf]
  %v3535 = vld [vmem:[%s3527 + $0x1c] sm:$0xf]
  %v3536 = vunpack.c.l.bf16 %v3528
  %v3537 = vunpack.c.l.bf16 %v3529
  %v3538 = vunpack.c.l.bf16 %v3530
  %v3539 = vunpack.c.l.bf16 %v3531
  %v3540 = vunpack.c.l.bf16 %v3532
  %v3541 = vunpack.c.l.bf16 %v3533
  %v3542 = vunpack.c.l.bf16 %v3534
  %v3543 = vunpack.c.l.bf16 %v3535
  %3544 = vmatprep.subr.mxu0 0.0
  %3545 = vmatpush1.msra.mxu0 %v3536
  %3546 = vmatprep.subr.mxu0 0.0
  %3547 = vmatpush1.msra.mxu0 %v3537
  %3548 = vmatprep.subr.mxu0 0.0
  %3549 = vmatpush1.msra.mxu0 %v3538
  %3550 = vmatprep.subr.mxu0 0.0
  %3551 = vmatpush1.msra.mxu0 %v3539
  %3552 = vmatprep.subr.mxu0 0.0
  %3553 = vmatpush1.msra.mxu0 %v3540
  %3554 = vmatprep.subr.mxu0 0.0
  %3555 = vmatpush1.msra.mxu0 %v3541
  %3556 = vmatprep.subr.mxu0 0.0
  %3557 = vmatpush1.msra.mxu0 %v3542
  %3558 = vmatprep.subr.mxu0 0.0
  %3559 = vmatpush1.msra.mxu0 %v3543
  %3560 = vmatprep.subr.mxu0 0.0
  %3561 = vmatpush1.msra.mxu0 0.0
  %3562 = vmatprep.subr.mxu0 0.0
  %3563 = vmatpush1.msra.mxu0 0.0
  %3564 = vmatprep.subr.mxu0 0.0
  %3565 = vmatpush1.msra.mxu0 0.0
  %3566 = vmatprep.subr.mxu0 0.0
  %3567 = vmatpush1.msra.mxu0 0.0
  %3568 = vmatprep.subr.mxu0 0.0
  %3569 = vmatpush1.msra.mxu0 0.0
  %3570 = vmatprep.subr.mxu0 0.0
  %3571 = vmatpush1.msra.mxu0 0.0
  %3572 = vmatprep.subr.mxu0 0.0
  %3573 = vmatpush1.msra.mxu0 0.0
  %3574 = vmatprep.subr.mxu0 0.0
  %3575 = vmatpush1.msra.mxu0 0.0
  %3576 = vmatprep.subr.mxu0 0.0
  %3577 = vmatpush1.msra.mxu0 0.0
  %3578 = vmatprep.subr.mxu0 0.0
  %3579 = vmatpush1.msra.mxu0 0.0
  %3580 = vmatprep.subr.mxu0 0.0
  %3581 = vmatpush1.msra.mxu0 0.0
  %3582 = vmatprep.subr.mxu0 0.0
  %3583 = vmatpush1.msra.mxu0 0.0
  %3584 = vmatprep.subr.mxu0 0.0
  %3585 = vmatpush1.msra.mxu0 0.0
  %3586 = vmatprep.subr.mxu0 0.0
  %3587 = vmatpush1.msra.mxu0 0.0
  %3588 = vmatprep.subr.mxu0 0.0
  %3589 = vmatpush1.msra.mxu0 0.0
  %3590 = vmatprep.subr.mxu0 0.0
  %3591 = vmatpush1.msra.mxu0 0.0
  %3592 = vmatprep.subr.mxu0 0.0
  %3593 = vmatpush1.msra.mxu0 0.0
  %3594 = vmatprep.subr.mxu0 0.0
  %3595 = vmatpush1.msra.mxu0 0.0
  %3596 = vmatprep.subr.mxu0 0.0
  %3597 = vmatpush1.msra.mxu0 0.0
  %3598 = vmatprep.subr.mxu0 0.0
  %3599 = vmatpush1.msra.mxu0 0.0
  %3600 = vmatprep.subr.mxu0 0.0
  %3601 = vmatpush1.msra.mxu0 0.0
  %3602 = vmatprep.subr.mxu0 0.0
  %3603 = vmatpush1.msra.mxu0 0.0
  %3604 = vmatprep.subr.mxu0 0.0
  %3605 = vmatpush1.msra.mxu0 0.0
  %3606 = vmatprep.subr.mxu0 0.0
  %3607 = vmatpush1.msra.mxu0 0.0
  %3608 = vmatprep.mubr.f32.mxu0 0.0
  %3609 = vmatmul.mubr.f32.gmra.mrb[0].mxu0 %v2619
  %v3610 = vpop.f32.mrb[0].mxu0
  %v3611 = vadd.f32 0.0, %v3610
  %v3612 = vpop.f32.mrb[0].mxu0
  %3613 = vmatprep.mubr.f32.mxu0 0.0
  %3614 = vmatmul.mubr.f32.gmra.mrb[0].mxu0 %v2622
  %v3615 = vpop.f32.mrb[0].mxu0
  %v3616 = vadd.f32 0.0, %v3615
  %v3617 = vpop.f32.mrb[0].mxu0
  %3618 = vdwg.mxu0
  %s3619 = scalar_lea.vmem %s13, 352
  %v3620 = vld [vmem:[%s3619] sm:$0xf]
  %v3621 = vld [vmem:[%s3619 + $0x4] sm:$0xf]
  %v3622 = vld [vmem:[%s3619 + $0x8] sm:$0xf]
  %v3623 = vld [vmem:[%s3619 + $0xc] sm:$0xf]
  %v3624 = vld [vmem:[%s3619 + $0x10] sm:$0xf]
  %v3625 = vld [vmem:[%s3619 + $0x14] sm:$0xf]
  %v3626 = vld [vmem:[%s3619 + $0x18] sm:$0xf]
  %v3627 = vld [vmem:[%s3619 + $0x1c] sm:$0xf]
  %v3628 = vunpack.c.l.bf16 %v3620
  %v3629 = vunpack.c.l.bf16 %v3621
  %v3630 = vunpack.c.l.bf16 %v3622
  %v3631 = vunpack.c.l.bf16 %v3623
  %v3632 = vunpack.c.l.bf16 %v3624
  %v3633 = vunpack.c.l.bf16 %v3625
  %v3634 = vunpack.c.l.bf16 %v3626
  %v3635 = vunpack.c.l.bf16 %v3627
  %3636 = vmatprep.subr.mxu0 0.0
  %3637 = vmatpush1.msra.mxu0 %v3628
  %3638 = vmatprep.subr.mxu0 0.0
  %3639 = vmatpush1.msra.mxu0 %v3629
  %3640 = vmatprep.subr.mxu0 0.0
  %3641 = vmatpush1.msra.mxu0 %v3630
  %3642 = vmatprep.subr.mxu0 0.0
  %3643 = vmatpush1.msra.mxu0 %v3631
  %3644 = vmatprep.subr.mxu0 0.0
  %3645 = vmatpush1.msra.mxu0 %v3632
  %3646 = vmatprep.subr.mxu0 0.0
  %3647 = vmatpush1.msra.mxu0 %v3633
  %3648 = vmatprep.subr.mxu0 0.0
  %3649 = vmatpush1.msra.mxu0 %v3634
  %3650 = vmatprep.subr.mxu0 0.0
  %3651 = vmatpush1.msra.mxu0 %v3635
  %3652 = vmatprep.subr.mxu0 0.0
  %3653 = vmatpush1.msra.mxu0 0.0
  %3654 = vmatprep.subr.mxu0 0.0
  %3655 = vmatpush1.msra.mxu0 0.0
  %3656 = vmatprep.subr.mxu0 0.0
  %3657 = vmatpush1.msra.mxu0 0.0
  %3658 = vmatprep.subr.mxu0 0.0
  %3659 = vmatpush1.msra.mxu0 0.0
  %3660 = vmatprep.subr.mxu0 0.0
  %3661 = vmatpush1.msra.mxu0 0.0
  %3662 = vmatprep.subr.mxu0 0.0
  %3663 = vmatpush1.msra.mxu0 0.0
  %3664 = vmatprep.subr.mxu0 0.0
  %3665 = vmatpush1.msra.mxu0 0.0
  %3666 = vmatprep.subr.mxu0 0.0
  %3667 = vmatpush1.msra.mxu0 0.0
  %3668 = vmatprep.subr.mxu0 0.0
  %3669 = vmatpush1.msra.mxu0 0.0
  %3670 = vmatprep.subr.mxu0 0.0
  %3671 = vmatpush1.msra.mxu0 0.0
  %3672 = vmatprep.subr.mxu0 0.0
  %3673 = vmatpush1.msra.mxu0 0.0
  %3674 = vmatprep.subr.mxu0 0.0
  %3675 = vmatpush1.msra.mxu0 0.0
  %3676 = vmatprep.subr.mxu0 0.0
  %3677 = vmatpush1.msra.mxu0 0.0
  %3678 = vmatprep.subr.mxu0 0.0
  %3679 = vmatpush1.msra.mxu0 0.0
  %3680 = vmatprep.subr.mxu0 0.0
  %3681 = vmatpush1.msra.mxu0 0.0
  %3682 = vmatprep.subr.mxu0 0.0
  %3683 = vmatpush1.msra.mxu0 0.0
  %3684 = vmatprep.subr.mxu0 0.0
  %3685 = vmatpush1.msra.mxu0 0.0
  %3686 = vmatprep.subr.mxu0 0.0
  %3687 = vmatpush1.msra.mxu0 0.0
  %3688 = vmatprep.subr.mxu0 0.0
  %3689 = vmatpush1.msra.mxu0 0.0
  %3690 = vmatprep.subr.mxu0 0.0
  %3691 = vmatpush1.msra.mxu0 0.0
  %3692 = vmatprep.subr.mxu0 0.0
  %3693 = vmatpush1.msra.mxu0 0.0
  %3694 = vmatprep.subr.mxu0 0.0
  %3695 = vmatpush1.msra.mxu0 0.0
  %3696 = vmatprep.subr.mxu0 0.0
  %3697 = vmatpush1.msra.mxu0 0.0
  %3698 = vmatprep.subr.mxu0 0.0
  %3699 = vmatpush1.msra.mxu0 0.0
  %3700 = vmatprep.mubr.f32.mxu0 0.0
  %3701 = vmatmul.mubr.f32.gmra.mrb[0].mxu0 %v2619
  %v3702 = vpop.f32.mrb[0].mxu0
  %v3703 = vadd.f32 0.0, %v3702
  %v3704 = vpop.f32.mrb[0].mxu0
  %3705 = vmatprep.mubr.f32.mxu0 0.0
  %3706 = vmatmul.mubr.f32.gmra.mrb[0].mxu0 %v2622
  %v3707 = vpop.f32.mrb[0].mxu0
  %v3708 = vadd.f32 0.0, %v3707
  %v3709 = vpop.f32.mrb[0].mxu0
  %3710 = vdwg.mxu0
  %s3711 = scalar_lea.vmem %s13, 384
  %v3712 = vld [vmem:[%s3711] sm:$0xf]
  %v3713 = vld [vmem:[%s3711 + $0x4] sm:$0xf]
  %v3714 = vld [vmem:[%s3711 + $0x8] sm:$0xf]
  %v3715 = vld [vmem:[%s3711 + $0xc] sm:$0xf]
  %v3716 = vld [vmem:[%s3711 + $0x10] sm:$0xf]
  %v3717 = vld [vmem:[%s3711 + $0x14] sm:$0xf]
  %v3718 = vld [vmem:[%s3711 + $0x18] sm:$0xf]
  %v3719 = vld [vmem:[%s3711 + $0x1c] sm:$0xf]
  %v3720 = vunpack.c.l.bf16 %v3712
  %v3721 = vunpack.c.l.bf16 %v3713
  %v3722 = vunpack.c.l.bf16 %v3714
  %v3723 = vunpack.c.l.bf16 %v3715
  %v3724 = vunpack.c.l.bf16 %v3716
  %v3725 = vunpack.c.l.bf16 %v3717
  %v3726 = vunpack.c.l.bf16 %v3718
  %v3727 = vunpack.c.l.bf16 %v3719
  %3728 = vmatprep.subr.mxu0 0.0
  %3729 = vmatpush1.msra.mxu0 %v3720
  %3730 = vmatprep.subr.mxu0 0.0
  %3731 = vmatpush1.msra.mxu0 %v3721
  %3732 = vmatprep.subr.mxu0 0.0
  %3733 = vmatpush1.msra.mxu0 %v3722
  %3734 = vmatprep.subr.mxu0 0.0
  %3735 = vmatpush1.msra.mxu0 %v3723
  %3736 = vmatprep.subr.mxu0 0.0
  %3737 = vmatpush1.msra.mxu0 %v3724
  %3738 = vmatprep.subr.mxu0 0.0
  %3739 = vmatpush1.msra.mxu0 %v3725
  %3740 = vmatprep.subr.mxu0 0.0
  %3741 = vmatpush1.msra.mxu0 %v3726
  %3742 = vmatprep.subr.mxu0 0.0
  %3743 = vmatpush1.msra.mxu0 %v3727
  %3744 = vmatprep.subr.mxu0 0.0
  %3745 = vmatpush1.msra.mxu0 0.0
  %3746 = vmatprep.subr.mxu0 0.0
  %3747 = vmatpush1.msra.mxu0 0.0
  %3748 = vmatprep.subr.mxu0 0.0
  %3749 = vmatpush1.msra.mxu0 0.0
  %3750 = vmatprep.subr.mxu0 0.0
  %3751 = vmatpush1.msra.mxu0 0.0
  %3752 = vmatprep.subr.mxu0 0.0
  %3753 = vmatpush1.msra.mxu0 0.0
  %3754 = vmatprep.subr.mxu0 0.0
  %3755 = vmatpush1.msra.mxu0 0.0
  %3756 = vmatprep.subr.mxu0 0.0
  %3757 = vmatpush1.msra.mxu0 0.0
  %3758 = vmatprep.subr.mxu0 0.0
  %3759 = vmatpush1.msra.mxu0 0.0
  %3760 = vmatprep.subr.mxu0 0.0
  %3761 = vmatpush1.msra.mxu0 0.0
  %3762 = vmatprep.subr.mxu0 0.0
  %3763 = vmatpush1.msra.mxu0 0.0
  %3764 = vmatprep.subr.mxu0 0.0
  %3765 = vmatpush1.msra.mxu0 0.0
  %3766 = vmatprep.subr.mxu0 0.0
  %3767 = vmatpush1.msra.mxu0 0.0
  %3768 = vmatprep.subr.mxu0 0.0
  %3769 = vmatpush1.msra.mxu0 0.0
  %3770 = vmatprep.subr.mxu0 0.0
  %3771 = vmatpush1.msra.mxu0 0.0
  %3772 = vmatprep.subr.mxu0 0.0
  %3773 = vmatpush1.msra.mxu0 0.0
  %3774 = vmatprep.subr.mxu0 0.0
  %3775 = vmatpush1.msra.mxu0 0.0
  %3776 = vmatprep.subr.mxu0 0.0
  %3777 = vmatpush1.msra.mxu0 0.0
  %3778 = vmatprep.subr.mxu0 0.0
  %3779 = vmatpush1.msra.mxu0 0.0
  %3780 = vmatprep.subr.mxu0 0.0
  %3781 = vmatpush1.msra.mxu0 0.0
  %3782 = vmatprep.subr.mxu0 0.0
  %3783 = vmatpush1.msra.mxu0 0.0
  %3784 = vmatprep.subr.mxu0 0.0
  %3785 = vmatpush1.msra.mxu0 0.0
  %3786 = vmatprep.subr.mxu0 0.0
  %3787 = vmatpush1.msra.mxu0 0.0
  %3788 = vmatprep.subr.mxu0 0.0
  %3789 = vmatpush1.msra.mxu0 0.0
  %3790 = vmatprep.subr.mxu0 0.0
  %3791 = vmatpush1.msra.mxu0 0.0
  %3792 = vmatprep.mubr.f32.mxu0 0.0
  %3793 = vmatmul.mubr.f32.gmra.mrb[0].mxu0 %v2619
  %v3794 = vpop.f32.mrb[0].mxu0
  %v3795 = vadd.f32 0.0, %v3794
  %v3796 = vpop.f32.mrb[0].mxu0
  %3797 = vmatprep.mubr.f32.mxu0 0.0
  %3798 = vmatmul.mubr.f32.gmra.mrb[0].mxu0 %v2622
  %v3799 = vpop.f32.mrb[0].mxu0
  %v3800 = vadd.f32 0.0, %v3799
  %v3801 = vpop.f32.mrb[0].mxu0
  %3802 = vdwg.mxu0
  %s3803 = scalar_lea.vmem %s13, 416
  %v3804 = vld [vmem:[%s3803] sm:$0xf]
  %v3805 = vld [vmem:[%s3803 + $0x4] sm:$0xf]
  %v3806 = vld [vmem:[%s3803 + $0x8] sm:$0xf]
  %v3807 = vld [vmem:[%s3803 + $0xc] sm:$0xf]
  %v3808 = vld [vmem:[%s3803 + $0x10] sm:$0xf]
  %v3809 = vld [vmem:[%s3803 + $0x14] sm:$0xf]
  %v3810 = vld [vmem:[%s3803 + $0x18] sm:$0xf]
  %v3811 = vld [vmem:[%s3803 + $0x1c] sm:$0xf]
  %v3812 = vunpack.c.l.bf16 %v3804
  %v3813 = vunpack.c.l.bf16 %v3805
  %v3814 = vunpack.c.l.bf16 %v3806
  %v3815 = vunpack.c.l.bf16 %v3807
  %v3816 = vunpack.c.l.bf16 %v3808
  %v3817 = vunpack.c.l.bf16 %v3809
  %v3818 = vunpack.c.l.bf16 %v3810
  %v3819 = vunpack.c.l.bf16 %v3811
  %3820 = vmatprep.subr.mxu0 0.0
  %3821 = vmatpush1.msra.mxu0 %v3812
  %3822 = vmatprep.subr.mxu0 0.0
  %3823 = vmatpush1.msra.mxu0 %v3813
  %3824 = vmatprep.subr.mxu0 0.0
  %3825 = vmatpush1.msra.mxu0 %v3814
  %3826 = vmatprep.subr.mxu0 0.0
  %3827 = vmatpush1.msra.mxu0 %v3815
  %3828 = vmatprep.subr.mxu0 0.0
  %3829 = vmatpush1.msra.mxu0 %v3816
  %3830 = vmatprep.subr.mxu0 0.0
  %3831 = vmatpush1.msra.mxu0 %v3817
  %3832 = vmatprep.subr.mxu0 0.0
  %3833 = vmatpush1.msra.mxu0 %v3818
  %3834 = vmatprep.subr.mxu0 0.0
  %3835 = vmatpush1.msra.mxu0 %v3819
  %3836 = vmatprep.subr.mxu0 0.0
  %3837 = vmatpush1.msra.mxu0 0.0
  %3838 = vmatprep.subr.mxu0 0.0
  %3839 = vmatpush1.msra.mxu0 0.0
  %3840 = vmatprep.subr.mxu0 0.0
  %3841 = vmatpush1.msra.mxu0 0.0
  %3842 = vmatprep.subr.mxu0 0.0
  %3843 = vmatpush1.msra.mxu0 0.0
  %3844 = vmatprep.subr.mxu0 0.0
  %3845 = vmatpush1.msra.mxu0 0.0
  %3846 = vmatprep.subr.mxu0 0.0
  %3847 = vmatpush1.msra.mxu0 0.0
  %3848 = vmatprep.subr.mxu0 0.0
  %3849 = vmatpush1.msra.mxu0 0.0
  %3850 = vmatprep.subr.mxu0 0.0
  %3851 = vmatpush1.msra.mxu0 0.0
  %3852 = vmatprep.subr.mxu0 0.0
  %3853 = vmatpush1.msra.mxu0 0.0
  %3854 = vmatprep.subr.mxu0 0.0
  %3855 = vmatpush1.msra.mxu0 0.0
  %3856 = vmatprep.subr.mxu0 0.0
  %3857 = vmatpush1.msra.mxu0 0.0
  %3858 = vmatprep.subr.mxu0 0.0
  %3859 = vmatpush1.msra.mxu0 0.0
  %3860 = vmatprep.subr.mxu0 0.0
  %3861 = vmatpush1.msra.mxu0 0.0
  %3862 = vmatprep.subr.mxu0 0.0
  %3863 = vmatpush1.msra.mxu0 0.0
  %3864 = vmatprep.subr.mxu0 0.0
  %3865 = vmatpush1.msra.mxu0 0.0
  %3866 = vmatprep.subr.mxu0 0.0
  %3867 = vmatpush1.msra.mxu0 0.0
  %3868 = vmatprep.subr.mxu0 0.0
  %3869 = vmatpush1.msra.mxu0 0.0
  %3870 = vmatprep.subr.mxu0 0.0
  %3871 = vmatpush1.msra.mxu0 0.0
  %3872 = vmatprep.subr.mxu0 0.0
  %3873 = vmatpush1.msra.mxu0 0.0
  %3874 = vmatprep.subr.mxu0 0.0
  %3875 = vmatpush1.msra.mxu0 0.0
  %3876 = vmatprep.subr.mxu0 0.0
  %3877 = vmatpush1.msra.mxu0 0.0
  %3878 = vmatprep.subr.mxu0 0.0
  %3879 = vmatpush1.msra.mxu0 0.0
  %3880 = vmatprep.subr.mxu0 0.0
  %3881 = vmatpush1.msra.mxu0 0.0
  %3882 = vmatprep.subr.mxu0 0.0
  %3883 = vmatpush1.msra.mxu0 0.0
  %3884 = vmatprep.mubr.f32.mxu0 0.0
  %3885 = vmatmul.mubr.f32.gmra.mrb[0].mxu0 %v2619
  %v3886 = vpop.f32.mrb[0].mxu0
  %v3887 = vadd.f32 0.0, %v3886
  %v3888 = vpop.f32.mrb[0].mxu0
  %3889 = vmatprep.mubr.f32.mxu0 0.0
  %3890 = vmatmul.mubr.f32.gmra.mrb[0].mxu0 %v2622
  %v3891 = vpop.f32.mrb[0].mxu0
  %v3892 = vadd.f32 0.0, %v3891
  %v3893 = vpop.f32.mrb[0].mxu0
  %3894 = vdwg.mxu0
  %s3895 = scalar_lea.vmem %s13, 448
  %v3896 = vld [vmem:[%s3895] sm:$0xf]
  %v3897 = vld [vmem:[%s3895 + $0x4] sm:$0xf]
  %v3898 = vld [vmem:[%s3895 + $0x8] sm:$0xf]
  %v3899 = vld [vmem:[%s3895 + $0xc] sm:$0xf]
  %v3900 = vld [vmem:[%s3895 + $0x10] sm:$0xf]
  %v3901 = vld [vmem:[%s3895 + $0x14] sm:$0xf]
  %v3902 = vld [vmem:[%s3895 + $0x18] sm:$0xf]
  %v3903 = vld [vmem:[%s3895 + $0x1c] sm:$0xf]
  %v3904 = vunpack.c.l.bf16 %v3896
  %v3905 = vunpack.c.l.bf16 %v3897
  %v3906 = vunpack.c.l.bf16 %v3898
  %v3907 = vunpack.c.l.bf16 %v3899
  %v3908 = vunpack.c.l.bf16 %v3900
  %v3909 = vunpack.c.l.bf16 %v3901
  %v3910 = vunpack.c.l.bf16 %v3902
  %v3911 = vunpack.c.l.bf16 %v3903
  %3912 = vmatprep.subr.mxu0 0.0
  %3913 = vmatpush1.msra.mxu0 %v3904
  %3914 = vmatprep.subr.mxu0 0.0
  %3915 = vmatpush1.msra.mxu0 %v3905
  %3916 = vmatprep.subr.mxu0 0.0
  %3917 = vmatpush1.msra.mxu0 %v3906
  %3918 = vmatprep.subr.mxu0 0.0
  %3919 = vmatpush1.msra.mxu0 %v3907
  %3920 = vmatprep.subr.mxu0 0.0
  %3921 = vmatpush1.msra.mxu0 %v3908
  %3922 = vmatprep.subr.mxu0 0.0
  %3923 = vmatpush1.msra.mxu0 %v3909
  %3924 = vmatprep.subr.mxu0 0.0
  %3925 = vmatpush1.msra.mxu0 %v3910
  %3926 = vmatprep.subr.mxu0 0.0
  %3927 = vmatpush1.msra.mxu0 %v3911
  %3928 = vmatprep.subr.mxu0 0.0
  %3929 = vmatpush1.msra.mxu0 0.0
  %3930 = vmatprep.subr.mxu0 0.0
  %3931 = vmatpush1.msra.mxu0 0.0
  %3932 = vmatprep.subr.mxu0 0.0
  %3933 = vmatpush1.msra.mxu0 0.0
  %3934 = vmatprep.subr.mxu0 0.0
  %3935 = vmatpush1.msra.mxu0 0.0
  %3936 = vmatprep.subr.mxu0 0.0
  %3937 = vmatpush1.msra.mxu0 0.0
  %3938 = vmatprep.subr.mxu0 0.0
  %3939 = vmatpush1.msra.mxu0 0.0
  %3940 = vmatprep.subr.mxu0 0.0
  %3941 = vmatpush1.msra.mxu0 0.0
  %3942 = vmatprep.subr.mxu0 0.0
  %3943 = vmatpush1.msra.mxu0 0.0
  %3944 = vmatprep.subr.mxu0 0.0
  %3945 = vmatpush1.msra.mxu0 0.0
  %3946 = vmatprep.subr.mxu0 0.0
  %3947 = vmatpush1.msra.mxu0 0.0
  %3948 = vmatprep.subr.mxu0 0.0
  %3949 = vmatpush1.msra.mxu0 0.0
  %3950 = vmatprep.subr.mxu0 0.0
  %3951 = vmatpush1.msra.mxu0 0.0
  %3952 = vmatprep.subr.mxu0 0.0
  %3953 = vmatpush1.msra.mxu0 0.0
  %3954 = vmatprep.subr.mxu0 0.0
  %3955 = vmatpush1.msra.mxu0 0.0
  %3956 = vmatprep.subr.mxu0 0.0
  %3957 = vmatpush1.msra.mxu0 0.0
  %3958 = vmatprep.subr.mxu0 0.0
  %3959 = vmatpush1.msra.mxu0 0.0
  %3960 = vmatprep.subr.mxu0 0.0
  %3961 = vmatpush1.msra.mxu0 0.0
  %3962 = vmatprep.subr.mxu0 0.0
  %3963 = vmatpush1.msra.mxu0 0.0
  %3964 = vmatprep.subr.mxu0 0.0
  %3965 = vmatpush1.msra.mxu0 0.0
  %3966 = vmatprep.subr.mxu0 0.0
  %3967 = vmatpush1.msra.mxu0 0.0
  %3968 = vmatprep.subr.mxu0 0.0
  %3969 = vmatpush1.msra.mxu0 0.0
  %3970 = vmatprep.subr.mxu0 0.0
  %3971 = vmatpush1.msra.mxu0 0.0
  %3972 = vmatprep.subr.mxu0 0.0
  %3973 = vmatpush1.msra.mxu0 0.0
  %3974 = vmatprep.subr.mxu0 0.0
  %3975 = vmatpush1.msra.mxu0 0.0
  %3976 = vmatprep.mubr.f32.mxu0 0.0
  %3977 = vmatmul.mubr.f32.gmra.mrb[0].mxu0 %v2619
  %v3978 = vpop.f32.mrb[0].mxu0
  %v3979 = vadd.f32 0.0, %v3978
  %v3980 = vpop.f32.mrb[0].mxu0
  %3981 = vmatprep.mubr.f32.mxu0 0.0
  %3982 = vmatmul.mubr.f32.gmra.mrb[0].mxu0 %v2622
  %v3983 = vpop.f32.mrb[0].mxu0
  %v3984 = vadd.f32 0.0, %v3983
  %v3985 = vpop.f32.mrb[0].mxu0
  %3986 = vdwg.mxu0
  %s3987 = scalar_lea.vmem %s13, 480
  %v3988 = vld [vmem:[%s3987] sm:$0xf]
  %v3989 = vld [vmem:[%s3987 + $0x4] sm:$0xf]
  %v3990 = vld [vmem:[%s3987 + $0x8] sm:$0xf]
  %v3991 = vld [vmem:[%s3987 + $0xc] sm:$0xf]
  %v3992 = vld [vmem:[%s3987 + $0x10] sm:$0xf]
  %v3993 = vld [vmem:[%s3987 + $0x14] sm:$0xf]
  %v3994 = vld [vmem:[%s3987 + $0x18] sm:$0xf]
  %v3995 = vld [vmem:[%s3987 + $0x1c] sm:$0xf]
  %v3996 = vunpack.c.l.bf16 %v3988
  %v3997 = vunpack.c.l.bf16 %v3989
  %v3998 = vunpack.c.l.bf16 %v3990
  %v3999 = vunpack.c.l.bf16 %v3991
  %v4000 = vunpack.c.l.bf16 %v3992
  %v4001 = vunpack.c.l.bf16 %v3993
  %v4002 = vunpack.c.l.bf16 %v3994
  %v4003 = vunpack.c.l.bf16 %v3995
  %4004 = vmatprep.subr.mxu0 0.0
  %4005 = vmatpush1.msra.mxu0 %v3996
  %4006 = vmatprep.subr.mxu0 0.0
  %4007 = vmatpush1.msra.mxu0 %v3997
  %4008 = vmatprep.subr.mxu0 0.0
  %4009 = vmatpush1.msra.mxu0 %v3998
  %4010 = vmatprep.subr.mxu0 0.0
  %4011 = vmatpush1.msra.mxu0 %v3999
  %4012 = vmatprep.subr.mxu0 0.0
  %4013 = vmatpush1.msra.mxu0 %v4000
  %4014 = vmatprep.subr.mxu0 0.0
  %4015 = vmatpush1.msra.mxu0 %v4001
  %4016 = vmatprep.subr.mxu0 0.0
  %4017 = vmatpush1.msra.mxu0 %v4002
  %4018 = vmatprep.subr.mxu0 0.0
  %4019 = vmatpush1.msra.mxu0 %v4003
  %4020 = vmatprep.subr.mxu0 0.0
  %4021 = vmatpush1.msra.mxu0 0.0
  %4022 = vmatprep.subr.mxu0 0.0
  %4023 = vmatpush1.msra.mxu0 0.0
  %4024 = vmatprep.subr.mxu0 0.0
  %4025 = vmatpush1.msra.mxu0 0.0
  %4026 = vmatprep.subr.mxu0 0.0
  %4027 = vmatpush1.msra.mxu0 0.0
  %4028 = vmatprep.subr.mxu0 0.0
  %4029 = vmatpush1.msra.mxu0 0.0
  %4030 = vmatprep.subr.mxu0 0.0
  %4031 = vmatpush1.msra.mxu0 0.0
  %4032 = vmatprep.subr.mxu0 0.0
  %4033 = vmatpush1.msra.mxu0 0.0
  %4034 = vmatprep.subr.mxu0 0.0
  %4035 = vmatpush1.msra.mxu0 0.0
  %4036 = vmatprep.subr.mxu0 0.0
  %4037 = vmatpush1.msra.mxu0 0.0
  %4038 = vmatprep.subr.mxu0 0.0
  %4039 = vmatpush1.msra.mxu0 0.0
  %4040 = vmatprep.subr.mxu0 0.0
  %4041 = vmatpush1.msra.mxu0 0.0
  %4042 = vmatprep.subr.mxu0 0.0
  %4043 = vmatpush1.msra.mxu0 0.0
  %4044 = vmatprep.subr.mxu0 0.0
  %4045 = vmatpush1.msra.mxu0 0.0
  %4046 = vmatprep.subr.mxu0 0.0
  %4047 = vmatpush1.msra.mxu0 0.0
  %4048 = vmatprep.subr.mxu0 0.0
  %4049 = vmatpush1.msra.mxu0 0.0
  %4050 = vmatprep.subr.mxu0 0.0
  %4051 = vmatpush1.msra.mxu0 0.0
  %4052 = vmatprep.subr.mxu0 0.0
  %4053 = vmatpush1.msra.mxu0 0.0
  %4054 = vmatprep.subr.mxu0 0.0
  %4055 = vmatpush1.msra.mxu0 0.0
  %4056 = vmatprep.subr.mxu0 0.0
  %4057 = vmatpush1.msra.mxu0 0.0
  %4058 = vmatprep.subr.mxu0 0.0
  %4059 = vmatpush1.msra.mxu0 0.0
  %4060 = vmatprep.subr.mxu0 0.0
  %4061 = vmatpush1.msra.mxu0 0.0
  %4062 = vmatprep.subr.mxu0 0.0
  %4063 = vmatpush1.msra.mxu0 0.0
  %4064 = vmatprep.subr.mxu0 0.0
  %4065 = vmatpush1.msra.mxu0 0.0
  %4066 = vmatprep.subr.mxu0 0.0
  %4067 = vmatpush1.msra.mxu0 0.0
  %4068 = vmatprep.mubr.f32.mxu0 0.0
  %4069 = vmatmul.mubr.f32.gmra.mrb[0].mxu0 %v2619
  %v4070 = vpop.f32.mrb[0].mxu0
  %v4071 = vadd.f32 0.0, %v4070
  %v4072 = vpop.f32.mrb[0].mxu0
  %4073 = vmatprep.mubr.f32.mxu0 0.0
  %4074 = vmatmul.mubr.f32.gmra.mrb[0].mxu0 %v2622
  %v4075 = vpop.f32.mrb[0].mxu0
  %v4076 = vadd.f32 0.0, %v4075
  %v4077 = vpop.f32.mrb[0].mxu0
  %4078 = vdwg.mxu0
  %v4079 = vld [vmem:[%s15] sm:$0xff]
  %v4080 = vld [vmem:[%s15 + $0x8] sm:$0xff]
  %v4081 = vld [vmem:[%s15 + $0x10] sm:$0xff]
  %v4082 = vld [vmem:[%s15 + $0x18] sm:$0xff]
  %v4083 = vld [vmem:[%s15 + $0x20] sm:$0xff]
  %v4084 = vld [vmem:[%s15 + $0x28] sm:$0xff]
  %v4085 = vld [vmem:[%s15 + $0x30] sm:$0xff]
  %v4086 = vld [vmem:[%s15 + $0x38] sm:$0xff]
  %4087 = vmatprep.subr.mxu0 0.0
  %4088 = vmatpush1.msra.mxu0 %v2691
  %4089 = vmatprep.subr.mxu0 0.0
  %4090 = vmatpush1.msra.mxu0 %v2696
  %4091 = vmatprep.subr.mxu0 0.0
  %4092 = vmatpush1.msra.mxu0 %v2783
  %4093 = vmatprep.subr.mxu0 0.0
  %4094 = vmatpush1.msra.mxu0 %v2788
  %4095 = vmatprep.subr.mxu0 0.0
  %4096 = vmatpush1.msra.mxu0 %v2875
  %4097 = vmatprep.subr.mxu0 0.0
  %4098 = vmatpush1.msra.mxu0 %v2880
  %4099 = vmatprep.subr.mxu0 0.0
  %4100 = vmatpush1.msra.mxu0 %v2967
  %4101 = vmatprep.subr.mxu0 0.0
  %4102 = vmatpush1.msra.mxu0 %v2972
  %4103 = vmatprep.subr.mxu0 0.0
  %4104 = vmatpush1.msra.mxu0 %v3059
  %4105 = vmatprep.subr.mxu0 0.0
  %4106 = vmatpush1.msra.mxu0 %v3064
  %4107 = vmatprep.subr.mxu0 0.0
  %4108 = vmatpush1.msra.mxu0 %v3151
  %4109 = vmatprep.subr.mxu0 0.0
  %4110 = vmatpush1.msra.mxu0 %v3156
  %4111 = vmatprep.subr.mxu0 0.0
  %4112 = vmatpush1.msra.mxu0 %v3243
  %4113 = vmatprep.subr.mxu0 0.0
  %4114 = vmatpush1.msra.mxu0 %v3248
  %4115 = vmatprep.subr.mxu0 0.0
  %4116 = vmatpush1.msra.mxu0 %v3335
  %4117 = vmatprep.subr.mxu0 0.0
  %4118 = vmatpush1.msra.mxu0 %v3340
  %4119 = vmatprep.subr.mxu0 0.0
  %4120 = vmatpush1.msra.mxu0 %v3427
  %4121 = vmatprep.subr.mxu0 0.0
  %4122 = vmatpush1.msra.mxu0 %v3432
  %4123 = vmatprep.subr.mxu0 0.0
  %4124 = vmatpush1.msra.mxu0 %v3519
  %4125 = vmatprep.subr.mxu0 0.0
  %4126 = vmatpush1.msra.mxu0 %v3524
  %4127 = vmatprep.subr.mxu0 0.0
  %4128 = vmatpush1.msra.mxu0 %v3611
  %4129 = vmatprep.subr.mxu0 0.0
  %4130 = vmatpush1.msra.mxu0 %v3616
  %4131 = vmatprep.subr.mxu0 0.0
  %4132 = vmatpush1.msra.mxu0 %v3703
  %4133 = vmatprep.subr.mxu0 0.0
  %4134 = vmatpush1.msra.mxu0 %v3708
  %4135 = vmatprep.subr.mxu0 0.0
  %4136 = vmatpush1.msra.mxu0 %v3795
  %4137 = vmatprep.subr.mxu0 0.0
  %4138 = vmatpush1.msra.mxu0 %v3800
  %4139 = vmatprep.subr.mxu0 0.0
  %4140 = vmatpush1.msra.mxu0 %v3887
  %4141 = vmatprep.subr.mxu0 0.0
  %4142 = vmatpush1.msra.mxu0 %v3892
  %4143 = vmatprep.subr.mxu0 0.0
  %4144 = vmatpush1.msra.mxu0 %v3979
  %4145 = vmatprep.subr.mxu0 0.0
  %4146 = vmatpush1.msra.mxu0 %v3984
  %4147 = vmatprep.subr.mxu0 0.0
  %4148 = vmatpush1.msra.mxu0 %v4071
  %4149 = vmatprep.subr.mxu0 0.0
  %4150 = vmatpush1.msra.mxu0 %v4076
  %4151 = vmatprep.mubr.f32.mxu0 %v4080
  %4152 = vmatmul.mubr.f32.gmra.mrb[0].mxu0 %v4079
  %v4153 = vpop.f32.mrb[0].mxu0
  %v4154 = vadd.f32 0.0, %v4153
  %v4155 = vpop.f32.mrb[0].mxu0
  %4156 = vmatprep.mubr.f32.mxu0 %v4082
  %4157 = vmatmul.mubr.f32.gmra.mrb[0].mxu0 %v4081
  %v4158 = vpop.f32.mrb[0].mxu0
  %v4159 = vadd.f32 0.0, %v4158
  %v4160 = vpop.f32.mrb[0].mxu0
  %4161 = vmatprep.mubr.f32.mxu0 %v4084
  %4162 = vmatmul.mubr.f32.gmra.mrb[0].mxu0 %v4083
  %v4163 = vpop.f32.mrb[0].mxu0
  %v4164 = vadd.f32 0.0, %v4163
  %v4165 = vpop.f32.mrb[0].mxu0
  %4166 = vmatprep.mubr.f32.mxu0 %v4086
  %4167 = vmatmul.mubr.f32.gmra.mrb[0].mxu0 %v4085
  %v4168 = vpop.f32.mrb[0].mxu0
  %v4169 = vadd.f32 0.0, %v4168
  %v4170 = vpop.f32.mrb[0].mxu0
  %4171 = vdwg.mxu0
  %v4172 = vsel %vm2448, %v4154, 0.0
  %4173 = vadd.xlane.f32.xlu0 %v4172
  %v4174 = vpop.xlane.xlu0 %4173
  %v4175 = vsel %vm2448, %v4159, 0.0
  %4176 = vadd.xlane.f32.xlu0 %v4175
  %v4177 = vpop.xlane.xlu0 %4176
  %v4178 = vsel %vm2448, %v4164, 0.0
  %4179 = vadd.xlane.f32.xlu0 %v4178
  %v4180 = vpop.xlane.xlu0 %4179
  %v4181 = vsel %vm2448, %v4169, 0.0
  %4182 = vadd.xlane.f32.xlu0 %v4181
  %v4183 = vpop.xlane.xlu0 %4182
  %v4184 = vmul.f32 %v4154, %v4154
  %v4185 = vmul.f32 %v4159, %v4159
  %v4186 = vmul.f32 %v4164, %v4164
  %v4187 = vmul.f32 %v4169, %v4169
  %v4188 = vsel %vm2448, %v4184, 0.0
  %4189 = vadd.xlane.f32.xlu0 %v4188
  %v4190 = vpop.xlane.xlu0 %4189
  %v4191 = vsel %vm2448, %v4185, 0.0
  %4192 = vadd.xlane.f32.xlu0 %v4191
  %v4193 = vpop.xlane.xlu0 %4192
  %v4194 = vsel %vm2448, %v4186, 0.0
  %4195 = vadd.xlane.f32.xlu0 %v4194
  %v4196 = vpop.xlane.xlu0 %4195
  %v4197 = vsel %vm2448, %v4187, 0.0
  %4198 = vadd.xlane.f32.xlu0 %v4197
  %v4199 = vpop.xlane.xlu0 %4198
  %v4200 = vsel %vm2443, %v4174, %v4190
  %v4201 = vsel %vm2443, %v4177, %v4193
  %v4202 = vsel %vm2443, %v4180, %v4196
  %v4203 = vsel %vm2443, %v4183, %v4199
  %v4204 = vld [vmem:[%s17] sm:$0xff]
  %v4205 = vld [vmem:[%s17 + $0x8] sm:$0xff]
  %v4206 = vld [vmem:[%s17 + $0x10] sm:$0xff]
  %v4207 = vld [vmem:[%s17 + $0x18] sm:$0xff]
  %v4209 = vsel %vm2346, %v4204, 0
  %v4212 = vsel %vm2346, %v4205, 0
  %v4215 = vsel %vm2346, %v4206, 0
  %v4218 = vsel %vm2346, %v4207, 0
  %4220 = vmatprep.subr.mxu0 0.0
  %4221 = vmatpush1.msra.mxu0 %v4200
  %4222 = vmatprep.subr.mxu0 0.0
  %4223 = vmatpush1.msra.mxu0 %v4201
  %4224 = vmatprep.subr.mxu0 0.0
  %4225 = vmatpush1.msra.mxu0 %v4202
  %4226 = vmatprep.subr.mxu0 0.0
  %4227 = vmatpush1.msra.mxu0 %v4203
  %4228 = vmatprep.subr.mxu0 0.0
  %4229 = vmatpush1.msra.mxu0 0.0
  %4230 = vmatprep.subr.mxu0 0.0
  %4231 = vmatpush1.msra.mxu0 0.0
  %4232 = vmatprep.subr.mxu0 0.0
  %4233 = vmatpush1.msra.mxu0 0.0
  %4234 = vmatprep.subr.mxu0 0.0
  %4235 = vmatpush1.msra.mxu0 0.0
  %4236 = vmatprep.subr.mxu0 0.0
  %4237 = vmatpush1.msra.mxu0 0.0
  %4238 = vmatprep.subr.mxu0 0.0
  %4239 = vmatpush1.msra.mxu0 0.0
  %4240 = vmatprep.subr.mxu0 0.0
  %4241 = vmatpush1.msra.mxu0 0.0
  %4242 = vmatprep.subr.mxu0 0.0
  %4243 = vmatpush1.msra.mxu0 0.0
  %4244 = vmatprep.subr.mxu0 0.0
  %4245 = vmatpush1.msra.mxu0 0.0
  %4246 = vmatprep.subr.mxu0 0.0
  %4247 = vmatpush1.msra.mxu0 0.0
  %4248 = vmatprep.subr.mxu0 0.0
  %4249 = vmatpush1.msra.mxu0 0.0
  %4250 = vmatprep.subr.mxu0 0.0
  %4251 = vmatpush1.msra.mxu0 0.0
  %4252 = vmatprep.subr.mxu0 0.0
  %4253 = vmatpush1.msra.mxu0 0.0
  %4254 = vmatprep.subr.mxu0 0.0
  %4255 = vmatpush1.msra.mxu0 0.0
  %4256 = vmatprep.subr.mxu0 0.0
  %4257 = vmatpush1.msra.mxu0 0.0
  %4258 = vmatprep.subr.mxu0 0.0
  %4259 = vmatpush1.msra.mxu0 0.0
  %4260 = vmatprep.subr.mxu0 0.0
  %4261 = vmatpush1.msra.mxu0 0.0
  %4262 = vmatprep.subr.mxu0 0.0
  %4263 = vmatpush1.msra.mxu0 0.0
  %4264 = vmatprep.subr.mxu0 0.0
  %4265 = vmatpush1.msra.mxu0 0.0
  %4266 = vmatprep.subr.mxu0 0.0
  %4267 = vmatpush1.msra.mxu0 0.0
  %4268 = vmatprep.subr.mxu0 0.0
  %4269 = vmatpush1.msra.mxu0 0.0
  %4270 = vmatprep.subr.mxu0 0.0
  %4271 = vmatpush1.msra.mxu0 0.0
  %4272 = vmatprep.subr.mxu0 0.0
  %4273 = vmatpush1.msra.mxu0 0.0
  %4274 = vmatprep.subr.mxu0 0.0
  %4275 = vmatpush1.msra.mxu0 0.0
  %4276 = vmatprep.subr.mxu0 0.0
  %4277 = vmatpush1.msra.mxu0 0.0
  %4278 = vmatprep.subr.mxu0 0.0
  %4279 = vmatpush1.msra.mxu0 0.0
  %4280 = vmatprep.subr.mxu0 0.0
  %4281 = vmatpush1.msra.mxu0 0.0
  %4282 = vmatprep.subr.mxu0 0.0
  %4283 = vmatpush1.msra.mxu0 0.0
  %4284 = vmatprep.mubr.f32.mxu0 0.0
  %4285 = vmatmul.mubr.f32.gmra.mrb[0].mxu0 %v4209
  %v4286 = vpop.f32.mrb[0].mxu0
  %v4287 = vadd.f32 0.0, %v4286
  %v4288 = vpop.f32.mrb[0].mxu0
  %4289 = vmatprep.mubr.f32.mxu0 0.0
  %4290 = vmatmul.mubr.f32.gmra.mrb[0].mxu0 %v4212
  %v4291 = vpop.f32.mrb[0].mxu0
  %v4292 = vadd.f32 0.0, %v4291
  %v4293 = vpop.f32.mrb[0].mxu0
  %4294 = vmatprep.mubr.f32.mxu0 0.0
  %4295 = vmatmul.mubr.f32.gmra.mrb[0].mxu0 %v4215
  %v4296 = vpop.f32.mrb[0].mxu0
  %v4297 = vadd.f32 0.0, %v4296
  %v4298 = vpop.f32.mrb[0].mxu0
  %4299 = vmatprep.mubr.f32.mxu0 0.0
  %4300 = vmatmul.mubr.f32.gmra.mrb[0].mxu0 %v4218
  %v4301 = vpop.f32.mrb[0].mxu0
  %v4302 = vadd.f32 0.0, %v4301
  %v4303 = vpop.f32.mrb[0].mxu0
  %4304 = vdwg.mxu0
  %v4305 = vmul.f32 %v4287, %v4287
  %v4306 = vmul.f32 %v4292, %v4292
  %v4307 = vmul.f32 %v4297, %v4297
  %v4308 = vmul.f32 %v4302, %v4302
  %4313 = vrot.lane.b32.xlu0 %v4305, 1
  %v4314 = vpop.permute.xlu0 %4313
  %4315 = vrot.lane.b32.xlu0 %v4306, 1
  %v4316 = vpop.permute.xlu0 %4315
  %4317 = vrot.lane.b32.xlu0 %v4307, 1
  %v4318 = vpop.permute.xlu0 %4317
  %4319 = vrot.lane.b32.xlu0 %v4308, 1
  %v4320 = vpop.permute.xlu0 %4319
  %v4325 = vsub.f32 %v4287, %v4314
  %v4326 = vsub.f32 %v4292, %v4316
  %v4327 = vsub.f32 %v4297, %v4318
  %v4328 = vsub.f32 %v4302, %v4320
  %v4329 = vmax.f32 %v4325, 0.0
  %v4330 = vmax.f32 %v4326, 0.0
  %v4331 = vmax.f32 %v4327, 0.0
  %v4332 = vmax.f32 %v4328, 0.0
  %4334 = vset.pattern.permute.xlu0 0
  %4335 = vperm.xlu0 %4334, %v4287
  %v4336 = vpop.permute.xlu0 %4335
  %4339 = vset.pattern.permute.xlu0 0
  %4340 = vperm.xlu0 %4339, %v4292
  %v4341 = vpop.permute.xlu0 %4340
  %4344 = vset.pattern.permute.xlu0 0
  %4345 = vperm.xlu0 %4344, %v4297
  %v4346 = vpop.permute.xlu0 %4345
  %4349 = vset.pattern.permute.xlu0 0
  %4350 = vperm.xlu0 %4349, %v4302
  %v4351 = vpop.permute.xlu0 %4350
  %v4353 = vsub.f32 %v4154, %v4336
  %v4354 = vsub.f32 %v4159, %v4341
  %v4355 = vsub.f32 %v4164, %v4346
  %v4356 = vsub.f32 %v4169, %v4351
  %v4357 = vadd.f32 %v4329, 1e-05
  %v4358 = vadd.f32 %v4330, 1e-05
  %v4359 = vadd.f32 %v4331, 1e-05
  %v4360 = vadd.f32 %v4332, 1e-05
  %v4361 = vrsqrt.pop %v4357
  %v4362 = vrsqrt.pop %v4358
  %v4363 = vrsqrt.pop %v4359
  %v4364 = vrsqrt.pop %v4360
  %4366 = vset.pattern.permute.xlu0 1
  %4367 = vperm.xlu0 %4366, %v4361
  %v4368 = vpop.permute.xlu0 %4367
  %4371 = vset.pattern.permute.xlu0 1
  %4372 = vperm.xlu0 %4371, %v4362
  %v4373 = vpop.permute.xlu0 %4372
  %4376 = vset.pattern.permute.xlu0 1
  %4377 = vperm.xlu0 %4376, %v4363
  %v4378 = vpop.permute.xlu0 %4377
  %4381 = vset.pattern.permute.xlu0 1
  %4382 = vperm.xlu0 %4381, %v4364
  %v4383 = vpop.permute.xlu0 %4382
  %v4385 = vmul.f32 %v4353, %v4368
  %v4386 = vmul.f32 %v4354, %v4373
  %v4387 = vmul.f32 %v4355, %v4378
  %v4388 = vmul.f32 %v4356, %v4383
  %v4389 = vld [vmem:[%s19] sm:$0xff]
  %v4390 = vld [vmem:[%s19 + $0x8] sm:$0xff]
  %v4391 = vld [vmem:[%s19 + $0x10] sm:$0xff]
  %v4392 = vld [vmem:[%s19 + $0x18] sm:$0xff]
  %4394 = vset.pattern.permute.xlu0 0
  %4395 = vperm.xlu0 %4394, %v4389
  %v4396 = vpop.permute.xlu0 %4395
  %4399 = vset.pattern.permute.xlu0 0
  %4400 = vperm.xlu0 %4399, %v4390
  %v4401 = vpop.permute.xlu0 %4400
  %4404 = vset.pattern.permute.xlu0 0
  %4405 = vperm.xlu0 %4404, %v4391
  %v4406 = vpop.permute.xlu0 %4405
  %4409 = vset.pattern.permute.xlu0 0
  %4410 = vperm.xlu0 %4409, %v4392
  %v4411 = vpop.permute.xlu0 %4410
  %v4413 = vmul.f32 %v4385, %v4396
  %v4414 = vmul.f32 %v4386, %v4401
  %v4415 = vmul.f32 %v4387, %v4406
  %v4416 = vmul.f32 %v4388, %v4411
  %v4417 = vld [vmem:[%s21] sm:$0xff]
  %v4418 = vld [vmem:[%s21 + $0x8] sm:$0xff]
  %v4419 = vld [vmem:[%s21 + $0x10] sm:$0xff]
  %v4420 = vld [vmem:[%s21 + $0x18] sm:$0xff]
  %4422 = vset.pattern.permute.xlu0 0
  %4423 = vperm.xlu0 %4422, %v4417
  %v4424 = vpop.permute.xlu0 %4423
  %4427 = vset.pattern.permute.xlu0 0
  %4428 = vperm.xlu0 %4427, %v4418
  %v4429 = vpop.permute.xlu0 %4428
  %4432 = vset.pattern.permute.xlu0 0
  %4433 = vperm.xlu0 %4432, %v4419
  %v4434 = vpop.permute.xlu0 %4433
  %4437 = vset.pattern.permute.xlu0 0
  %4438 = vperm.xlu0 %4437, %v4420
  %v4439 = vpop.permute.xlu0 %4438
  %v4441 = vadd.f32 %v4413, %v4424
  %v4442 = vadd.f32 %v4414, %v4429
  %v4443 = vadd.f32 %v4415, %v4434
  %v4444 = vadd.f32 %v4416, %v4439
  %v4445 = vmax.f32 %v4441, 0.0
  %v4446 = vmax.f32 %v4442, 0.0
  %v4447 = vmax.f32 %v4443, 0.0
  %v4448 = vmax.f32 %v4444, 0.0
  %v4449 = vld [vmem:[%s23] sm:$0xf]
  %v4450 = vld [vmem:[%s23 + $0x4] sm:$0xf]
  %v4451 = vunpack.c.l.bf16 %v4449
  %v4452 = vunpack.c.l.bf16 %v4450
  %v4454 = vsel %vm2448, %v4445, 0
  %v4457 = vsel %vm2448, %v4446, 0
  %v4460 = vsel %vm2448, %v4447, 0
  %v4463 = vsel %vm2448, %v4448, 0
  %4465 = vmatprep.subr.mxu0 0.0
  %4466 = vmatpush1.msra.mxu0 %v4451
  %4467 = vmatprep.subr.mxu0 0.0
  %4468 = vmatpush1.msra.mxu0 %v4452
  %4469 = vmatprep.subr.mxu0 0.0
  %4470 = vmatpush1.msra.mxu0 0.0
  %4471 = vmatprep.subr.mxu0 0.0
  %4472 = vmatpush1.msra.mxu0 0.0
  %4473 = vmatprep.subr.mxu0 0.0
  %4474 = vmatpush1.msra.mxu0 0.0
  %4475 = vmatprep.subr.mxu0 0.0
  %4476 = vmatpush1.msra.mxu0 0.0
  %4477 = vmatprep.subr.mxu0 0.0
  %4478 = vmatpush1.msra.mxu0 0.0
  %4479 = vmatprep.subr.mxu0 0.0
  %4480 = vmatpush1.msra.mxu0 0.0
  %4481 = vmatprep.subr.mxu0 0.0
  %4482 = vmatpush1.msra.mxu0 0.0
  %4483 = vmatprep.subr.mxu0 0.0
  %4484 = vmatpush1.msra.mxu0 0.0
  %4485 = vmatprep.subr.mxu0 0.0
  %4486 = vmatpush1.msra.mxu0 0.0
  %4487 = vmatprep.subr.mxu0 0.0
  %4488 = vmatpush1.msra.mxu0 0.0
  %4489 = vmatprep.subr.mxu0 0.0
  %4490 = vmatpush1.msra.mxu0 0.0
  %4491 = vmatprep.subr.mxu0 0.0
  %4492 = vmatpush1.msra.mxu0 0.0
  %4493 = vmatprep.subr.mxu0 0.0
  %4494 = vmatpush1.msra.mxu0 0.0
  %4495 = vmatprep.subr.mxu0 0.0
  %4496 = vmatpush1.msra.mxu0 0.0
  %4497 = vmatprep.subr.mxu0 0.0
  %4498 = vmatpush1.msra.mxu0 0.0
  %4499 = vmatprep.subr.mxu0 0.0
  %4500 = vmatpush1.msra.mxu0 0.0
  %4501 = vmatprep.subr.mxu0 0.0
  %4502 = vmatpush1.msra.mxu0 0.0
  %4503 = vmatprep.subr.mxu0 0.0
  %4504 = vmatpush1.msra.mxu0 0.0
  %4505 = vmatprep.subr.mxu0 0.0
  %4506 = vmatpush1.msra.mxu0 0.0
  %4507 = vmatprep.subr.mxu0 0.0
  %4508 = vmatpush1.msra.mxu0 0.0
  %4509 = vmatprep.subr.mxu0 0.0
  %4510 = vmatpush1.msra.mxu0 0.0
  %4511 = vmatprep.subr.mxu0 0.0
  %4512 = vmatpush1.msra.mxu0 0.0
  %4513 = vmatprep.subr.mxu0 0.0
  %4514 = vmatpush1.msra.mxu0 0.0
  %4515 = vmatprep.subr.mxu0 0.0
  %4516 = vmatpush1.msra.mxu0 0.0
  %4517 = vmatprep.subr.mxu0 0.0
  %4518 = vmatpush1.msra.mxu0 0.0
  %4519 = vmatprep.subr.mxu0 0.0
  %4520 = vmatpush1.msra.mxu0 0.0
  %4521 = vmatprep.subr.mxu0 0.0
  %4522 = vmatpush1.msra.mxu0 0.0
  %4523 = vmatprep.subr.mxu0 0.0
  %4524 = vmatpush1.msra.mxu0 0.0
  %4525 = vmatprep.subr.mxu0 0.0
  %4526 = vmatpush1.msra.mxu0 0.0
  %4527 = vmatprep.subr.mxu0 0.0
  %4528 = vmatpush1.msra.mxu0 0.0
  %4529 = vmatprep.mubr.f32.mxu0 0.0
  %4530 = vmatmul.mubr.f32.gmra.mrb[0].mxu0 %v4454
  %v4531 = vpop.f32.mrb[0].mxu0
  %v4532 = vadd.f32 0.0, %v4531
  %v4533 = vpop.f32.mrb[0].mxu0
  %4534 = vmatprep.mubr.f32.mxu0 0.0
  %4535 = vmatmul.mubr.f32.gmra.mrb[0].mxu0 %v4457
  %v4536 = vpop.f32.mrb[0].mxu0
  %v4537 = vadd.f32 0.0, %v4536
  %v4538 = vpop.f32.mrb[0].mxu0
  %4539 = vmatprep.mubr.f32.mxu0 0.0
  %4540 = vmatmul.mubr.f32.gmra.mrb[0].mxu0 %v4460
  %v4541 = vpop.f32.mrb[0].mxu0
  %v4542 = vadd.f32 0.0, %v4541
  %v4543 = vpop.f32.mrb[0].mxu0
  %4544 = vmatprep.mubr.f32.mxu0 0.0
  %4545 = vmatmul.mubr.f32.gmra.mrb[0].mxu0 %v4463
  %v4546 = vpop.f32.mrb[0].mxu0
  %v4547 = vadd.f32 0.0, %v4546
  %v4548 = vpop.f32.mrb[0].mxu0
  %4549 = vdwg.mxu0
  %s4550 = scalar_lea.vmem %s23, 8
  %v4551 = vld [vmem:[%s4550] sm:$0xf]
  %v4552 = vld [vmem:[%s4550 + $0x4] sm:$0xf]
  %v4553 = vunpack.c.l.bf16 %v4551
  %v4554 = vunpack.c.l.bf16 %v4552
  %4555 = vmatprep.subr.mxu0 0.0
  %4556 = vmatpush1.msra.mxu0 %v4553
  %4557 = vmatprep.subr.mxu0 0.0
  %4558 = vmatpush1.msra.mxu0 %v4554
  %4559 = vmatprep.subr.mxu0 0.0
  %4560 = vmatpush1.msra.mxu0 0.0
  %4561 = vmatprep.subr.mxu0 0.0
  %4562 = vmatpush1.msra.mxu0 0.0
  %4563 = vmatprep.subr.mxu0 0.0
  %4564 = vmatpush1.msra.mxu0 0.0
  %4565 = vmatprep.subr.mxu0 0.0
  %4566 = vmatpush1.msra.mxu0 0.0
  %4567 = vmatprep.subr.mxu0 0.0
  %4568 = vmatpush1.msra.mxu0 0.0
  %4569 = vmatprep.subr.mxu0 0.0
  %4570 = vmatpush1.msra.mxu0 0.0
  %4571 = vmatprep.subr.mxu0 0.0
  %4572 = vmatpush1.msra.mxu0 0.0
  %4573 = vmatprep.subr.mxu0 0.0
  %4574 = vmatpush1.msra.mxu0 0.0
  %4575 = vmatprep.subr.mxu0 0.0
  %4576 = vmatpush1.msra.mxu0 0.0
  %4577 = vmatprep.subr.mxu0 0.0
  %4578 = vmatpush1.msra.mxu0 0.0
  %4579 = vmatprep.subr.mxu0 0.0
  %4580 = vmatpush1.msra.mxu0 0.0
  %4581 = vmatprep.subr.mxu0 0.0
  %4582 = vmatpush1.msra.mxu0 0.0
  %4583 = vmatprep.subr.mxu0 0.0
  %4584 = vmatpush1.msra.mxu0 0.0
  %4585 = vmatprep.subr.mxu0 0.0
  %4586 = vmatpush1.msra.mxu0 0.0
  %4587 = vmatprep.subr.mxu0 0.0
  %4588 = vmatpush1.msra.mxu0 0.0
  %4589 = vmatprep.subr.mxu0 0.0
  %4590 = vmatpush1.msra.mxu0 0.0
  %4591 = vmatprep.subr.mxu0 0.0
  %4592 = vmatpush1.msra.mxu0 0.0
  %4593 = vmatprep.subr.mxu0 0.0
  %4594 = vmatpush1.msra.mxu0 0.0
  %4595 = vmatprep.subr.mxu0 0.0
  %4596 = vmatpush1.msra.mxu0 0.0
  %4597 = vmatprep.subr.mxu0 0.0
  %4598 = vmatpush1.msra.mxu0 0.0
  %4599 = vmatprep.subr.mxu0 0.0
  %4600 = vmatpush1.msra.mxu0 0.0
  %4601 = vmatprep.subr.mxu0 0.0
  %4602 = vmatpush1.msra.mxu0 0.0
  %4603 = vmatprep.subr.mxu0 0.0
  %4604 = vmatpush1.msra.mxu0 0.0
  %4605 = vmatprep.subr.mxu0 0.0
  %4606 = vmatpush1.msra.mxu0 0.0
  %4607 = vmatprep.subr.mxu0 0.0
  %4608 = vmatpush1.msra.mxu0 0.0
  %4609 = vmatprep.subr.mxu0 0.0
  %4610 = vmatpush1.msra.mxu0 0.0
  %4611 = vmatprep.subr.mxu0 0.0
  %4612 = vmatpush1.msra.mxu0 0.0
  %4613 = vmatprep.subr.mxu0 0.0
  %4614 = vmatpush1.msra.mxu0 0.0
  %4615 = vmatprep.subr.mxu0 0.0
  %4616 = vmatpush1.msra.mxu0 0.0
  %4617 = vmatprep.subr.mxu0 0.0
  %4618 = vmatpush1.msra.mxu0 0.0
  %4619 = vmatprep.mubr.f32.mxu0 0.0
  %4620 = vmatmul.mubr.f32.gmra.mrb[0].mxu0 %v4454
  %v4621 = vpop.f32.mrb[0].mxu0
  %v4622 = vadd.f32 0.0, %v4621
  %v4623 = vpop.f32.mrb[0].mxu0
  %4624 = vmatprep.mubr.f32.mxu0 0.0
  %4625 = vmatmul.mubr.f32.gmra.mrb[0].mxu0 %v4457
  %v4626 = vpop.f32.mrb[0].mxu0
  %v4627 = vadd.f32 0.0, %v4626
  %v4628 = vpop.f32.mrb[0].mxu0
  %4629 = vmatprep.mubr.f32.mxu0 0.0
  %4630 = vmatmul.mubr.f32.gmra.mrb[0].mxu0 %v4460
  %v4631 = vpop.f32.mrb[0].mxu0
  %v4632 = vadd.f32 0.0, %v4631
  %v4633 = vpop.f32.mrb[0].mxu0
  %4634 = vmatprep.mubr.f32.mxu0 0.0
  %4635 = vmatmul.mubr.f32.gmra.mrb[0].mxu0 %v4463
  %v4636 = vpop.f32.mrb[0].mxu0
  %v4637 = vadd.f32 0.0, %v4636
  %v4638 = vpop.f32.mrb[0].mxu0
  %4639 = vdwg.mxu0
  %s4640 = scalar_lea.vmem %s23, 16
  %v4641 = vld [vmem:[%s4640] sm:$0xf]
  %v4642 = vld [vmem:[%s4640 + $0x4] sm:$0xf]
  %v4643 = vunpack.c.l.bf16 %v4641
  %v4644 = vunpack.c.l.bf16 %v4642
  %4645 = vmatprep.subr.mxu0 0.0
  %4646 = vmatpush1.msra.mxu0 %v4643
  %4647 = vmatprep.subr.mxu0 0.0
  %4648 = vmatpush1.msra.mxu0 %v4644
  %4649 = vmatprep.subr.mxu0 0.0
  %4650 = vmatpush1.msra.mxu0 0.0
  %4651 = vmatprep.subr.mxu0 0.0
  %4652 = vmatpush1.msra.mxu0 0.0
  %4653 = vmatprep.subr.mxu0 0.0
  %4654 = vmatpush1.msra.mxu0 0.0
  %4655 = vmatprep.subr.mxu0 0.0
  %4656 = vmatpush1.msra.mxu0 0.0
  %4657 = vmatprep.subr.mxu0 0.0
  %4658 = vmatpush1.msra.mxu0 0.0
  %4659 = vmatprep.subr.mxu0 0.0
  %4660 = vmatpush1.msra.mxu0 0.0
  %4661 = vmatprep.subr.mxu0 0.0
  %4662 = vmatpush1.msra.mxu0 0.0
  %4663 = vmatprep.subr.mxu0 0.0
  %4664 = vmatpush1.msra.mxu0 0.0
  %4665 = vmatprep.subr.mxu0 0.0
  %4666 = vmatpush1.msra.mxu0 0.0
  %4667 = vmatprep.subr.mxu0 0.0
  %4668 = vmatpush1.msra.mxu0 0.0
  %4669 = vmatprep.subr.mxu0 0.0
  %4670 = vmatpush1.msra.mxu0 0.0
  %4671 = vmatprep.subr.mxu0 0.0
  %4672 = vmatpush1.msra.mxu0 0.0
  %4673 = vmatprep.subr.mxu0 0.0
  %4674 = vmatpush1.msra.mxu0 0.0
  %4675 = vmatprep.subr.mxu0 0.0
  %4676 = vmatpush1.msra.mxu0 0.0
  %4677 = vmatprep.subr.mxu0 0.0
  %4678 = vmatpush1.msra.mxu0 0.0
  %4679 = vmatprep.subr.mxu0 0.0
  %4680 = vmatpush1.msra.mxu0 0.0
  %4681 = vmatprep.subr.mxu0 0.0
  %4682 = vmatpush1.msra.mxu0 0.0
  %4683 = vmatprep.subr.mxu0 0.0
  %4684 = vmatpush1.msra.mxu0 0.0
  %4685 = vmatprep.subr.mxu0 0.0
  %4686 = vmatpush1.msra.mxu0 0.0
  %4687 = vmatprep.subr.mxu0 0.0
  %4688 = vmatpush1.msra.mxu0 0.0
  %4689 = vmatprep.subr.mxu0 0.0
  %4690 = vmatpush1.msra.mxu0 0.0
  %4691 = vmatprep.subr.mxu0 0.0
  %4692 = vmatpush1.msra.mxu0 0.0
  %4693 = vmatprep.subr.mxu0 0.0
  %4694 = vmatpush1.msra.mxu0 0.0
  %4695 = vmatprep.subr.mxu0 0.0
  %4696 = vmatpush1.msra.mxu0 0.0
  %4697 = vmatprep.subr.mxu0 0.0
  %4698 = vmatpush1.msra.mxu0 0.0
  %4699 = vmatprep.subr.mxu0 0.0
  %4700 = vmatpush1.msra.mxu0 0.0
  %4701 = vmatprep.subr.mxu0 0.0
  %4702 = vmatpush1.msra.mxu0 0.0
  %4703 = vmatprep.subr.mxu0 0.0
  %4704 = vmatpush1.msra.mxu0 0.0
  %4705 = vmatprep.subr.mxu0 0.0
  %4706 = vmatpush1.msra.mxu0 0.0
  %4707 = vmatprep.subr.mxu0 0.0
  %4708 = vmatpush1.msra.mxu0 0.0
  %4709 = vmatprep.mubr.f32.mxu0 0.0
  %4710 = vmatmul.mubr.f32.gmra.mrb[0].mxu0 %v4454
  %v4711 = vpop.f32.mrb[0].mxu0
  %v4712 = vadd.f32 0.0, %v4711
  %v4713 = vpop.f32.mrb[0].mxu0
  %4714 = vmatprep.mubr.f32.mxu0 0.0
  %4715 = vmatmul.mubr.f32.gmra.mrb[0].mxu0 %v4457
  %v4716 = vpop.f32.mrb[0].mxu0
  %v4717 = vadd.f32 0.0, %v4716
  %v4718 = vpop.f32.mrb[0].mxu0
  %4719 = vmatprep.mubr.f32.mxu0 0.0
  %4720 = vmatmul.mubr.f32.gmra.mrb[0].mxu0 %v4460
  %v4721 = vpop.f32.mrb[0].mxu0
  %v4722 = vadd.f32 0.0, %v4721
  %v4723 = vpop.f32.mrb[0].mxu0
  %4724 = vmatprep.mubr.f32.mxu0 0.0
  %4725 = vmatmul.mubr.f32.gmra.mrb[0].mxu0 %v4463
  %v4726 = vpop.f32.mrb[0].mxu0
  %v4727 = vadd.f32 0.0, %v4726
  %v4728 = vpop.f32.mrb[0].mxu0
  %4729 = vdwg.mxu0
  %s4730 = scalar_lea.vmem %s23, 24
  %v4731 = vld [vmem:[%s4730] sm:$0xf]
  %v4732 = vld [vmem:[%s4730 + $0x4] sm:$0xf]
  %v4733 = vunpack.c.l.bf16 %v4731
  %v4734 = vunpack.c.l.bf16 %v4732
  %4735 = vmatprep.subr.mxu0 0.0
  %4736 = vmatpush1.msra.mxu0 %v4733
  %4737 = vmatprep.subr.mxu0 0.0
  %4738 = vmatpush1.msra.mxu0 %v4734
  %4739 = vmatprep.subr.mxu0 0.0
  %4740 = vmatpush1.msra.mxu0 0.0
  %4741 = vmatprep.subr.mxu0 0.0
  %4742 = vmatpush1.msra.mxu0 0.0
  %4743 = vmatprep.subr.mxu0 0.0
  %4744 = vmatpush1.msra.mxu0 0.0
  %4745 = vmatprep.subr.mxu0 0.0
  %4746 = vmatpush1.msra.mxu0 0.0
  %4747 = vmatprep.subr.mxu0 0.0
  %4748 = vmatpush1.msra.mxu0 0.0
  %4749 = vmatprep.subr.mxu0 0.0
  %4750 = vmatpush1.msra.mxu0 0.0
  %4751 = vmatprep.subr.mxu0 0.0
  %4752 = vmatpush1.msra.mxu0 0.0
  %4753 = vmatprep.subr.mxu0 0.0
  %4754 = vmatpush1.msra.mxu0 0.0
  %4755 = vmatprep.subr.mxu0 0.0
  %4756 = vmatpush1.msra.mxu0 0.0
  %4757 = vmatprep.subr.mxu0 0.0
  %4758 = vmatpush1.msra.mxu0 0.0
  %4759 = vmatprep.subr.mxu0 0.0
  %4760 = vmatpush1.msra.mxu0 0.0
  %4761 = vmatprep.subr.mxu0 0.0
  %4762 = vmatpush1.msra.mxu0 0.0
  %4763 = vmatprep.subr.mxu0 0.0
  %4764 = vmatpush1.msra.mxu0 0.0
  %4765 = vmatprep.subr.mxu0 0.0
  %4766 = vmatpush1.msra.mxu0 0.0
  %4767 = vmatprep.subr.mxu0 0.0
  %4768 = vmatpush1.msra.mxu0 0.0
  %4769 = vmatprep.subr.mxu0 0.0
  %4770 = vmatpush1.msra.mxu0 0.0
  %4771 = vmatprep.subr.mxu0 0.0
  %4772 = vmatpush1.msra.mxu0 0.0
  %4773 = vmatprep.subr.mxu0 0.0
  %4774 = vmatpush1.msra.mxu0 0.0
  %4775 = vmatprep.subr.mxu0 0.0
  %4776 = vmatpush1.msra.mxu0 0.0
  %4777 = vmatprep.subr.mxu0 0.0
  %4778 = vmatpush1.msra.mxu0 0.0
  %4779 = vmatprep.subr.mxu0 0.0
  %4780 = vmatpush1.msra.mxu0 0.0
  %4781 = vmatprep.subr.mxu0 0.0
  %4782 = vmatpush1.msra.mxu0 0.0
  %4783 = vmatprep.subr.mxu0 0.0
  %4784 = vmatpush1.msra.mxu0 0.0
  %4785 = vmatprep.subr.mxu0 0.0
  %4786 = vmatpush1.msra.mxu0 0.0
  %4787 = vmatprep.subr.mxu0 0.0
  %4788 = vmatpush1.msra.mxu0 0.0
  %4789 = vmatprep.subr.mxu0 0.0
  %4790 = vmatpush1.msra.mxu0 0.0
  %4791 = vmatprep.subr.mxu0 0.0
  %4792 = vmatpush1.msra.mxu0 0.0
  %4793 = vmatprep.subr.mxu0 0.0
  %4794 = vmatpush1.msra.mxu0 0.0
  %4795 = vmatprep.subr.mxu0 0.0
  %4796 = vmatpush1.msra.mxu0 0.0
  %4797 = vmatprep.subr.mxu0 0.0
  %4798 = vmatpush1.msra.mxu0 0.0
  %4799 = vmatprep.mubr.f32.mxu0 0.0
  %4800 = vmatmul.mubr.f32.gmra.mrb[0].mxu0 %v4454
  %v4801 = vpop.f32.mrb[0].mxu0
  %v4802 = vadd.f32 0.0, %v4801
  %v4803 = vpop.f32.mrb[0].mxu0
  %4804 = vmatprep.mubr.f32.mxu0 0.0
  %4805 = vmatmul.mubr.f32.gmra.mrb[0].mxu0 %v4457
  %v4806 = vpop.f32.mrb[0].mxu0
  %v4807 = vadd.f32 0.0, %v4806
  %v4808 = vpop.f32.mrb[0].mxu0
  %4809 = vmatprep.mubr.f32.mxu0 0.0
  %4810 = vmatmul.mubr.f32.gmra.mrb[0].mxu0 %v4460
  %v4811 = vpop.f32.mrb[0].mxu0
  %v4812 = vadd.f32 0.0, %v4811
  %v4813 = vpop.f32.mrb[0].mxu0
  %4814 = vmatprep.mubr.f32.mxu0 0.0
  %4815 = vmatmul.mubr.f32.gmra.mrb[0].mxu0 %v4463
  %v4816 = vpop.f32.mrb[0].mxu0
  %v4817 = vadd.f32 0.0, %v4816
  %v4818 = vpop.f32.mrb[0].mxu0
  %4819 = vdwg.mxu0
  %s4820 = scalar_lea.vmem %s23, 32
  %v4821 = vld [vmem:[%s4820] sm:$0xf]
  %v4822 = vld [vmem:[%s4820 + $0x4] sm:$0xf]
  %v4823 = vunpack.c.l.bf16 %v4821
  %v4824 = vunpack.c.l.bf16 %v4822
  %4825 = vmatprep.subr.mxu0 0.0
  %4826 = vmatpush1.msra.mxu0 %v4823
  %4827 = vmatprep.subr.mxu0 0.0
  %4828 = vmatpush1.msra.mxu0 %v4824
  %4829 = vmatprep.subr.mxu0 0.0
  %4830 = vmatpush1.msra.mxu0 0.0
  %4831 = vmatprep.subr.mxu0 0.0
  %4832 = vmatpush1.msra.mxu0 0.0
  %4833 = vmatprep.subr.mxu0 0.0
  %4834 = vmatpush1.msra.mxu0 0.0
  %4835 = vmatprep.subr.mxu0 0.0
  %4836 = vmatpush1.msra.mxu0 0.0
  %4837 = vmatprep.subr.mxu0 0.0
  %4838 = vmatpush1.msra.mxu0 0.0
  %4839 = vmatprep.subr.mxu0 0.0
  %4840 = vmatpush1.msra.mxu0 0.0
  %4841 = vmatprep.subr.mxu0 0.0
  %4842 = vmatpush1.msra.mxu0 0.0
  %4843 = vmatprep.subr.mxu0 0.0
  %4844 = vmatpush1.msra.mxu0 0.0
  %4845 = vmatprep.subr.mxu0 0.0
  %4846 = vmatpush1.msra.mxu0 0.0
  %4847 = vmatprep.subr.mxu0 0.0
  %4848 = vmatpush1.msra.mxu0 0.0
  %4849 = vmatprep.subr.mxu0 0.0
  %4850 = vmatpush1.msra.mxu0 0.0
  %4851 = vmatprep.subr.mxu0 0.0
  %4852 = vmatpush1.msra.mxu0 0.0
  %4853 = vmatprep.subr.mxu0 0.0
  %4854 = vmatpush1.msra.mxu0 0.0
  %4855 = vmatprep.subr.mxu0 0.0
  %4856 = vmatpush1.msra.mxu0 0.0
  %4857 = vmatprep.subr.mxu0 0.0
  %4858 = vmatpush1.msra.mxu0 0.0
  %4859 = vmatprep.subr.mxu0 0.0
  %4860 = vmatpush1.msra.mxu0 0.0
  %4861 = vmatprep.subr.mxu0 0.0
  %4862 = vmatpush1.msra.mxu0 0.0
  %4863 = vmatprep.subr.mxu0 0.0
  %4864 = vmatpush1.msra.mxu0 0.0
  %4865 = vmatprep.subr.mxu0 0.0
  %4866 = vmatpush1.msra.mxu0 0.0
  %4867 = vmatprep.subr.mxu0 0.0
  %4868 = vmatpush1.msra.mxu0 0.0
  %4869 = vmatprep.subr.mxu0 0.0
  %4870 = vmatpush1.msra.mxu0 0.0
  %4871 = vmatprep.subr.mxu0 0.0
  %4872 = vmatpush1.msra.mxu0 0.0
  %4873 = vmatprep.subr.mxu0 0.0
  %4874 = vmatpush1.msra.mxu0 0.0
  %4875 = vmatprep.subr.mxu0 0.0
  %4876 = vmatpush1.msra.mxu0 0.0
  %4877 = vmatprep.subr.mxu0 0.0
  %4878 = vmatpush1.msra.mxu0 0.0
  %4879 = vmatprep.subr.mxu0 0.0
  %4880 = vmatpush1.msra.mxu0 0.0
  %4881 = vmatprep.subr.mxu0 0.0
  %4882 = vmatpush1.msra.mxu0 0.0
  %4883 = vmatprep.subr.mxu0 0.0
  %4884 = vmatpush1.msra.mxu0 0.0
  %4885 = vmatprep.subr.mxu0 0.0
  %4886 = vmatpush1.msra.mxu0 0.0
  %4887 = vmatprep.subr.mxu0 0.0
  %4888 = vmatpush1.msra.mxu0 0.0
  %4889 = vmatprep.mubr.f32.mxu0 0.0
  %4890 = vmatmul.mubr.f32.gmra.mrb[0].mxu0 %v4454
  %v4891 = vpop.f32.mrb[0].mxu0
  %v4892 = vadd.f32 0.0, %v4891
  %v4893 = vpop.f32.mrb[0].mxu0
  %4894 = vmatprep.mubr.f32.mxu0 0.0
  %4895 = vmatmul.mubr.f32.gmra.mrb[0].mxu0 %v4457
  %v4896 = vpop.f32.mrb[0].mxu0
  %v4897 = vadd.f32 0.0, %v4896
  %v4898 = vpop.f32.mrb[0].mxu0
  %4899 = vmatprep.mubr.f32.mxu0 0.0
  %4900 = vmatmul.mubr.f32.gmra.mrb[0].mxu0 %v4460
  %v4901 = vpop.f32.mrb[0].mxu0
  %v4902 = vadd.f32 0.0, %v4901
  %v4903 = vpop.f32.mrb[0].mxu0
  %4904 = vmatprep.mubr.f32.mxu0 0.0
  %4905 = vmatmul.mubr.f32.gmra.mrb[0].mxu0 %v4463
  %v4906 = vpop.f32.mrb[0].mxu0
  %v4907 = vadd.f32 0.0, %v4906
  %v4908 = vpop.f32.mrb[0].mxu0
  %4909 = vdwg.mxu0
  %s4910 = scalar_lea.vmem %s23, 40
  %v4911 = vld [vmem:[%s4910] sm:$0xf]
  %v4912 = vld [vmem:[%s4910 + $0x4] sm:$0xf]
  %v4913 = vunpack.c.l.bf16 %v4911
  %v4914 = vunpack.c.l.bf16 %v4912
  %4915 = vmatprep.subr.mxu0 0.0
  %4916 = vmatpush1.msra.mxu0 %v4913
  %4917 = vmatprep.subr.mxu0 0.0
  %4918 = vmatpush1.msra.mxu0 %v4914
  %4919 = vmatprep.subr.mxu0 0.0
  %4920 = vmatpush1.msra.mxu0 0.0
  %4921 = vmatprep.subr.mxu0 0.0
  %4922 = vmatpush1.msra.mxu0 0.0
  %4923 = vmatprep.subr.mxu0 0.0
  %4924 = vmatpush1.msra.mxu0 0.0
  %4925 = vmatprep.subr.mxu0 0.0
  %4926 = vmatpush1.msra.mxu0 0.0
  %4927 = vmatprep.subr.mxu0 0.0
  %4928 = vmatpush1.msra.mxu0 0.0
  %4929 = vmatprep.subr.mxu0 0.0
  %4930 = vmatpush1.msra.mxu0 0.0
  %4931 = vmatprep.subr.mxu0 0.0
  %4932 = vmatpush1.msra.mxu0 0.0
  %4933 = vmatprep.subr.mxu0 0.0
  %4934 = vmatpush1.msra.mxu0 0.0
  %4935 = vmatprep.subr.mxu0 0.0
  %4936 = vmatpush1.msra.mxu0 0.0
  %4937 = vmatprep.subr.mxu0 0.0
  %4938 = vmatpush1.msra.mxu0 0.0
  %4939 = vmatprep.subr.mxu0 0.0
  %4940 = vmatpush1.msra.mxu0 0.0
  %4941 = vmatprep.subr.mxu0 0.0
  %4942 = vmatpush1.msra.mxu0 0.0
  %4943 = vmatprep.subr.mxu0 0.0
  %4944 = vmatpush1.msra.mxu0 0.0
  %4945 = vmatprep.subr.mxu0 0.0
  %4946 = vmatpush1.msra.mxu0 0.0
  %4947 = vmatprep.subr.mxu0 0.0
  %4948 = vmatpush1.msra.mxu0 0.0
  %4949 = vmatprep.subr.mxu0 0.0
  %4950 = vmatpush1.msra.mxu0 0.0
  %4951 = vmatprep.subr.mxu0 0.0
  %4952 = vmatpush1.msra.mxu0 0.0
  %4953 = vmatprep.subr.mxu0 0.0
  %4954 = vmatpush1.msra.mxu0 0.0
  %4955 = vmatprep.subr.mxu0 0.0
  %4956 = vmatpush1.msra.mxu0 0.0
  %4957 = vmatprep.subr.mxu0 0.0
  %4958 = vmatpush1.msra.mxu0 0.0
  %4959 = vmatprep.subr.mxu0 0.0
  %4960 = vmatpush1.msra.mxu0 0.0
  %4961 = vmatprep.subr.mxu0 0.0
  %4962 = vmatpush1.msra.mxu0 0.0
  %4963 = vmatprep.subr.mxu0 0.0
  %4964 = vmatpush1.msra.mxu0 0.0
  %4965 = vmatprep.subr.mxu0 0.0
  %4966 = vmatpush1.msra.mxu0 0.0
  %4967 = vmatprep.subr.mxu0 0.0
  %4968 = vmatpush1.msra.mxu0 0.0
  %4969 = vmatprep.subr.mxu0 0.0
  %4970 = vmatpush1.msra.mxu0 0.0
  %4971 = vmatprep.subr.mxu0 0.0
  %4972 = vmatpush1.msra.mxu0 0.0
  %4973 = vmatprep.subr.mxu0 0.0
  %4974 = vmatpush1.msra.mxu0 0.0
  %4975 = vmatprep.subr.mxu0 0.0
  %4976 = vmatpush1.msra.mxu0 0.0
  %4977 = vmatprep.subr.mxu0 0.0
  %4978 = vmatpush1.msra.mxu0 0.0
  %4979 = vmatprep.mubr.f32.mxu0 0.0
  %4980 = vmatmul.mubr.f32.gmra.mrb[0].mxu0 %v4454
  %v4981 = vpop.f32.mrb[0].mxu0
  %v4982 = vadd.f32 0.0, %v4981
  %v4983 = vpop.f32.mrb[0].mxu0
  %4984 = vmatprep.mubr.f32.mxu0 0.0
  %4985 = vmatmul.mubr.f32.gmra.mrb[0].mxu0 %v4457
  %v4986 = vpop.f32.mrb[0].mxu0
  %v4987 = vadd.f32 0.0, %v4986
  %v4988 = vpop.f32.mrb[0].mxu0
  %4989 = vmatprep.mubr.f32.mxu0 0.0
  %4990 = vmatmul.mubr.f32.gmra.mrb[0].mxu0 %v4460
  %v4991 = vpop.f32.mrb[0].mxu0
  %v4992 = vadd.f32 0.0, %v4991
  %v4993 = vpop.f32.mrb[0].mxu0
  %4994 = vmatprep.mubr.f32.mxu0 0.0
  %4995 = vmatmul.mubr.f32.gmra.mrb[0].mxu0 %v4463
  %v4996 = vpop.f32.mrb[0].mxu0
  %v4997 = vadd.f32 0.0, %v4996
  %v4998 = vpop.f32.mrb[0].mxu0
  %4999 = vdwg.mxu0
  %s5000 = scalar_lea.vmem %s23, 48
  %v5001 = vld [vmem:[%s5000] sm:$0xf]
  %v5002 = vld [vmem:[%s5000 + $0x4] sm:$0xf]
  %v5003 = vunpack.c.l.bf16 %v5001
  %v5004 = vunpack.c.l.bf16 %v5002
  %5005 = vmatprep.subr.mxu0 0.0
  %5006 = vmatpush1.msra.mxu0 %v5003
  %5007 = vmatprep.subr.mxu0 0.0
  %5008 = vmatpush1.msra.mxu0 %v5004
  %5009 = vmatprep.subr.mxu0 0.0
  %5010 = vmatpush1.msra.mxu0 0.0
  %5011 = vmatprep.subr.mxu0 0.0
  %5012 = vmatpush1.msra.mxu0 0.0
  %5013 = vmatprep.subr.mxu0 0.0
  %5014 = vmatpush1.msra.mxu0 0.0
  %5015 = vmatprep.subr.mxu0 0.0
  %5016 = vmatpush1.msra.mxu0 0.0
  %5017 = vmatprep.subr.mxu0 0.0
  %5018 = vmatpush1.msra.mxu0 0.0
  %5019 = vmatprep.subr.mxu0 0.0
  %5020 = vmatpush1.msra.mxu0 0.0
  %5021 = vmatprep.subr.mxu0 0.0
  %5022 = vmatpush1.msra.mxu0 0.0
  %5023 = vmatprep.subr.mxu0 0.0
  %5024 = vmatpush1.msra.mxu0 0.0
  %5025 = vmatprep.subr.mxu0 0.0
  %5026 = vmatpush1.msra.mxu0 0.0
  %5027 = vmatprep.subr.mxu0 0.0
  %5028 = vmatpush1.msra.mxu0 0.0
  %5029 = vmatprep.subr.mxu0 0.0
  %5030 = vmatpush1.msra.mxu0 0.0
  %5031 = vmatprep.subr.mxu0 0.0
  %5032 = vmatpush1.msra.mxu0 0.0
  %5033 = vmatprep.subr.mxu0 0.0
  %5034 = vmatpush1.msra.mxu0 0.0
  %5035 = vmatprep.subr.mxu0 0.0
  %5036 = vmatpush1.msra.mxu0 0.0
  %5037 = vmatprep.subr.mxu0 0.0
  %5038 = vmatpush1.msra.mxu0 0.0
  %5039 = vmatprep.subr.mxu0 0.0
  %5040 = vmatpush1.msra.mxu0 0.0
  %5041 = vmatprep.subr.mxu0 0.0
  %5042 = vmatpush1.msra.mxu0 0.0
  %5043 = vmatprep.subr.mxu0 0.0
  %5044 = vmatpush1.msra.mxu0 0.0
  %5045 = vmatprep.subr.mxu0 0.0
  %5046 = vmatpush1.msra.mxu0 0.0
  %5047 = vmatprep.subr.mxu0 0.0
  %5048 = vmatpush1.msra.mxu0 0.0
  %5049 = vmatprep.subr.mxu0 0.0
  %5050 = vmatpush1.msra.mxu0 0.0
  %5051 = vmatprep.subr.mxu0 0.0
  %5052 = vmatpush1.msra.mxu0 0.0
  %5053 = vmatprep.subr.mxu0 0.0
  %5054 = vmatpush1.msra.mxu0 0.0
  %5055 = vmatprep.subr.mxu0 0.0
  %5056 = vmatpush1.msra.mxu0 0.0
  %5057 = vmatprep.subr.mxu0 0.0
  %5058 = vmatpush1.msra.mxu0 0.0
  %5059 = vmatprep.subr.mxu0 0.0
  %5060 = vmatpush1.msra.mxu0 0.0
  %5061 = vmatprep.subr.mxu0 0.0
  %5062 = vmatpush1.msra.mxu0 0.0
  %5063 = vmatprep.subr.mxu0 0.0
  %5064 = vmatpush1.msra.mxu0 0.0
  %5065 = vmatprep.subr.mxu0 0.0
  %5066 = vmatpush1.msra.mxu0 0.0
  %5067 = vmatprep.subr.mxu0 0.0
  %5068 = vmatpush1.msra.mxu0 0.0
  %5069 = vmatprep.mubr.f32.mxu0 0.0
  %5070 = vmatmul.mubr.f32.gmra.mrb[0].mxu0 %v4454
  %v5071 = vpop.f32.mrb[0].mxu0
  %v5072 = vadd.f32 0.0, %v5071
  %v5073 = vpop.f32.mrb[0].mxu0
  %5074 = vmatprep.mubr.f32.mxu0 0.0
  %5075 = vmatmul.mubr.f32.gmra.mrb[0].mxu0 %v4457
  %v5076 = vpop.f32.mrb[0].mxu0
  %v5077 = vadd.f32 0.0, %v5076
  %v5078 = vpop.f32.mrb[0].mxu0
  %5079 = vmatprep.mubr.f32.mxu0 0.0
  %5080 = vmatmul.mubr.f32.gmra.mrb[0].mxu0 %v4460
  %v5081 = vpop.f32.mrb[0].mxu0
  %v5082 = vadd.f32 0.0, %v5081
  %v5083 = vpop.f32.mrb[0].mxu0
  %5084 = vmatprep.mubr.f32.mxu0 0.0
  %5085 = vmatmul.mubr.f32.gmra.mrb[0].mxu0 %v4463
  %v5086 = vpop.f32.mrb[0].mxu0
  %v5087 = vadd.f32 0.0, %v5086
  %v5088 = vpop.f32.mrb[0].mxu0
  %5089 = vdwg.mxu0
  %s5090 = scalar_lea.vmem %s23, 56
  %v5091 = vld [vmem:[%s5090] sm:$0xf]
  %v5092 = vld [vmem:[%s5090 + $0x4] sm:$0xf]
  %v5093 = vunpack.c.l.bf16 %v5091
  %v5094 = vunpack.c.l.bf16 %v5092
  %5095 = vmatprep.subr.mxu0 0.0
  %5096 = vmatpush1.msra.mxu0 %v5093
  %5097 = vmatprep.subr.mxu0 0.0
  %5098 = vmatpush1.msra.mxu0 %v5094
  %5099 = vmatprep.subr.mxu0 0.0
  %5100 = vmatpush1.msra.mxu0 0.0
  %5101 = vmatprep.subr.mxu0 0.0
  %5102 = vmatpush1.msra.mxu0 0.0
  %5103 = vmatprep.subr.mxu0 0.0
  %5104 = vmatpush1.msra.mxu0 0.0
  %5105 = vmatprep.subr.mxu0 0.0
  %5106 = vmatpush1.msra.mxu0 0.0
  %5107 = vmatprep.subr.mxu0 0.0
  %5108 = vmatpush1.msra.mxu0 0.0
  %5109 = vmatprep.subr.mxu0 0.0
  %5110 = vmatpush1.msra.mxu0 0.0
  %5111 = vmatprep.subr.mxu0 0.0
  %5112 = vmatpush1.msra.mxu0 0.0
  %5113 = vmatprep.subr.mxu0 0.0
  %5114 = vmatpush1.msra.mxu0 0.0
  %5115 = vmatprep.subr.mxu0 0.0
  %5116 = vmatpush1.msra.mxu0 0.0
  %5117 = vmatprep.subr.mxu0 0.0
  %5118 = vmatpush1.msra.mxu0 0.0
  %5119 = vmatprep.subr.mxu0 0.0
  %5120 = vmatpush1.msra.mxu0 0.0
  %5121 = vmatprep.subr.mxu0 0.0
  %5122 = vmatpush1.msra.mxu0 0.0
  %5123 = vmatprep.subr.mxu0 0.0
  %5124 = vmatpush1.msra.mxu0 0.0
  %5125 = vmatprep.subr.mxu0 0.0
  %5126 = vmatpush1.msra.mxu0 0.0
  %5127 = vmatprep.subr.mxu0 0.0
  %5128 = vmatpush1.msra.mxu0 0.0
  %5129 = vmatprep.subr.mxu0 0.0
  %5130 = vmatpush1.msra.mxu0 0.0
  %5131 = vmatprep.subr.mxu0 0.0
  %5132 = vmatpush1.msra.mxu0 0.0
  %5133 = vmatprep.subr.mxu0 0.0
  %5134 = vmatpush1.msra.mxu0 0.0
  %5135 = vmatprep.subr.mxu0 0.0
  %5136 = vmatpush1.msra.mxu0 0.0
  %5137 = vmatprep.subr.mxu0 0.0
  %5138 = vmatpush1.msra.mxu0 0.0
  %5139 = vmatprep.subr.mxu0 0.0
  %5140 = vmatpush1.msra.mxu0 0.0
  %5141 = vmatprep.subr.mxu0 0.0
  %5142 = vmatpush1.msra.mxu0 0.0
  %5143 = vmatprep.subr.mxu0 0.0
  %5144 = vmatpush1.msra.mxu0 0.0
  %5145 = vmatprep.subr.mxu0 0.0
  %5146 = vmatpush1.msra.mxu0 0.0
  %5147 = vmatprep.subr.mxu0 0.0
  %5148 = vmatpush1.msra.mxu0 0.0
  %5149 = vmatprep.subr.mxu0 0.0
  %5150 = vmatpush1.msra.mxu0 0.0
  %5151 = vmatprep.subr.mxu0 0.0
  %5152 = vmatpush1.msra.mxu0 0.0
  %5153 = vmatprep.subr.mxu0 0.0
  %5154 = vmatpush1.msra.mxu0 0.0
  %5155 = vmatprep.subr.mxu0 0.0
  %5156 = vmatpush1.msra.mxu0 0.0
  %5157 = vmatprep.subr.mxu0 0.0
  %5158 = vmatpush1.msra.mxu0 0.0
  %5159 = vmatprep.mubr.f32.mxu0 0.0
  %5160 = vmatmul.mubr.f32.gmra.mrb[0].mxu0 %v4454
  %v5161 = vpop.f32.mrb[0].mxu0
  %v5162 = vadd.f32 0.0, %v5161
  %v5163 = vpop.f32.mrb[0].mxu0
  %5164 = vmatprep.mubr.f32.mxu0 0.0
  %5165 = vmatmul.mubr.f32.gmra.mrb[0].mxu0 %v4457
  %v5166 = vpop.f32.mrb[0].mxu0
  %v5167 = vadd.f32 0.0, %v5166
  %v5168 = vpop.f32.mrb[0].mxu0
  %5169 = vmatprep.mubr.f32.mxu0 0.0
  %5170 = vmatmul.mubr.f32.gmra.mrb[0].mxu0 %v4460
  %v5171 = vpop.f32.mrb[0].mxu0
  %v5172 = vadd.f32 0.0, %v5171
  %v5173 = vpop.f32.mrb[0].mxu0
  %5174 = vmatprep.mubr.f32.mxu0 0.0
  %5175 = vmatmul.mubr.f32.gmra.mrb[0].mxu0 %v4463
  %v5176 = vpop.f32.mrb[0].mxu0
  %v5177 = vadd.f32 0.0, %v5176
  %v5178 = vpop.f32.mrb[0].mxu0
  %5179 = vdwg.mxu0
  %s5180 = scalar_lea.vmem %s23, 64
  %v5181 = vld [vmem:[%s5180] sm:$0xf]
  %v5182 = vld [vmem:[%s5180 + $0x4] sm:$0xf]
  %v5183 = vunpack.c.l.bf16 %v5181
  %v5184 = vunpack.c.l.bf16 %v5182
  %5185 = vmatprep.subr.mxu0 0.0
  %5186 = vmatpush1.msra.mxu0 %v5183
  %5187 = vmatprep.subr.mxu0 0.0
  %5188 = vmatpush1.msra.mxu0 %v5184
  %5189 = vmatprep.subr.mxu0 0.0
  %5190 = vmatpush1.msra.mxu0 0.0
  %5191 = vmatprep.subr.mxu0 0.0
  %5192 = vmatpush1.msra.mxu0 0.0
  %5193 = vmatprep.subr.mxu0 0.0
  %5194 = vmatpush1.msra.mxu0 0.0
  %5195 = vmatprep.subr.mxu0 0.0
  %5196 = vmatpush1.msra.mxu0 0.0
  %5197 = vmatprep.subr.mxu0 0.0
  %5198 = vmatpush1.msra.mxu0 0.0
  %5199 = vmatprep.subr.mxu0 0.0
  %5200 = vmatpush1.msra.mxu0 0.0
  %5201 = vmatprep.subr.mxu0 0.0
  %5202 = vmatpush1.msra.mxu0 0.0
  %5203 = vmatprep.subr.mxu0 0.0
  %5204 = vmatpush1.msra.mxu0 0.0
  %5205 = vmatprep.subr.mxu0 0.0
  %5206 = vmatpush1.msra.mxu0 0.0
  %5207 = vmatprep.subr.mxu0 0.0
  %5208 = vmatpush1.msra.mxu0 0.0
  %5209 = vmatprep.subr.mxu0 0.0
  %5210 = vmatpush1.msra.mxu0 0.0
  %5211 = vmatprep.subr.mxu0 0.0
  %5212 = vmatpush1.msra.mxu0 0.0
  %5213 = vmatprep.subr.mxu0 0.0
  %5214 = vmatpush1.msra.mxu0 0.0
  %5215 = vmatprep.subr.mxu0 0.0
  %5216 = vmatpush1.msra.mxu0 0.0
  %5217 = vmatprep.subr.mxu0 0.0
  %5218 = vmatpush1.msra.mxu0 0.0
  %5219 = vmatprep.subr.mxu0 0.0
  %5220 = vmatpush1.msra.mxu0 0.0
  %5221 = vmatprep.subr.mxu0 0.0
  %5222 = vmatpush1.msra.mxu0 0.0
  %5223 = vmatprep.subr.mxu0 0.0
  %5224 = vmatpush1.msra.mxu0 0.0
  %5225 = vmatprep.subr.mxu0 0.0
  %5226 = vmatpush1.msra.mxu0 0.0
  %5227 = vmatprep.subr.mxu0 0.0
  %5228 = vmatpush1.msra.mxu0 0.0
  %5229 = vmatprep.subr.mxu0 0.0
  %5230 = vmatpush1.msra.mxu0 0.0
  %5231 = vmatprep.subr.mxu0 0.0
  %5232 = vmatpush1.msra.mxu0 0.0
  %5233 = vmatprep.subr.mxu0 0.0
  %5234 = vmatpush1.msra.mxu0 0.0
  %5235 = vmatprep.subr.mxu0 0.0
  %5236 = vmatpush1.msra.mxu0 0.0
  %5237 = vmatprep.subr.mxu0 0.0
  %5238 = vmatpush1.msra.mxu0 0.0
  %5239 = vmatprep.subr.mxu0 0.0
  %5240 = vmatpush1.msra.mxu0 0.0
  %5241 = vmatprep.subr.mxu0 0.0
  %5242 = vmatpush1.msra.mxu0 0.0
  %5243 = vmatprep.subr.mxu0 0.0
  %5244 = vmatpush1.msra.mxu0 0.0
  %5245 = vmatprep.subr.mxu0 0.0
  %5246 = vmatpush1.msra.mxu0 0.0
  %5247 = vmatprep.subr.mxu0 0.0
  %5248 = vmatpush1.msra.mxu0 0.0
  %5249 = vmatprep.mubr.f32.mxu0 0.0
  %5250 = vmatmul.mubr.f32.gmra.mrb[0].mxu0 %v4454
  %v5251 = vpop.f32.mrb[0].mxu0
  %v5252 = vadd.f32 0.0, %v5251
  %v5253 = vpop.f32.mrb[0].mxu0
  %5254 = vmatprep.mubr.f32.mxu0 0.0
  %5255 = vmatmul.mubr.f32.gmra.mrb[0].mxu0 %v4457
  %v5256 = vpop.f32.mrb[0].mxu0
  %v5257 = vadd.f32 0.0, %v5256
  %v5258 = vpop.f32.mrb[0].mxu0
  %5259 = vmatprep.mubr.f32.mxu0 0.0
  %5260 = vmatmul.mubr.f32.gmra.mrb[0].mxu0 %v4460
  %v5261 = vpop.f32.mrb[0].mxu0
  %v5262 = vadd.f32 0.0, %v5261
  %v5263 = vpop.f32.mrb[0].mxu0
  %5264 = vmatprep.mubr.f32.mxu0 0.0
  %5265 = vmatmul.mubr.f32.gmra.mrb[0].mxu0 %v4463
  %v5266 = vpop.f32.mrb[0].mxu0
  %v5267 = vadd.f32 0.0, %v5266
  %v5268 = vpop.f32.mrb[0].mxu0
  %5269 = vdwg.mxu0
  %s5270 = scalar_lea.vmem %s23, 72
  %v5271 = vld [vmem:[%s5270] sm:$0xf]
  %v5272 = vld [vmem:[%s5270 + $0x4] sm:$0xf]
  %v5273 = vunpack.c.l.bf16 %v5271
  %v5274 = vunpack.c.l.bf16 %v5272
  %5275 = vmatprep.subr.mxu0 0.0
  %5276 = vmatpush1.msra.mxu0 %v5273
  %5277 = vmatprep.subr.mxu0 0.0
  %5278 = vmatpush1.msra.mxu0 %v5274
  %5279 = vmatprep.subr.mxu0 0.0
  %5280 = vmatpush1.msra.mxu0 0.0
  %5281 = vmatprep.subr.mxu0 0.0
  %5282 = vmatpush1.msra.mxu0 0.0
  %5283 = vmatprep.subr.mxu0 0.0
  %5284 = vmatpush1.msra.mxu0 0.0
  %5285 = vmatprep.subr.mxu0 0.0
  %5286 = vmatpush1.msra.mxu0 0.0
  %5287 = vmatprep.subr.mxu0 0.0
  %5288 = vmatpush1.msra.mxu0 0.0
  %5289 = vmatprep.subr.mxu0 0.0
  %5290 = vmatpush1.msra.mxu0 0.0
  %5291 = vmatprep.subr.mxu0 0.0
  %5292 = vmatpush1.msra.mxu0 0.0
  %5293 = vmatprep.subr.mxu0 0.0
  %5294 = vmatpush1.msra.mxu0 0.0
  %5295 = vmatprep.subr.mxu0 0.0
  %5296 = vmatpush1.msra.mxu0 0.0
  %5297 = vmatprep.subr.mxu0 0.0
  %5298 = vmatpush1.msra.mxu0 0.0
  %5299 = vmatprep.subr.mxu0 0.0
  %5300 = vmatpush1.msra.mxu0 0.0
  %5301 = vmatprep.subr.mxu0 0.0
  %5302 = vmatpush1.msra.mxu0 0.0
  %5303 = vmatprep.subr.mxu0 0.0
  %5304 = vmatpush1.msra.mxu0 0.0
  %5305 = vmatprep.subr.mxu0 0.0
  %5306 = vmatpush1.msra.mxu0 0.0
  %5307 = vmatprep.subr.mxu0 0.0
  %5308 = vmatpush1.msra.mxu0 0.0
  %5309 = vmatprep.subr.mxu0 0.0
  %5310 = vmatpush1.msra.mxu0 0.0
  %5311 = vmatprep.subr.mxu0 0.0
  %5312 = vmatpush1.msra.mxu0 0.0
  %5313 = vmatprep.subr.mxu0 0.0
  %5314 = vmatpush1.msra.mxu0 0.0
  %5315 = vmatprep.subr.mxu0 0.0
  %5316 = vmatpush1.msra.mxu0 0.0
  %5317 = vmatprep.subr.mxu0 0.0
  %5318 = vmatpush1.msra.mxu0 0.0
  %5319 = vmatprep.subr.mxu0 0.0
  %5320 = vmatpush1.msra.mxu0 0.0
  %5321 = vmatprep.subr.mxu0 0.0
  %5322 = vmatpush1.msra.mxu0 0.0
  %5323 = vmatprep.subr.mxu0 0.0
  %5324 = vmatpush1.msra.mxu0 0.0
  %5325 = vmatprep.subr.mxu0 0.0
  %5326 = vmatpush1.msra.mxu0 0.0
  %5327 = vmatprep.subr.mxu0 0.0
  %5328 = vmatpush1.msra.mxu0 0.0
  %5329 = vmatprep.subr.mxu0 0.0
  %5330 = vmatpush1.msra.mxu0 0.0
  %5331 = vmatprep.subr.mxu0 0.0
  %5332 = vmatpush1.msra.mxu0 0.0
  %5333 = vmatprep.subr.mxu0 0.0
  %5334 = vmatpush1.msra.mxu0 0.0
  %5335 = vmatprep.subr.mxu0 0.0
  %5336 = vmatpush1.msra.mxu0 0.0
  %5337 = vmatprep.subr.mxu0 0.0
  %5338 = vmatpush1.msra.mxu0 0.0
  %5339 = vmatprep.mubr.f32.mxu0 0.0
  %5340 = vmatmul.mubr.f32.gmra.mrb[0].mxu0 %v4454
  %v5341 = vpop.f32.mrb[0].mxu0
  %v5342 = vadd.f32 0.0, %v5341
  %v5343 = vpop.f32.mrb[0].mxu0
  %5344 = vmatprep.mubr.f32.mxu0 0.0
  %5345 = vmatmul.mubr.f32.gmra.mrb[0].mxu0 %v4457
  %v5346 = vpop.f32.mrb[0].mxu0
  %v5347 = vadd.f32 0.0, %v5346
  %v5348 = vpop.f32.mrb[0].mxu0
  %5349 = vmatprep.mubr.f32.mxu0 0.0
  %5350 = vmatmul.mubr.f32.gmra.mrb[0].mxu0 %v4460
  %v5351 = vpop.f32.mrb[0].mxu0
  %v5352 = vadd.f32 0.0, %v5351
  %v5353 = vpop.f32.mrb[0].mxu0
  %5354 = vmatprep.mubr.f32.mxu0 0.0
  %5355 = vmatmul.mubr.f32.gmra.mrb[0].mxu0 %v4463
  %v5356 = vpop.f32.mrb[0].mxu0
  %v5357 = vadd.f32 0.0, %v5356
  %v5358 = vpop.f32.mrb[0].mxu0
  %5359 = vdwg.mxu0
  %s5360 = scalar_lea.vmem %s23, 80
  %v5361 = vld [vmem:[%s5360] sm:$0xf]
  %v5362 = vld [vmem:[%s5360 + $0x4] sm:$0xf]
  %v5363 = vunpack.c.l.bf16 %v5361
  %v5364 = vunpack.c.l.bf16 %v5362
  %5365 = vmatprep.subr.mxu0 0.0
  %5366 = vmatpush1.msra.mxu0 %v5363
  %5367 = vmatprep.subr.mxu0 0.0
  %5368 = vmatpush1.msra.mxu0 %v5364
  %5369 = vmatprep.subr.mxu0 0.0
  %5370 = vmatpush1.msra.mxu0 0.0
  %5371 = vmatprep.subr.mxu0 0.0
  %5372 = vmatpush1.msra.mxu0 0.0
  %5373 = vmatprep.subr.mxu0 0.0
  %5374 = vmatpush1.msra.mxu0 0.0
  %5375 = vmatprep.subr.mxu0 0.0
  %5376 = vmatpush1.msra.mxu0 0.0
  %5377 = vmatprep.subr.mxu0 0.0
  %5378 = vmatpush1.msra.mxu0 0.0
  %5379 = vmatprep.subr.mxu0 0.0
  %5380 = vmatpush1.msra.mxu0 0.0
  %5381 = vmatprep.subr.mxu0 0.0
  %5382 = vmatpush1.msra.mxu0 0.0
  %5383 = vmatprep.subr.mxu0 0.0
  %5384 = vmatpush1.msra.mxu0 0.0
  %5385 = vmatprep.subr.mxu0 0.0
  %5386 = vmatpush1.msra.mxu0 0.0
  %5387 = vmatprep.subr.mxu0 0.0
  %5388 = vmatpush1.msra.mxu0 0.0
  %5389 = vmatprep.subr.mxu0 0.0
  %5390 = vmatpush1.msra.mxu0 0.0
  %5391 = vmatprep.subr.mxu0 0.0
  %5392 = vmatpush1.msra.mxu0 0.0
  %5393 = vmatprep.subr.mxu0 0.0
  %5394 = vmatpush1.msra.mxu0 0.0
  %5395 = vmatprep.subr.mxu0 0.0
  %5396 = vmatpush1.msra.mxu0 0.0
  %5397 = vmatprep.subr.mxu0 0.0
  %5398 = vmatpush1.msra.mxu0 0.0
  %5399 = vmatprep.subr.mxu0 0.0
  %5400 = vmatpush1.msra.mxu0 0.0
  %5401 = vmatprep.subr.mxu0 0.0
  %5402 = vmatpush1.msra.mxu0 0.0
  %5403 = vmatprep.subr.mxu0 0.0
  %5404 = vmatpush1.msra.mxu0 0.0
  %5405 = vmatprep.subr.mxu0 0.0
  %5406 = vmatpush1.msra.mxu0 0.0
  %5407 = vmatprep.subr.mxu0 0.0
  %5408 = vmatpush1.msra.mxu0 0.0
  %5409 = vmatprep.subr.mxu0 0.0
  %5410 = vmatpush1.msra.mxu0 0.0
  %5411 = vmatprep.subr.mxu0 0.0
  %5412 = vmatpush1.msra.mxu0 0.0
  %5413 = vmatprep.subr.mxu0 0.0
  %5414 = vmatpush1.msra.mxu0 0.0
  %5415 = vmatprep.subr.mxu0 0.0
  %5416 = vmatpush1.msra.mxu0 0.0
  %5417 = vmatprep.subr.mxu0 0.0
  %5418 = vmatpush1.msra.mxu0 0.0
  %5419 = vmatprep.subr.mxu0 0.0
  %5420 = vmatpush1.msra.mxu0 0.0
  %5421 = vmatprep.subr.mxu0 0.0
  %5422 = vmatpush1.msra.mxu0 0.0
  %5423 = vmatprep.subr.mxu0 0.0
  %5424 = vmatpush1.msra.mxu0 0.0
  %5425 = vmatprep.subr.mxu0 0.0
  %5426 = vmatpush1.msra.mxu0 0.0
  %5427 = vmatprep.subr.mxu0 0.0
  %5428 = vmatpush1.msra.mxu0 0.0
  %5429 = vmatprep.mubr.f32.mxu0 0.0
  %5430 = vmatmul.mubr.f32.gmra.mrb[0].mxu0 %v4454
  %v5431 = vpop.f32.mrb[0].mxu0
  %v5432 = vadd.f32 0.0, %v5431
  %v5433 = vpop.f32.mrb[0].mxu0
  %5434 = vmatprep.mubr.f32.mxu0 0.0
  %5435 = vmatmul.mubr.f32.gmra.mrb[0].mxu0 %v4457
  %v5436 = vpop.f32.mrb[0].mxu0
  %v5437 = vadd.f32 0.0, %v5436
  %v5438 = vpop.f32.mrb[0].mxu0
  %5439 = vmatprep.mubr.f32.mxu0 0.0
  %5440 = vmatmul.mubr.f32.gmra.mrb[0].mxu0 %v4460
  %v5441 = vpop.f32.mrb[0].mxu0
  %v5442 = vadd.f32 0.0, %v5441
  %v5443 = vpop.f32.mrb[0].mxu0
  %5444 = vmatprep.mubr.f32.mxu0 0.0
  %5445 = vmatmul.mubr.f32.gmra.mrb[0].mxu0 %v4463
  %v5446 = vpop.f32.mrb[0].mxu0
  %v5447 = vadd.f32 0.0, %v5446
  %v5448 = vpop.f32.mrb[0].mxu0
  %5449 = vdwg.mxu0
  %s5450 = scalar_lea.vmem %s23, 88
  %v5451 = vld [vmem:[%s5450] sm:$0xf]
  %v5452 = vld [vmem:[%s5450 + $0x4] sm:$0xf]
  %v5453 = vunpack.c.l.bf16 %v5451
  %v5454 = vunpack.c.l.bf16 %v5452
  %5455 = vmatprep.subr.mxu0 0.0
  %5456 = vmatpush1.msra.mxu0 %v5453
  %5457 = vmatprep.subr.mxu0 0.0
  %5458 = vmatpush1.msra.mxu0 %v5454
  %5459 = vmatprep.subr.mxu0 0.0
  %5460 = vmatpush1.msra.mxu0 0.0
  %5461 = vmatprep.subr.mxu0 0.0
  %5462 = vmatpush1.msra.mxu0 0.0
  %5463 = vmatprep.subr.mxu0 0.0
  %5464 = vmatpush1.msra.mxu0 0.0
  %5465 = vmatprep.subr.mxu0 0.0
  %5466 = vmatpush1.msra.mxu0 0.0
  %5467 = vmatprep.subr.mxu0 0.0
  %5468 = vmatpush1.msra.mxu0 0.0
  %5469 = vmatprep.subr.mxu0 0.0
  %5470 = vmatpush1.msra.mxu0 0.0
  %5471 = vmatprep.subr.mxu0 0.0
  %5472 = vmatpush1.msra.mxu0 0.0
  %5473 = vmatprep.subr.mxu0 0.0
  %5474 = vmatpush1.msra.mxu0 0.0
  %5475 = vmatprep.subr.mxu0 0.0
  %5476 = vmatpush1.msra.mxu0 0.0
  %5477 = vmatprep.subr.mxu0 0.0
  %5478 = vmatpush1.msra.mxu0 0.0
  %5479 = vmatprep.subr.mxu0 0.0
  %5480 = vmatpush1.msra.mxu0 0.0
  %5481 = vmatprep.subr.mxu0 0.0
  %5482 = vmatpush1.msra.mxu0 0.0
  %5483 = vmatprep.subr.mxu0 0.0
  %5484 = vmatpush1.msra.mxu0 0.0
  %5485 = vmatprep.subr.mxu0 0.0
  %5486 = vmatpush1.msra.mxu0 0.0
  %5487 = vmatprep.subr.mxu0 0.0
  %5488 = vmatpush1.msra.mxu0 0.0
  %5489 = vmatprep.subr.mxu0 0.0
  %5490 = vmatpush1.msra.mxu0 0.0
  %5491 = vmatprep.subr.mxu0 0.0
  %5492 = vmatpush1.msra.mxu0 0.0
  %5493 = vmatprep.subr.mxu0 0.0
  %5494 = vmatpush1.msra.mxu0 0.0
  %5495 = vmatprep.subr.mxu0 0.0
  %5496 = vmatpush1.msra.mxu0 0.0
  %5497 = vmatprep.subr.mxu0 0.0
  %5498 = vmatpush1.msra.mxu0 0.0
  %5499 = vmatprep.subr.mxu0 0.0
  %5500 = vmatpush1.msra.mxu0 0.0
  %5501 = vmatprep.subr.mxu0 0.0
  %5502 = vmatpush1.msra.mxu0 0.0
  %5503 = vmatprep.subr.mxu0 0.0
  %5504 = vmatpush1.msra.mxu0 0.0
  %5505 = vmatprep.subr.mxu0 0.0
  %5506 = vmatpush1.msra.mxu0 0.0
  %5507 = vmatprep.subr.mxu0 0.0
  %5508 = vmatpush1.msra.mxu0 0.0
  %5509 = vmatprep.subr.mxu0 0.0
  %5510 = vmatpush1.msra.mxu0 0.0
  %5511 = vmatprep.subr.mxu0 0.0
  %5512 = vmatpush1.msra.mxu0 0.0
  %5513 = vmatprep.subr.mxu0 0.0
  %5514 = vmatpush1.msra.mxu0 0.0
  %5515 = vmatprep.subr.mxu0 0.0
  %5516 = vmatpush1.msra.mxu0 0.0
  %5517 = vmatprep.subr.mxu0 0.0
  %5518 = vmatpush1.msra.mxu0 0.0
  %5519 = vmatprep.mubr.f32.mxu0 0.0
  %5520 = vmatmul.mubr.f32.gmra.mrb[0].mxu0 %v4454
  %v5521 = vpop.f32.mrb[0].mxu0
  %v5522 = vadd.f32 0.0, %v5521
  %v5523 = vpop.f32.mrb[0].mxu0
  %5524 = vmatprep.mubr.f32.mxu0 0.0
  %5525 = vmatmul.mubr.f32.gmra.mrb[0].mxu0 %v4457
  %v5526 = vpop.f32.mrb[0].mxu0
  %v5527 = vadd.f32 0.0, %v5526
  %v5528 = vpop.f32.mrb[0].mxu0
  %5529 = vmatprep.mubr.f32.mxu0 0.0
  %5530 = vmatmul.mubr.f32.gmra.mrb[0].mxu0 %v4460
  %v5531 = vpop.f32.mrb[0].mxu0
  %v5532 = vadd.f32 0.0, %v5531
  %v5533 = vpop.f32.mrb[0].mxu0
  %5534 = vmatprep.mubr.f32.mxu0 0.0
  %5535 = vmatmul.mubr.f32.gmra.mrb[0].mxu0 %v4463
  %v5536 = vpop.f32.mrb[0].mxu0
  %v5537 = vadd.f32 0.0, %v5536
  %v5538 = vpop.f32.mrb[0].mxu0
  %5539 = vdwg.mxu0
  %s5540 = scalar_lea.vmem %s23, 96
  %v5541 = vld [vmem:[%s5540] sm:$0xf]
  %v5542 = vld [vmem:[%s5540 + $0x4] sm:$0xf]
  %v5543 = vunpack.c.l.bf16 %v5541
  %v5544 = vunpack.c.l.bf16 %v5542
  %5545 = vmatprep.subr.mxu0 0.0
  %5546 = vmatpush1.msra.mxu0 %v5543
  %5547 = vmatprep.subr.mxu0 0.0
  %5548 = vmatpush1.msra.mxu0 %v5544
  %5549 = vmatprep.subr.mxu0 0.0
  %5550 = vmatpush1.msra.mxu0 0.0
  %5551 = vmatprep.subr.mxu0 0.0
  %5552 = vmatpush1.msra.mxu0 0.0
  %5553 = vmatprep.subr.mxu0 0.0
  %5554 = vmatpush1.msra.mxu0 0.0
  %5555 = vmatprep.subr.mxu0 0.0
  %5556 = vmatpush1.msra.mxu0 0.0
  %5557 = vmatprep.subr.mxu0 0.0
  %5558 = vmatpush1.msra.mxu0 0.0
  %5559 = vmatprep.subr.mxu0 0.0
  %5560 = vmatpush1.msra.mxu0 0.0
  %5561 = vmatprep.subr.mxu0 0.0
  %5562 = vmatpush1.msra.mxu0 0.0
  %5563 = vmatprep.subr.mxu0 0.0
  %5564 = vmatpush1.msra.mxu0 0.0
  %5565 = vmatprep.subr.mxu0 0.0
  %5566 = vmatpush1.msra.mxu0 0.0
  %5567 = vmatprep.subr.mxu0 0.0
  %5568 = vmatpush1.msra.mxu0 0.0
  %5569 = vmatprep.subr.mxu0 0.0
  %5570 = vmatpush1.msra.mxu0 0.0
  %5571 = vmatprep.subr.mxu0 0.0
  %5572 = vmatpush1.msra.mxu0 0.0
  %5573 = vmatprep.subr.mxu0 0.0
  %5574 = vmatpush1.msra.mxu0 0.0
  %5575 = vmatprep.subr.mxu0 0.0
  %5576 = vmatpush1.msra.mxu0 0.0
  %5577 = vmatprep.subr.mxu0 0.0
  %5578 = vmatpush1.msra.mxu0 0.0
  %5579 = vmatprep.subr.mxu0 0.0
  %5580 = vmatpush1.msra.mxu0 0.0
  %5581 = vmatprep.subr.mxu0 0.0
  %5582 = vmatpush1.msra.mxu0 0.0
  %5583 = vmatprep.subr.mxu0 0.0
  %5584 = vmatpush1.msra.mxu0 0.0
  %5585 = vmatprep.subr.mxu0 0.0
  %5586 = vmatpush1.msra.mxu0 0.0
  %5587 = vmatprep.subr.mxu0 0.0
  %5588 = vmatpush1.msra.mxu0 0.0
  %5589 = vmatprep.subr.mxu0 0.0
  %5590 = vmatpush1.msra.mxu0 0.0
  %5591 = vmatprep.subr.mxu0 0.0
  %5592 = vmatpush1.msra.mxu0 0.0
  %5593 = vmatprep.subr.mxu0 0.0
  %5594 = vmatpush1.msra.mxu0 0.0
  %5595 = vmatprep.subr.mxu0 0.0
  %5596 = vmatpush1.msra.mxu0 0.0
  %5597 = vmatprep.subr.mxu0 0.0
  %5598 = vmatpush1.msra.mxu0 0.0
  %5599 = vmatprep.subr.mxu0 0.0
  %5600 = vmatpush1.msra.mxu0 0.0
  %5601 = vmatprep.subr.mxu0 0.0
  %5602 = vmatpush1.msra.mxu0 0.0
  %5603 = vmatprep.subr.mxu0 0.0
  %5604 = vmatpush1.msra.mxu0 0.0
  %5605 = vmatprep.subr.mxu0 0.0
  %5606 = vmatpush1.msra.mxu0 0.0
  %5607 = vmatprep.subr.mxu0 0.0
  %5608 = vmatpush1.msra.mxu0 0.0
  %5609 = vmatprep.mubr.f32.mxu0 0.0
  %5610 = vmatmul.mubr.f32.gmra.mrb[0].mxu0 %v4454
  %v5611 = vpop.f32.mrb[0].mxu0
  %v5612 = vadd.f32 0.0, %v5611
  %v5613 = vpop.f32.mrb[0].mxu0
  %5614 = vmatprep.mubr.f32.mxu0 0.0
  %5615 = vmatmul.mubr.f32.gmra.mrb[0].mxu0 %v4457
  %v5616 = vpop.f32.mrb[0].mxu0
  %v5617 = vadd.f32 0.0, %v5616
  %v5618 = vpop.f32.mrb[0].mxu0
  %5619 = vmatprep.mubr.f32.mxu0 0.0
  %5620 = vmatmul.mubr.f32.gmra.mrb[0].mxu0 %v4460
  %v5621 = vpop.f32.mrb[0].mxu0
  %v5622 = vadd.f32 0.0, %v5621
  %v5623 = vpop.f32.mrb[0].mxu0
  %5624 = vmatprep.mubr.f32.mxu0 0.0
  %5625 = vmatmul.mubr.f32.gmra.mrb[0].mxu0 %v4463
  %v5626 = vpop.f32.mrb[0].mxu0
  %v5627 = vadd.f32 0.0, %v5626
  %v5628 = vpop.f32.mrb[0].mxu0
  %5629 = vdwg.mxu0
  %s5630 = scalar_lea.vmem %s23, 104
  %v5631 = vld [vmem:[%s5630] sm:$0xf]
  %v5632 = vld [vmem:[%s5630 + $0x4] sm:$0xf]
  %v5633 = vunpack.c.l.bf16 %v5631
  %v5634 = vunpack.c.l.bf16 %v5632
  %5635 = vmatprep.subr.mxu0 0.0
  %5636 = vmatpush1.msra.mxu0 %v5633
  %5637 = vmatprep.subr.mxu0 0.0
  %5638 = vmatpush1.msra.mxu0 %v5634
  %5639 = vmatprep.subr.mxu0 0.0
  %5640 = vmatpush1.msra.mxu0 0.0
  %5641 = vmatprep.subr.mxu0 0.0
  %5642 = vmatpush1.msra.mxu0 0.0
  %5643 = vmatprep.subr.mxu0 0.0
  %5644 = vmatpush1.msra.mxu0 0.0
  %5645 = vmatprep.subr.mxu0 0.0
  %5646 = vmatpush1.msra.mxu0 0.0
  %5647 = vmatprep.subr.mxu0 0.0
  %5648 = vmatpush1.msra.mxu0 0.0
  %5649 = vmatprep.subr.mxu0 0.0
  %5650 = vmatpush1.msra.mxu0 0.0
  %5651 = vmatprep.subr.mxu0 0.0
  %5652 = vmatpush1.msra.mxu0 0.0
  %5653 = vmatprep.subr.mxu0 0.0
  %5654 = vmatpush1.msra.mxu0 0.0
  %5655 = vmatprep.subr.mxu0 0.0
  %5656 = vmatpush1.msra.mxu0 0.0
  %5657 = vmatprep.subr.mxu0 0.0
  %5658 = vmatpush1.msra.mxu0 0.0
  %5659 = vmatprep.subr.mxu0 0.0
  %5660 = vmatpush1.msra.mxu0 0.0
  %5661 = vmatprep.subr.mxu0 0.0
  %5662 = vmatpush1.msra.mxu0 0.0
  %5663 = vmatprep.subr.mxu0 0.0
  %5664 = vmatpush1.msra.mxu0 0.0
  %5665 = vmatprep.subr.mxu0 0.0
  %5666 = vmatpush1.msra.mxu0 0.0
  %5667 = vmatprep.subr.mxu0 0.0
  %5668 = vmatpush1.msra.mxu0 0.0
  %5669 = vmatprep.subr.mxu0 0.0
  %5670 = vmatpush1.msra.mxu0 0.0
  %5671 = vmatprep.subr.mxu0 0.0
  %5672 = vmatpush1.msra.mxu0 0.0
  %5673 = vmatprep.subr.mxu0 0.0
  %5674 = vmatpush1.msra.mxu0 0.0
  %5675 = vmatprep.subr.mxu0 0.0
  %5676 = vmatpush1.msra.mxu0 0.0
  %5677 = vmatprep.subr.mxu0 0.0
  %5678 = vmatpush1.msra.mxu0 0.0
  %5679 = vmatprep.subr.mxu0 0.0
  %5680 = vmatpush1.msra.mxu0 0.0
  %5681 = vmatprep.subr.mxu0 0.0
  %5682 = vmatpush1.msra.mxu0 0.0
  %5683 = vmatprep.subr.mxu0 0.0
  %5684 = vmatpush1.msra.mxu0 0.0
  %5685 = vmatprep.subr.mxu0 0.0
  %5686 = vmatpush1.msra.mxu0 0.0
  %5687 = vmatprep.subr.mxu0 0.0
  %5688 = vmatpush1.msra.mxu0 0.0
  %5689 = vmatprep.subr.mxu0 0.0
  %5690 = vmatpush1.msra.mxu0 0.0
  %5691 = vmatprep.subr.mxu0 0.0
  %5692 = vmatpush1.msra.mxu0 0.0
  %5693 = vmatprep.subr.mxu0 0.0
  %5694 = vmatpush1.msra.mxu0 0.0
  %5695 = vmatprep.subr.mxu0 0.0
  %5696 = vmatpush1.msra.mxu0 0.0
  %5697 = vmatprep.subr.mxu0 0.0
  %5698 = vmatpush1.msra.mxu0 0.0
  %5699 = vmatprep.mubr.f32.mxu0 0.0
  %5700 = vmatmul.mubr.f32.gmra.mrb[0].mxu0 %v4454
  %v5701 = vpop.f32.mrb[0].mxu0
  %v5702 = vadd.f32 0.0, %v5701
  %v5703 = vpop.f32.mrb[0].mxu0
  %5704 = vmatprep.mubr.f32.mxu0 0.0
  %5705 = vmatmul.mubr.f32.gmra.mrb[0].mxu0 %v4457
  %v5706 = vpop.f32.mrb[0].mxu0
  %v5707 = vadd.f32 0.0, %v5706
  %v5708 = vpop.f32.mrb[0].mxu0
  %5709 = vmatprep.mubr.f32.mxu0 0.0
  %5710 = vmatmul.mubr.f32.gmra.mrb[0].mxu0 %v4460
  %v5711 = vpop.f32.mrb[0].mxu0
  %v5712 = vadd.f32 0.0, %v5711
  %v5713 = vpop.f32.mrb[0].mxu0
  %5714 = vmatprep.mubr.f32.mxu0 0.0
  %5715 = vmatmul.mubr.f32.gmra.mrb[0].mxu0 %v4463
  %v5716 = vpop.f32.mrb[0].mxu0
  %v5717 = vadd.f32 0.0, %v5716
  %v5718 = vpop.f32.mrb[0].mxu0
  %5719 = vdwg.mxu0
  %s5720 = scalar_lea.vmem %s23, 112
  %v5721 = vld [vmem:[%s5720] sm:$0xf]
  %v5722 = vld [vmem:[%s5720 + $0x4] sm:$0xf]
  %v5723 = vunpack.c.l.bf16 %v5721
  %v5724 = vunpack.c.l.bf16 %v5722
  %5725 = vmatprep.subr.mxu0 0.0
  %5726 = vmatpush1.msra.mxu0 %v5723
  %5727 = vmatprep.subr.mxu0 0.0
  %5728 = vmatpush1.msra.mxu0 %v5724
  %5729 = vmatprep.subr.mxu0 0.0
  %5730 = vmatpush1.msra.mxu0 0.0
  %5731 = vmatprep.subr.mxu0 0.0
  %5732 = vmatpush1.msra.mxu0 0.0
  %5733 = vmatprep.subr.mxu0 0.0
  %5734 = vmatpush1.msra.mxu0 0.0
  %5735 = vmatprep.subr.mxu0 0.0
  %5736 = vmatpush1.msra.mxu0 0.0
  %5737 = vmatprep.subr.mxu0 0.0
  %5738 = vmatpush1.msra.mxu0 0.0
  %5739 = vmatprep.subr.mxu0 0.0
  %5740 = vmatpush1.msra.mxu0 0.0
  %5741 = vmatprep.subr.mxu0 0.0
  %5742 = vmatpush1.msra.mxu0 0.0
  %5743 = vmatprep.subr.mxu0 0.0
  %5744 = vmatpush1.msra.mxu0 0.0
  %5745 = vmatprep.subr.mxu0 0.0
  %5746 = vmatpush1.msra.mxu0 0.0
  %5747 = vmatprep.subr.mxu0 0.0
  %5748 = vmatpush1.msra.mxu0 0.0
  %5749 = vmatprep.subr.mxu0 0.0
  %5750 = vmatpush1.msra.mxu0 0.0
  %5751 = vmatprep.subr.mxu0 0.0
  %5752 = vmatpush1.msra.mxu0 0.0
  %5753 = vmatprep.subr.mxu0 0.0
  %5754 = vmatpush1.msra.mxu0 0.0
  %5755 = vmatprep.subr.mxu0 0.0
  %5756 = vmatpush1.msra.mxu0 0.0
  %5757 = vmatprep.subr.mxu0 0.0
  %5758 = vmatpush1.msra.mxu0 0.0
  %5759 = vmatprep.subr.mxu0 0.0
  %5760 = vmatpush1.msra.mxu0 0.0
  %5761 = vmatprep.subr.mxu0 0.0
  %5762 = vmatpush1.msra.mxu0 0.0
  %5763 = vmatprep.subr.mxu0 0.0
  %5764 = vmatpush1.msra.mxu0 0.0
  %5765 = vmatprep.subr.mxu0 0.0
  %5766 = vmatpush1.msra.mxu0 0.0
  %5767 = vmatprep.subr.mxu0 0.0
  %5768 = vmatpush1.msra.mxu0 0.0
  %5769 = vmatprep.subr.mxu0 0.0
  %5770 = vmatpush1.msra.mxu0 0.0
  %5771 = vmatprep.subr.mxu0 0.0
  %5772 = vmatpush1.msra.mxu0 0.0
  %5773 = vmatprep.subr.mxu0 0.0
  %5774 = vmatpush1.msra.mxu0 0.0
  %5775 = vmatprep.subr.mxu0 0.0
  %5776 = vmatpush1.msra.mxu0 0.0
  %5777 = vmatprep.subr.mxu0 0.0
  %5778 = vmatpush1.msra.mxu0 0.0
  %5779 = vmatprep.subr.mxu0 0.0
  %5780 = vmatpush1.msra.mxu0 0.0
  %5781 = vmatprep.subr.mxu0 0.0
  %5782 = vmatpush1.msra.mxu0 0.0
  %5783 = vmatprep.subr.mxu0 0.0
  %5784 = vmatpush1.msra.mxu0 0.0
  %5785 = vmatprep.subr.mxu0 0.0
  %5786 = vmatpush1.msra.mxu0 0.0
  %5787 = vmatprep.subr.mxu0 0.0
  %5788 = vmatpush1.msra.mxu0 0.0
  %5789 = vmatprep.mubr.f32.mxu0 0.0
  %5790 = vmatmul.mubr.f32.gmra.mrb[0].mxu0 %v4454
  %v5791 = vpop.f32.mrb[0].mxu0
  %v5792 = vadd.f32 0.0, %v5791
  %v5793 = vpop.f32.mrb[0].mxu0
  %5794 = vmatprep.mubr.f32.mxu0 0.0
  %5795 = vmatmul.mubr.f32.gmra.mrb[0].mxu0 %v4457
  %v5796 = vpop.f32.mrb[0].mxu0
  %v5797 = vadd.f32 0.0, %v5796
  %v5798 = vpop.f32.mrb[0].mxu0
  %5799 = vmatprep.mubr.f32.mxu0 0.0
  %5800 = vmatmul.mubr.f32.gmra.mrb[0].mxu0 %v4460
  %v5801 = vpop.f32.mrb[0].mxu0
  %v5802 = vadd.f32 0.0, %v5801
  %v5803 = vpop.f32.mrb[0].mxu0
  %5804 = vmatprep.mubr.f32.mxu0 0.0
  %5805 = vmatmul.mubr.f32.gmra.mrb[0].mxu0 %v4463
  %v5806 = vpop.f32.mrb[0].mxu0
  %v5807 = vadd.f32 0.0, %v5806
  %v5808 = vpop.f32.mrb[0].mxu0
  %5809 = vdwg.mxu0
  %s5810 = scalar_lea.vmem %s23, 120
  %v5811 = vld [vmem:[%s5810] sm:$0xf]
  %v5812 = vld [vmem:[%s5810 + $0x4] sm:$0xf]
  %v5813 = vunpack.c.l.bf16 %v5811
  %v5814 = vunpack.c.l.bf16 %v5812
  %5815 = vmatprep.subr.mxu0 0.0
  %5816 = vmatpush1.msra.mxu0 %v5813
  %5817 = vmatprep.subr.mxu0 0.0
  %5818 = vmatpush1.msra.mxu0 %v5814
  %5819 = vmatprep.subr.mxu0 0.0
  %5820 = vmatpush1.msra.mxu0 0.0
  %5821 = vmatprep.subr.mxu0 0.0
  %5822 = vmatpush1.msra.mxu0 0.0
  %5823 = vmatprep.subr.mxu0 0.0
  %5824 = vmatpush1.msra.mxu0 0.0
  %5825 = vmatprep.subr.mxu0 0.0
  %5826 = vmatpush1.msra.mxu0 0.0
  %5827 = vmatprep.subr.mxu0 0.0
  %5828 = vmatpush1.msra.mxu0 0.0
  %5829 = vmatprep.subr.mxu0 0.0
  %5830 = vmatpush1.msra.mxu0 0.0
  %5831 = vmatprep.subr.mxu0 0.0
  %5832 = vmatpush1.msra.mxu0 0.0
  %5833 = vmatprep.subr.mxu0 0.0
  %5834 = vmatpush1.msra.mxu0 0.0
  %5835 = vmatprep.subr.mxu0 0.0
  %5836 = vmatpush1.msra.mxu0 0.0
  %5837 = vmatprep.subr.mxu0 0.0
  %5838 = vmatpush1.msra.mxu0 0.0
  %5839 = vmatprep.subr.mxu0 0.0
  %5840 = vmatpush1.msra.mxu0 0.0
  %5841 = vmatprep.subr.mxu0 0.0
  %5842 = vmatpush1.msra.mxu0 0.0
  %5843 = vmatprep.subr.mxu0 0.0
  %5844 = vmatpush1.msra.mxu0 0.0
  %5845 = vmatprep.subr.mxu0 0.0
  %5846 = vmatpush1.msra.mxu0 0.0
  %5847 = vmatprep.subr.mxu0 0.0
  %5848 = vmatpush1.msra.mxu0 0.0
  %5849 = vmatprep.subr.mxu0 0.0
  %5850 = vmatpush1.msra.mxu0 0.0
  %5851 = vmatprep.subr.mxu0 0.0
  %5852 = vmatpush1.msra.mxu0 0.0
  %5853 = vmatprep.subr.mxu0 0.0
  %5854 = vmatpush1.msra.mxu0 0.0
  %5855 = vmatprep.subr.mxu0 0.0
  %5856 = vmatpush1.msra.mxu0 0.0
  %5857 = vmatprep.subr.mxu0 0.0
  %5858 = vmatpush1.msra.mxu0 0.0
  %5859 = vmatprep.subr.mxu0 0.0
  %5860 = vmatpush1.msra.mxu0 0.0
  %5861 = vmatprep.subr.mxu0 0.0
  %5862 = vmatpush1.msra.mxu0 0.0
  %5863 = vmatprep.subr.mxu0 0.0
  %5864 = vmatpush1.msra.mxu0 0.0
  %5865 = vmatprep.subr.mxu0 0.0
  %5866 = vmatpush1.msra.mxu0 0.0
  %5867 = vmatprep.subr.mxu0 0.0
  %5868 = vmatpush1.msra.mxu0 0.0
  %5869 = vmatprep.subr.mxu0 0.0
  %5870 = vmatpush1.msra.mxu0 0.0
  %5871 = vmatprep.subr.mxu0 0.0
  %5872 = vmatpush1.msra.mxu0 0.0
  %5873 = vmatprep.subr.mxu0 0.0
  %5874 = vmatpush1.msra.mxu0 0.0
  %5875 = vmatprep.subr.mxu0 0.0
  %5876 = vmatpush1.msra.mxu0 0.0
  %5877 = vmatprep.subr.mxu0 0.0
  %5878 = vmatpush1.msra.mxu0 0.0
  %5879 = vmatprep.mubr.f32.mxu0 0.0
  %5880 = vmatmul.mubr.f32.gmra.mrb[0].mxu0 %v4454
  %v5881 = vpop.f32.mrb[0].mxu0
  %v5882 = vadd.f32 0.0, %v5881
  %v5883 = vpop.f32.mrb[0].mxu0
  %5884 = vmatprep.mubr.f32.mxu0 0.0
  %5885 = vmatmul.mubr.f32.gmra.mrb[0].mxu0 %v4457
  %v5886 = vpop.f32.mrb[0].mxu0
  %v5887 = vadd.f32 0.0, %v5886
  %v5888 = vpop.f32.mrb[0].mxu0
  %5889 = vmatprep.mubr.f32.mxu0 0.0
  %5890 = vmatmul.mubr.f32.gmra.mrb[0].mxu0 %v4460
  %v5891 = vpop.f32.mrb[0].mxu0
  %v5892 = vadd.f32 0.0, %v5891
  %v5893 = vpop.f32.mrb[0].mxu0
  %5894 = vmatprep.mubr.f32.mxu0 0.0
  %5895 = vmatmul.mubr.f32.gmra.mrb[0].mxu0 %v4463
  %v5896 = vpop.f32.mrb[0].mxu0
  %v5897 = vadd.f32 0.0, %v5896
  %v5898 = vpop.f32.mrb[0].mxu0
  %5899 = vdwg.mxu0
  %v5900 = vld [vmem:[%s25] sm:$0xff]
  %v5901 = vld [vmem:[%s25 + $0x8] sm:$0xff]
  %v5902 = vld [vmem:[%s25 + $0x10] sm:$0xff]
  %v5903 = vld [vmem:[%s25 + $0x18] sm:$0xff]
  %v5904 = vld [vmem:[%s25 + $0x20] sm:$0xff]
  %v5905 = vld [vmem:[%s25 + $0x28] sm:$0xff]
  %v5906 = vld [vmem:[%s25 + $0x30] sm:$0xff]
  %v5907 = vld [vmem:[%s25 + $0x38] sm:$0xff]
  %v5908 = vld [vmem:[%s25 + $0x40] sm:$0xff]
  %v5909 = vld [vmem:[%s25 + $0x48] sm:$0xff]
  %v5910 = vld [vmem:[%s25 + $0x50] sm:$0xff]
  %v5911 = vld [vmem:[%s25 + $0x58] sm:$0xff]
  %v5912 = vld [vmem:[%s25 + $0x60] sm:$0xff]
  %v5913 = vld [vmem:[%s25 + $0x68] sm:$0xff]
  %v5914 = vld [vmem:[%s25 + $0x70] sm:$0xff]
  %v5915 = vld [vmem:[%s25 + $0x78] sm:$0xff]
  %v5916 = vld [vmem:[%s25 + $0x80] sm:$0xff]
  %v5917 = vld [vmem:[%s25 + $0x88] sm:$0xff]
  %v5918 = vld [vmem:[%s25 + $0x90] sm:$0xff]
  %v5919 = vld [vmem:[%s25 + $0x98] sm:$0xff]
  %v5920 = vld [vmem:[%s25 + $0xa0] sm:$0xff]
  %v5921 = vld [vmem:[%s25 + $0xa8] sm:$0xff]
  %v5922 = vld [vmem:[%s25 + $0xb0] sm:$0xff]
  %v5923 = vld [vmem:[%s25 + $0xb8] sm:$0xff]
  %v5924 = vld [vmem:[%s25 + $0xc0] sm:$0xff]
  %v5925 = vld [vmem:[%s25 + $0xc8] sm:$0xff]
  %v5926 = vld [vmem:[%s25 + $0xd0] sm:$0xff]
  %v5927 = vld [vmem:[%s25 + $0xd8] sm:$0xff]
  %v5928 = vld [vmem:[%s25 + $0xe0] sm:$0xff]
  %v5929 = vld [vmem:[%s25 + $0xe8] sm:$0xff]
  %v5930 = vld [vmem:[%s25 + $0xf0] sm:$0xff]
  %v5931 = vld [vmem:[%s25 + $0xf8] sm:$0xff]
  %5932 = vmatprep.subr.mxu0 0.0
  %5933 = vmatpush1.msra.mxu0 %v4532
  %5934 = vmatprep.subr.mxu0 0.0
  %5935 = vmatpush1.msra.mxu0 %v4537
  %5936 = vmatprep.subr.mxu0 0.0
  %5937 = vmatpush1.msra.mxu0 %v4542
  %5938 = vmatprep.subr.mxu0 0.0
  %5939 = vmatpush1.msra.mxu0 %v4547
  %5940 = vmatprep.subr.mxu0 0.0
  %5941 = vmatpush1.msra.mxu0 %v4622
  %5942 = vmatprep.subr.mxu0 0.0
  %5943 = vmatpush1.msra.mxu0 %v4627
  %5944 = vmatprep.subr.mxu0 0.0
  %5945 = vmatpush1.msra.mxu0 %v4632
  %5946 = vmatprep.subr.mxu0 0.0
  %5947 = vmatpush1.msra.mxu0 %v4637
  %5948 = vmatprep.subr.mxu0 0.0
  %5949 = vmatpush1.msra.mxu0 %v4712
  %5950 = vmatprep.subr.mxu0 0.0
  %5951 = vmatpush1.msra.mxu0 %v4717
  %5952 = vmatprep.subr.mxu0 0.0
  %5953 = vmatpush1.msra.mxu0 %v4722
  %5954 = vmatprep.subr.mxu0 0.0
  %5955 = vmatpush1.msra.mxu0 %v4727
  %5956 = vmatprep.subr.mxu0 0.0
  %5957 = vmatpush1.msra.mxu0 %v4802
  %5958 = vmatprep.subr.mxu0 0.0
  %5959 = vmatpush1.msra.mxu0 %v4807
  %5960 = vmatprep.subr.mxu0 0.0
  %5961 = vmatpush1.msra.mxu0 %v4812
  %5962 = vmatprep.subr.mxu0 0.0
  %5963 = vmatpush1.msra.mxu0 %v4817
  %5964 = vmatprep.subr.mxu0 0.0
  %5965 = vmatpush1.msra.mxu0 %v4892
  %5966 = vmatprep.subr.mxu0 0.0
  %5967 = vmatpush1.msra.mxu0 %v4897
  %5968 = vmatprep.subr.mxu0 0.0
  %5969 = vmatpush1.msra.mxu0 %v4902
  %5970 = vmatprep.subr.mxu0 0.0
  %5971 = vmatpush1.msra.mxu0 %v4907
  %5972 = vmatprep.subr.mxu0 0.0
  %5973 = vmatpush1.msra.mxu0 %v4982
  %5974 = vmatprep.subr.mxu0 0.0
  %5975 = vmatpush1.msra.mxu0 %v4987
  %5976 = vmatprep.subr.mxu0 0.0
  %5977 = vmatpush1.msra.mxu0 %v4992
  %5978 = vmatprep.subr.mxu0 0.0
  %5979 = vmatpush1.msra.mxu0 %v4997
  %5980 = vmatprep.subr.mxu0 0.0
  %5981 = vmatpush1.msra.mxu0 %v5072
  %5982 = vmatprep.subr.mxu0 0.0
  %5983 = vmatpush1.msra.mxu0 %v5077
  %5984 = vmatprep.subr.mxu0 0.0
  %5985 = vmatpush1.msra.mxu0 %v5082
  %5986 = vmatprep.subr.mxu0 0.0
  %5987 = vmatpush1.msra.mxu0 %v5087
  %5988 = vmatprep.subr.mxu0 0.0
  %5989 = vmatpush1.msra.mxu0 %v5162
  %5990 = vmatprep.subr.mxu0 0.0
  %5991 = vmatpush1.msra.mxu0 %v5167
  %5992 = vmatprep.subr.mxu0 0.0
  %5993 = vmatpush1.msra.mxu0 %v5172
  %5994 = vmatprep.subr.mxu0 0.0
  %5995 = vmatpush1.msra.mxu0 %v5177
  %5996 = vmatprep.mubr.f32.mxu0 %v5901
  %5997 = vmatmul.mubr.f32.gmra.mrb[0].mxu0 %v5900
  %v5998 = vpop.f32.mrb[0].mxu0
  %v5999 = vadd.f32 0.0, %v5998
  %v6000 = vpop.f32.mrb[0].mxu0
  %6001 = vmatprep.mubr.f32.mxu0 %v5905
  %6002 = vmatmul.mubr.f32.gmra.mrb[0].mxu0 %v5904
  %v6003 = vpop.f32.mrb[0].mxu0
  %v6004 = vadd.f32 0.0, %v6003
  %v6005 = vpop.f32.mrb[0].mxu0
  %6006 = vmatprep.mubr.f32.mxu0 %v5909
  %6007 = vmatmul.mubr.f32.gmra.mrb[0].mxu0 %v5908
  %v6008 = vpop.f32.mrb[0].mxu0
  %v6009 = vadd.f32 0.0, %v6008
  %v6010 = vpop.f32.mrb[0].mxu0
  %6011 = vmatprep.mubr.f32.mxu0 %v5913
  %6012 = vmatmul.mubr.f32.gmra.mrb[0].mxu0 %v5912
  %v6013 = vpop.f32.mrb[0].mxu0
  %v6014 = vadd.f32 0.0, %v6013
  %v6015 = vpop.f32.mrb[0].mxu0
  %6016 = vmatprep.mubr.f32.mxu0 %v5917
  %6017 = vmatmul.mubr.f32.gmra.mrb[0].mxu0 %v5916
  %v6018 = vpop.f32.mrb[0].mxu0
  %v6019 = vadd.f32 0.0, %v6018
  %v6020 = vpop.f32.mrb[0].mxu0
  %6021 = vmatprep.mubr.f32.mxu0 %v5921
  %6022 = vmatmul.mubr.f32.gmra.mrb[0].mxu0 %v5920
  %v6023 = vpop.f32.mrb[0].mxu0
  %v6024 = vadd.f32 0.0, %v6023
  %v6025 = vpop.f32.mrb[0].mxu0
  %6026 = vmatprep.mubr.f32.mxu0 %v5925
  %6027 = vmatmul.mubr.f32.gmra.mrb[0].mxu0 %v5924
  %v6028 = vpop.f32.mrb[0].mxu0
  %v6029 = vadd.f32 0.0, %v6028
  %v6030 = vpop.f32.mrb[0].mxu0
  %6031 = vmatprep.mubr.f32.mxu0 %v5929
  %6032 = vmatmul.mubr.f32.gmra.mrb[0].mxu0 %v5928
  %v6033 = vpop.f32.mrb[0].mxu0
  %v6034 = vadd.f32 0.0, %v6033
  %v6035 = vpop.f32.mrb[0].mxu0
  %6036 = vdwg.mxu0
  %6037 = vmatprep.subr.mxu0 0.0
  %6038 = vmatpush1.msra.mxu0 %v5252
  %6039 = vmatprep.subr.mxu0 0.0
  %6040 = vmatpush1.msra.mxu0 %v5257
  %6041 = vmatprep.subr.mxu0 0.0
  %6042 = vmatpush1.msra.mxu0 %v5262
  %6043 = vmatprep.subr.mxu0 0.0
  %6044 = vmatpush1.msra.mxu0 %v5267
  %6045 = vmatprep.subr.mxu0 0.0
  %6046 = vmatpush1.msra.mxu0 %v5342
  %6047 = vmatprep.subr.mxu0 0.0
  %6048 = vmatpush1.msra.mxu0 %v5347
  %6049 = vmatprep.subr.mxu0 0.0
  %6050 = vmatpush1.msra.mxu0 %v5352
  %6051 = vmatprep.subr.mxu0 0.0
  %6052 = vmatpush1.msra.mxu0 %v5357
  %6053 = vmatprep.subr.mxu0 0.0
  %6054 = vmatpush1.msra.mxu0 %v5432
  %6055 = vmatprep.subr.mxu0 0.0
  %6056 = vmatpush1.msra.mxu0 %v5437
  %6057 = vmatprep.subr.mxu0 0.0
  %6058 = vmatpush1.msra.mxu0 %v5442
  %6059 = vmatprep.subr.mxu0 0.0
  %6060 = vmatpush1.msra.mxu0 %v5447
  %6061 = vmatprep.subr.mxu0 0.0
  %6062 = vmatpush1.msra.mxu0 %v5522
  %6063 = vmatprep.subr.mxu0 0.0
  %6064 = vmatpush1.msra.mxu0 %v5527
  %6065 = vmatprep.subr.mxu0 0.0
  %6066 = vmatpush1.msra.mxu0 %v5532
  %6067 = vmatprep.subr.mxu0 0.0
  %6068 = vmatpush1.msra.mxu0 %v5537
  %6069 = vmatprep.subr.mxu0 0.0
  %6070 = vmatpush1.msra.mxu0 %v5612
  %6071 = vmatprep.subr.mxu0 0.0
  %6072 = vmatpush1.msra.mxu0 %v5617
  %6073 = vmatprep.subr.mxu0 0.0
  %6074 = vmatpush1.msra.mxu0 %v5622
  %6075 = vmatprep.subr.mxu0 0.0
  %6076 = vmatpush1.msra.mxu0 %v5627
  %6077 = vmatprep.subr.mxu0 0.0
  %6078 = vmatpush1.msra.mxu0 %v5702
  %6079 = vmatprep.subr.mxu0 0.0
  %6080 = vmatpush1.msra.mxu0 %v5707
  %6081 = vmatprep.subr.mxu0 0.0
  %6082 = vmatpush1.msra.mxu0 %v5712
  %6083 = vmatprep.subr.mxu0 0.0
  %6084 = vmatpush1.msra.mxu0 %v5717
  %6085 = vmatprep.subr.mxu0 0.0
  %6086 = vmatpush1.msra.mxu0 %v5792
  %6087 = vmatprep.subr.mxu0 0.0
  %6088 = vmatpush1.msra.mxu0 %v5797
  %6089 = vmatprep.subr.mxu0 0.0
  %6090 = vmatpush1.msra.mxu0 %v5802
  %6091 = vmatprep.subr.mxu0 0.0
  %6092 = vmatpush1.msra.mxu0 %v5807
  %6093 = vmatprep.subr.mxu0 0.0
  %6094 = vmatpush1.msra.mxu0 %v5882
  %6095 = vmatprep.subr.mxu0 0.0
  %6096 = vmatpush1.msra.mxu0 %v5887
  %6097 = vmatprep.subr.mxu0 0.0
  %6098 = vmatpush1.msra.mxu0 %v5892
  %6099 = vmatprep.subr.mxu0 0.0
  %6100 = vmatpush1.msra.mxu0 %v5897
  %6101 = vmatprep.mubr.f32.mxu0 %v5903
  %6102 = vmatmul.mubr.f32.gmra.mrb[0].mxu0 %v5902
  %v6103 = vpop.f32.mrb[0].mxu0
  %v6104 = vadd.f32 %v5999, %v6103
  %v6105 = vpop.f32.mrb[0].mxu0
  %6106 = vmatprep.mubr.f32.mxu0 %v5907
  %6107 = vmatmul.mubr.f32.gmra.mrb[0].mxu0 %v5906
  %v6108 = vpop.f32.mrb[0].mxu0
  %v6109 = vadd.f32 %v6004, %v6108
  %v6110 = vpop.f32.mrb[0].mxu0
  %6111 = vmatprep.mubr.f32.mxu0 %v5911
  %6112 = vmatmul.mubr.f32.gmra.mrb[0].mxu0 %v5910
  %v6113 = vpop.f32.mrb[0].mxu0
  %v6114 = vadd.f32 %v6009, %v6113
  %v6115 = vpop.f32.mrb[0].mxu0
  %6116 = vmatprep.mubr.f32.mxu0 %v5915
  %6117 = vmatmul.mubr.f32.gmra.mrb[0].mxu0 %v5914
  %v6118 = vpop.f32.mrb[0].mxu0
  %v6119 = vadd.f32 %v6014, %v6118
  %v6120 = vpop.f32.mrb[0].mxu0
  %6121 = vmatprep.mubr.f32.mxu0 %v5919
  %6122 = vmatmul.mubr.f32.gmra.mrb[0].mxu0 %v5918
  %v6123 = vpop.f32.mrb[0].mxu0
  %v6124 = vadd.f32 %v6019, %v6123
  %v6125 = vpop.f32.mrb[0].mxu0
  %6126 = vmatprep.mubr.f32.mxu0 %v5923
  %6127 = vmatmul.mubr.f32.gmra.mrb[0].mxu0 %v5922
  %v6128 = vpop.f32.mrb[0].mxu0
  %v6129 = vadd.f32 %v6024, %v6128
  %v6130 = vpop.f32.mrb[0].mxu0
  %6131 = vmatprep.mubr.f32.mxu0 %v5927
  %6132 = vmatmul.mubr.f32.gmra.mrb[0].mxu0 %v5926
  %v6133 = vpop.f32.mrb[0].mxu0
  %v6134 = vadd.f32 %v6029, %v6133
  %v6135 = vpop.f32.mrb[0].mxu0
  %6136 = vmatprep.mubr.f32.mxu0 %v5931
  %6137 = vmatmul.mubr.f32.gmra.mrb[0].mxu0 %v5930
  %v6138 = vpop.f32.mrb[0].mxu0
  %v6139 = vadd.f32 %v6034, %v6138
  %v6140 = vpop.f32.mrb[0].mxu0
  %6141 = vdwg.mxu0
  %vm6142 = vcmask 31744
  %v6143 = vsel %vm6142, %v6104, 0.0
  %6144 = vadd.xlane.f32.xlu0 %v6143
  %v6145 = vpop.xlane.xlu0 %6144
  %v6146 = vsel %vm6142, %v6109, 0.0
  %6147 = vadd.xlane.f32.xlu0 %v6146
  %v6148 = vpop.xlane.xlu0 %6147
  %v6149 = vsel %vm6142, %v6114, 0.0
  %6150 = vadd.xlane.f32.xlu0 %v6149
  %v6151 = vpop.xlane.xlu0 %6150
  %v6152 = vsel %vm6142, %v6119, 0.0
  %6153 = vadd.xlane.f32.xlu0 %v6152
  %v6154 = vpop.xlane.xlu0 %6153
  %v6155 = vsel %vm6142, %v6124, 0.0
  %6156 = vadd.xlane.f32.xlu0 %v6155
  %v6157 = vpop.xlane.xlu0 %6156
  %v6158 = vsel %vm6142, %v6129, 0.0
  %6159 = vadd.xlane.f32.xlu0 %v6158
  %v6160 = vpop.xlane.xlu0 %6159
  %v6161 = vsel %vm6142, %v6134, 0.0
  %6162 = vadd.xlane.f32.xlu0 %v6161
  %v6163 = vpop.xlane.xlu0 %6162
  %v6164 = vsel %vm6142, %v6139, 0.0
  %6165 = vadd.xlane.f32.xlu0 %v6164
  %v6166 = vpop.xlane.xlu0 %6165
  %v6167 = vmul.f32 %v6104, %v6104
  %v6168 = vmul.f32 %v6109, %v6109
  %v6169 = vmul.f32 %v6114, %v6114
  %v6170 = vmul.f32 %v6119, %v6119
  %v6171 = vmul.f32 %v6124, %v6124
  %v6172 = vmul.f32 %v6129, %v6129
  %v6173 = vmul.f32 %v6134, %v6134
  %v6174 = vmul.f32 %v6139, %v6139
  %v6175 = vsel %vm6142, %v6167, 0.0
  %6176 = vadd.xlane.f32.xlu0 %v6175
  %v6177 = vpop.xlane.xlu0 %6176
  %v6178 = vsel %vm6142, %v6168, 0.0
  %6179 = vadd.xlane.f32.xlu0 %v6178
  %v6180 = vpop.xlane.xlu0 %6179
  %v6181 = vsel %vm6142, %v6169, 0.0
  %6182 = vadd.xlane.f32.xlu0 %v6181
  %v6183 = vpop.xlane.xlu0 %6182
  %v6184 = vsel %vm6142, %v6170, 0.0
  %6185 = vadd.xlane.f32.xlu0 %v6184
  %v6186 = vpop.xlane.xlu0 %6185
  %v6187 = vsel %vm6142, %v6171, 0.0
  %6188 = vadd.xlane.f32.xlu0 %v6187
  %v6189 = vpop.xlane.xlu0 %6188
  %v6190 = vsel %vm6142, %v6172, 0.0
  %6191 = vadd.xlane.f32.xlu0 %v6190
  %v6192 = vpop.xlane.xlu0 %6191
  %v6193 = vsel %vm6142, %v6173, 0.0
  %6194 = vadd.xlane.f32.xlu0 %v6193
  %v6195 = vpop.xlane.xlu0 %6194
  %v6196 = vsel %vm6142, %v6174, 0.0
  %6197 = vadd.xlane.f32.xlu0 %v6196
  %v6198 = vpop.xlane.xlu0 %6197
  %v6199 = vsel %vm2443, %v6145, %v6177
  %v6200 = vsel %vm2443, %v6148, %v6180
  %v6201 = vsel %vm2443, %v6151, %v6183
  %v6202 = vsel %vm2443, %v6154, %v6186
  %v6203 = vsel %vm2443, %v6157, %v6189
  %v6204 = vsel %vm2443, %v6160, %v6192
  %v6205 = vsel %vm2443, %v6163, %v6195
  %v6206 = vsel %vm2443, %v6166, %v6198
  %v6207 = vld [vmem:[%s27] sm:$0xff]
  %v6208 = vld [vmem:[%s27 + $0x8] sm:$0xff]
  %v6209 = vld [vmem:[%s27 + $0x10] sm:$0xff]
  %v6210 = vld [vmem:[%s27 + $0x18] sm:$0xff]
  %v6211 = vld [vmem:[%s27 + $0x20] sm:$0xff]
  %v6212 = vld [vmem:[%s27 + $0x28] sm:$0xff]
  %v6213 = vld [vmem:[%s27 + $0x30] sm:$0xff]
  %v6214 = vld [vmem:[%s27 + $0x38] sm:$0xff]
  %v6216 = vsel %vm2428, %v6207, 0
  %v6219 = vsel %vm2428, %v6208, 0
  %v6222 = vsel %vm2428, %v6209, 0
  %v6225 = vsel %vm2428, %v6210, 0
  %v6228 = vsel %vm2428, %v6211, 0
  %v6231 = vsel %vm2428, %v6212, 0
  %v6234 = vsel %vm2428, %v6213, 0
  %v6237 = vsel %vm2428, %v6214, 0
  %6239 = vmatprep.subr.mxu0 0.0
  %6240 = vmatpush1.msra.mxu0 %v6199
  %6241 = vmatprep.subr.mxu0 0.0
  %6242 = vmatpush1.msra.mxu0 %v6200
  %6243 = vmatprep.subr.mxu0 0.0
  %6244 = vmatpush1.msra.mxu0 %v6201
  %6245 = vmatprep.subr.mxu0 0.0
  %6246 = vmatpush1.msra.mxu0 %v6202
  %6247 = vmatprep.subr.mxu0 0.0
  %6248 = vmatpush1.msra.mxu0 %v6203
  %6249 = vmatprep.subr.mxu0 0.0
  %6250 = vmatpush1.msra.mxu0 %v6204
  %6251 = vmatprep.subr.mxu0 0.0
  %6252 = vmatpush1.msra.mxu0 %v6205
  %6253 = vmatprep.subr.mxu0 0.0
  %6254 = vmatpush1.msra.mxu0 %v6206
  %6255 = vmatprep.subr.mxu0 0.0
  %6256 = vmatpush1.msra.mxu0 0.0
  %6257 = vmatprep.subr.mxu0 0.0
  %6258 = vmatpush1.msra.mxu0 0.0
  %6259 = vmatprep.subr.mxu0 0.0
  %6260 = vmatpush1.msra.mxu0 0.0
  %6261 = vmatprep.subr.mxu0 0.0
  %6262 = vmatpush1.msra.mxu0 0.0
  %6263 = vmatprep.subr.mxu0 0.0
  %6264 = vmatpush1.msra.mxu0 0.0
  %6265 = vmatprep.subr.mxu0 0.0
  %6266 = vmatpush1.msra.mxu0 0.0
  %6267 = vmatprep.subr.mxu0 0.0
  %6268 = vmatpush1.msra.mxu0 0.0
  %6269 = vmatprep.subr.mxu0 0.0
  %6270 = vmatpush1.msra.mxu0 0.0
  %6271 = vmatprep.subr.mxu0 0.0
  %6272 = vmatpush1.msra.mxu0 0.0
  %6273 = vmatprep.subr.mxu0 0.0
  %6274 = vmatpush1.msra.mxu0 0.0
  %6275 = vmatprep.subr.mxu0 0.0
  %6276 = vmatpush1.msra.mxu0 0.0
  %6277 = vmatprep.subr.mxu0 0.0
  %6278 = vmatpush1.msra.mxu0 0.0
  %6279 = vmatprep.subr.mxu0 0.0
  %6280 = vmatpush1.msra.mxu0 0.0
  %6281 = vmatprep.subr.mxu0 0.0
  %6282 = vmatpush1.msra.mxu0 0.0
  %6283 = vmatprep.subr.mxu0 0.0
  %6284 = vmatpush1.msra.mxu0 0.0
  %6285 = vmatprep.subr.mxu0 0.0
  %6286 = vmatpush1.msra.mxu0 0.0
  %6287 = vmatprep.subr.mxu0 0.0
  %6288 = vmatpush1.msra.mxu0 0.0
  %6289 = vmatprep.subr.mxu0 0.0
  %6290 = vmatpush1.msra.mxu0 0.0
  %6291 = vmatprep.subr.mxu0 0.0
  %6292 = vmatpush1.msra.mxu0 0.0
  %6293 = vmatprep.subr.mxu0 0.0
  %6294 = vmatpush1.msra.mxu0 0.0
  %6295 = vmatprep.subr.mxu0 0.0
  %6296 = vmatpush1.msra.mxu0 0.0
  %6297 = vmatprep.subr.mxu0 0.0
  %6298 = vmatpush1.msra.mxu0 0.0
  %6299 = vmatprep.subr.mxu0 0.0
  %6300 = vmatpush1.msra.mxu0 0.0
  %6301 = vmatprep.subr.mxu0 0.0
  %6302 = vmatpush1.msra.mxu0 0.0
  %6303 = vmatprep.mubr.f32.mxu0 0.0
  %6304 = vmatmul.mubr.f32.gmra.mrb[0].mxu0 %v6216
  %v6305 = vpop.f32.mrb[0].mxu0
  %v6306 = vadd.f32 0.0, %v6305
  %v6307 = vpop.f32.mrb[0].mxu0
  %6308 = vmatprep.mubr.f32.mxu0 0.0
  %6309 = vmatmul.mubr.f32.gmra.mrb[0].mxu0 %v6219
  %v6310 = vpop.f32.mrb[0].mxu0
  %v6311 = vadd.f32 0.0, %v6310
  %v6312 = vpop.f32.mrb[0].mxu0
  %6313 = vmatprep.mubr.f32.mxu0 0.0
  %6314 = vmatmul.mubr.f32.gmra.mrb[0].mxu0 %v6222
  %v6315 = vpop.f32.mrb[0].mxu0
  %v6316 = vadd.f32 0.0, %v6315
  %v6317 = vpop.f32.mrb[0].mxu0
  %6318 = vmatprep.mubr.f32.mxu0 0.0
  %6319 = vmatmul.mubr.f32.gmra.mrb[0].mxu0 %v6225
  %v6320 = vpop.f32.mrb[0].mxu0
  %v6321 = vadd.f32 0.0, %v6320
  %v6322 = vpop.f32.mrb[0].mxu0
  %6323 = vmatprep.mubr.f32.mxu0 0.0
  %6324 = vmatmul.mubr.f32.gmra.mrb[0].mxu0 %v6228
  %v6325 = vpop.f32.mrb[0].mxu0
  %v6326 = vadd.f32 0.0, %v6325
  %v6327 = vpop.f32.mrb[0].mxu0
  %6328 = vmatprep.mubr.f32.mxu0 0.0
  %6329 = vmatmul.mubr.f32.gmra.mrb[0].mxu0 %v6231
  %v6330 = vpop.f32.mrb[0].mxu0
  %v6331 = vadd.f32 0.0, %v6330
  %v6332 = vpop.f32.mrb[0].mxu0
  %6333 = vmatprep.mubr.f32.mxu0 0.0
  %6334 = vmatmul.mubr.f32.gmra.mrb[0].mxu0 %v6234
  %v6335 = vpop.f32.mrb[0].mxu0
  %v6336 = vadd.f32 0.0, %v6335
  %v6337 = vpop.f32.mrb[0].mxu0
  %6338 = vmatprep.mubr.f32.mxu0 0.0
  %6339 = vmatmul.mubr.f32.gmra.mrb[0].mxu0 %v6237
  %v6340 = vpop.f32.mrb[0].mxu0
  %v6341 = vadd.f32 0.0, %v6340
  %v6342 = vpop.f32.mrb[0].mxu0
  %6343 = vdwg.mxu0
  %v6344 = vmul.f32 %v6306, %v6306
  %v6345 = vmul.f32 %v6311, %v6311
  %v6346 = vmul.f32 %v6316, %v6316
  %v6347 = vmul.f32 %v6321, %v6321
  %v6348 = vmul.f32 %v6326, %v6326
  %v6349 = vmul.f32 %v6331, %v6331
  %v6350 = vmul.f32 %v6336, %v6336
  %v6351 = vmul.f32 %v6341, %v6341
  %6360 = vrot.lane.b32.xlu0 %v6344, 1
  %v6361 = vpop.permute.xlu0 %6360
  %6362 = vrot.lane.b32.xlu0 %v6345, 1
  %v6363 = vpop.permute.xlu0 %6362
  %6364 = vrot.lane.b32.xlu0 %v6346, 1
  %v6365 = vpop.permute.xlu0 %6364
  %6366 = vrot.lane.b32.xlu0 %v6347, 1
  %v6367 = vpop.permute.xlu0 %6366
  %6368 = vrot.lane.b32.xlu0 %v6348, 1
  %v6369 = vpop.permute.xlu0 %6368
  %6370 = vrot.lane.b32.xlu0 %v6349, 1
  %v6371 = vpop.permute.xlu0 %6370
  %6372 = vrot.lane.b32.xlu0 %v6350, 1
  %v6373 = vpop.permute.xlu0 %6372
  %6374 = vrot.lane.b32.xlu0 %v6351, 1
  %v6375 = vpop.permute.xlu0 %6374
  %v6384 = vsub.f32 %v6306, %v6361
  %v6385 = vsub.f32 %v6311, %v6363
  %v6386 = vsub.f32 %v6316, %v6365
  %v6387 = vsub.f32 %v6321, %v6367
  %v6388 = vsub.f32 %v6326, %v6369
  %v6389 = vsub.f32 %v6331, %v6371
  %v6390 = vsub.f32 %v6336, %v6373
  %v6391 = vsub.f32 %v6341, %v6375
  %v6392 = vmax.f32 %v6384, 0.0
  %v6393 = vmax.f32 %v6385, 0.0
  %v6394 = vmax.f32 %v6386, 0.0
  %v6395 = vmax.f32 %v6387, 0.0
  %v6396 = vmax.f32 %v6388, 0.0
  %v6397 = vmax.f32 %v6389, 0.0
  %v6398 = vmax.f32 %v6390, 0.0
  %v6399 = vmax.f32 %v6391, 0.0
  %6401 = vset.pattern.permute.xlu0 0
  %6402 = vperm.xlu0 %6401, %v6306
  %v6403 = vpop.permute.xlu0 %6402
  %6406 = vset.pattern.permute.xlu0 0
  %6407 = vperm.xlu0 %6406, %v6311
  %v6408 = vpop.permute.xlu0 %6407
  %6411 = vset.pattern.permute.xlu0 0
  %6412 = vperm.xlu0 %6411, %v6316
  %v6413 = vpop.permute.xlu0 %6412
  %6416 = vset.pattern.permute.xlu0 0
  %6417 = vperm.xlu0 %6416, %v6321
  %v6418 = vpop.permute.xlu0 %6417
  %6421 = vset.pattern.permute.xlu0 0
  %6422 = vperm.xlu0 %6421, %v6326
  %v6423 = vpop.permute.xlu0 %6422
  %6426 = vset.pattern.permute.xlu0 0
  %6427 = vperm.xlu0 %6426, %v6331
  %v6428 = vpop.permute.xlu0 %6427
  %6431 = vset.pattern.permute.xlu0 0
  %6432 = vperm.xlu0 %6431, %v6336
  %v6433 = vpop.permute.xlu0 %6432
  %6436 = vset.pattern.permute.xlu0 0
  %6437 = vperm.xlu0 %6436, %v6341
  %v6438 = vpop.permute.xlu0 %6437
  %v6440 = vsub.f32 %v6104, %v6403
  %v6441 = vsub.f32 %v6109, %v6408
  %v6442 = vsub.f32 %v6114, %v6413
  %v6443 = vsub.f32 %v6119, %v6418
  %v6444 = vsub.f32 %v6124, %v6423
  %v6445 = vsub.f32 %v6129, %v6428
  %v6446 = vsub.f32 %v6134, %v6433
  %v6447 = vsub.f32 %v6139, %v6438
  %v6448 = vadd.f32 %v6392, 1e-05
  %v6449 = vadd.f32 %v6393, 1e-05
  %v6450 = vadd.f32 %v6394, 1e-05
  %v6451 = vadd.f32 %v6395, 1e-05
  %v6452 = vadd.f32 %v6396, 1e-05
  %v6453 = vadd.f32 %v6397, 1e-05
  %v6454 = vadd.f32 %v6398, 1e-05
  %v6455 = vadd.f32 %v6399, 1e-05
  %v6456 = vrsqrt.pop %v6448
  %v6457 = vrsqrt.pop %v6449
  %v6458 = vrsqrt.pop %v6450
  %v6459 = vrsqrt.pop %v6451
  %v6460 = vrsqrt.pop %v6452
  %v6461 = vrsqrt.pop %v6453
  %v6462 = vrsqrt.pop %v6454
  %v6463 = vrsqrt.pop %v6455
  %6465 = vset.pattern.permute.xlu0 1
  %6466 = vperm.xlu0 %6465, %v6456
  %v6467 = vpop.permute.xlu0 %6466
  %6470 = vset.pattern.permute.xlu0 1
  %6471 = vperm.xlu0 %6470, %v6457
  %v6472 = vpop.permute.xlu0 %6471
  %6475 = vset.pattern.permute.xlu0 1
  %6476 = vperm.xlu0 %6475, %v6458
  %v6477 = vpop.permute.xlu0 %6476
  %6480 = vset.pattern.permute.xlu0 1
  %6481 = vperm.xlu0 %6480, %v6459
  %v6482 = vpop.permute.xlu0 %6481
  %6485 = vset.pattern.permute.xlu0 1
  %6486 = vperm.xlu0 %6485, %v6460
  %v6487 = vpop.permute.xlu0 %6486
  %6490 = vset.pattern.permute.xlu0 1
  %6491 = vperm.xlu0 %6490, %v6461
  %v6492 = vpop.permute.xlu0 %6491
  %6495 = vset.pattern.permute.xlu0 1
  %6496 = vperm.xlu0 %6495, %v6462
  %v6497 = vpop.permute.xlu0 %6496
  %6500 = vset.pattern.permute.xlu0 1
  %6501 = vperm.xlu0 %6500, %v6463
  %v6502 = vpop.permute.xlu0 %6501
  %v6504 = vmul.f32 %v6440, %v6467
  %v6505 = vmul.f32 %v6441, %v6472
  %v6506 = vmul.f32 %v6442, %v6477
  %v6507 = vmul.f32 %v6443, %v6482
  %v6508 = vmul.f32 %v6444, %v6487
  %v6509 = vmul.f32 %v6445, %v6492
  %v6510 = vmul.f32 %v6446, %v6497
  %v6511 = vmul.f32 %v6447, %v6502
  %v6512 = vld [vmem:[%s29] sm:$0xff]
  %v6513 = vld [vmem:[%s29 + $0x8] sm:$0xff]
  %v6514 = vld [vmem:[%s29 + $0x10] sm:$0xff]
  %v6515 = vld [vmem:[%s29 + $0x18] sm:$0xff]
  %v6516 = vld [vmem:[%s29 + $0x20] sm:$0xff]
  %v6517 = vld [vmem:[%s29 + $0x28] sm:$0xff]
  %v6518 = vld [vmem:[%s29 + $0x30] sm:$0xff]
  %v6519 = vld [vmem:[%s29 + $0x38] sm:$0xff]
  %6521 = vset.pattern.permute.xlu0 0
  %6522 = vperm.xlu0 %6521, %v6512
  %v6523 = vpop.permute.xlu0 %6522
  %6526 = vset.pattern.permute.xlu0 0
  %6527 = vperm.xlu0 %6526, %v6513
  %v6528 = vpop.permute.xlu0 %6527
  %6531 = vset.pattern.permute.xlu0 0
  %6532 = vperm.xlu0 %6531, %v6514
  %v6533 = vpop.permute.xlu0 %6532
  %6536 = vset.pattern.permute.xlu0 0
  %6537 = vperm.xlu0 %6536, %v6515
  %v6538 = vpop.permute.xlu0 %6537
  %6541 = vset.pattern.permute.xlu0 0
  %6542 = vperm.xlu0 %6541, %v6516
  %v6543 = vpop.permute.xlu0 %6542
  %6546 = vset.pattern.permute.xlu0 0
  %6547 = vperm.xlu0 %6546, %v6517
  %v6548 = vpop.permute.xlu0 %6547
  %6551 = vset.pattern.permute.xlu0 0
  %6552 = vperm.xlu0 %6551, %v6518
  %v6553 = vpop.permute.xlu0 %6552
  %6556 = vset.pattern.permute.xlu0 0
  %6557 = vperm.xlu0 %6556, %v6519
  %v6558 = vpop.permute.xlu0 %6557
  %v6560 = vmul.f32 %v6504, %v6523
  %v6561 = vmul.f32 %v6505, %v6528
  %v6562 = vmul.f32 %v6506, %v6533
  %v6563 = vmul.f32 %v6507, %v6538
  %v6564 = vmul.f32 %v6508, %v6543
  %v6565 = vmul.f32 %v6509, %v6548
  %v6566 = vmul.f32 %v6510, %v6553
  %v6567 = vmul.f32 %v6511, %v6558
  %v6568 = vld [vmem:[%s31] sm:$0xff]
  %v6569 = vld [vmem:[%s31 + $0x8] sm:$0xff]
  %v6570 = vld [vmem:[%s31 + $0x10] sm:$0xff]
  %v6571 = vld [vmem:[%s31 + $0x18] sm:$0xff]
  %v6572 = vld [vmem:[%s31 + $0x20] sm:$0xff]
  %v6573 = vld [vmem:[%s31 + $0x28] sm:$0xff]
  %v6574 = vld [vmem:[%s31 + $0x30] sm:$0xff]
  %v6575 = vld [vmem:[%s31 + $0x38] sm:$0xff]
  %6577 = vset.pattern.permute.xlu0 0
  %6578 = vperm.xlu0 %6577, %v6568
  %v6579 = vpop.permute.xlu0 %6578
  %6582 = vset.pattern.permute.xlu0 0
  %6583 = vperm.xlu0 %6582, %v6569
  %v6584 = vpop.permute.xlu0 %6583
  %6587 = vset.pattern.permute.xlu0 0
  %6588 = vperm.xlu0 %6587, %v6570
  %v6589 = vpop.permute.xlu0 %6588
  %6592 = vset.pattern.permute.xlu0 0
  %6593 = vperm.xlu0 %6592, %v6571
  %v6594 = vpop.permute.xlu0 %6593
  %6597 = vset.pattern.permute.xlu0 0
  %6598 = vperm.xlu0 %6597, %v6572
  %v6599 = vpop.permute.xlu0 %6598
  %6602 = vset.pattern.permute.xlu0 0
  %6603 = vperm.xlu0 %6602, %v6573
  %v6604 = vpop.permute.xlu0 %6603
  %6607 = vset.pattern.permute.xlu0 0
  %6608 = vperm.xlu0 %6607, %v6574
  %v6609 = vpop.permute.xlu0 %6608
  %6612 = vset.pattern.permute.xlu0 0
  %6613 = vperm.xlu0 %6612, %v6575
  %v6614 = vpop.permute.xlu0 %6613
  %v6616 = vadd.f32 %v6560, %v6579
  %v6617 = vadd.f32 %v6561, %v6584
  %v6618 = vadd.f32 %v6562, %v6589
  %v6619 = vadd.f32 %v6563, %v6594
  %v6620 = vadd.f32 %v6564, %v6599
  %v6621 = vadd.f32 %v6565, %v6604
  %v6622 = vadd.f32 %v6566, %v6609
  %v6623 = vadd.f32 %v6567, %v6614
  %v6624 = vmax.f32 %v6616, 0.0
  %v6625 = vmax.f32 %v6617, 0.0
  %v6626 = vmax.f32 %v6618, 0.0
  %v6627 = vmax.f32 %v6619, 0.0
  %v6628 = vmax.f32 %v6620, 0.0
  %v6629 = vmax.f32 %v6621, 0.0
  %v6630 = vmax.f32 %v6622, 0.0
  %v6631 = vmax.f32 %v6623, 0.0
  %v6632 = vld [vmem:[%s33] sm:$0x3]
  %v6633 = vunpack.c.l.bf16 %v6632
  %v6635 = vsel %vm6142, %v6624, 0
  %v6638 = vsel %vm6142, %v6625, 0
  %v6641 = vsel %vm6142, %v6626, 0
  %v6644 = vsel %vm6142, %v6627, 0
  %v6647 = vsel %vm6142, %v6628, 0
  %v6650 = vsel %vm6142, %v6629, 0
  %v6653 = vsel %vm6142, %v6630, 0
  %v6656 = vsel %vm6142, %v6631, 0
  %v6659 = vsel %vm2331, %v6633, 0
  %6661 = vmatprep.subr.mxu0 0.0
  %6662 = vmatpush1.msra.mxu0 %v6659
  %6663 = vmatprep.subr.mxu0 0.0
  %6664 = vmatpush1.msra.mxu0 0.0
  %6665 = vmatprep.subr.mxu0 0.0
  %6666 = vmatpush1.msra.mxu0 0.0
  %6667 = vmatprep.subr.mxu0 0.0
  %6668 = vmatpush1.msra.mxu0 0.0
  %6669 = vmatprep.subr.mxu0 0.0
  %6670 = vmatpush1.msra.mxu0 0.0
  %6671 = vmatprep.subr.mxu0 0.0
  %6672 = vmatpush1.msra.mxu0 0.0
  %6673 = vmatprep.subr.mxu0 0.0
  %6674 = vmatpush1.msra.mxu0 0.0
  %6675 = vmatprep.subr.mxu0 0.0
  %6676 = vmatpush1.msra.mxu0 0.0
  %6677 = vmatprep.subr.mxu0 0.0
  %6678 = vmatpush1.msra.mxu0 0.0
  %6679 = vmatprep.subr.mxu0 0.0
  %6680 = vmatpush1.msra.mxu0 0.0
  %6681 = vmatprep.subr.mxu0 0.0
  %6682 = vmatpush1.msra.mxu0 0.0
  %6683 = vmatprep.subr.mxu0 0.0
  %6684 = vmatpush1.msra.mxu0 0.0
  %6685 = vmatprep.subr.mxu0 0.0
  %6686 = vmatpush1.msra.mxu0 0.0
  %6687 = vmatprep.subr.mxu0 0.0
  %6688 = vmatpush1.msra.mxu0 0.0
  %6689 = vmatprep.subr.mxu0 0.0
  %6690 = vmatpush1.msra.mxu0 0.0
  %6691 = vmatprep.subr.mxu0 0.0
  %6692 = vmatpush1.msra.mxu0 0.0
  %6693 = vmatprep.subr.mxu0 0.0
  %6694 = vmatpush1.msra.mxu0 0.0
  %6695 = vmatprep.subr.mxu0 0.0
  %6696 = vmatpush1.msra.mxu0 0.0
  %6697 = vmatprep.subr.mxu0 0.0
  %6698 = vmatpush1.msra.mxu0 0.0
  %6699 = vmatprep.subr.mxu0 0.0
  %6700 = vmatpush1.msra.mxu0 0.0
  %6701 = vmatprep.subr.mxu0 0.0
  %6702 = vmatpush1.msra.mxu0 0.0
  %6703 = vmatprep.subr.mxu0 0.0
  %6704 = vmatpush1.msra.mxu0 0.0
  %6705 = vmatprep.subr.mxu0 0.0
  %6706 = vmatpush1.msra.mxu0 0.0
  %6707 = vmatprep.subr.mxu0 0.0
  %6708 = vmatpush1.msra.mxu0 0.0
  %6709 = vmatprep.subr.mxu0 0.0
  %6710 = vmatpush1.msra.mxu0 0.0
  %6711 = vmatprep.subr.mxu0 0.0
  %6712 = vmatpush1.msra.mxu0 0.0
  %6713 = vmatprep.subr.mxu0 0.0
  %6714 = vmatpush1.msra.mxu0 0.0
  %6715 = vmatprep.subr.mxu0 0.0
  %6716 = vmatpush1.msra.mxu0 0.0
  %6717 = vmatprep.subr.mxu0 0.0
  %6718 = vmatpush1.msra.mxu0 0.0
  %6719 = vmatprep.subr.mxu0 0.0
  %6720 = vmatpush1.msra.mxu0 0.0
  %6721 = vmatprep.subr.mxu0 0.0
  %6722 = vmatpush1.msra.mxu0 0.0
  %6723 = vmatprep.subr.mxu0 0.0
  %6724 = vmatpush1.msra.mxu0 0.0
  %6725 = vmatprep.mubr.f32.mxu0 0.0
  %6726 = vmatmul.mubr.f32.gmra.mrb[0].mxu0 %v6635
  %v6727 = vpop.f32.mrb[0].mxu0
  %v6728 = vadd.f32 0.0, %v6727
  %v6729 = vpop.f32.mrb[0].mxu0
  %6730 = vmatprep.mubr.f32.mxu0 0.0
  %6731 = vmatmul.mubr.f32.gmra.mrb[0].mxu0 %v6638
  %v6732 = vpop.f32.mrb[0].mxu0
  %v6733 = vadd.f32 0.0, %v6732
  %v6734 = vpop.f32.mrb[0].mxu0
  %6735 = vmatprep.mubr.f32.mxu0 0.0
  %6736 = vmatmul.mubr.f32.gmra.mrb[0].mxu0 %v6641
  %v6737 = vpop.f32.mrb[0].mxu0
  %v6738 = vadd.f32 0.0, %v6737
  %v6739 = vpop.f32.mrb[0].mxu0
  %6740 = vmatprep.mubr.f32.mxu0 0.0
  %6741 = vmatmul.mubr.f32.gmra.mrb[0].mxu0 %v6644
  %v6742 = vpop.f32.mrb[0].mxu0
  %v6743 = vadd.f32 0.0, %v6742
  %v6744 = vpop.f32.mrb[0].mxu0
  %6745 = vmatprep.mubr.f32.mxu0 0.0
  %6746 = vmatmul.mubr.f32.gmra.mrb[0].mxu0 %v6647
  %v6747 = vpop.f32.mrb[0].mxu0
  %v6748 = vadd.f32 0.0, %v6747
  %v6749 = vpop.f32.mrb[0].mxu0
  %6750 = vmatprep.mubr.f32.mxu0 0.0
  %6751 = vmatmul.mubr.f32.gmra.mrb[0].mxu0 %v6650
  %v6752 = vpop.f32.mrb[0].mxu0
  %v6753 = vadd.f32 0.0, %v6752
  %v6754 = vpop.f32.mrb[0].mxu0
  %6755 = vmatprep.mubr.f32.mxu0 0.0
  %6756 = vmatmul.mubr.f32.gmra.mrb[0].mxu0 %v6653
  %v6757 = vpop.f32.mrb[0].mxu0
  %v6758 = vadd.f32 0.0, %v6757
  %v6759 = vpop.f32.mrb[0].mxu0
  %6760 = vmatprep.mubr.f32.mxu0 0.0
  %6761 = vmatmul.mubr.f32.gmra.mrb[0].mxu0 %v6656
  %v6762 = vpop.f32.mrb[0].mxu0
  %v6763 = vadd.f32 0.0, %v6762
  %v6764 = vpop.f32.mrb[0].mxu0
  %6765 = vdwg.mxu0
  %s6766 = scalar_lea.vmem %s33, 2
  %v6767 = vld [vmem:[%s6766] sm:$0x3]
  %v6768 = vunpack.c.l.bf16 %v6767
  %v6770 = vsel %vm2331, %v6768, 0
  %6772 = vmatprep.subr.mxu0 0.0
  %6773 = vmatpush1.msra.mxu0 %v6770
  %6774 = vmatprep.subr.mxu0 0.0
  %6775 = vmatpush1.msra.mxu0 0.0
  %6776 = vmatprep.subr.mxu0 0.0
  %6777 = vmatpush1.msra.mxu0 0.0
  %6778 = vmatprep.subr.mxu0 0.0
  %6779 = vmatpush1.msra.mxu0 0.0
  %6780 = vmatprep.subr.mxu0 0.0
  %6781 = vmatpush1.msra.mxu0 0.0
  %6782 = vmatprep.subr.mxu0 0.0
  %6783 = vmatpush1.msra.mxu0 0.0
  %6784 = vmatprep.subr.mxu0 0.0
  %6785 = vmatpush1.msra.mxu0 0.0
  %6786 = vmatprep.subr.mxu0 0.0
  %6787 = vmatpush1.msra.mxu0 0.0
  %6788 = vmatprep.subr.mxu0 0.0
  %6789 = vmatpush1.msra.mxu0 0.0
  %6790 = vmatprep.subr.mxu0 0.0
  %6791 = vmatpush1.msra.mxu0 0.0
  %6792 = vmatprep.subr.mxu0 0.0
  %6793 = vmatpush1.msra.mxu0 0.0
  %6794 = vmatprep.subr.mxu0 0.0
  %6795 = vmatpush1.msra.mxu0 0.0
  %6796 = vmatprep.subr.mxu0 0.0
  %6797 = vmatpush1.msra.mxu0 0.0
  %6798 = vmatprep.subr.mxu0 0.0
  %6799 = vmatpush1.msra.mxu0 0.0
  %6800 = vmatprep.subr.mxu0 0.0
  %6801 = vmatpush1.msra.mxu0 0.0
  %6802 = vmatprep.subr.mxu0 0.0
  %6803 = vmatpush1.msra.mxu0 0.0
  %6804 = vmatprep.subr.mxu0 0.0
  %6805 = vmatpush1.msra.mxu0 0.0
  %6806 = vmatprep.subr.mxu0 0.0
  %6807 = vmatpush1.msra.mxu0 0.0
  %6808 = vmatprep.subr.mxu0 0.0
  %6809 = vmatpush1.msra.mxu0 0.0
  %6810 = vmatprep.subr.mxu0 0.0
  %6811 = vmatpush1.msra.mxu0 0.0
  %6812 = vmatprep.subr.mxu0 0.0
  %6813 = vmatpush1.msra.mxu0 0.0
  %6814 = vmatprep.subr.mxu0 0.0
  %6815 = vmatpush1.msra.mxu0 0.0
  %6816 = vmatprep.subr.mxu0 0.0
  %6817 = vmatpush1.msra.mxu0 0.0
  %6818 = vmatprep.subr.mxu0 0.0
  %6819 = vmatpush1.msra.mxu0 0.0
  %6820 = vmatprep.subr.mxu0 0.0
  %6821 = vmatpush1.msra.mxu0 0.0
  %6822 = vmatprep.subr.mxu0 0.0
  %6823 = vmatpush1.msra.mxu0 0.0
  %6824 = vmatprep.subr.mxu0 0.0
  %6825 = vmatpush1.msra.mxu0 0.0
  %6826 = vmatprep.subr.mxu0 0.0
  %6827 = vmatpush1.msra.mxu0 0.0
  %6828 = vmatprep.subr.mxu0 0.0
  %6829 = vmatpush1.msra.mxu0 0.0
  %6830 = vmatprep.subr.mxu0 0.0
  %6831 = vmatpush1.msra.mxu0 0.0
  %6832 = vmatprep.subr.mxu0 0.0
  %6833 = vmatpush1.msra.mxu0 0.0
  %6834 = vmatprep.subr.mxu0 0.0
  %6835 = vmatpush1.msra.mxu0 0.0
  %6836 = vmatprep.mubr.f32.mxu0 0.0
  %6837 = vmatmul.mubr.f32.gmra.mrb[0].mxu0 %v6635
  %v6838 = vpop.f32.mrb[0].mxu0
  %v6839 = vadd.f32 0.0, %v6838
  %v6840 = vpop.f32.mrb[0].mxu0
  %6841 = vmatprep.mubr.f32.mxu0 0.0
  %6842 = vmatmul.mubr.f32.gmra.mrb[0].mxu0 %v6638
  %v6843 = vpop.f32.mrb[0].mxu0
  %v6844 = vadd.f32 0.0, %v6843
  %v6845 = vpop.f32.mrb[0].mxu0
  %6846 = vmatprep.mubr.f32.mxu0 0.0
  %6847 = vmatmul.mubr.f32.gmra.mrb[0].mxu0 %v6641
  %v6848 = vpop.f32.mrb[0].mxu0
  %v6849 = vadd.f32 0.0, %v6848
  %v6850 = vpop.f32.mrb[0].mxu0
  %6851 = vmatprep.mubr.f32.mxu0 0.0
  %6852 = vmatmul.mubr.f32.gmra.mrb[0].mxu0 %v6644
  %v6853 = vpop.f32.mrb[0].mxu0
  %v6854 = vadd.f32 0.0, %v6853
  %v6855 = vpop.f32.mrb[0].mxu0
  %6856 = vmatprep.mubr.f32.mxu0 0.0
  %6857 = vmatmul.mubr.f32.gmra.mrb[0].mxu0 %v6647
  %v6858 = vpop.f32.mrb[0].mxu0
  %v6859 = vadd.f32 0.0, %v6858
  %v6860 = vpop.f32.mrb[0].mxu0
  %6861 = vmatprep.mubr.f32.mxu0 0.0
  %6862 = vmatmul.mubr.f32.gmra.mrb[0].mxu0 %v6650
  %v6863 = vpop.f32.mrb[0].mxu0
  %v6864 = vadd.f32 0.0, %v6863
  %v6865 = vpop.f32.mrb[0].mxu0
  %6866 = vmatprep.mubr.f32.mxu0 0.0
  %6867 = vmatmul.mubr.f32.gmra.mrb[0].mxu0 %v6653
  %v6868 = vpop.f32.mrb[0].mxu0
  %v6869 = vadd.f32 0.0, %v6868
  %v6870 = vpop.f32.mrb[0].mxu0
  %6871 = vmatprep.mubr.f32.mxu0 0.0
  %6872 = vmatmul.mubr.f32.gmra.mrb[0].mxu0 %v6656
  %v6873 = vpop.f32.mrb[0].mxu0
  %v6874 = vadd.f32 0.0, %v6873
  %v6875 = vpop.f32.mrb[0].mxu0
  %6876 = vdwg.mxu0
  %s6877 = scalar_lea.vmem %s33, 4
  %v6878 = vld [vmem:[%s6877] sm:$0x3]
  %v6879 = vunpack.c.l.bf16 %v6878
  %v6881 = vsel %vm2331, %v6879, 0
  %6883 = vmatprep.subr.mxu0 0.0
  %6884 = vmatpush1.msra.mxu0 %v6881
  %6885 = vmatprep.subr.mxu0 0.0
  %6886 = vmatpush1.msra.mxu0 0.0
  %6887 = vmatprep.subr.mxu0 0.0
  %6888 = vmatpush1.msra.mxu0 0.0
  %6889 = vmatprep.subr.mxu0 0.0
  %6890 = vmatpush1.msra.mxu0 0.0
  %6891 = vmatprep.subr.mxu0 0.0
  %6892 = vmatpush1.msra.mxu0 0.0
  %6893 = vmatprep.subr.mxu0 0.0
  %6894 = vmatpush1.msra.mxu0 0.0
  %6895 = vmatprep.subr.mxu0 0.0
  %6896 = vmatpush1.msra.mxu0 0.0
  %6897 = vmatprep.subr.mxu0 0.0
  %6898 = vmatpush1.msra.mxu0 0.0
  %6899 = vmatprep.subr.mxu0 0.0
  %6900 = vmatpush1.msra.mxu0 0.0
  %6901 = vmatprep.subr.mxu0 0.0
  %6902 = vmatpush1.msra.mxu0 0.0
  %6903 = vmatprep.subr.mxu0 0.0
  %6904 = vmatpush1.msra.mxu0 0.0
  %6905 = vmatprep.subr.mxu0 0.0
  %6906 = vmatpush1.msra.mxu0 0.0
  %6907 = vmatprep.subr.mxu0 0.0
  %6908 = vmatpush1.msra.mxu0 0.0
  %6909 = vmatprep.subr.mxu0 0.0
  %6910 = vmatpush1.msra.mxu0 0.0
  %6911 = vmatprep.subr.mxu0 0.0
  %6912 = vmatpush1.msra.mxu0 0.0
  %6913 = vmatprep.subr.mxu0 0.0
  %6914 = vmatpush1.msra.mxu0 0.0
  %6915 = vmatprep.subr.mxu0 0.0
  %6916 = vmatpush1.msra.mxu0 0.0
  %6917 = vmatprep.subr.mxu0 0.0
  %6918 = vmatpush1.msra.mxu0 0.0
  %6919 = vmatprep.subr.mxu0 0.0
  %6920 = vmatpush1.msra.mxu0 0.0
  %6921 = vmatprep.subr.mxu0 0.0
  %6922 = vmatpush1.msra.mxu0 0.0
  %6923 = vmatprep.subr.mxu0 0.0
  %6924 = vmatpush1.msra.mxu0 0.0
  %6925 = vmatprep.subr.mxu0 0.0
  %6926 = vmatpush1.msra.mxu0 0.0
  %6927 = vmatprep.subr.mxu0 0.0
  %6928 = vmatpush1.msra.mxu0 0.0
  %6929 = vmatprep.subr.mxu0 0.0
  %6930 = vmatpush1.msra.mxu0 0.0
  %6931 = vmatprep.subr.mxu0 0.0
  %6932 = vmatpush1.msra.mxu0 0.0
  %6933 = vmatprep.subr.mxu0 0.0
  %6934 = vmatpush1.msra.mxu0 0.0
  %6935 = vmatprep.subr.mxu0 0.0
  %6936 = vmatpush1.msra.mxu0 0.0
  %6937 = vmatprep.subr.mxu0 0.0
  %6938 = vmatpush1.msra.mxu0 0.0
  %6939 = vmatprep.subr.mxu0 0.0
  %6940 = vmatpush1.msra.mxu0 0.0
  %6941 = vmatprep.subr.mxu0 0.0
  %6942 = vmatpush1.msra.mxu0 0.0
  %6943 = vmatprep.subr.mxu0 0.0
  %6944 = vmatpush1.msra.mxu0 0.0
  %6945 = vmatprep.subr.mxu0 0.0
  %6946 = vmatpush1.msra.mxu0 0.0
  %6947 = vmatprep.mubr.f32.mxu0 0.0
  %6948 = vmatmul.mubr.f32.gmra.mrb[0].mxu0 %v6635
  %v6949 = vpop.f32.mrb[0].mxu0
  %v6950 = vadd.f32 0.0, %v6949
  %v6951 = vpop.f32.mrb[0].mxu0
  %6952 = vmatprep.mubr.f32.mxu0 0.0
  %6953 = vmatmul.mubr.f32.gmra.mrb[0].mxu0 %v6638
  %v6954 = vpop.f32.mrb[0].mxu0
  %v6955 = vadd.f32 0.0, %v6954
  %v6956 = vpop.f32.mrb[0].mxu0
  %6957 = vmatprep.mubr.f32.mxu0 0.0
  %6958 = vmatmul.mubr.f32.gmra.mrb[0].mxu0 %v6641
  %v6959 = vpop.f32.mrb[0].mxu0
  %v6960 = vadd.f32 0.0, %v6959
  %v6961 = vpop.f32.mrb[0].mxu0
  %6962 = vmatprep.mubr.f32.mxu0 0.0
  %6963 = vmatmul.mubr.f32.gmra.mrb[0].mxu0 %v6644
  %v6964 = vpop.f32.mrb[0].mxu0
  %v6965 = vadd.f32 0.0, %v6964
  %v6966 = vpop.f32.mrb[0].mxu0
  %6967 = vmatprep.mubr.f32.mxu0 0.0
  %6968 = vmatmul.mubr.f32.gmra.mrb[0].mxu0 %v6647
  %v6969 = vpop.f32.mrb[0].mxu0
  %v6970 = vadd.f32 0.0, %v6969
  %v6971 = vpop.f32.mrb[0].mxu0
  %6972 = vmatprep.mubr.f32.mxu0 0.0
  %6973 = vmatmul.mubr.f32.gmra.mrb[0].mxu0 %v6650
  %v6974 = vpop.f32.mrb[0].mxu0
  %v6975 = vadd.f32 0.0, %v6974
  %v6976 = vpop.f32.mrb[0].mxu0
  %6977 = vmatprep.mubr.f32.mxu0 0.0
  %6978 = vmatmul.mubr.f32.gmra.mrb[0].mxu0 %v6653
  %v6979 = vpop.f32.mrb[0].mxu0
  %v6980 = vadd.f32 0.0, %v6979
  %v6981 = vpop.f32.mrb[0].mxu0
  %6982 = vmatprep.mubr.f32.mxu0 0.0
  %6983 = vmatmul.mubr.f32.gmra.mrb[0].mxu0 %v6656
  %v6984 = vpop.f32.mrb[0].mxu0
  %v6985 = vadd.f32 0.0, %v6984
  %v6986 = vpop.f32.mrb[0].mxu0
  %6987 = vdwg.mxu0
  %s6988 = scalar_lea.vmem %s33, 6
  %v6989 = vld [vmem:[%s6988] sm:$0x3]
  %v6990 = vunpack.c.l.bf16 %v6989
  %v6992 = vsel %vm2331, %v6990, 0
  %6994 = vmatprep.subr.mxu0 0.0
  %6995 = vmatpush1.msra.mxu0 %v6992
  %6996 = vmatprep.subr.mxu0 0.0
  %6997 = vmatpush1.msra.mxu0 0.0
  %6998 = vmatprep.subr.mxu0 0.0
  %6999 = vmatpush1.msra.mxu0 0.0
  %7000 = vmatprep.subr.mxu0 0.0
  %7001 = vmatpush1.msra.mxu0 0.0
  %7002 = vmatprep.subr.mxu0 0.0
  %7003 = vmatpush1.msra.mxu0 0.0
  %7004 = vmatprep.subr.mxu0 0.0
  %7005 = vmatpush1.msra.mxu0 0.0
  %7006 = vmatprep.subr.mxu0 0.0
  %7007 = vmatpush1.msra.mxu0 0.0
  %7008 = vmatprep.subr.mxu0 0.0
  %7009 = vmatpush1.msra.mxu0 0.0
  %7010 = vmatprep.subr.mxu0 0.0
  %7011 = vmatpush1.msra.mxu0 0.0
  %7012 = vmatprep.subr.mxu0 0.0
  %7013 = vmatpush1.msra.mxu0 0.0
  %7014 = vmatprep.subr.mxu0 0.0
  %7015 = vmatpush1.msra.mxu0 0.0
  %7016 = vmatprep.subr.mxu0 0.0
  %7017 = vmatpush1.msra.mxu0 0.0
  %7018 = vmatprep.subr.mxu0 0.0
  %7019 = vmatpush1.msra.mxu0 0.0
  %7020 = vmatprep.subr.mxu0 0.0
  %7021 = vmatpush1.msra.mxu0 0.0
  %7022 = vmatprep.subr.mxu0 0.0
  %7023 = vmatpush1.msra.mxu0 0.0
  %7024 = vmatprep.subr.mxu0 0.0
  %7025 = vmatpush1.msra.mxu0 0.0
  %7026 = vmatprep.subr.mxu0 0.0
  %7027 = vmatpush1.msra.mxu0 0.0
  %7028 = vmatprep.subr.mxu0 0.0
  %7029 = vmatpush1.msra.mxu0 0.0
  %7030 = vmatprep.subr.mxu0 0.0
  %7031 = vmatpush1.msra.mxu0 0.0
  %7032 = vmatprep.subr.mxu0 0.0
  %7033 = vmatpush1.msra.mxu0 0.0
  %7034 = vmatprep.subr.mxu0 0.0
  %7035 = vmatpush1.msra.mxu0 0.0
  %7036 = vmatprep.subr.mxu0 0.0
  %7037 = vmatpush1.msra.mxu0 0.0
  %7038 = vmatprep.subr.mxu0 0.0
  %7039 = vmatpush1.msra.mxu0 0.0
  %7040 = vmatprep.subr.mxu0 0.0
  %7041 = vmatpush1.msra.mxu0 0.0
  %7042 = vmatprep.subr.mxu0 0.0
  %7043 = vmatpush1.msra.mxu0 0.0
  %7044 = vmatprep.subr.mxu0 0.0
  %7045 = vmatpush1.msra.mxu0 0.0
  %7046 = vmatprep.subr.mxu0 0.0
  %7047 = vmatpush1.msra.mxu0 0.0
  %7048 = vmatprep.subr.mxu0 0.0
  %7049 = vmatpush1.msra.mxu0 0.0
  %7050 = vmatprep.subr.mxu0 0.0
  %7051 = vmatpush1.msra.mxu0 0.0
  %7052 = vmatprep.subr.mxu0 0.0
  %7053 = vmatpush1.msra.mxu0 0.0
  %7054 = vmatprep.subr.mxu0 0.0
  %7055 = vmatpush1.msra.mxu0 0.0
  %7056 = vmatprep.subr.mxu0 0.0
  %7057 = vmatpush1.msra.mxu0 0.0
  %7058 = vmatprep.mubr.f32.mxu0 0.0
  %7059 = vmatmul.mubr.f32.gmra.mrb[0].mxu0 %v6635
  %v7060 = vpop.f32.mrb[0].mxu0
  %v7061 = vadd.f32 0.0, %v7060
  %v7062 = vpop.f32.mrb[0].mxu0
  %7063 = vmatprep.mubr.f32.mxu0 0.0
  %7064 = vmatmul.mubr.f32.gmra.mrb[0].mxu0 %v6638
  %v7065 = vpop.f32.mrb[0].mxu0
  %v7066 = vadd.f32 0.0, %v7065
  %v7067 = vpop.f32.mrb[0].mxu0
  %7068 = vmatprep.mubr.f32.mxu0 0.0
  %7069 = vmatmul.mubr.f32.gmra.mrb[0].mxu0 %v6641
  %v7070 = vpop.f32.mrb[0].mxu0
  %v7071 = vadd.f32 0.0, %v7070
  %v7072 = vpop.f32.mrb[0].mxu0
  %7073 = vmatprep.mubr.f32.mxu0 0.0
  %7074 = vmatmul.mubr.f32.gmra.mrb[0].mxu0 %v6644
  %v7075 = vpop.f32.mrb[0].mxu0
  %v7076 = vadd.f32 0.0, %v7075
  %v7077 = vpop.f32.mrb[0].mxu0
  %7078 = vmatprep.mubr.f32.mxu0 0.0
  %7079 = vmatmul.mubr.f32.gmra.mrb[0].mxu0 %v6647
  %v7080 = vpop.f32.mrb[0].mxu0
  %v7081 = vadd.f32 0.0, %v7080
  %v7082 = vpop.f32.mrb[0].mxu0
  %7083 = vmatprep.mubr.f32.mxu0 0.0
  %7084 = vmatmul.mubr.f32.gmra.mrb[0].mxu0 %v6650
  %v7085 = vpop.f32.mrb[0].mxu0
  %v7086 = vadd.f32 0.0, %v7085
  %v7087 = vpop.f32.mrb[0].mxu0
  %7088 = vmatprep.mubr.f32.mxu0 0.0
  %7089 = vmatmul.mubr.f32.gmra.mrb[0].mxu0 %v6653
  %v7090 = vpop.f32.mrb[0].mxu0
  %v7091 = vadd.f32 0.0, %v7090
  %v7092 = vpop.f32.mrb[0].mxu0
  %7093 = vmatprep.mubr.f32.mxu0 0.0
  %7094 = vmatmul.mubr.f32.gmra.mrb[0].mxu0 %v6656
  %v7095 = vpop.f32.mrb[0].mxu0
  %v7096 = vadd.f32 0.0, %v7095
  %v7097 = vpop.f32.mrb[0].mxu0
  %7098 = vdwg.mxu0
  %s7099 = scalar_lea.vmem %s33, 8
  %v7100 = vld [vmem:[%s7099] sm:$0x3]
  %v7101 = vunpack.c.l.bf16 %v7100
  %v7103 = vsel %vm2331, %v7101, 0
  %7105 = vmatprep.subr.mxu0 0.0
  %7106 = vmatpush1.msra.mxu0 %v7103
  %7107 = vmatprep.subr.mxu0 0.0
  %7108 = vmatpush1.msra.mxu0 0.0
  %7109 = vmatprep.subr.mxu0 0.0
  %7110 = vmatpush1.msra.mxu0 0.0
  %7111 = vmatprep.subr.mxu0 0.0
  %7112 = vmatpush1.msra.mxu0 0.0
  %7113 = vmatprep.subr.mxu0 0.0
  %7114 = vmatpush1.msra.mxu0 0.0
  %7115 = vmatprep.subr.mxu0 0.0
  %7116 = vmatpush1.msra.mxu0 0.0
  %7117 = vmatprep.subr.mxu0 0.0
  %7118 = vmatpush1.msra.mxu0 0.0
  %7119 = vmatprep.subr.mxu0 0.0
  %7120 = vmatpush1.msra.mxu0 0.0
  %7121 = vmatprep.subr.mxu0 0.0
  %7122 = vmatpush1.msra.mxu0 0.0
  %7123 = vmatprep.subr.mxu0 0.0
  %7124 = vmatpush1.msra.mxu0 0.0
  %7125 = vmatprep.subr.mxu0 0.0
  %7126 = vmatpush1.msra.mxu0 0.0
  %7127 = vmatprep.subr.mxu0 0.0
  %7128 = vmatpush1.msra.mxu0 0.0
  %7129 = vmatprep.subr.mxu0 0.0
  %7130 = vmatpush1.msra.mxu0 0.0
  %7131 = vmatprep.subr.mxu0 0.0
  %7132 = vmatpush1.msra.mxu0 0.0
  %7133 = vmatprep.subr.mxu0 0.0
  %7134 = vmatpush1.msra.mxu0 0.0
  %7135 = vmatprep.subr.mxu0 0.0
  %7136 = vmatpush1.msra.mxu0 0.0
  %7137 = vmatprep.subr.mxu0 0.0
  %7138 = vmatpush1.msra.mxu0 0.0
  %7139 = vmatprep.subr.mxu0 0.0
  %7140 = vmatpush1.msra.mxu0 0.0
  %7141 = vmatprep.subr.mxu0 0.0
  %7142 = vmatpush1.msra.mxu0 0.0
  %7143 = vmatprep.subr.mxu0 0.0
  %7144 = vmatpush1.msra.mxu0 0.0
  %7145 = vmatprep.subr.mxu0 0.0
  %7146 = vmatpush1.msra.mxu0 0.0
  %7147 = vmatprep.subr.mxu0 0.0
  %7148 = vmatpush1.msra.mxu0 0.0
  %7149 = vmatprep.subr.mxu0 0.0
  %7150 = vmatpush1.msra.mxu0 0.0
  %7151 = vmatprep.subr.mxu0 0.0
  %7152 = vmatpush1.msra.mxu0 0.0
  %7153 = vmatprep.subr.mxu0 0.0
  %7154 = vmatpush1.msra.mxu0 0.0
  %7155 = vmatprep.subr.mxu0 0.0
  %7156 = vmatpush1.msra.mxu0 0.0
  %7157 = vmatprep.subr.mxu0 0.0
  %7158 = vmatpush1.msra.mxu0 0.0
  %7159 = vmatprep.subr.mxu0 0.0
  %7160 = vmatpush1.msra.mxu0 0.0
  %7161 = vmatprep.subr.mxu0 0.0
  %7162 = vmatpush1.msra.mxu0 0.0
  %7163 = vmatprep.subr.mxu0 0.0
  %7164 = vmatpush1.msra.mxu0 0.0
  %7165 = vmatprep.subr.mxu0 0.0
  %7166 = vmatpush1.msra.mxu0 0.0
  %7167 = vmatprep.subr.mxu0 0.0
  %7168 = vmatpush1.msra.mxu0 0.0
  %7169 = vmatprep.mubr.f32.mxu0 0.0
  %7170 = vmatmul.mubr.f32.gmra.mrb[0].mxu0 %v6635
  %v7171 = vpop.f32.mrb[0].mxu0
  %v7172 = vadd.f32 0.0, %v7171
  %v7173 = vpop.f32.mrb[0].mxu0
  %7174 = vmatprep.mubr.f32.mxu0 0.0
  %7175 = vmatmul.mubr.f32.gmra.mrb[0].mxu0 %v6638
  %v7176 = vpop.f32.mrb[0].mxu0
  %v7177 = vadd.f32 0.0, %v7176
  %v7178 = vpop.f32.mrb[0].mxu0
  %7179 = vmatprep.mubr.f32.mxu0 0.0
  %7180 = vmatmul.mubr.f32.gmra.mrb[0].mxu0 %v6641
  %v7181 = vpop.f32.mrb[0].mxu0
  %v7182 = vadd.f32 0.0, %v7181
  %v7183 = vpop.f32.mrb[0].mxu0
  %7184 = vmatprep.mubr.f32.mxu0 0.0
  %7185 = vmatmul.mubr.f32.gmra.mrb[0].mxu0 %v6644
  %v7186 = vpop.f32.mrb[0].mxu0
  %v7187 = vadd.f32 0.0, %v7186
  %v7188 = vpop.f32.mrb[0].mxu0
  %7189 = vmatprep.mubr.f32.mxu0 0.0
  %7190 = vmatmul.mubr.f32.gmra.mrb[0].mxu0 %v6647
  %v7191 = vpop.f32.mrb[0].mxu0
  %v7192 = vadd.f32 0.0, %v7191
  %v7193 = vpop.f32.mrb[0].mxu0
  %7194 = vmatprep.mubr.f32.mxu0 0.0
  %7195 = vmatmul.mubr.f32.gmra.mrb[0].mxu0 %v6650
  %v7196 = vpop.f32.mrb[0].mxu0
  %v7197 = vadd.f32 0.0, %v7196
  %v7198 = vpop.f32.mrb[0].mxu0
  %7199 = vmatprep.mubr.f32.mxu0 0.0
  %7200 = vmatmul.mubr.f32.gmra.mrb[0].mxu0 %v6653
  %v7201 = vpop.f32.mrb[0].mxu0
  %v7202 = vadd.f32 0.0, %v7201
  %v7203 = vpop.f32.mrb[0].mxu0
  %7204 = vmatprep.mubr.f32.mxu0 0.0
  %7205 = vmatmul.mubr.f32.gmra.mrb[0].mxu0 %v6656
  %v7206 = vpop.f32.mrb[0].mxu0
  %v7207 = vadd.f32 0.0, %v7206
  %v7208 = vpop.f32.mrb[0].mxu0
  %7209 = vdwg.mxu0
  %s7210 = scalar_lea.vmem %s33, 10
  %v7211 = vld [vmem:[%s7210] sm:$0x3]
  %v7212 = vunpack.c.l.bf16 %v7211
  %v7214 = vsel %vm2331, %v7212, 0
  %7216 = vmatprep.subr.mxu0 0.0
  %7217 = vmatpush1.msra.mxu0 %v7214
  %7218 = vmatprep.subr.mxu0 0.0
  %7219 = vmatpush1.msra.mxu0 0.0
  %7220 = vmatprep.subr.mxu0 0.0
  %7221 = vmatpush1.msra.mxu0 0.0
  %7222 = vmatprep.subr.mxu0 0.0
  %7223 = vmatpush1.msra.mxu0 0.0
  %7224 = vmatprep.subr.mxu0 0.0
  %7225 = vmatpush1.msra.mxu0 0.0
  %7226 = vmatprep.subr.mxu0 0.0
  %7227 = vmatpush1.msra.mxu0 0.0
  %7228 = vmatprep.subr.mxu0 0.0
  %7229 = vmatpush1.msra.mxu0 0.0
  %7230 = vmatprep.subr.mxu0 0.0
  %7231 = vmatpush1.msra.mxu0 0.0
  %7232 = vmatprep.subr.mxu0 0.0
  %7233 = vmatpush1.msra.mxu0 0.0
  %7234 = vmatprep.subr.mxu0 0.0
  %7235 = vmatpush1.msra.mxu0 0.0
  %7236 = vmatprep.subr.mxu0 0.0
  %7237 = vmatpush1.msra.mxu0 0.0
  %7238 = vmatprep.subr.mxu0 0.0
  %7239 = vmatpush1.msra.mxu0 0.0
  %7240 = vmatprep.subr.mxu0 0.0
  %7241 = vmatpush1.msra.mxu0 0.0
  %7242 = vmatprep.subr.mxu0 0.0
  %7243 = vmatpush1.msra.mxu0 0.0
  %7244 = vmatprep.subr.mxu0 0.0
  %7245 = vmatpush1.msra.mxu0 0.0
  %7246 = vmatprep.subr.mxu0 0.0
  %7247 = vmatpush1.msra.mxu0 0.0
  %7248 = vmatprep.subr.mxu0 0.0
  %7249 = vmatpush1.msra.mxu0 0.0
  %7250 = vmatprep.subr.mxu0 0.0
  %7251 = vmatpush1.msra.mxu0 0.0
  %7252 = vmatprep.subr.mxu0 0.0
  %7253 = vmatpush1.msra.mxu0 0.0
  %7254 = vmatprep.subr.mxu0 0.0
  %7255 = vmatpush1.msra.mxu0 0.0
  %7256 = vmatprep.subr.mxu0 0.0
  %7257 = vmatpush1.msra.mxu0 0.0
  %7258 = vmatprep.subr.mxu0 0.0
  %7259 = vmatpush1.msra.mxu0 0.0
  %7260 = vmatprep.subr.mxu0 0.0
  %7261 = vmatpush1.msra.mxu0 0.0
  %7262 = vmatprep.subr.mxu0 0.0
  %7263 = vmatpush1.msra.mxu0 0.0
  %7264 = vmatprep.subr.mxu0 0.0
  %7265 = vmatpush1.msra.mxu0 0.0
  %7266 = vmatprep.subr.mxu0 0.0
  %7267 = vmatpush1.msra.mxu0 0.0
  %7268 = vmatprep.subr.mxu0 0.0
  %7269 = vmatpush1.msra.mxu0 0.0
  %7270 = vmatprep.subr.mxu0 0.0
  %7271 = vmatpush1.msra.mxu0 0.0
  %7272 = vmatprep.subr.mxu0 0.0
  %7273 = vmatpush1.msra.mxu0 0.0
  %7274 = vmatprep.subr.mxu0 0.0
  %7275 = vmatpush1.msra.mxu0 0.0
  %7276 = vmatprep.subr.mxu0 0.0
  %7277 = vmatpush1.msra.mxu0 0.0
  %7278 = vmatprep.subr.mxu0 0.0
  %7279 = vmatpush1.msra.mxu0 0.0
  %7280 = vmatprep.mubr.f32.mxu0 0.0
  %7281 = vmatmul.mubr.f32.gmra.mrb[0].mxu0 %v6635
  %v7282 = vpop.f32.mrb[0].mxu0
  %v7283 = vadd.f32 0.0, %v7282
  %v7284 = vpop.f32.mrb[0].mxu0
  %7285 = vmatprep.mubr.f32.mxu0 0.0
  %7286 = vmatmul.mubr.f32.gmra.mrb[0].mxu0 %v6638
  %v7287 = vpop.f32.mrb[0].mxu0
  %v7288 = vadd.f32 0.0, %v7287
  %v7289 = vpop.f32.mrb[0].mxu0
  %7290 = vmatprep.mubr.f32.mxu0 0.0
  %7291 = vmatmul.mubr.f32.gmra.mrb[0].mxu0 %v6641
  %v7292 = vpop.f32.mrb[0].mxu0
  %v7293 = vadd.f32 0.0, %v7292
  %v7294 = vpop.f32.mrb[0].mxu0
  %7295 = vmatprep.mubr.f32.mxu0 0.0
  %7296 = vmatmul.mubr.f32.gmra.mrb[0].mxu0 %v6644
  %v7297 = vpop.f32.mrb[0].mxu0
  %v7298 = vadd.f32 0.0, %v7297
  %v7299 = vpop.f32.mrb[0].mxu0
  %7300 = vmatprep.mubr.f32.mxu0 0.0
  %7301 = vmatmul.mubr.f32.gmra.mrb[0].mxu0 %v6647
  %v7302 = vpop.f32.mrb[0].mxu0
  %v7303 = vadd.f32 0.0, %v7302
  %v7304 = vpop.f32.mrb[0].mxu0
  %7305 = vmatprep.mubr.f32.mxu0 0.0
  %7306 = vmatmul.mubr.f32.gmra.mrb[0].mxu0 %v6650
  %v7307 = vpop.f32.mrb[0].mxu0
  %v7308 = vadd.f32 0.0, %v7307
  %v7309 = vpop.f32.mrb[0].mxu0
  %7310 = vmatprep.mubr.f32.mxu0 0.0
  %7311 = vmatmul.mubr.f32.gmra.mrb[0].mxu0 %v6653
  %v7312 = vpop.f32.mrb[0].mxu0
  %v7313 = vadd.f32 0.0, %v7312
  %v7314 = vpop.f32.mrb[0].mxu0
  %7315 = vmatprep.mubr.f32.mxu0 0.0
  %7316 = vmatmul.mubr.f32.gmra.mrb[0].mxu0 %v6656
  %v7317 = vpop.f32.mrb[0].mxu0
  %v7318 = vadd.f32 0.0, %v7317
  %v7319 = vpop.f32.mrb[0].mxu0
  %7320 = vdwg.mxu0
  %s7321 = scalar_lea.vmem %s33, 12
  %v7322 = vld [vmem:[%s7321] sm:$0x3]
  %v7323 = vunpack.c.l.bf16 %v7322
  %v7325 = vsel %vm2331, %v7323, 0
  %7327 = vmatprep.subr.mxu0 0.0
  %7328 = vmatpush1.msra.mxu0 %v7325
  %7329 = vmatprep.subr.mxu0 0.0
  %7330 = vmatpush1.msra.mxu0 0.0
  %7331 = vmatprep.subr.mxu0 0.0
  %7332 = vmatpush1.msra.mxu0 0.0
  %7333 = vmatprep.subr.mxu0 0.0
  %7334 = vmatpush1.msra.mxu0 0.0
  %7335 = vmatprep.subr.mxu0 0.0
  %7336 = vmatpush1.msra.mxu0 0.0
  %7337 = vmatprep.subr.mxu0 0.0
  %7338 = vmatpush1.msra.mxu0 0.0
  %7339 = vmatprep.subr.mxu0 0.0
  %7340 = vmatpush1.msra.mxu0 0.0
  %7341 = vmatprep.subr.mxu0 0.0
  %7342 = vmatpush1.msra.mxu0 0.0
  %7343 = vmatprep.subr.mxu0 0.0
  %7344 = vmatpush1.msra.mxu0 0.0
  %7345 = vmatprep.subr.mxu0 0.0
  %7346 = vmatpush1.msra.mxu0 0.0
  %7347 = vmatprep.subr.mxu0 0.0
  %7348 = vmatpush1.msra.mxu0 0.0
  %7349 = vmatprep.subr.mxu0 0.0
  %7350 = vmatpush1.msra.mxu0 0.0
  %7351 = vmatprep.subr.mxu0 0.0
  %7352 = vmatpush1.msra.mxu0 0.0
  %7353 = vmatprep.subr.mxu0 0.0
  %7354 = vmatpush1.msra.mxu0 0.0
  %7355 = vmatprep.subr.mxu0 0.0
  %7356 = vmatpush1.msra.mxu0 0.0
  %7357 = vmatprep.subr.mxu0 0.0
  %7358 = vmatpush1.msra.mxu0 0.0
  %7359 = vmatprep.subr.mxu0 0.0
  %7360 = vmatpush1.msra.mxu0 0.0
  %7361 = vmatprep.subr.mxu0 0.0
  %7362 = vmatpush1.msra.mxu0 0.0
  %7363 = vmatprep.subr.mxu0 0.0
  %7364 = vmatpush1.msra.mxu0 0.0
  %7365 = vmatprep.subr.mxu0 0.0
  %7366 = vmatpush1.msra.mxu0 0.0
  %7367 = vmatprep.subr.mxu0 0.0
  %7368 = vmatpush1.msra.mxu0 0.0
  %7369 = vmatprep.subr.mxu0 0.0
  %7370 = vmatpush1.msra.mxu0 0.0
  %7371 = vmatprep.subr.mxu0 0.0
  %7372 = vmatpush1.msra.mxu0 0.0
  %7373 = vmatprep.subr.mxu0 0.0
  %7374 = vmatpush1.msra.mxu0 0.0
  %7375 = vmatprep.subr.mxu0 0.0
  %7376 = vmatpush1.msra.mxu0 0.0
  %7377 = vmatprep.subr.mxu0 0.0
  %7378 = vmatpush1.msra.mxu0 0.0
  %7379 = vmatprep.subr.mxu0 0.0
  %7380 = vmatpush1.msra.mxu0 0.0
  %7381 = vmatprep.subr.mxu0 0.0
  %7382 = vmatpush1.msra.mxu0 0.0
  %7383 = vmatprep.subr.mxu0 0.0
  %7384 = vmatpush1.msra.mxu0 0.0
  %7385 = vmatprep.subr.mxu0 0.0
  %7386 = vmatpush1.msra.mxu0 0.0
  %7387 = vmatprep.subr.mxu0 0.0
  %7388 = vmatpush1.msra.mxu0 0.0
  %7389 = vmatprep.subr.mxu0 0.0
  %7390 = vmatpush1.msra.mxu0 0.0
  %7391 = vmatprep.mubr.f32.mxu0 0.0
  %7392 = vmatmul.mubr.f32.gmra.mrb[0].mxu0 %v6635
  %v7393 = vpop.f32.mrb[0].mxu0
  %v7394 = vadd.f32 0.0, %v7393
  %v7395 = vpop.f32.mrb[0].mxu0
  %7396 = vmatprep.mubr.f32.mxu0 0.0
  %7397 = vmatmul.mubr.f32.gmra.mrb[0].mxu0 %v6638
  %v7398 = vpop.f32.mrb[0].mxu0
  %v7399 = vadd.f32 0.0, %v7398
  %v7400 = vpop.f32.mrb[0].mxu0
  %7401 = vmatprep.mubr.f32.mxu0 0.0
  %7402 = vmatmul.mubr.f32.gmra.mrb[0].mxu0 %v6641
  %v7403 = vpop.f32.mrb[0].mxu0
  %v7404 = vadd.f32 0.0, %v7403
  %v7405 = vpop.f32.mrb[0].mxu0
  %7406 = vmatprep.mubr.f32.mxu0 0.0
  %7407 = vmatmul.mubr.f32.gmra.mrb[0].mxu0 %v6644
  %v7408 = vpop.f32.mrb[0].mxu0
  %v7409 = vadd.f32 0.0, %v7408
  %v7410 = vpop.f32.mrb[0].mxu0
  %7411 = vmatprep.mubr.f32.mxu0 0.0
  %7412 = vmatmul.mubr.f32.gmra.mrb[0].mxu0 %v6647
  %v7413 = vpop.f32.mrb[0].mxu0
  %v7414 = vadd.f32 0.0, %v7413
  %v7415 = vpop.f32.mrb[0].mxu0
  %7416 = vmatprep.mubr.f32.mxu0 0.0
  %7417 = vmatmul.mubr.f32.gmra.mrb[0].mxu0 %v6650
  %v7418 = vpop.f32.mrb[0].mxu0
  %v7419 = vadd.f32 0.0, %v7418
  %v7420 = vpop.f32.mrb[0].mxu0
  %7421 = vmatprep.mubr.f32.mxu0 0.0
  %7422 = vmatmul.mubr.f32.gmra.mrb[0].mxu0 %v6653
  %v7423 = vpop.f32.mrb[0].mxu0
  %v7424 = vadd.f32 0.0, %v7423
  %v7425 = vpop.f32.mrb[0].mxu0
  %7426 = vmatprep.mubr.f32.mxu0 0.0
  %7427 = vmatmul.mubr.f32.gmra.mrb[0].mxu0 %v6656
  %v7428 = vpop.f32.mrb[0].mxu0
  %v7429 = vadd.f32 0.0, %v7428
  %v7430 = vpop.f32.mrb[0].mxu0
  %7431 = vdwg.mxu0
  %s7432 = scalar_lea.vmem %s33, 14
  %v7433 = vld [vmem:[%s7432] sm:$0x3]
  %v7434 = vunpack.c.l.bf16 %v7433
  %v7436 = vsel %vm2331, %v7434, 0
  %7438 = vmatprep.subr.mxu0 0.0
  %7439 = vmatpush1.msra.mxu0 %v7436
  %7440 = vmatprep.subr.mxu0 0.0
  %7441 = vmatpush1.msra.mxu0 0.0
  %7442 = vmatprep.subr.mxu0 0.0
  %7443 = vmatpush1.msra.mxu0 0.0
  %7444 = vmatprep.subr.mxu0 0.0
  %7445 = vmatpush1.msra.mxu0 0.0
  %7446 = vmatprep.subr.mxu0 0.0
  %7447 = vmatpush1.msra.mxu0 0.0
  %7448 = vmatprep.subr.mxu0 0.0
  %7449 = vmatpush1.msra.mxu0 0.0
  %7450 = vmatprep.subr.mxu0 0.0
  %7451 = vmatpush1.msra.mxu0 0.0
  %7452 = vmatprep.subr.mxu0 0.0
  %7453 = vmatpush1.msra.mxu0 0.0
  %7454 = vmatprep.subr.mxu0 0.0
  %7455 = vmatpush1.msra.mxu0 0.0
  %7456 = vmatprep.subr.mxu0 0.0
  %7457 = vmatpush1.msra.mxu0 0.0
  %7458 = vmatprep.subr.mxu0 0.0
  %7459 = vmatpush1.msra.mxu0 0.0
  %7460 = vmatprep.subr.mxu0 0.0
  %7461 = vmatpush1.msra.mxu0 0.0
  %7462 = vmatprep.subr.mxu0 0.0
  %7463 = vmatpush1.msra.mxu0 0.0
  %7464 = vmatprep.subr.mxu0 0.0
  %7465 = vmatpush1.msra.mxu0 0.0
  %7466 = vmatprep.subr.mxu0 0.0
  %7467 = vmatpush1.msra.mxu0 0.0
  %7468 = vmatprep.subr.mxu0 0.0
  %7469 = vmatpush1.msra.mxu0 0.0
  %7470 = vmatprep.subr.mxu0 0.0
  %7471 = vmatpush1.msra.mxu0 0.0
  %7472 = vmatprep.subr.mxu0 0.0
  %7473 = vmatpush1.msra.mxu0 0.0
  %7474 = vmatprep.subr.mxu0 0.0
  %7475 = vmatpush1.msra.mxu0 0.0
  %7476 = vmatprep.subr.mxu0 0.0
  %7477 = vmatpush1.msra.mxu0 0.0
  %7478 = vmatprep.subr.mxu0 0.0
  %7479 = vmatpush1.msra.mxu0 0.0
  %7480 = vmatprep.subr.mxu0 0.0
  %7481 = vmatpush1.msra.mxu0 0.0
  %7482 = vmatprep.subr.mxu0 0.0
  %7483 = vmatpush1.msra.mxu0 0.0
  %7484 = vmatprep.subr.mxu0 0.0
  %7485 = vmatpush1.msra.mxu0 0.0
  %7486 = vmatprep.subr.mxu0 0.0
  %7487 = vmatpush1.msra.mxu0 0.0
  %7488 = vmatprep.subr.mxu0 0.0
  %7489 = vmatpush1.msra.mxu0 0.0
  %7490 = vmatprep.subr.mxu0 0.0
  %7491 = vmatpush1.msra.mxu0 0.0
  %7492 = vmatprep.subr.mxu0 0.0
  %7493 = vmatpush1.msra.mxu0 0.0
  %7494 = vmatprep.subr.mxu0 0.0
  %7495 = vmatpush1.msra.mxu0 0.0
  %7496 = vmatprep.subr.mxu0 0.0
  %7497 = vmatpush1.msra.mxu0 0.0
  %7498 = vmatprep.subr.mxu0 0.0
  %7499 = vmatpush1.msra.mxu0 0.0
  %7500 = vmatprep.subr.mxu0 0.0
  %7501 = vmatpush1.msra.mxu0 0.0
  %7502 = vmatprep.mubr.f32.mxu0 0.0
  %7503 = vmatmul.mubr.f32.gmra.mrb[0].mxu0 %v6635
  %v7504 = vpop.f32.mrb[0].mxu0
  %v7505 = vadd.f32 0.0, %v7504
  %v7506 = vpop.f32.mrb[0].mxu0
  %7507 = vmatprep.mubr.f32.mxu0 0.0
  %7508 = vmatmul.mubr.f32.gmra.mrb[0].mxu0 %v6638
  %v7509 = vpop.f32.mrb[0].mxu0
  %v7510 = vadd.f32 0.0, %v7509
  %v7511 = vpop.f32.mrb[0].mxu0
  %7512 = vmatprep.mubr.f32.mxu0 0.0
  %7513 = vmatmul.mubr.f32.gmra.mrb[0].mxu0 %v6641
  %v7514 = vpop.f32.mrb[0].mxu0
  %v7515 = vadd.f32 0.0, %v7514
  %v7516 = vpop.f32.mrb[0].mxu0
  %7517 = vmatprep.mubr.f32.mxu0 0.0
  %7518 = vmatmul.mubr.f32.gmra.mrb[0].mxu0 %v6644
  %v7519 = vpop.f32.mrb[0].mxu0
  %v7520 = vadd.f32 0.0, %v7519
  %v7521 = vpop.f32.mrb[0].mxu0
  %7522 = vmatprep.mubr.f32.mxu0 0.0
  %7523 = vmatmul.mubr.f32.gmra.mrb[0].mxu0 %v6647
  %v7524 = vpop.f32.mrb[0].mxu0
  %v7525 = vadd.f32 0.0, %v7524
  %v7526 = vpop.f32.mrb[0].mxu0
  %7527 = vmatprep.mubr.f32.mxu0 0.0
  %7528 = vmatmul.mubr.f32.gmra.mrb[0].mxu0 %v6650
  %v7529 = vpop.f32.mrb[0].mxu0
  %v7530 = vadd.f32 0.0, %v7529
  %v7531 = vpop.f32.mrb[0].mxu0
  %7532 = vmatprep.mubr.f32.mxu0 0.0
  %7533 = vmatmul.mubr.f32.gmra.mrb[0].mxu0 %v6653
  %v7534 = vpop.f32.mrb[0].mxu0
  %v7535 = vadd.f32 0.0, %v7534
  %v7536 = vpop.f32.mrb[0].mxu0
  %7537 = vmatprep.mubr.f32.mxu0 0.0
  %7538 = vmatmul.mubr.f32.gmra.mrb[0].mxu0 %v6656
  %v7539 = vpop.f32.mrb[0].mxu0
  %v7540 = vadd.f32 0.0, %v7539
  %v7541 = vpop.f32.mrb[0].mxu0
  %7542 = vdwg.mxu0
  %s7543 = scalar_lea.vmem %s33, 16
  %v7544 = vld [vmem:[%s7543] sm:$0x3]
  %v7545 = vunpack.c.l.bf16 %v7544
  %v7547 = vsel %vm2331, %v7545, 0
  %7549 = vmatprep.subr.mxu0 0.0
  %7550 = vmatpush1.msra.mxu0 %v7547
  %7551 = vmatprep.subr.mxu0 0.0
  %7552 = vmatpush1.msra.mxu0 0.0
  %7553 = vmatprep.subr.mxu0 0.0
  %7554 = vmatpush1.msra.mxu0 0.0
  %7555 = vmatprep.subr.mxu0 0.0
  %7556 = vmatpush1.msra.mxu0 0.0
  %7557 = vmatprep.subr.mxu0 0.0
  %7558 = vmatpush1.msra.mxu0 0.0
  %7559 = vmatprep.subr.mxu0 0.0
  %7560 = vmatpush1.msra.mxu0 0.0
  %7561 = vmatprep.subr.mxu0 0.0
  %7562 = vmatpush1.msra.mxu0 0.0
  %7563 = vmatprep.subr.mxu0 0.0
  %7564 = vmatpush1.msra.mxu0 0.0
  %7565 = vmatprep.subr.mxu0 0.0
  %7566 = vmatpush1.msra.mxu0 0.0
  %7567 = vmatprep.subr.mxu0 0.0
  %7568 = vmatpush1.msra.mxu0 0.0
  %7569 = vmatprep.subr.mxu0 0.0
  %7570 = vmatpush1.msra.mxu0 0.0
  %7571 = vmatprep.subr.mxu0 0.0
  %7572 = vmatpush1.msra.mxu0 0.0
  %7573 = vmatprep.subr.mxu0 0.0
  %7574 = vmatpush1.msra.mxu0 0.0
  %7575 = vmatprep.subr.mxu0 0.0
  %7576 = vmatpush1.msra.mxu0 0.0
  %7577 = vmatprep.subr.mxu0 0.0
  %7578 = vmatpush1.msra.mxu0 0.0
  %7579 = vmatprep.subr.mxu0 0.0
  %7580 = vmatpush1.msra.mxu0 0.0
  %7581 = vmatprep.subr.mxu0 0.0
  %7582 = vmatpush1.msra.mxu0 0.0
  %7583 = vmatprep.subr.mxu0 0.0
  %7584 = vmatpush1.msra.mxu0 0.0
  %7585 = vmatprep.subr.mxu0 0.0
  %7586 = vmatpush1.msra.mxu0 0.0
  %7587 = vmatprep.subr.mxu0 0.0
  %7588 = vmatpush1.msra.mxu0 0.0
  %7589 = vmatprep.subr.mxu0 0.0
  %7590 = vmatpush1.msra.mxu0 0.0
  %7591 = vmatprep.subr.mxu0 0.0
  %7592 = vmatpush1.msra.mxu0 0.0
  %7593 = vmatprep.subr.mxu0 0.0
  %7594 = vmatpush1.msra.mxu0 0.0
  %7595 = vmatprep.subr.mxu0 0.0
  %7596 = vmatpush1.msra.mxu0 0.0
  %7597 = vmatprep.subr.mxu0 0.0
  %7598 = vmatpush1.msra.mxu0 0.0
  %7599 = vmatprep.subr.mxu0 0.0
  %7600 = vmatpush1.msra.mxu0 0.0
  %7601 = vmatprep.subr.mxu0 0.0
  %7602 = vmatpush1.msra.mxu0 0.0
  %7603 = vmatprep.subr.mxu0 0.0
  %7604 = vmatpush1.msra.mxu0 0.0
  %7605 = vmatprep.subr.mxu0 0.0
  %7606 = vmatpush1.msra.mxu0 0.0
  %7607 = vmatprep.subr.mxu0 0.0
  %7608 = vmatpush1.msra.mxu0 0.0
  %7609 = vmatprep.subr.mxu0 0.0
  %7610 = vmatpush1.msra.mxu0 0.0
  %7611 = vmatprep.subr.mxu0 0.0
  %7612 = vmatpush1.msra.mxu0 0.0
  %7613 = vmatprep.mubr.f32.mxu0 0.0
  %7614 = vmatmul.mubr.f32.gmra.mrb[0].mxu0 %v6635
  %v7615 = vpop.f32.mrb[0].mxu0
  %v7616 = vadd.f32 0.0, %v7615
  %v7617 = vpop.f32.mrb[0].mxu0
  %7618 = vmatprep.mubr.f32.mxu0 0.0
  %7619 = vmatmul.mubr.f32.gmra.mrb[0].mxu0 %v6638
  %v7620 = vpop.f32.mrb[0].mxu0
  %v7621 = vadd.f32 0.0, %v7620
  %v7622 = vpop.f32.mrb[0].mxu0
  %7623 = vmatprep.mubr.f32.mxu0 0.0
  %7624 = vmatmul.mubr.f32.gmra.mrb[0].mxu0 %v6641
  %v7625 = vpop.f32.mrb[0].mxu0
  %v7626 = vadd.f32 0.0, %v7625
  %v7627 = vpop.f32.mrb[0].mxu0
  %7628 = vmatprep.mubr.f32.mxu0 0.0
  %7629 = vmatmul.mubr.f32.gmra.mrb[0].mxu0 %v6644
  %v7630 = vpop.f32.mrb[0].mxu0
  %v7631 = vadd.f32 0.0, %v7630
  %v7632 = vpop.f32.mrb[0].mxu0
  %7633 = vmatprep.mubr.f32.mxu0 0.0
  %7634 = vmatmul.mubr.f32.gmra.mrb[0].mxu0 %v6647
  %v7635 = vpop.f32.mrb[0].mxu0
  %v7636 = vadd.f32 0.0, %v7635
  %v7637 = vpop.f32.mrb[0].mxu0
  %7638 = vmatprep.mubr.f32.mxu0 0.0
  %7639 = vmatmul.mubr.f32.gmra.mrb[0].mxu0 %v6650
  %v7640 = vpop.f32.mrb[0].mxu0
  %v7641 = vadd.f32 0.0, %v7640
  %v7642 = vpop.f32.mrb[0].mxu0
  %7643 = vmatprep.mubr.f32.mxu0 0.0
  %7644 = vmatmul.mubr.f32.gmra.mrb[0].mxu0 %v6653
  %v7645 = vpop.f32.mrb[0].mxu0
  %v7646 = vadd.f32 0.0, %v7645
  %v7647 = vpop.f32.mrb[0].mxu0
  %7648 = vmatprep.mubr.f32.mxu0 0.0
  %7649 = vmatmul.mubr.f32.gmra.mrb[0].mxu0 %v6656
  %v7650 = vpop.f32.mrb[0].mxu0
  %v7651 = vadd.f32 0.0, %v7650
  %v7652 = vpop.f32.mrb[0].mxu0
  %7653 = vdwg.mxu0
  %v7654 = vld [vmem:[%s35] sm:$0xff]
  %v7655 = vld [vmem:[%s35 + $0x8] sm:$0xff]
  %v7656 = vld [vmem:[%s35 + $0x10] sm:$0xff]
  %v7657 = vld [vmem:[%s35 + $0x18] sm:$0xff]
  %v7658 = vld [vmem:[%s35 + $0x20] sm:$0xff]
  %v7659 = vld [vmem:[%s35 + $0x28] sm:$0xff]
  %v7660 = vld [vmem:[%s35 + $0x30] sm:$0xff]
  %v7661 = vld [vmem:[%s35 + $0x38] sm:$0xff]
  %v7662 = vld [vmem:[%s35 + $0x40] sm:$0xff]
  %v7663 = vld [vmem:[%s35 + $0x48] sm:$0xff]
  %v7664 = vld [vmem:[%s35 + $0x50] sm:$0xff]
  %v7665 = vld [vmem:[%s35 + $0x58] sm:$0xff]
  %v7666 = vld [vmem:[%s35 + $0x60] sm:$0xff]
  %v7667 = vld [vmem:[%s35 + $0x68] sm:$0xff]
  %v7668 = vld [vmem:[%s35 + $0x70] sm:$0xff]
  %v7669 = vld [vmem:[%s35 + $0x78] sm:$0xff]
  %v7670 = vld [vmem:[%s35 + $0x80] sm:$0xff]
  %v7671 = vld [vmem:[%s35 + $0x88] sm:$0xff]
  %v7672 = vld [vmem:[%s35 + $0x90] sm:$0xff]
  %v7673 = vld [vmem:[%s35 + $0x98] sm:$0xff]
  %v7675 = vsel %vm2428, %v7658, 0
  %v7678 = vsel %vm2428, %v7663, 0
  %v7681 = vsel %vm2428, %v7668, 0
  %v7684 = vsel %vm2428, %v7673, 0
  %7686 = vmatprep.subr.mxu0 0.0
  %7687 = vmatpush1.msra.mxu0 %v6728
  %7688 = vmatprep.subr.mxu0 0.0
  %7689 = vmatpush1.msra.mxu0 %v6733
  %7690 = vmatprep.subr.mxu0 0.0
  %7691 = vmatpush1.msra.mxu0 %v6738
  %7692 = vmatprep.subr.mxu0 0.0
  %7693 = vmatpush1.msra.mxu0 %v6743
  %7694 = vmatprep.subr.mxu0 0.0
  %7695 = vmatpush1.msra.mxu0 %v6748
  %7696 = vmatprep.subr.mxu0 0.0
  %7697 = vmatpush1.msra.mxu0 %v6753
  %7698 = vmatprep.subr.mxu0 0.0
  %7699 = vmatpush1.msra.mxu0 %v6758
  %7700 = vmatprep.subr.mxu0 0.0
  %7701 = vmatpush1.msra.mxu0 %v6763
  %7702 = vmatprep.subr.mxu0 0.0
  %7703 = vmatpush1.msra.mxu0 %v6839
  %7704 = vmatprep.subr.mxu0 0.0
  %7705 = vmatpush1.msra.mxu0 %v6844
  %7706 = vmatprep.subr.mxu0 0.0
  %7707 = vmatpush1.msra.mxu0 %v6849
  %7708 = vmatprep.subr.mxu0 0.0
  %7709 = vmatpush1.msra.mxu0 %v6854
  %7710 = vmatprep.subr.mxu0 0.0
  %7711 = vmatpush1.msra.mxu0 %v6859
  %7712 = vmatprep.subr.mxu0 0.0
  %7713 = vmatpush1.msra.mxu0 %v6864
  %7714 = vmatprep.subr.mxu0 0.0
  %7715 = vmatpush1.msra.mxu0 %v6869
  %7716 = vmatprep.subr.mxu0 0.0
  %7717 = vmatpush1.msra.mxu0 %v6874
  %7718 = vmatprep.subr.mxu0 0.0
  %7719 = vmatpush1.msra.mxu0 %v6950
  %7720 = vmatprep.subr.mxu0 0.0
  %7721 = vmatpush1.msra.mxu0 %v6955
  %7722 = vmatprep.subr.mxu0 0.0
  %7723 = vmatpush1.msra.mxu0 %v6960
  %7724 = vmatprep.subr.mxu0 0.0
  %7725 = vmatpush1.msra.mxu0 %v6965
  %7726 = vmatprep.subr.mxu0 0.0
  %7727 = vmatpush1.msra.mxu0 %v6970
  %7728 = vmatprep.subr.mxu0 0.0
  %7729 = vmatpush1.msra.mxu0 %v6975
  %7730 = vmatprep.subr.mxu0 0.0
  %7731 = vmatpush1.msra.mxu0 %v6980
  %7732 = vmatprep.subr.mxu0 0.0
  %7733 = vmatpush1.msra.mxu0 %v6985
  %7734 = vmatprep.subr.mxu0 0.0
  %7735 = vmatpush1.msra.mxu0 %v7061
  %7736 = vmatprep.subr.mxu0 0.0
  %7737 = vmatpush1.msra.mxu0 %v7066
  %7738 = vmatprep.subr.mxu0 0.0
  %7739 = vmatpush1.msra.mxu0 %v7071
  %7740 = vmatprep.subr.mxu0 0.0
  %7741 = vmatpush1.msra.mxu0 %v7076
  %7742 = vmatprep.subr.mxu0 0.0
  %7743 = vmatpush1.msra.mxu0 %v7081
  %7744 = vmatprep.subr.mxu0 0.0
  %7745 = vmatpush1.msra.mxu0 %v7086
  %7746 = vmatprep.subr.mxu0 0.0
  %7747 = vmatpush1.msra.mxu0 %v7091
  %7748 = vmatprep.subr.mxu0 0.0
  %7749 = vmatpush1.msra.mxu0 %v7096
  %7750 = vmatprep.mubr.f32.mxu0 %v7655
  %7751 = vmatmul.mubr.f32.gmra.mrb[0].mxu0 %v7654
  %v7752 = vpop.f32.mrb[0].mxu0
  %v7753 = vadd.f32 0.0, %v7752
  %v7754 = vpop.f32.mrb[0].mxu0
  %7755 = vmatprep.mubr.f32.mxu0 %v7660
  %7756 = vmatmul.mubr.f32.gmra.mrb[0].mxu0 %v7659
  %v7757 = vpop.f32.mrb[0].mxu0
  %v7758 = vadd.f32 0.0, %v7757
  %v7759 = vpop.f32.mrb[0].mxu0
  %7760 = vmatprep.mubr.f32.mxu0 %v7665
  %7761 = vmatmul.mubr.f32.gmra.mrb[0].mxu0 %v7664
  %v7762 = vpop.f32.mrb[0].mxu0
  %v7763 = vadd.f32 0.0, %v7762
  %v7764 = vpop.f32.mrb[0].mxu0
  %7765 = vmatprep.mubr.f32.mxu0 %v7670
  %7766 = vmatmul.mubr.f32.gmra.mrb[0].mxu0 %v7669
  %v7767 = vpop.f32.mrb[0].mxu0
  %v7768 = vadd.f32 0.0, %v7767
  %v7769 = vpop.f32.mrb[0].mxu0
  %7770 = vdwg.mxu0
  %7771 = vmatprep.subr.mxu0 0.0
  %7772 = vmatpush1.msra.mxu0 %v7172
  %7773 = vmatprep.subr.mxu0 0.0
  %7774 = vmatpush1.msra.mxu0 %v7177
  %7775 = vmatprep.subr.mxu0 0.0
  %7776 = vmatpush1.msra.mxu0 %v7182
  %7777 = vmatprep.subr.mxu0 0.0
  %7778 = vmatpush1.msra.mxu0 %v7187
  %7779 = vmatprep.subr.mxu0 0.0
  %7780 = vmatpush1.msra.mxu0 %v7192
  %7781 = vmatprep.subr.mxu0 0.0
  %7782 = vmatpush1.msra.mxu0 %v7197
  %7783 = vmatprep.subr.mxu0 0.0
  %7784 = vmatpush1.msra.mxu0 %v7202
  %7785 = vmatprep.subr.mxu0 0.0
  %7786 = vmatpush1.msra.mxu0 %v7207
  %7787 = vmatprep.subr.mxu0 0.0
  %7788 = vmatpush1.msra.mxu0 %v7283
  %7789 = vmatprep.subr.mxu0 0.0
  %7790 = vmatpush1.msra.mxu0 %v7288
  %7791 = vmatprep.subr.mxu0 0.0
  %7792 = vmatpush1.msra.mxu0 %v7293
  %7793 = vmatprep.subr.mxu0 0.0
  %7794 = vmatpush1.msra.mxu0 %v7298
  %7795 = vmatprep.subr.mxu0 0.0
  %7796 = vmatpush1.msra.mxu0 %v7303
  %7797 = vmatprep.subr.mxu0 0.0
  %7798 = vmatpush1.msra.mxu0 %v7308
  %7799 = vmatprep.subr.mxu0 0.0
  %7800 = vmatpush1.msra.mxu0 %v7313
  %7801 = vmatprep.subr.mxu0 0.0
  %7802 = vmatpush1.msra.mxu0 %v7318
  %7803 = vmatprep.subr.mxu0 0.0
  %7804 = vmatpush1.msra.mxu0 %v7394
  %7805 = vmatprep.subr.mxu0 0.0
  %7806 = vmatpush1.msra.mxu0 %v7399
  %7807 = vmatprep.subr.mxu0 0.0
  %7808 = vmatpush1.msra.mxu0 %v7404
  %7809 = vmatprep.subr.mxu0 0.0
  %7810 = vmatpush1.msra.mxu0 %v7409
  %7811 = vmatprep.subr.mxu0 0.0
  %7812 = vmatpush1.msra.mxu0 %v7414
  %7813 = vmatprep.subr.mxu0 0.0
  %7814 = vmatpush1.msra.mxu0 %v7419
  %7815 = vmatprep.subr.mxu0 0.0
  %7816 = vmatpush1.msra.mxu0 %v7424
  %7817 = vmatprep.subr.mxu0 0.0
  %7818 = vmatpush1.msra.mxu0 %v7429
  %7819 = vmatprep.subr.mxu0 0.0
  %7820 = vmatpush1.msra.mxu0 %v7505
  %7821 = vmatprep.subr.mxu0 0.0
  %7822 = vmatpush1.msra.mxu0 %v7510
  %7823 = vmatprep.subr.mxu0 0.0
  %7824 = vmatpush1.msra.mxu0 %v7515
  %7825 = vmatprep.subr.mxu0 0.0
  %7826 = vmatpush1.msra.mxu0 %v7520
  %7827 = vmatprep.subr.mxu0 0.0
  %7828 = vmatpush1.msra.mxu0 %v7525
  %7829 = vmatprep.subr.mxu0 0.0
  %7830 = vmatpush1.msra.mxu0 %v7530
  %7831 = vmatprep.subr.mxu0 0.0
  %7832 = vmatpush1.msra.mxu0 %v7535
  %7833 = vmatprep.subr.mxu0 0.0
  %7834 = vmatpush1.msra.mxu0 %v7540
  %7835 = vmatprep.mubr.f32.mxu0 %v7657
  %7836 = vmatmul.mubr.f32.gmra.mrb[0].mxu0 %v7656
  %v7837 = vpop.f32.mrb[0].mxu0
  %v7838 = vadd.f32 %v7753, %v7837
  %v7839 = vpop.f32.mrb[0].mxu0
  %7840 = vmatprep.mubr.f32.mxu0 %v7662
  %7841 = vmatmul.mubr.f32.gmra.mrb[0].mxu0 %v7661
  %v7842 = vpop.f32.mrb[0].mxu0
  %v7843 = vadd.f32 %v7758, %v7842
  %v7844 = vpop.f32.mrb[0].mxu0
  %7845 = vmatprep.mubr.f32.mxu0 %v7667
  %7846 = vmatmul.mubr.f32.gmra.mrb[0].mxu0 %v7666
  %v7847 = vpop.f32.mrb[0].mxu0
  %v7848 = vadd.f32 %v7763, %v7847
  %v7849 = vpop.f32.mrb[0].mxu0
  %7850 = vmatprep.mubr.f32.mxu0 %v7672
  %7851 = vmatmul.mubr.f32.gmra.mrb[0].mxu0 %v7671
  %v7852 = vpop.f32.mrb[0].mxu0
  %v7853 = vadd.f32 %v7768, %v7852
  %v7854 = vpop.f32.mrb[0].mxu0
  %7855 = vdwg.mxu0
  %7856 = vmatprep.subr.mxu0 0.0
  %7857 = vmatpush1.msra.mxu0 %v7616
  %7858 = vmatprep.subr.mxu0 0.0
  %7859 = vmatpush1.msra.mxu0 %v7621
  %7860 = vmatprep.subr.mxu0 0.0
  %7861 = vmatpush1.msra.mxu0 %v7626
  %7862 = vmatprep.subr.mxu0 0.0
  %7863 = vmatpush1.msra.mxu0 %v7631
  %7864 = vmatprep.subr.mxu0 0.0
  %7865 = vmatpush1.msra.mxu0 %v7636
  %7866 = vmatprep.subr.mxu0 0.0
  %7867 = vmatpush1.msra.mxu0 %v7641
  %7868 = vmatprep.subr.mxu0 0.0
  %7869 = vmatpush1.msra.mxu0 %v7646
  %7870 = vmatprep.subr.mxu0 0.0
  %7871 = vmatpush1.msra.mxu0 %v7651
  %7872 = vmatprep.subr.mxu0 0.0
  %7873 = vmatpush1.msra.mxu0 0.0
  %7874 = vmatprep.subr.mxu0 0.0
  %7875 = vmatpush1.msra.mxu0 0.0
  %7876 = vmatprep.subr.mxu0 0.0
  %7877 = vmatpush1.msra.mxu0 0.0
  %7878 = vmatprep.subr.mxu0 0.0
  %7879 = vmatpush1.msra.mxu0 0.0
  %7880 = vmatprep.subr.mxu0 0.0
  %7881 = vmatpush1.msra.mxu0 0.0
  %7882 = vmatprep.subr.mxu0 0.0
  %7883 = vmatpush1.msra.mxu0 0.0
  %7884 = vmatprep.subr.mxu0 0.0
  %7885 = vmatpush1.msra.mxu0 0.0
  %7886 = vmatprep.subr.mxu0 0.0
  %7887 = vmatpush1.msra.mxu0 0.0
  %7888 = vmatprep.subr.mxu0 0.0
  %7889 = vmatpush1.msra.mxu0 0.0
  %7890 = vmatprep.subr.mxu0 0.0
  %7891 = vmatpush1.msra.mxu0 0.0
  %7892 = vmatprep.subr.mxu0 0.0
  %7893 = vmatpush1.msra.mxu0 0.0
  %7894 = vmatprep.subr.mxu0 0.0
  %7895 = vmatpush1.msra.mxu0 0.0
  %7896 = vmatprep.subr.mxu0 0.0
  %7897 = vmatpush1.msra.mxu0 0.0
  %7898 = vmatprep.subr.mxu0 0.0
  %7899 = vmatpush1.msra.mxu0 0.0
  %7900 = vmatprep.subr.mxu0 0.0
  %7901 = vmatpush1.msra.mxu0 0.0
  %7902 = vmatprep.subr.mxu0 0.0
  %7903 = vmatpush1.msra.mxu0 0.0
  %7904 = vmatprep.subr.mxu0 0.0
  %7905 = vmatpush1.msra.mxu0 0.0
  %7906 = vmatprep.subr.mxu0 0.0
  %7907 = vmatpush1.msra.mxu0 0.0
  %7908 = vmatprep.subr.mxu0 0.0
  %7909 = vmatpush1.msra.mxu0 0.0
  %7910 = vmatprep.subr.mxu0 0.0
  %7911 = vmatpush1.msra.mxu0 0.0
  %7912 = vmatprep.subr.mxu0 0.0
  %7913 = vmatpush1.msra.mxu0 0.0
  %7914 = vmatprep.subr.mxu0 0.0
  %7915 = vmatpush1.msra.mxu0 0.0
  %7916 = vmatprep.subr.mxu0 0.0
  %7917 = vmatpush1.msra.mxu0 0.0
  %7918 = vmatprep.subr.mxu0 0.0
  %7919 = vmatpush1.msra.mxu0 0.0
  %7920 = vmatprep.mubr.f32.mxu0 0.0
  %7921 = vmatmul.mubr.f32.gmra.mrb[0].mxu0 %v7675
  %v7922 = vpop.f32.mrb[0].mxu0
  %v7923 = vadd.f32 %v7838, %v7922
  %v7924 = vpop.f32.mrb[0].mxu0
  %7925 = vmatprep.mubr.f32.mxu0 0.0
  %7926 = vmatmul.mubr.f32.gmra.mrb[0].mxu0 %v7678
  %v7927 = vpop.f32.mrb[0].mxu0
  %v7928 = vadd.f32 %v7843, %v7927
  %v7929 = vpop.f32.mrb[0].mxu0
  %7930 = vmatprep.mubr.f32.mxu0 0.0
  %7931 = vmatmul.mubr.f32.gmra.mrb[0].mxu0 %v7681
  %v7932 = vpop.f32.mrb[0].mxu0
  %v7933 = vadd.f32 %v7848, %v7932
  %v7934 = vpop.f32.mrb[0].mxu0
  %7935 = vmatprep.mubr.f32.mxu0 0.0
  %7936 = vmatmul.mubr.f32.gmra.mrb[0].mxu0 %v7684
  %v7937 = vpop.f32.mrb[0].mxu0
  %v7938 = vadd.f32 %v7853, %v7937
  %v7939 = vpop.f32.mrb[0].mxu0
  %7940 = vdwg.mxu0
  %v7941 = vsel %vm2448, %v7923, 0.0
  %7942 = vadd.xlane.f32.xlu0 %v7941
  %v7943 = vpop.xlane.xlu0 %7942
  %v7944 = vsel %vm2448, %v7928, 0.0
  %7945 = vadd.xlane.f32.xlu0 %v7944
  %v7946 = vpop.xlane.xlu0 %7945
  %v7947 = vsel %vm2448, %v7933, 0.0
  %7948 = vadd.xlane.f32.xlu0 %v7947
  %v7949 = vpop.xlane.xlu0 %7948
  %v7950 = vsel %vm2448, %v7938, 0.0
  %7951 = vadd.xlane.f32.xlu0 %v7950
  %v7952 = vpop.xlane.xlu0 %7951
  %v7953 = vmul.f32 %v7923, %v7923
  %v7954 = vmul.f32 %v7928, %v7928
  %v7955 = vmul.f32 %v7933, %v7933
  %v7956 = vmul.f32 %v7938, %v7938
  %v7957 = vsel %vm2448, %v7953, 0.0
  %7958 = vadd.xlane.f32.xlu0 %v7957
  %v7959 = vpop.xlane.xlu0 %7958
  %v7960 = vsel %vm2448, %v7954, 0.0
  %7961 = vadd.xlane.f32.xlu0 %v7960
  %v7962 = vpop.xlane.xlu0 %7961
  %v7963 = vsel %vm2448, %v7955, 0.0
  %7964 = vadd.xlane.f32.xlu0 %v7963
  %v7965 = vpop.xlane.xlu0 %7964
  %v7966 = vsel %vm2448, %v7956, 0.0
  %7967 = vadd.xlane.f32.xlu0 %v7966
  %v7968 = vpop.xlane.xlu0 %7967
  %v7969 = vsel %vm2443, %v7943, %v7959
  %v7970 = vsel %vm2443, %v7946, %v7962
  %v7971 = vsel %vm2443, %v7949, %v7965
  %v7972 = vsel %vm2443, %v7952, %v7968
  %v7973 = vld [vmem:[%s37] sm:$0xff]
  %v7974 = vld [vmem:[%s37 + $0x8] sm:$0xff]
  %v7975 = vld [vmem:[%s37 + $0x10] sm:$0xff]
  %v7976 = vld [vmem:[%s37 + $0x18] sm:$0xff]
  %v7978 = vsel %vm2346, %v7973, 0
  %v7981 = vsel %vm2346, %v7974, 0
  %v7984 = vsel %vm2346, %v7975, 0
  %v7987 = vsel %vm2346, %v7976, 0
  %7989 = vmatprep.subr.mxu0 0.0
  %7990 = vmatpush1.msra.mxu0 %v7969
  %7991 = vmatprep.subr.mxu0 0.0
  %7992 = vmatpush1.msra.mxu0 %v7970
  %7993 = vmatprep.subr.mxu0 0.0
  %7994 = vmatpush1.msra.mxu0 %v7971
  %7995 = vmatprep.subr.mxu0 0.0
  %7996 = vmatpush1.msra.mxu0 %v7972
  %7997 = vmatprep.subr.mxu0 0.0
  %7998 = vmatpush1.msra.mxu0 0.0
  %7999 = vmatprep.subr.mxu0 0.0
  %8000 = vmatpush1.msra.mxu0 0.0
  %8001 = vmatprep.subr.mxu0 0.0
  %8002 = vmatpush1.msra.mxu0 0.0
  %8003 = vmatprep.subr.mxu0 0.0
  %8004 = vmatpush1.msra.mxu0 0.0
  %8005 = vmatprep.subr.mxu0 0.0
  %8006 = vmatpush1.msra.mxu0 0.0
  %8007 = vmatprep.subr.mxu0 0.0
  %8008 = vmatpush1.msra.mxu0 0.0
  %8009 = vmatprep.subr.mxu0 0.0
  %8010 = vmatpush1.msra.mxu0 0.0
  %8011 = vmatprep.subr.mxu0 0.0
  %8012 = vmatpush1.msra.mxu0 0.0
  %8013 = vmatprep.subr.mxu0 0.0
  %8014 = vmatpush1.msra.mxu0 0.0
  %8015 = vmatprep.subr.mxu0 0.0
  %8016 = vmatpush1.msra.mxu0 0.0
  %8017 = vmatprep.subr.mxu0 0.0
  %8018 = vmatpush1.msra.mxu0 0.0
  %8019 = vmatprep.subr.mxu0 0.0
  %8020 = vmatpush1.msra.mxu0 0.0
  %8021 = vmatprep.subr.mxu0 0.0
  %8022 = vmatpush1.msra.mxu0 0.0
  %8023 = vmatprep.subr.mxu0 0.0
  %8024 = vmatpush1.msra.mxu0 0.0
  %8025 = vmatprep.subr.mxu0 0.0
  %8026 = vmatpush1.msra.mxu0 0.0
  %8027 = vmatprep.subr.mxu0 0.0
  %8028 = vmatpush1.msra.mxu0 0.0
  %8029 = vmatprep.subr.mxu0 0.0
  %8030 = vmatpush1.msra.mxu0 0.0
  %8031 = vmatprep.subr.mxu0 0.0
  %8032 = vmatpush1.msra.mxu0 0.0
  %8033 = vmatprep.subr.mxu0 0.0
  %8034 = vmatpush1.msra.mxu0 0.0
  %8035 = vmatprep.subr.mxu0 0.0
  %8036 = vmatpush1.msra.mxu0 0.0
  %8037 = vmatprep.subr.mxu0 0.0
  %8038 = vmatpush1.msra.mxu0 0.0
  %8039 = vmatprep.subr.mxu0 0.0
  %8040 = vmatpush1.msra.mxu0 0.0
  %8041 = vmatprep.subr.mxu0 0.0
  %8042 = vmatpush1.msra.mxu0 0.0
  %8043 = vmatprep.subr.mxu0 0.0
  %8044 = vmatpush1.msra.mxu0 0.0
  %8045 = vmatprep.subr.mxu0 0.0
  %8046 = vmatpush1.msra.mxu0 0.0
  %8047 = vmatprep.subr.mxu0 0.0
  %8048 = vmatpush1.msra.mxu0 0.0
  %8049 = vmatprep.subr.mxu0 0.0
  %8050 = vmatpush1.msra.mxu0 0.0
  %8051 = vmatprep.subr.mxu0 0.0
  %8052 = vmatpush1.msra.mxu0 0.0
  %8053 = vmatprep.mubr.f32.mxu0 0.0
  %8054 = vmatmul.mubr.f32.gmra.mrb[0].mxu0 %v7978
  %v8055 = vpop.f32.mrb[0].mxu0
  %v8056 = vadd.f32 0.0, %v8055
  %v8057 = vpop.f32.mrb[0].mxu0
  %8058 = vmatprep.mubr.f32.mxu0 0.0
  %8059 = vmatmul.mubr.f32.gmra.mrb[0].mxu0 %v7981
  %v8060 = vpop.f32.mrb[0].mxu0
  %v8061 = vadd.f32 0.0, %v8060
  %v8062 = vpop.f32.mrb[0].mxu0
  %8063 = vmatprep.mubr.f32.mxu0 0.0
  %8064 = vmatmul.mubr.f32.gmra.mrb[0].mxu0 %v7984
  %v8065 = vpop.f32.mrb[0].mxu0
  %v8066 = vadd.f32 0.0, %v8065
  %v8067 = vpop.f32.mrb[0].mxu0
  %8068 = vmatprep.mubr.f32.mxu0 0.0
  %8069 = vmatmul.mubr.f32.gmra.mrb[0].mxu0 %v7987
  %v8070 = vpop.f32.mrb[0].mxu0
  %v8071 = vadd.f32 0.0, %v8070
  %v8072 = vpop.f32.mrb[0].mxu0
  %8073 = vdwg.mxu0
  %v8074 = vmul.f32 %v8056, %v8056
  %v8075 = vmul.f32 %v8061, %v8061
  %v8076 = vmul.f32 %v8066, %v8066
  %v8077 = vmul.f32 %v8071, %v8071
  %8082 = vrot.lane.b32.xlu0 %v8074, 1
  %v8083 = vpop.permute.xlu0 %8082
  %8084 = vrot.lane.b32.xlu0 %v8075, 1
  %v8085 = vpop.permute.xlu0 %8084
  %8086 = vrot.lane.b32.xlu0 %v8076, 1
  %v8087 = vpop.permute.xlu0 %8086
  %8088 = vrot.lane.b32.xlu0 %v8077, 1
  %v8089 = vpop.permute.xlu0 %8088
  %v8094 = vsub.f32 %v8056, %v8083
  %v8095 = vsub.f32 %v8061, %v8085
  %v8096 = vsub.f32 %v8066, %v8087
  %v8097 = vsub.f32 %v8071, %v8089
  %v8098 = vmax.f32 %v8094, 0.0
  %v8099 = vmax.f32 %v8095, 0.0
  %v8100 = vmax.f32 %v8096, 0.0
  %v8101 = vmax.f32 %v8097, 0.0
  %8103 = vset.pattern.permute.xlu0 0
  %8104 = vperm.xlu0 %8103, %v8056
  %v8105 = vpop.permute.xlu0 %8104
  %8108 = vset.pattern.permute.xlu0 0
  %8109 = vperm.xlu0 %8108, %v8061
  %v8110 = vpop.permute.xlu0 %8109
  %8113 = vset.pattern.permute.xlu0 0
  %8114 = vperm.xlu0 %8113, %v8066
  %v8115 = vpop.permute.xlu0 %8114
  %8118 = vset.pattern.permute.xlu0 0
  %8119 = vperm.xlu0 %8118, %v8071
  %v8120 = vpop.permute.xlu0 %8119
  %v8122 = vsub.f32 %v7923, %v8105
  %v8123 = vsub.f32 %v7928, %v8110
  %v8124 = vsub.f32 %v7933, %v8115
  %v8125 = vsub.f32 %v7938, %v8120
  %v8126 = vadd.f32 %v8098, 1e-05
  %v8127 = vadd.f32 %v8099, 1e-05
  %v8128 = vadd.f32 %v8100, 1e-05
  %v8129 = vadd.f32 %v8101, 1e-05
  %v8130 = vrsqrt.pop %v8126
  %v8131 = vrsqrt.pop %v8127
  %v8132 = vrsqrt.pop %v8128
  %v8133 = vrsqrt.pop %v8129
  %8135 = vset.pattern.permute.xlu0 1
  %8136 = vperm.xlu0 %8135, %v8130
  %v8137 = vpop.permute.xlu0 %8136
  %8140 = vset.pattern.permute.xlu0 1
  %8141 = vperm.xlu0 %8140, %v8131
  %v8142 = vpop.permute.xlu0 %8141
  %8145 = vset.pattern.permute.xlu0 1
  %8146 = vperm.xlu0 %8145, %v8132
  %v8147 = vpop.permute.xlu0 %8146
  %8150 = vset.pattern.permute.xlu0 1
  %8151 = vperm.xlu0 %8150, %v8133
  %v8152 = vpop.permute.xlu0 %8151
  %v8154 = vmul.f32 %v8122, %v8137
  %v8155 = vmul.f32 %v8123, %v8142
  %v8156 = vmul.f32 %v8124, %v8147
  %v8157 = vmul.f32 %v8125, %v8152
  %v8158 = vld [vmem:[%s39] sm:$0xff]
  %v8159 = vld [vmem:[%s39 + $0x8] sm:$0xff]
  %v8160 = vld [vmem:[%s39 + $0x10] sm:$0xff]
  %v8161 = vld [vmem:[%s39 + $0x18] sm:$0xff]
  %8163 = vset.pattern.permute.xlu0 0
  %8164 = vperm.xlu0 %8163, %v8158
  %v8165 = vpop.permute.xlu0 %8164
  %8168 = vset.pattern.permute.xlu0 0
  %8169 = vperm.xlu0 %8168, %v8159
  %v8170 = vpop.permute.xlu0 %8169
  %8173 = vset.pattern.permute.xlu0 0
  %8174 = vperm.xlu0 %8173, %v8160
  %v8175 = vpop.permute.xlu0 %8174
  %8178 = vset.pattern.permute.xlu0 0
  %8179 = vperm.xlu0 %8178, %v8161
  %v8180 = vpop.permute.xlu0 %8179
  %v8182 = vmul.f32 %v8154, %v8165
  %v8183 = vmul.f32 %v8155, %v8170
  %v8184 = vmul.f32 %v8156, %v8175
  %v8185 = vmul.f32 %v8157, %v8180
  %v8186 = vld [vmem:[%s41] sm:$0xff]
  %v8187 = vld [vmem:[%s41 + $0x8] sm:$0xff]
  %v8188 = vld [vmem:[%s41 + $0x10] sm:$0xff]
  %v8189 = vld [vmem:[%s41 + $0x18] sm:$0xff]
  %8191 = vset.pattern.permute.xlu0 0
  %8192 = vperm.xlu0 %8191, %v8186
  %v8193 = vpop.permute.xlu0 %8192
  %8196 = vset.pattern.permute.xlu0 0
  %8197 = vperm.xlu0 %8196, %v8187
  %v8198 = vpop.permute.xlu0 %8197
  %8201 = vset.pattern.permute.xlu0 0
  %8202 = vperm.xlu0 %8201, %v8188
  %v8203 = vpop.permute.xlu0 %8202
  %8206 = vset.pattern.permute.xlu0 0
  %8207 = vperm.xlu0 %8206, %v8189
  %v8208 = vpop.permute.xlu0 %8207
  %v8210 = vadd.f32 %v8182, %v8193
  %v8211 = vadd.f32 %v8183, %v8198
  %v8212 = vadd.f32 %v8184, %v8203
  %v8213 = vadd.f32 %v8185, %v8208
  %v8214 = vmax.f32 %v8210, 0.0
  %v8215 = vmax.f32 %v8211, 0.0
  %v8216 = vmax.f32 %v8212, 0.0
  %v8217 = vmax.f32 %v8213, 0.0
  %v8218 = vld [vmem:[%s43] sm:$0xf]
  %v8219 = vld [vmem:[%s43 + $0x4] sm:$0xf]
  %v8220 = vunpack.c.l.bf16 %v8218
  %v8221 = vunpack.c.l.bf16 %v8219
  %v8223 = vsel %vm2448, %v8214, 0
  %v8226 = vsel %vm2448, %v8215, 0
  %v8229 = vsel %vm2448, %v8216, 0
  %v8232 = vsel %vm2448, %v8217, 0
  %8234 = vmatprep.subr.mxu0 0.0
  %8235 = vmatpush1.msra.mxu0 %v8220
  %8236 = vmatprep.subr.mxu0 0.0
  %8237 = vmatpush1.msra.mxu0 %v8221
  %8238 = vmatprep.subr.mxu0 0.0
  %8239 = vmatpush1.msra.mxu0 0.0
  %8240 = vmatprep.subr.mxu0 0.0
  %8241 = vmatpush1.msra.mxu0 0.0
  %8242 = vmatprep.subr.mxu0 0.0
  %8243 = vmatpush1.msra.mxu0 0.0
  %8244 = vmatprep.subr.mxu0 0.0
  %8245 = vmatpush1.msra.mxu0 0.0
  %8246 = vmatprep.subr.mxu0 0.0
  %8247 = vmatpush1.msra.mxu0 0.0
  %8248 = vmatprep.subr.mxu0 0.0
  %8249 = vmatpush1.msra.mxu0 0.0
  %8250 = vmatprep.subr.mxu0 0.0
  %8251 = vmatpush1.msra.mxu0 0.0
  %8252 = vmatprep.subr.mxu0 0.0
  %8253 = vmatpush1.msra.mxu0 0.0
  %8254 = vmatprep.subr.mxu0 0.0
  %8255 = vmatpush1.msra.mxu0 0.0
  %8256 = vmatprep.subr.mxu0 0.0
  %8257 = vmatpush1.msra.mxu0 0.0
  %8258 = vmatprep.subr.mxu0 0.0
  %8259 = vmatpush1.msra.mxu0 0.0
  %8260 = vmatprep.subr.mxu0 0.0
  %8261 = vmatpush1.msra.mxu0 0.0
  %8262 = vmatprep.subr.mxu0 0.0
  %8263 = vmatpush1.msra.mxu0 0.0
  %8264 = vmatprep.subr.mxu0 0.0
  %8265 = vmatpush1.msra.mxu0 0.0
  %8266 = vmatprep.subr.mxu0 0.0
  %8267 = vmatpush1.msra.mxu0 0.0
  %8268 = vmatprep.subr.mxu0 0.0
  %8269 = vmatpush1.msra.mxu0 0.0
  %8270 = vmatprep.subr.mxu0 0.0
  %8271 = vmatpush1.msra.mxu0 0.0
  %8272 = vmatprep.subr.mxu0 0.0
  %8273 = vmatpush1.msra.mxu0 0.0
  %8274 = vmatprep.subr.mxu0 0.0
  %8275 = vmatpush1.msra.mxu0 0.0
  %8276 = vmatprep.subr.mxu0 0.0
  %8277 = vmatpush1.msra.mxu0 0.0
  %8278 = vmatprep.subr.mxu0 0.0
  %8279 = vmatpush1.msra.mxu0 0.0
  %8280 = vmatprep.subr.mxu0 0.0
  %8281 = vmatpush1.msra.mxu0 0.0
  %8282 = vmatprep.subr.mxu0 0.0
  %8283 = vmatpush1.msra.mxu0 0.0
  %8284 = vmatprep.subr.mxu0 0.0
  %8285 = vmatpush1.msra.mxu0 0.0
  %8286 = vmatprep.subr.mxu0 0.0
  %8287 = vmatpush1.msra.mxu0 0.0
  %8288 = vmatprep.subr.mxu0 0.0
  %8289 = vmatpush1.msra.mxu0 0.0
  %8290 = vmatprep.subr.mxu0 0.0
  %8291 = vmatpush1.msra.mxu0 0.0
  %8292 = vmatprep.subr.mxu0 0.0
  %8293 = vmatpush1.msra.mxu0 0.0
  %8294 = vmatprep.subr.mxu0 0.0
  %8295 = vmatpush1.msra.mxu0 0.0
  %8296 = vmatprep.subr.mxu0 0.0
  %8297 = vmatpush1.msra.mxu0 0.0
  %8298 = vmatprep.mubr.f32.mxu0 0.0
  %8299 = vmatmul.mubr.f32.gmra.mrb[0].mxu0 %v8223
  %v8300 = vpop.f32.mrb[0].mxu0
  %v8301 = vadd.f32 0.0, %v8300
  %v8302 = vpop.f32.mrb[0].mxu0
  %8303 = vmatprep.mubr.f32.mxu0 0.0
  %8304 = vmatmul.mubr.f32.gmra.mrb[0].mxu0 %v8226
  %v8305 = vpop.f32.mrb[0].mxu0
  %v8306 = vadd.f32 0.0, %v8305
  %v8307 = vpop.f32.mrb[0].mxu0
  %8308 = vmatprep.mubr.f32.mxu0 0.0
  %8309 = vmatmul.mubr.f32.gmra.mrb[0].mxu0 %v8229
  %v8310 = vpop.f32.mrb[0].mxu0
  %v8311 = vadd.f32 0.0, %v8310
  %v8312 = vpop.f32.mrb[0].mxu0
  %8313 = vmatprep.mubr.f32.mxu0 0.0
  %8314 = vmatmul.mubr.f32.gmra.mrb[0].mxu0 %v8232
  %v8315 = vpop.f32.mrb[0].mxu0
  %v8316 = vadd.f32 0.0, %v8315
  %v8317 = vpop.f32.mrb[0].mxu0
  %8318 = vmatprep.mubr.f32.mxu0 0.0
  %8319 = vmatmul.mubr.f32.gmra.mrb[0].mxu0 %v4454
  %v8320 = vpop.f32.mrb[0].mxu0
  %v8321 = vadd.f32 0.0, %v8320
  %v8322 = vpop.f32.mrb[0].mxu0
  %8323 = vmatprep.mubr.f32.mxu0 0.0
  %8324 = vmatmul.mubr.f32.gmra.mrb[0].mxu0 %v4457
  %v8325 = vpop.f32.mrb[0].mxu0
  %v8326 = vadd.f32 0.0, %v8325
  %v8327 = vpop.f32.mrb[0].mxu0
  %8328 = vmatprep.mubr.f32.mxu0 0.0
  %8329 = vmatmul.mubr.f32.gmra.mrb[0].mxu0 %v4460
  %v8330 = vpop.f32.mrb[0].mxu0
  %v8331 = vadd.f32 0.0, %v8330
  %v8332 = vpop.f32.mrb[0].mxu0
  %8333 = vmatprep.mubr.f32.mxu0 0.0
  %8334 = vmatmul.mubr.f32.gmra.mrb[0].mxu0 %v4463
  %v8335 = vpop.f32.mrb[0].mxu0
  %v8336 = vadd.f32 0.0, %v8335
  %v8337 = vpop.f32.mrb[0].mxu0
  %8338 = vdwg.mxu0
  %s8339 = scalar_lea.vmem %s43, 8
  %v8340 = vld [vmem:[%s8339] sm:$0xf]
  %v8341 = vld [vmem:[%s8339 + $0x4] sm:$0xf]
  %v8342 = vunpack.c.l.bf16 %v8340
  %v8343 = vunpack.c.l.bf16 %v8341
  %8344 = vmatprep.subr.mxu0 0.0
  %8345 = vmatpush1.msra.mxu0 %v8342
  %8346 = vmatprep.subr.mxu0 0.0
  %8347 = vmatpush1.msra.mxu0 %v8343
  %8348 = vmatprep.subr.mxu0 0.0
  %8349 = vmatpush1.msra.mxu0 0.0
  %8350 = vmatprep.subr.mxu0 0.0
  %8351 = vmatpush1.msra.mxu0 0.0
  %8352 = vmatprep.subr.mxu0 0.0
  %8353 = vmatpush1.msra.mxu0 0.0
  %8354 = vmatprep.subr.mxu0 0.0
  %8355 = vmatpush1.msra.mxu0 0.0
  %8356 = vmatprep.subr.mxu0 0.0
  %8357 = vmatpush1.msra.mxu0 0.0
  %8358 = vmatprep.subr.mxu0 0.0
  %8359 = vmatpush1.msra.mxu0 0.0
  %8360 = vmatprep.subr.mxu0 0.0
  %8361 = vmatpush1.msra.mxu0 0.0
  %8362 = vmatprep.subr.mxu0 0.0
  %8363 = vmatpush1.msra.mxu0 0.0
  %8364 = vmatprep.subr.mxu0 0.0
  %8365 = vmatpush1.msra.mxu0 0.0
  %8366 = vmatprep.subr.mxu0 0.0
  %8367 = vmatpush1.msra.mxu0 0.0
  %8368 = vmatprep.subr.mxu0 0.0
  %8369 = vmatpush1.msra.mxu0 0.0
  %8370 = vmatprep.subr.mxu0 0.0
  %8371 = vmatpush1.msra.mxu0 0.0
  %8372 = vmatprep.subr.mxu0 0.0
  %8373 = vmatpush1.msra.mxu0 0.0
  %8374 = vmatprep.subr.mxu0 0.0
  %8375 = vmatpush1.msra.mxu0 0.0
  %8376 = vmatprep.subr.mxu0 0.0
  %8377 = vmatpush1.msra.mxu0 0.0
  %8378 = vmatprep.subr.mxu0 0.0
  %8379 = vmatpush1.msra.mxu0 0.0
  %8380 = vmatprep.subr.mxu0 0.0
  %8381 = vmatpush1.msra.mxu0 0.0
  %8382 = vmatprep.subr.mxu0 0.0
  %8383 = vmatpush1.msra.mxu0 0.0
  %8384 = vmatprep.subr.mxu0 0.0
  %8385 = vmatpush1.msra.mxu0 0.0
  %8386 = vmatprep.subr.mxu0 0.0
  %8387 = vmatpush1.msra.mxu0 0.0
  %8388 = vmatprep.subr.mxu0 0.0
  %8389 = vmatpush1.msra.mxu0 0.0
  %8390 = vmatprep.subr.mxu0 0.0
  %8391 = vmatpush1.msra.mxu0 0.0
  %8392 = vmatprep.subr.mxu0 0.0
  %8393 = vmatpush1.msra.mxu0 0.0
  %8394 = vmatprep.subr.mxu0 0.0
  %8395 = vmatpush1.msra.mxu0 0.0
  %8396 = vmatprep.subr.mxu0 0.0
  %8397 = vmatpush1.msra.mxu0 0.0
  %8398 = vmatprep.subr.mxu0 0.0
  %8399 = vmatpush1.msra.mxu0 0.0
  %8400 = vmatprep.subr.mxu0 0.0
  %8401 = vmatpush1.msra.mxu0 0.0
  %8402 = vmatprep.subr.mxu0 0.0
  %8403 = vmatpush1.msra.mxu0 0.0
  %8404 = vmatprep.subr.mxu0 0.0
  %8405 = vmatpush1.msra.mxu0 0.0
  %8406 = vmatprep.subr.mxu0 0.0
  %8407 = vmatpush1.msra.mxu0 0.0
  %8408 = vmatprep.mubr.f32.mxu0 0.0
  %8409 = vmatmul.mubr.f32.gmra.mrb[0].mxu0 %v8223
  %v8410 = vpop.f32.mrb[0].mxu0
  %v8411 = vadd.f32 0.0, %v8410
  %v8412 = vpop.f32.mrb[0].mxu0
  %8413 = vmatprep.mubr.f32.mxu0 0.0
  %8414 = vmatmul.mubr.f32.gmra.mrb[0].mxu0 %v8226
  %v8415 = vpop.f32.mrb[0].mxu0
  %v8416 = vadd.f32 0.0, %v8415
  %v8417 = vpop.f32.mrb[0].mxu0
  %8418 = vmatprep.mubr.f32.mxu0 0.0
  %8419 = vmatmul.mubr.f32.gmra.mrb[0].mxu0 %v8229
  %v8420 = vpop.f32.mrb[0].mxu0
  %v8421 = vadd.f32 0.0, %v8420
  %v8422 = vpop.f32.mrb[0].mxu0
  %8423 = vmatprep.mubr.f32.mxu0 0.0
  %8424 = vmatmul.mubr.f32.gmra.mrb[0].mxu0 %v8232
  %v8425 = vpop.f32.mrb[0].mxu0
  %v8426 = vadd.f32 0.0, %v8425
  %v8427 = vpop.f32.mrb[0].mxu0
  %8428 = vmatprep.mubr.f32.mxu0 0.0
  %8429 = vmatmul.mubr.f32.gmra.mrb[0].mxu0 %v4454
  %v8430 = vpop.f32.mrb[0].mxu0
  %v8431 = vadd.f32 0.0, %v8430
  %v8432 = vpop.f32.mrb[0].mxu0
  %8433 = vmatprep.mubr.f32.mxu0 0.0
  %8434 = vmatmul.mubr.f32.gmra.mrb[0].mxu0 %v4457
  %v8435 = vpop.f32.mrb[0].mxu0
  %v8436 = vadd.f32 0.0, %v8435
  %v8437 = vpop.f32.mrb[0].mxu0
  %8438 = vmatprep.mubr.f32.mxu0 0.0
  %8439 = vmatmul.mubr.f32.gmra.mrb[0].mxu0 %v4460
  %v8440 = vpop.f32.mrb[0].mxu0
  %v8441 = vadd.f32 0.0, %v8440
  %v8442 = vpop.f32.mrb[0].mxu0
  %8443 = vmatprep.mubr.f32.mxu0 0.0
  %8444 = vmatmul.mubr.f32.gmra.mrb[0].mxu0 %v4463
  %v8445 = vpop.f32.mrb[0].mxu0
  %v8446 = vadd.f32 0.0, %v8445
  %v8447 = vpop.f32.mrb[0].mxu0
  %8448 = vdwg.mxu0
  %s8449 = scalar_lea.vmem %s43, 16
  %v8450 = vld [vmem:[%s8449] sm:$0xf]
  %v8451 = vld [vmem:[%s8449 + $0x4] sm:$0xf]
  %v8452 = vunpack.c.l.bf16 %v8450
  %v8453 = vunpack.c.l.bf16 %v8451
  %8454 = vmatprep.subr.mxu0 0.0
  %8455 = vmatpush1.msra.mxu0 %v8452
  %8456 = vmatprep.subr.mxu0 0.0
  %8457 = vmatpush1.msra.mxu0 %v8453
  %8458 = vmatprep.subr.mxu0 0.0
  %8459 = vmatpush1.msra.mxu0 0.0
  %8460 = vmatprep.subr.mxu0 0.0
  %8461 = vmatpush1.msra.mxu0 0.0
  %8462 = vmatprep.subr.mxu0 0.0
  %8463 = vmatpush1.msra.mxu0 0.0
  %8464 = vmatprep.subr.mxu0 0.0
  %8465 = vmatpush1.msra.mxu0 0.0
  %8466 = vmatprep.subr.mxu0 0.0
  %8467 = vmatpush1.msra.mxu0 0.0
  %8468 = vmatprep.subr.mxu0 0.0
  %8469 = vmatpush1.msra.mxu0 0.0
  %8470 = vmatprep.subr.mxu0 0.0
  %8471 = vmatpush1.msra.mxu0 0.0
  %8472 = vmatprep.subr.mxu0 0.0
  %8473 = vmatpush1.msra.mxu0 0.0
  %8474 = vmatprep.subr.mxu0 0.0
  %8475 = vmatpush1.msra.mxu0 0.0
  %8476 = vmatprep.subr.mxu0 0.0
  %8477 = vmatpush1.msra.mxu0 0.0
  %8478 = vmatprep.subr.mxu0 0.0
  %8479 = vmatpush1.msra.mxu0 0.0
  %8480 = vmatprep.subr.mxu0 0.0
  %8481 = vmatpush1.msra.mxu0 0.0
  %8482 = vmatprep.subr.mxu0 0.0
  %8483 = vmatpush1.msra.mxu0 0.0
  %8484 = vmatprep.subr.mxu0 0.0
  %8485 = vmatpush1.msra.mxu0 0.0
  %8486 = vmatprep.subr.mxu0 0.0
  %8487 = vmatpush1.msra.mxu0 0.0
  %8488 = vmatprep.subr.mxu0 0.0
  %8489 = vmatpush1.msra.mxu0 0.0
  %8490 = vmatprep.subr.mxu0 0.0
  %8491 = vmatpush1.msra.mxu0 0.0
  %8492 = vmatprep.subr.mxu0 0.0
  %8493 = vmatpush1.msra.mxu0 0.0
  %8494 = vmatprep.subr.mxu0 0.0
  %8495 = vmatpush1.msra.mxu0 0.0
  %8496 = vmatprep.subr.mxu0 0.0
  %8497 = vmatpush1.msra.mxu0 0.0
  %8498 = vmatprep.subr.mxu0 0.0
  %8499 = vmatpush1.msra.mxu0 0.0
  %8500 = vmatprep.subr.mxu0 0.0
  %8501 = vmatpush1.msra.mxu0 0.0
  %8502 = vmatprep.subr.mxu0 0.0
  %8503 = vmatpush1.msra.mxu0 0.0
  %8504 = vmatprep.subr.mxu0 0.0
  %8505 = vmatpush1.msra.mxu0 0.0
  %8506 = vmatprep.subr.mxu0 0.0
  %8507 = vmatpush1.msra.mxu0 0.0
  %8508 = vmatprep.subr.mxu0 0.0
  %8509 = vmatpush1.msra.mxu0 0.0
  %8510 = vmatprep.subr.mxu0 0.0
  %8511 = vmatpush1.msra.mxu0 0.0
  %8512 = vmatprep.subr.mxu0 0.0
  %8513 = vmatpush1.msra.mxu0 0.0
  %8514 = vmatprep.subr.mxu0 0.0
  %8515 = vmatpush1.msra.mxu0 0.0
  %8516 = vmatprep.subr.mxu0 0.0
  %8517 = vmatpush1.msra.mxu0 0.0
  %8518 = vmatprep.mubr.f32.mxu0 0.0
  %8519 = vmatmul.mubr.f32.gmra.mrb[0].mxu0 %v8223
  %v8520 = vpop.f32.mrb[0].mxu0
  %v8521 = vadd.f32 0.0, %v8520
  %v8522 = vpop.f32.mrb[0].mxu0
  %8523 = vmatprep.mubr.f32.mxu0 0.0
  %8524 = vmatmul.mubr.f32.gmra.mrb[0].mxu0 %v8226
  %v8525 = vpop.f32.mrb[0].mxu0
  %v8526 = vadd.f32 0.0, %v8525
  %v8527 = vpop.f32.mrb[0].mxu0
  %8528 = vmatprep.mubr.f32.mxu0 0.0
  %8529 = vmatmul.mubr.f32.gmra.mrb[0].mxu0 %v8229
  %v8530 = vpop.f32.mrb[0].mxu0
  %v8531 = vadd.f32 0.0, %v8530
  %v8532 = vpop.f32.mrb[0].mxu0
  %8533 = vmatprep.mubr.f32.mxu0 0.0
  %8534 = vmatmul.mubr.f32.gmra.mrb[0].mxu0 %v8232
  %v8535 = vpop.f32.mrb[0].mxu0
  %v8536 = vadd.f32 0.0, %v8535
  %v8537 = vpop.f32.mrb[0].mxu0
  %8538 = vmatprep.mubr.f32.mxu0 0.0
  %8539 = vmatmul.mubr.f32.gmra.mrb[0].mxu0 %v4454
  %v8540 = vpop.f32.mrb[0].mxu0
  %v8541 = vadd.f32 0.0, %v8540
  %v8542 = vpop.f32.mrb[0].mxu0
  %8543 = vmatprep.mubr.f32.mxu0 0.0
  %8544 = vmatmul.mubr.f32.gmra.mrb[0].mxu0 %v4457
  %v8545 = vpop.f32.mrb[0].mxu0
  %v8546 = vadd.f32 0.0, %v8545
  %v8547 = vpop.f32.mrb[0].mxu0
  %8548 = vmatprep.mubr.f32.mxu0 0.0
  %8549 = vmatmul.mubr.f32.gmra.mrb[0].mxu0 %v4460
  %v8550 = vpop.f32.mrb[0].mxu0
  %v8551 = vadd.f32 0.0, %v8550
  %v8552 = vpop.f32.mrb[0].mxu0
  %8553 = vmatprep.mubr.f32.mxu0 0.0
  %8554 = vmatmul.mubr.f32.gmra.mrb[0].mxu0 %v4463
  %v8555 = vpop.f32.mrb[0].mxu0
  %v8556 = vadd.f32 0.0, %v8555
  %v8557 = vpop.f32.mrb[0].mxu0
  %8558 = vdwg.mxu0
  %s8559 = scalar_lea.vmem %s43, 24
  %v8560 = vld [vmem:[%s8559] sm:$0xf]
  %v8561 = vld [vmem:[%s8559 + $0x4] sm:$0xf]
  %v8562 = vunpack.c.l.bf16 %v8560
  %v8563 = vunpack.c.l.bf16 %v8561
  %8564 = vmatprep.subr.mxu0 0.0
  %8565 = vmatpush1.msra.mxu0 %v8562
  %8566 = vmatprep.subr.mxu0 0.0
  %8567 = vmatpush1.msra.mxu0 %v8563
  %8568 = vmatprep.subr.mxu0 0.0
  %8569 = vmatpush1.msra.mxu0 0.0
  %8570 = vmatprep.subr.mxu0 0.0
  %8571 = vmatpush1.msra.mxu0 0.0
  %8572 = vmatprep.subr.mxu0 0.0
  %8573 = vmatpush1.msra.mxu0 0.0
  %8574 = vmatprep.subr.mxu0 0.0
  %8575 = vmatpush1.msra.mxu0 0.0
  %8576 = vmatprep.subr.mxu0 0.0
  %8577 = vmatpush1.msra.mxu0 0.0
  %8578 = vmatprep.subr.mxu0 0.0
  %8579 = vmatpush1.msra.mxu0 0.0
  %8580 = vmatprep.subr.mxu0 0.0
  %8581 = vmatpush1.msra.mxu0 0.0
  %8582 = vmatprep.subr.mxu0 0.0
  %8583 = vmatpush1.msra.mxu0 0.0
  %8584 = vmatprep.subr.mxu0 0.0
  %8585 = vmatpush1.msra.mxu0 0.0
  %8586 = vmatprep.subr.mxu0 0.0
  %8587 = vmatpush1.msra.mxu0 0.0
  %8588 = vmatprep.subr.mxu0 0.0
  %8589 = vmatpush1.msra.mxu0 0.0
  %8590 = vmatprep.subr.mxu0 0.0
  %8591 = vmatpush1.msra.mxu0 0.0
  %8592 = vmatprep.subr.mxu0 0.0
  %8593 = vmatpush1.msra.mxu0 0.0
  %8594 = vmatprep.subr.mxu0 0.0
  %8595 = vmatpush1.msra.mxu0 0.0
  %8596 = vmatprep.subr.mxu0 0.0
  %8597 = vmatpush1.msra.mxu0 0.0
  %8598 = vmatprep.subr.mxu0 0.0
  %8599 = vmatpush1.msra.mxu0 0.0
  %8600 = vmatprep.subr.mxu0 0.0
  %8601 = vmatpush1.msra.mxu0 0.0
  %8602 = vmatprep.subr.mxu0 0.0
  %8603 = vmatpush1.msra.mxu0 0.0
  %8604 = vmatprep.subr.mxu0 0.0
  %8605 = vmatpush1.msra.mxu0 0.0
  %8606 = vmatprep.subr.mxu0 0.0
  %8607 = vmatpush1.msra.mxu0 0.0
  %8608 = vmatprep.subr.mxu0 0.0
  %8609 = vmatpush1.msra.mxu0 0.0
  %8610 = vmatprep.subr.mxu0 0.0
  %8611 = vmatpush1.msra.mxu0 0.0
  %8612 = vmatprep.subr.mxu0 0.0
  %8613 = vmatpush1.msra.mxu0 0.0
  %8614 = vmatprep.subr.mxu0 0.0
  %8615 = vmatpush1.msra.mxu0 0.0
  %8616 = vmatprep.subr.mxu0 0.0
  %8617 = vmatpush1.msra.mxu0 0.0
  %8618 = vmatprep.subr.mxu0 0.0
  %8619 = vmatpush1.msra.mxu0 0.0
  %8620 = vmatprep.subr.mxu0 0.0
  %8621 = vmatpush1.msra.mxu0 0.0
  %8622 = vmatprep.subr.mxu0 0.0
  %8623 = vmatpush1.msra.mxu0 0.0
  %8624 = vmatprep.subr.mxu0 0.0
  %8625 = vmatpush1.msra.mxu0 0.0
  %8626 = vmatprep.subr.mxu0 0.0
  %8627 = vmatpush1.msra.mxu0 0.0
  %8628 = vmatprep.mubr.f32.mxu0 0.0
  %8629 = vmatmul.mubr.f32.gmra.mrb[0].mxu0 %v8223
  %v8630 = vpop.f32.mrb[0].mxu0
  %v8631 = vadd.f32 0.0, %v8630
  %v8632 = vpop.f32.mrb[0].mxu0
  %8633 = vmatprep.mubr.f32.mxu0 0.0
  %8634 = vmatmul.mubr.f32.gmra.mrb[0].mxu0 %v8226
  %v8635 = vpop.f32.mrb[0].mxu0
  %v8636 = vadd.f32 0.0, %v8635
  %v8637 = vpop.f32.mrb[0].mxu0
  %8638 = vmatprep.mubr.f32.mxu0 0.0
  %8639 = vmatmul.mubr.f32.gmra.mrb[0].mxu0 %v8229
  %v8640 = vpop.f32.mrb[0].mxu0
  %v8641 = vadd.f32 0.0, %v8640
  %v8642 = vpop.f32.mrb[0].mxu0
  %8643 = vmatprep.mubr.f32.mxu0 0.0
  %8644 = vmatmul.mubr.f32.gmra.mrb[0].mxu0 %v8232
  %v8645 = vpop.f32.mrb[0].mxu0
  %v8646 = vadd.f32 0.0, %v8645
  %v8647 = vpop.f32.mrb[0].mxu0
  %8648 = vmatprep.mubr.f32.mxu0 0.0
  %8649 = vmatmul.mubr.f32.gmra.mrb[0].mxu0 %v4454
  %v8650 = vpop.f32.mrb[0].mxu0
  %v8651 = vadd.f32 0.0, %v8650
  %v8652 = vpop.f32.mrb[0].mxu0
  %8653 = vmatprep.mubr.f32.mxu0 0.0
  %8654 = vmatmul.mubr.f32.gmra.mrb[0].mxu0 %v4457
  %v8655 = vpop.f32.mrb[0].mxu0
  %v8656 = vadd.f32 0.0, %v8655
  %v8657 = vpop.f32.mrb[0].mxu0
  %8658 = vmatprep.mubr.f32.mxu0 0.0
  %8659 = vmatmul.mubr.f32.gmra.mrb[0].mxu0 %v4460
  %v8660 = vpop.f32.mrb[0].mxu0
  %v8661 = vadd.f32 0.0, %v8660
  %v8662 = vpop.f32.mrb[0].mxu0
  %8663 = vmatprep.mubr.f32.mxu0 0.0
  %8664 = vmatmul.mubr.f32.gmra.mrb[0].mxu0 %v4463
  %v8665 = vpop.f32.mrb[0].mxu0
  %v8666 = vadd.f32 0.0, %v8665
  %v8667 = vpop.f32.mrb[0].mxu0
  %8668 = vdwg.mxu0
  %s8669 = scalar_lea.vmem %s43, 32
  %v8670 = vld [vmem:[%s8669] sm:$0xf]
  %v8671 = vld [vmem:[%s8669 + $0x4] sm:$0xf]
  %v8672 = vunpack.c.l.bf16 %v8670
  %v8673 = vunpack.c.l.bf16 %v8671
  %8674 = vmatprep.subr.mxu0 0.0
  %8675 = vmatpush1.msra.mxu0 %v8672
  %8676 = vmatprep.subr.mxu0 0.0
  %8677 = vmatpush1.msra.mxu0 %v8673
  %8678 = vmatprep.subr.mxu0 0.0
  %8679 = vmatpush1.msra.mxu0 0.0
  %8680 = vmatprep.subr.mxu0 0.0
  %8681 = vmatpush1.msra.mxu0 0.0
  %8682 = vmatprep.subr.mxu0 0.0
  %8683 = vmatpush1.msra.mxu0 0.0
  %8684 = vmatprep.subr.mxu0 0.0
  %8685 = vmatpush1.msra.mxu0 0.0
  %8686 = vmatprep.subr.mxu0 0.0
  %8687 = vmatpush1.msra.mxu0 0.0
  %8688 = vmatprep.subr.mxu0 0.0
  %8689 = vmatpush1.msra.mxu0 0.0
  %8690 = vmatprep.subr.mxu0 0.0
  %8691 = vmatpush1.msra.mxu0 0.0
  %8692 = vmatprep.subr.mxu0 0.0
  %8693 = vmatpush1.msra.mxu0 0.0
  %8694 = vmatprep.subr.mxu0 0.0
  %8695 = vmatpush1.msra.mxu0 0.0
  %8696 = vmatprep.subr.mxu0 0.0
  %8697 = vmatpush1.msra.mxu0 0.0
  %8698 = vmatprep.subr.mxu0 0.0
  %8699 = vmatpush1.msra.mxu0 0.0
  %8700 = vmatprep.subr.mxu0 0.0
  %8701 = vmatpush1.msra.mxu0 0.0
  %8702 = vmatprep.subr.mxu0 0.0
  %8703 = vmatpush1.msra.mxu0 0.0
  %8704 = vmatprep.subr.mxu0 0.0
  %8705 = vmatpush1.msra.mxu0 0.0
  %8706 = vmatprep.subr.mxu0 0.0
  %8707 = vmatpush1.msra.mxu0 0.0
  %8708 = vmatprep.subr.mxu0 0.0
  %8709 = vmatpush1.msra.mxu0 0.0
  %8710 = vmatprep.subr.mxu0 0.0
  %8711 = vmatpush1.msra.mxu0 0.0
  %8712 = vmatprep.subr.mxu0 0.0
  %8713 = vmatpush1.msra.mxu0 0.0
  %8714 = vmatprep.subr.mxu0 0.0
  %8715 = vmatpush1.msra.mxu0 0.0
  %8716 = vmatprep.subr.mxu0 0.0
  %8717 = vmatpush1.msra.mxu0 0.0
  %8718 = vmatprep.subr.mxu0 0.0
  %8719 = vmatpush1.msra.mxu0 0.0
  %8720 = vmatprep.subr.mxu0 0.0
  %8721 = vmatpush1.msra.mxu0 0.0
  %8722 = vmatprep.subr.mxu0 0.0
  %8723 = vmatpush1.msra.mxu0 0.0
  %8724 = vmatprep.subr.mxu0 0.0
  %8725 = vmatpush1.msra.mxu0 0.0
  %8726 = vmatprep.subr.mxu0 0.0
  %8727 = vmatpush1.msra.mxu0 0.0
  %8728 = vmatprep.subr.mxu0 0.0
  %8729 = vmatpush1.msra.mxu0 0.0
  %8730 = vmatprep.subr.mxu0 0.0
  %8731 = vmatpush1.msra.mxu0 0.0
  %8732 = vmatprep.subr.mxu0 0.0
  %8733 = vmatpush1.msra.mxu0 0.0
  %8734 = vmatprep.subr.mxu0 0.0
  %8735 = vmatpush1.msra.mxu0 0.0
  %8736 = vmatprep.subr.mxu0 0.0
  %8737 = vmatpush1.msra.mxu0 0.0
  %8738 = vmatprep.mubr.f32.mxu0 0.0
  %8739 = vmatmul.mubr.f32.gmra.mrb[0].mxu0 %v8223
  %v8740 = vpop.f32.mrb[0].mxu0
  %v8741 = vadd.f32 0.0, %v8740
  %v8742 = vpop.f32.mrb[0].mxu0
  %8743 = vmatprep.mubr.f32.mxu0 0.0
  %8744 = vmatmul.mubr.f32.gmra.mrb[0].mxu0 %v8226
  %v8745 = vpop.f32.mrb[0].mxu0
  %v8746 = vadd.f32 0.0, %v8745
  %v8747 = vpop.f32.mrb[0].mxu0
  %8748 = vmatprep.mubr.f32.mxu0 0.0
  %8749 = vmatmul.mubr.f32.gmra.mrb[0].mxu0 %v8229
  %v8750 = vpop.f32.mrb[0].mxu0
  %v8751 = vadd.f32 0.0, %v8750
  %v8752 = vpop.f32.mrb[0].mxu0
  %8753 = vmatprep.mubr.f32.mxu0 0.0
  %8754 = vmatmul.mubr.f32.gmra.mrb[0].mxu0 %v8232
  %v8755 = vpop.f32.mrb[0].mxu0
  %v8756 = vadd.f32 0.0, %v8755
  %v8757 = vpop.f32.mrb[0].mxu0
  %8758 = vmatprep.mubr.f32.mxu0 0.0
  %8759 = vmatmul.mubr.f32.gmra.mrb[0].mxu0 %v4454
  %v8760 = vpop.f32.mrb[0].mxu0
  %v8761 = vadd.f32 0.0, %v8760
  %v8762 = vpop.f32.mrb[0].mxu0
  %8763 = vmatprep.mubr.f32.mxu0 0.0
  %8764 = vmatmul.mubr.f32.gmra.mrb[0].mxu0 %v4457
  %v8765 = vpop.f32.mrb[0].mxu0
  %v8766 = vadd.f32 0.0, %v8765
  %v8767 = vpop.f32.mrb[0].mxu0
  %8768 = vmatprep.mubr.f32.mxu0 0.0
  %8769 = vmatmul.mubr.f32.gmra.mrb[0].mxu0 %v4460
  %v8770 = vpop.f32.mrb[0].mxu0
  %v8771 = vadd.f32 0.0, %v8770
  %v8772 = vpop.f32.mrb[0].mxu0
  %8773 = vmatprep.mubr.f32.mxu0 0.0
  %8774 = vmatmul.mubr.f32.gmra.mrb[0].mxu0 %v4463
  %v8775 = vpop.f32.mrb[0].mxu0
  %v8776 = vadd.f32 0.0, %v8775
  %v8777 = vpop.f32.mrb[0].mxu0
  %8778 = vdwg.mxu0
  %s8779 = scalar_lea.vmem %s43, 40
  %v8780 = vld [vmem:[%s8779] sm:$0xf]
  %v8781 = vld [vmem:[%s8779 + $0x4] sm:$0xf]
  %v8782 = vunpack.c.l.bf16 %v8780
  %v8783 = vunpack.c.l.bf16 %v8781
  %8784 = vmatprep.subr.mxu0 0.0
  %8785 = vmatpush1.msra.mxu0 %v8782
  %8786 = vmatprep.subr.mxu0 0.0
  %8787 = vmatpush1.msra.mxu0 %v8783
  %8788 = vmatprep.subr.mxu0 0.0
  %8789 = vmatpush1.msra.mxu0 0.0
  %8790 = vmatprep.subr.mxu0 0.0
  %8791 = vmatpush1.msra.mxu0 0.0
  %8792 = vmatprep.subr.mxu0 0.0
  %8793 = vmatpush1.msra.mxu0 0.0
  %8794 = vmatprep.subr.mxu0 0.0
  %8795 = vmatpush1.msra.mxu0 0.0
  %8796 = vmatprep.subr.mxu0 0.0
  %8797 = vmatpush1.msra.mxu0 0.0
  %8798 = vmatprep.subr.mxu0 0.0
  %8799 = vmatpush1.msra.mxu0 0.0
  %8800 = vmatprep.subr.mxu0 0.0
  %8801 = vmatpush1.msra.mxu0 0.0
  %8802 = vmatprep.subr.mxu0 0.0
  %8803 = vmatpush1.msra.mxu0 0.0
  %8804 = vmatprep.subr.mxu0 0.0
  %8805 = vmatpush1.msra.mxu0 0.0
  %8806 = vmatprep.subr.mxu0 0.0
  %8807 = vmatpush1.msra.mxu0 0.0
  %8808 = vmatprep.subr.mxu0 0.0
  %8809 = vmatpush1.msra.mxu0 0.0
  %8810 = vmatprep.subr.mxu0 0.0
  %8811 = vmatpush1.msra.mxu0 0.0
  %8812 = vmatprep.subr.mxu0 0.0
  %8813 = vmatpush1.msra.mxu0 0.0
  %8814 = vmatprep.subr.mxu0 0.0
  %8815 = vmatpush1.msra.mxu0 0.0
  %8816 = vmatprep.subr.mxu0 0.0
  %8817 = vmatpush1.msra.mxu0 0.0
  %8818 = vmatprep.subr.mxu0 0.0
  %8819 = vmatpush1.msra.mxu0 0.0
  %8820 = vmatprep.subr.mxu0 0.0
  %8821 = vmatpush1.msra.mxu0 0.0
  %8822 = vmatprep.subr.mxu0 0.0
  %8823 = vmatpush1.msra.mxu0 0.0
  %8824 = vmatprep.subr.mxu0 0.0
  %8825 = vmatpush1.msra.mxu0 0.0
  %8826 = vmatprep.subr.mxu0 0.0
  %8827 = vmatpush1.msra.mxu0 0.0
  %8828 = vmatprep.subr.mxu0 0.0
  %8829 = vmatpush1.msra.mxu0 0.0
  %8830 = vmatprep.subr.mxu0 0.0
  %8831 = vmatpush1.msra.mxu0 0.0
  %8832 = vmatprep.subr.mxu0 0.0
  %8833 = vmatpush1.msra.mxu0 0.0
  %8834 = vmatprep.subr.mxu0 0.0
  %8835 = vmatpush1.msra.mxu0 0.0
  %8836 = vmatprep.subr.mxu0 0.0
  %8837 = vmatpush1.msra.mxu0 0.0
  %8838 = vmatprep.subr.mxu0 0.0
  %8839 = vmatpush1.msra.mxu0 0.0
  %8840 = vmatprep.subr.mxu0 0.0
  %8841 = vmatpush1.msra.mxu0 0.0
  %8842 = vmatprep.subr.mxu0 0.0
  %8843 = vmatpush1.msra.mxu0 0.0
  %8844 = vmatprep.subr.mxu0 0.0
  %8845 = vmatpush1.msra.mxu0 0.0
  %8846 = vmatprep.subr.mxu0 0.0
  %8847 = vmatpush1.msra.mxu0 0.0
  %8848 = vmatprep.mubr.f32.mxu0 0.0
  %8849 = vmatmul.mubr.f32.gmra.mrb[0].mxu0 %v8223
  %v8850 = vpop.f32.mrb[0].mxu0
  %v8851 = vadd.f32 0.0, %v8850
  %v8852 = vpop.f32.mrb[0].mxu0
  %8853 = vmatprep.mubr.f32.mxu0 0.0
  %8854 = vmatmul.mubr.f32.gmra.mrb[0].mxu0 %v8226
  %v8855 = vpop.f32.mrb[0].mxu0
  %v8856 = vadd.f32 0.0, %v8855
  %v8857 = vpop.f32.mrb[0].mxu0
  %8858 = vmatprep.mubr.f32.mxu0 0.0
  %8859 = vmatmul.mubr.f32.gmra.mrb[0].mxu0 %v8229
  %v8860 = vpop.f32.mrb[0].mxu0
  %v8861 = vadd.f32 0.0, %v8860
  %v8862 = vpop.f32.mrb[0].mxu0
  %8863 = vmatprep.mubr.f32.mxu0 0.0
  %8864 = vmatmul.mubr.f32.gmra.mrb[0].mxu0 %v8232
  %v8865 = vpop.f32.mrb[0].mxu0
  %v8866 = vadd.f32 0.0, %v8865
  %v8867 = vpop.f32.mrb[0].mxu0
  %8868 = vmatprep.mubr.f32.mxu0 0.0
  %8869 = vmatmul.mubr.f32.gmra.mrb[0].mxu0 %v4454
  %v8870 = vpop.f32.mrb[0].mxu0
  %v8871 = vadd.f32 0.0, %v8870
  %v8872 = vpop.f32.mrb[0].mxu0
  %8873 = vmatprep.mubr.f32.mxu0 0.0
  %8874 = vmatmul.mubr.f32.gmra.mrb[0].mxu0 %v4457
  %v8875 = vpop.f32.mrb[0].mxu0
  %v8876 = vadd.f32 0.0, %v8875
  %v8877 = vpop.f32.mrb[0].mxu0
  %8878 = vmatprep.mubr.f32.mxu0 0.0
  %8879 = vmatmul.mubr.f32.gmra.mrb[0].mxu0 %v4460
  %v8880 = vpop.f32.mrb[0].mxu0
  %v8881 = vadd.f32 0.0, %v8880
  %v8882 = vpop.f32.mrb[0].mxu0
  %8883 = vmatprep.mubr.f32.mxu0 0.0
  %8884 = vmatmul.mubr.f32.gmra.mrb[0].mxu0 %v4463
  %v8885 = vpop.f32.mrb[0].mxu0
  %v8886 = vadd.f32 0.0, %v8885
  %v8887 = vpop.f32.mrb[0].mxu0
  %8888 = vdwg.mxu0
  %s8889 = scalar_lea.vmem %s43, 48
  %v8890 = vld [vmem:[%s8889] sm:$0xf]
  %v8891 = vld [vmem:[%s8889 + $0x4] sm:$0xf]
  %v8892 = vunpack.c.l.bf16 %v8890
  %v8893 = vunpack.c.l.bf16 %v8891
  %8894 = vmatprep.subr.mxu0 0.0
  %8895 = vmatpush1.msra.mxu0 %v8892
  %8896 = vmatprep.subr.mxu0 0.0
  %8897 = vmatpush1.msra.mxu0 %v8893
  %8898 = vmatprep.subr.mxu0 0.0
  %8899 = vmatpush1.msra.mxu0 0.0
  %8900 = vmatprep.subr.mxu0 0.0
  %8901 = vmatpush1.msra.mxu0 0.0
  %8902 = vmatprep.subr.mxu0 0.0
  %8903 = vmatpush1.msra.mxu0 0.0
  %8904 = vmatprep.subr.mxu0 0.0
  %8905 = vmatpush1.msra.mxu0 0.0
  %8906 = vmatprep.subr.mxu0 0.0
  %8907 = vmatpush1.msra.mxu0 0.0
  %8908 = vmatprep.subr.mxu0 0.0
  %8909 = vmatpush1.msra.mxu0 0.0
  %8910 = vmatprep.subr.mxu0 0.0
  %8911 = vmatpush1.msra.mxu0 0.0
  %8912 = vmatprep.subr.mxu0 0.0
  %8913 = vmatpush1.msra.mxu0 0.0
  %8914 = vmatprep.subr.mxu0 0.0
  %8915 = vmatpush1.msra.mxu0 0.0
  %8916 = vmatprep.subr.mxu0 0.0
  %8917 = vmatpush1.msra.mxu0 0.0
  %8918 = vmatprep.subr.mxu0 0.0
  %8919 = vmatpush1.msra.mxu0 0.0
  %8920 = vmatprep.subr.mxu0 0.0
  %8921 = vmatpush1.msra.mxu0 0.0
  %8922 = vmatprep.subr.mxu0 0.0
  %8923 = vmatpush1.msra.mxu0 0.0
  %8924 = vmatprep.subr.mxu0 0.0
  %8925 = vmatpush1.msra.mxu0 0.0
  %8926 = vmatprep.subr.mxu0 0.0
  %8927 = vmatpush1.msra.mxu0 0.0
  %8928 = vmatprep.subr.mxu0 0.0
  %8929 = vmatpush1.msra.mxu0 0.0
  %8930 = vmatprep.subr.mxu0 0.0
  %8931 = vmatpush1.msra.mxu0 0.0
  %8932 = vmatprep.subr.mxu0 0.0
  %8933 = vmatpush1.msra.mxu0 0.0
  %8934 = vmatprep.subr.mxu0 0.0
  %8935 = vmatpush1.msra.mxu0 0.0
  %8936 = vmatprep.subr.mxu0 0.0
  %8937 = vmatpush1.msra.mxu0 0.0
  %8938 = vmatprep.subr.mxu0 0.0
  %8939 = vmatpush1.msra.mxu0 0.0
  %8940 = vmatprep.subr.mxu0 0.0
  %8941 = vmatpush1.msra.mxu0 0.0
  %8942 = vmatprep.subr.mxu0 0.0
  %8943 = vmatpush1.msra.mxu0 0.0
  %8944 = vmatprep.subr.mxu0 0.0
  %8945 = vmatpush1.msra.mxu0 0.0
  %8946 = vmatprep.subr.mxu0 0.0
  %8947 = vmatpush1.msra.mxu0 0.0
  %8948 = vmatprep.subr.mxu0 0.0
  %8949 = vmatpush1.msra.mxu0 0.0
  %8950 = vmatprep.subr.mxu0 0.0
  %8951 = vmatpush1.msra.mxu0 0.0
  %8952 = vmatprep.subr.mxu0 0.0
  %8953 = vmatpush1.msra.mxu0 0.0
  %8954 = vmatprep.subr.mxu0 0.0
  %8955 = vmatpush1.msra.mxu0 0.0
  %8956 = vmatprep.subr.mxu0 0.0
  %8957 = vmatpush1.msra.mxu0 0.0
  %8958 = vmatprep.mubr.f32.mxu0 0.0
  %8959 = vmatmul.mubr.f32.gmra.mrb[0].mxu0 %v8223
  %v8960 = vpop.f32.mrb[0].mxu0
  %v8961 = vadd.f32 0.0, %v8960
  %v8962 = vpop.f32.mrb[0].mxu0
  %8963 = vmatprep.mubr.f32.mxu0 0.0
  %8964 = vmatmul.mubr.f32.gmra.mrb[0].mxu0 %v8226
  %v8965 = vpop.f32.mrb[0].mxu0
  %v8966 = vadd.f32 0.0, %v8965
  %v8967 = vpop.f32.mrb[0].mxu0
  %8968 = vmatprep.mubr.f32.mxu0 0.0
  %8969 = vmatmul.mubr.f32.gmra.mrb[0].mxu0 %v8229
  %v8970 = vpop.f32.mrb[0].mxu0
  %v8971 = vadd.f32 0.0, %v8970
  %v8972 = vpop.f32.mrb[0].mxu0
  %8973 = vmatprep.mubr.f32.mxu0 0.0
  %8974 = vmatmul.mubr.f32.gmra.mrb[0].mxu0 %v8232
  %v8975 = vpop.f32.mrb[0].mxu0
  %v8976 = vadd.f32 0.0, %v8975
  %v8977 = vpop.f32.mrb[0].mxu0
  %8978 = vmatprep.mubr.f32.mxu0 0.0
  %8979 = vmatmul.mubr.f32.gmra.mrb[0].mxu0 %v4454
  %v8980 = vpop.f32.mrb[0].mxu0
  %v8981 = vadd.f32 0.0, %v8980
  %v8982 = vpop.f32.mrb[0].mxu0
  %8983 = vmatprep.mubr.f32.mxu0 0.0
  %8984 = vmatmul.mubr.f32.gmra.mrb[0].mxu0 %v4457
  %v8985 = vpop.f32.mrb[0].mxu0
  %v8986 = vadd.f32 0.0, %v8985
  %v8987 = vpop.f32.mrb[0].mxu0
  %8988 = vmatprep.mubr.f32.mxu0 0.0
  %8989 = vmatmul.mubr.f32.gmra.mrb[0].mxu0 %v4460
  %v8990 = vpop.f32.mrb[0].mxu0
  %v8991 = vadd.f32 0.0, %v8990
  %v8992 = vpop.f32.mrb[0].mxu0
  %8993 = vmatprep.mubr.f32.mxu0 0.0
  %8994 = vmatmul.mubr.f32.gmra.mrb[0].mxu0 %v4463
  %v8995 = vpop.f32.mrb[0].mxu0
  %v8996 = vadd.f32 0.0, %v8995
  %v8997 = vpop.f32.mrb[0].mxu0
  %8998 = vdwg.mxu0
  %s8999 = scalar_lea.vmem %s43, 56
  %v9000 = vld [vmem:[%s8999] sm:$0xf]
  %v9001 = vld [vmem:[%s8999 + $0x4] sm:$0xf]
  %v9002 = vunpack.c.l.bf16 %v9000
  %v9003 = vunpack.c.l.bf16 %v9001
  %9004 = vmatprep.subr.mxu0 0.0
  %9005 = vmatpush1.msra.mxu0 %v9002
  %9006 = vmatprep.subr.mxu0 0.0
  %9007 = vmatpush1.msra.mxu0 %v9003
  %9008 = vmatprep.subr.mxu0 0.0
  %9009 = vmatpush1.msra.mxu0 0.0
  %9010 = vmatprep.subr.mxu0 0.0
  %9011 = vmatpush1.msra.mxu0 0.0
  %9012 = vmatprep.subr.mxu0 0.0
  %9013 = vmatpush1.msra.mxu0 0.0
  %9014 = vmatprep.subr.mxu0 0.0
  %9015 = vmatpush1.msra.mxu0 0.0
  %9016 = vmatprep.subr.mxu0 0.0
  %9017 = vmatpush1.msra.mxu0 0.0
  %9018 = vmatprep.subr.mxu0 0.0
  %9019 = vmatpush1.msra.mxu0 0.0
  %9020 = vmatprep.subr.mxu0 0.0
  %9021 = vmatpush1.msra.mxu0 0.0
  %9022 = vmatprep.subr.mxu0 0.0
  %9023 = vmatpush1.msra.mxu0 0.0
  %9024 = vmatprep.subr.mxu0 0.0
  %9025 = vmatpush1.msra.mxu0 0.0
  %9026 = vmatprep.subr.mxu0 0.0
  %9027 = vmatpush1.msra.mxu0 0.0
  %9028 = vmatprep.subr.mxu0 0.0
  %9029 = vmatpush1.msra.mxu0 0.0
  %9030 = vmatprep.subr.mxu0 0.0
  %9031 = vmatpush1.msra.mxu0 0.0
  %9032 = vmatprep.subr.mxu0 0.0
  %9033 = vmatpush1.msra.mxu0 0.0
  %9034 = vmatprep.subr.mxu0 0.0
  %9035 = vmatpush1.msra.mxu0 0.0
  %9036 = vmatprep.subr.mxu0 0.0
  %9037 = vmatpush1.msra.mxu0 0.0
  %9038 = vmatprep.subr.mxu0 0.0
  %9039 = vmatpush1.msra.mxu0 0.0
  %9040 = vmatprep.subr.mxu0 0.0
  %9041 = vmatpush1.msra.mxu0 0.0
  %9042 = vmatprep.subr.mxu0 0.0
  %9043 = vmatpush1.msra.mxu0 0.0
  %9044 = vmatprep.subr.mxu0 0.0
  %9045 = vmatpush1.msra.mxu0 0.0
  %9046 = vmatprep.subr.mxu0 0.0
  %9047 = vmatpush1.msra.mxu0 0.0
  %9048 = vmatprep.subr.mxu0 0.0
  %9049 = vmatpush1.msra.mxu0 0.0
  %9050 = vmatprep.subr.mxu0 0.0
  %9051 = vmatpush1.msra.mxu0 0.0
  %9052 = vmatprep.subr.mxu0 0.0
  %9053 = vmatpush1.msra.mxu0 0.0
  %9054 = vmatprep.subr.mxu0 0.0
  %9055 = vmatpush1.msra.mxu0 0.0
  %9056 = vmatprep.subr.mxu0 0.0
  %9057 = vmatpush1.msra.mxu0 0.0
  %9058 = vmatprep.subr.mxu0 0.0
  %9059 = vmatpush1.msra.mxu0 0.0
  %9060 = vmatprep.subr.mxu0 0.0
  %9061 = vmatpush1.msra.mxu0 0.0
  %9062 = vmatprep.subr.mxu0 0.0
  %9063 = vmatpush1.msra.mxu0 0.0
  %9064 = vmatprep.subr.mxu0 0.0
  %9065 = vmatpush1.msra.mxu0 0.0
  %9066 = vmatprep.subr.mxu0 0.0
  %9067 = vmatpush1.msra.mxu0 0.0
  %9068 = vmatprep.mubr.f32.mxu0 0.0
  %9069 = vmatmul.mubr.f32.gmra.mrb[0].mxu0 %v8223
  %v9070 = vpop.f32.mrb[0].mxu0
  %v9071 = vadd.f32 0.0, %v9070
  %v9072 = vpop.f32.mrb[0].mxu0
  %9073 = vmatprep.mubr.f32.mxu0 0.0
  %9074 = vmatmul.mubr.f32.gmra.mrb[0].mxu0 %v8226
  %v9075 = vpop.f32.mrb[0].mxu0
  %v9076 = vadd.f32 0.0, %v9075
  %v9077 = vpop.f32.mrb[0].mxu0
  %9078 = vmatprep.mubr.f32.mxu0 0.0
  %9079 = vmatmul.mubr.f32.gmra.mrb[0].mxu0 %v8229
  %v9080 = vpop.f32.mrb[0].mxu0
  %v9081 = vadd.f32 0.0, %v9080
  %v9082 = vpop.f32.mrb[0].mxu0
  %9083 = vmatprep.mubr.f32.mxu0 0.0
  %9084 = vmatmul.mubr.f32.gmra.mrb[0].mxu0 %v8232
  %v9085 = vpop.f32.mrb[0].mxu0
  %v9086 = vadd.f32 0.0, %v9085
  %v9087 = vpop.f32.mrb[0].mxu0
  %9088 = vmatprep.mubr.f32.mxu0 0.0
  %9089 = vmatmul.mubr.f32.gmra.mrb[0].mxu0 %v4454
  %v9090 = vpop.f32.mrb[0].mxu0
  %v9091 = vadd.f32 0.0, %v9090
  %v9092 = vpop.f32.mrb[0].mxu0
  %9093 = vmatprep.mubr.f32.mxu0 0.0
  %9094 = vmatmul.mubr.f32.gmra.mrb[0].mxu0 %v4457
  %v9095 = vpop.f32.mrb[0].mxu0
  %v9096 = vadd.f32 0.0, %v9095
  %v9097 = vpop.f32.mrb[0].mxu0
  %9098 = vmatprep.mubr.f32.mxu0 0.0
  %9099 = vmatmul.mubr.f32.gmra.mrb[0].mxu0 %v4460
  %v9100 = vpop.f32.mrb[0].mxu0
  %v9101 = vadd.f32 0.0, %v9100
  %v9102 = vpop.f32.mrb[0].mxu0
  %9103 = vmatprep.mubr.f32.mxu0 0.0
  %9104 = vmatmul.mubr.f32.gmra.mrb[0].mxu0 %v4463
  %v9105 = vpop.f32.mrb[0].mxu0
  %v9106 = vadd.f32 0.0, %v9105
  %v9107 = vpop.f32.mrb[0].mxu0
  %9108 = vdwg.mxu0
  %s9109 = scalar_lea.vmem %s43, 64
  %v9110 = vld [vmem:[%s9109] sm:$0xf]
  %v9111 = vld [vmem:[%s9109 + $0x4] sm:$0xf]
  %v9112 = vunpack.c.l.bf16 %v9110
  %v9113 = vunpack.c.l.bf16 %v9111
  %9114 = vmatprep.subr.mxu0 0.0
  %9115 = vmatpush1.msra.mxu0 %v9112
  %9116 = vmatprep.subr.mxu0 0.0
  %9117 = vmatpush1.msra.mxu0 %v9113
  %9118 = vmatprep.subr.mxu0 0.0
  %9119 = vmatpush1.msra.mxu0 0.0
  %9120 = vmatprep.subr.mxu0 0.0
  %9121 = vmatpush1.msra.mxu0 0.0
  %9122 = vmatprep.subr.mxu0 0.0
  %9123 = vmatpush1.msra.mxu0 0.0
  %9124 = vmatprep.subr.mxu0 0.0
  %9125 = vmatpush1.msra.mxu0 0.0
  %9126 = vmatprep.subr.mxu0 0.0
  %9127 = vmatpush1.msra.mxu0 0.0
  %9128 = vmatprep.subr.mxu0 0.0
  %9129 = vmatpush1.msra.mxu0 0.0
  %9130 = vmatprep.subr.mxu0 0.0
  %9131 = vmatpush1.msra.mxu0 0.0
  %9132 = vmatprep.subr.mxu0 0.0
  %9133 = vmatpush1.msra.mxu0 0.0
  %9134 = vmatprep.subr.mxu0 0.0
  %9135 = vmatpush1.msra.mxu0 0.0
  %9136 = vmatprep.subr.mxu0 0.0
  %9137 = vmatpush1.msra.mxu0 0.0
  %9138 = vmatprep.subr.mxu0 0.0
  %9139 = vmatpush1.msra.mxu0 0.0
  %9140 = vmatprep.subr.mxu0 0.0
  %9141 = vmatpush1.msra.mxu0 0.0
  %9142 = vmatprep.subr.mxu0 0.0
  %9143 = vmatpush1.msra.mxu0 0.0
  %9144 = vmatprep.subr.mxu0 0.0
  %9145 = vmatpush1.msra.mxu0 0.0
  %9146 = vmatprep.subr.mxu0 0.0
  %9147 = vmatpush1.msra.mxu0 0.0
  %9148 = vmatprep.subr.mxu0 0.0
  %9149 = vmatpush1.msra.mxu0 0.0
  %9150 = vmatprep.subr.mxu0 0.0
  %9151 = vmatpush1.msra.mxu0 0.0
  %9152 = vmatprep.subr.mxu0 0.0
  %9153 = vmatpush1.msra.mxu0 0.0
  %9154 = vmatprep.subr.mxu0 0.0
  %9155 = vmatpush1.msra.mxu0 0.0
  %9156 = vmatprep.subr.mxu0 0.0
  %9157 = vmatpush1.msra.mxu0 0.0
  %9158 = vmatprep.subr.mxu0 0.0
  %9159 = vmatpush1.msra.mxu0 0.0
  %9160 = vmatprep.subr.mxu0 0.0
  %9161 = vmatpush1.msra.mxu0 0.0
  %9162 = vmatprep.subr.mxu0 0.0
  %9163 = vmatpush1.msra.mxu0 0.0
  %9164 = vmatprep.subr.mxu0 0.0
  %9165 = vmatpush1.msra.mxu0 0.0
  %9166 = vmatprep.subr.mxu0 0.0
  %9167 = vmatpush1.msra.mxu0 0.0
  %9168 = vmatprep.subr.mxu0 0.0
  %9169 = vmatpush1.msra.mxu0 0.0
  %9170 = vmatprep.subr.mxu0 0.0
  %9171 = vmatpush1.msra.mxu0 0.0
  %9172 = vmatprep.subr.mxu0 0.0
  %9173 = vmatpush1.msra.mxu0 0.0
  %9174 = vmatprep.subr.mxu0 0.0
  %9175 = vmatpush1.msra.mxu0 0.0
  %9176 = vmatprep.subr.mxu0 0.0
  %9177 = vmatpush1.msra.mxu0 0.0
  %9178 = vmatprep.mubr.f32.mxu0 0.0
  %9179 = vmatmul.mubr.f32.gmra.mrb[0].mxu0 %v8223
  %v9180 = vpop.f32.mrb[0].mxu0
  %v9181 = vadd.f32 0.0, %v9180
  %v9182 = vpop.f32.mrb[0].mxu0
  %9183 = vmatprep.mubr.f32.mxu0 0.0
  %9184 = vmatmul.mubr.f32.gmra.mrb[0].mxu0 %v8226
  %v9185 = vpop.f32.mrb[0].mxu0
  %v9186 = vadd.f32 0.0, %v9185
  %v9187 = vpop.f32.mrb[0].mxu0
  %9188 = vmatprep.mubr.f32.mxu0 0.0
  %9189 = vmatmul.mubr.f32.gmra.mrb[0].mxu0 %v8229
  %v9190 = vpop.f32.mrb[0].mxu0
  %v9191 = vadd.f32 0.0, %v9190
  %v9192 = vpop.f32.mrb[0].mxu0
  %9193 = vmatprep.mubr.f32.mxu0 0.0
  %9194 = vmatmul.mubr.f32.gmra.mrb[0].mxu0 %v8232
  %v9195 = vpop.f32.mrb[0].mxu0
  %v9196 = vadd.f32 0.0, %v9195
  %v9197 = vpop.f32.mrb[0].mxu0
  %9198 = vmatprep.mubr.f32.mxu0 0.0
  %9199 = vmatmul.mubr.f32.gmra.mrb[0].mxu0 %v4454
  %v9200 = vpop.f32.mrb[0].mxu0
  %v9201 = vadd.f32 0.0, %v9200
  %v9202 = vpop.f32.mrb[0].mxu0
  %9203 = vmatprep.mubr.f32.mxu0 0.0
  %9204 = vmatmul.mubr.f32.gmra.mrb[0].mxu0 %v4457
  %v9205 = vpop.f32.mrb[0].mxu0
  %v9206 = vadd.f32 0.0, %v9205
  %v9207 = vpop.f32.mrb[0].mxu0
  %9208 = vmatprep.mubr.f32.mxu0 0.0
  %9209 = vmatmul.mubr.f32.gmra.mrb[0].mxu0 %v4460
  %v9210 = vpop.f32.mrb[0].mxu0
  %v9211 = vadd.f32 0.0, %v9210
  %v9212 = vpop.f32.mrb[0].mxu0
  %9213 = vmatprep.mubr.f32.mxu0 0.0
  %9214 = vmatmul.mubr.f32.gmra.mrb[0].mxu0 %v4463
  %v9215 = vpop.f32.mrb[0].mxu0
  %v9216 = vadd.f32 0.0, %v9215
  %v9217 = vpop.f32.mrb[0].mxu0
  %9218 = vdwg.mxu0
  %v9219 = vld [vmem:[%s45] sm:$0xff]
  %v9220 = vld [vmem:[%s45 + $0x8] sm:$0xff]
  %v9221 = vld [vmem:[%s45 + $0x10] sm:$0xff]
  %v9222 = vld [vmem:[%s45 + $0x18] sm:$0xff]
  %v9223 = vld [vmem:[%s45 + $0x20] sm:$0xff]
  %v9224 = vld [vmem:[%s45 + $0x28] sm:$0xff]
  %v9225 = vld [vmem:[%s45 + $0x30] sm:$0xff]
  %v9226 = vld [vmem:[%s45 + $0x38] sm:$0xff]
  %v9227 = vld [vmem:[%s45 + $0x40] sm:$0xff]
  %v9228 = vld [vmem:[%s45 + $0x48] sm:$0xff]
  %v9230 = vsel %vm2428, %v9223, 0
  %v9233 = vsel %vm2428, %v9228, 0
  %9235 = vmatprep.subr.mxu0 0.0
  %9236 = vmatpush1.msra.mxu0 %v8301
  %9237 = vmatprep.subr.mxu0 0.0
  %9238 = vmatpush1.msra.mxu0 %v8306
  %9239 = vmatprep.subr.mxu0 0.0
  %9240 = vmatpush1.msra.mxu0 %v8311
  %9241 = vmatprep.subr.mxu0 0.0
  %9242 = vmatpush1.msra.mxu0 %v8316
  %9243 = vmatprep.subr.mxu0 0.0
  %9244 = vmatpush1.msra.mxu0 %v8321
  %9245 = vmatprep.subr.mxu0 0.0
  %9246 = vmatpush1.msra.mxu0 %v8326
  %9247 = vmatprep.subr.mxu0 0.0
  %9248 = vmatpush1.msra.mxu0 %v8331
  %9249 = vmatprep.subr.mxu0 0.0
  %9250 = vmatpush1.msra.mxu0 %v8336
  %9251 = vmatprep.subr.mxu0 0.0
  %9252 = vmatpush1.msra.mxu0 %v8411
  %9253 = vmatprep.subr.mxu0 0.0
  %9254 = vmatpush1.msra.mxu0 %v8416
  %9255 = vmatprep.subr.mxu0 0.0
  %9256 = vmatpush1.msra.mxu0 %v8421
  %9257 = vmatprep.subr.mxu0 0.0
  %9258 = vmatpush1.msra.mxu0 %v8426
  %9259 = vmatprep.subr.mxu0 0.0
  %9260 = vmatpush1.msra.mxu0 %v8431
  %9261 = vmatprep.subr.mxu0 0.0
  %9262 = vmatpush1.msra.mxu0 %v8436
  %9263 = vmatprep.subr.mxu0 0.0
  %9264 = vmatpush1.msra.mxu0 %v8441
  %9265 = vmatprep.subr.mxu0 0.0
  %9266 = vmatpush1.msra.mxu0 %v8446
  %9267 = vmatprep.subr.mxu0 0.0
  %9268 = vmatpush1.msra.mxu0 %v8521
  %9269 = vmatprep.subr.mxu0 0.0
  %9270 = vmatpush1.msra.mxu0 %v8526
  %9271 = vmatprep.subr.mxu0 0.0
  %9272 = vmatpush1.msra.mxu0 %v8531
  %9273 = vmatprep.subr.mxu0 0.0
  %9274 = vmatpush1.msra.mxu0 %v8536
  %9275 = vmatprep.subr.mxu0 0.0
  %9276 = vmatpush1.msra.mxu0 %v8541
  %9277 = vmatprep.subr.mxu0 0.0
  %9278 = vmatpush1.msra.mxu0 %v8546
  %9279 = vmatprep.subr.mxu0 0.0
  %9280 = vmatpush1.msra.mxu0 %v8551
  %9281 = vmatprep.subr.mxu0 0.0
  %9282 = vmatpush1.msra.mxu0 %v8556
  %9283 = vmatprep.subr.mxu0 0.0
  %9284 = vmatpush1.msra.mxu0 %v8631
  %9285 = vmatprep.subr.mxu0 0.0
  %9286 = vmatpush1.msra.mxu0 %v8636
  %9287 = vmatprep.subr.mxu0 0.0
  %9288 = vmatpush1.msra.mxu0 %v8641
  %9289 = vmatprep.subr.mxu0 0.0
  %9290 = vmatpush1.msra.mxu0 %v8646
  %9291 = vmatprep.subr.mxu0 0.0
  %9292 = vmatpush1.msra.mxu0 %v8651
  %9293 = vmatprep.subr.mxu0 0.0
  %9294 = vmatpush1.msra.mxu0 %v8656
  %9295 = vmatprep.subr.mxu0 0.0
  %9296 = vmatpush1.msra.mxu0 %v8661
  %9297 = vmatprep.subr.mxu0 0.0
  %9298 = vmatpush1.msra.mxu0 %v8666
  %9299 = vmatprep.mubr.f32.mxu0 %v9220
  %9300 = vmatmul.mubr.f32.gmra.mrb[0].mxu0 %v9219
  %v9301 = vpop.f32.mrb[0].mxu0
  %v9302 = vadd.f32 0.0, %v9301
  %v9303 = vpop.f32.mrb[0].mxu0
  %9304 = vmatprep.mubr.f32.mxu0 %v9225
  %9305 = vmatmul.mubr.f32.gmra.mrb[0].mxu0 %v9224
  %v9306 = vpop.f32.mrb[0].mxu0
  %v9307 = vadd.f32 0.0, %v9306
  %v9308 = vpop.f32.mrb[0].mxu0
  %9309 = vdwg.mxu0
  %9310 = vmatprep.subr.mxu0 0.0
  %9311 = vmatpush1.msra.mxu0 %v8741
  %9312 = vmatprep.subr.mxu0 0.0
  %9313 = vmatpush1.msra.mxu0 %v8746
  %9314 = vmatprep.subr.mxu0 0.0
  %9315 = vmatpush1.msra.mxu0 %v8751
  %9316 = vmatprep.subr.mxu0 0.0
  %9317 = vmatpush1.msra.mxu0 %v8756
  %9318 = vmatprep.subr.mxu0 0.0
  %9319 = vmatpush1.msra.mxu0 %v8761
  %9320 = vmatprep.subr.mxu0 0.0
  %9321 = vmatpush1.msra.mxu0 %v8766
  %9322 = vmatprep.subr.mxu0 0.0
  %9323 = vmatpush1.msra.mxu0 %v8771
  %9324 = vmatprep.subr.mxu0 0.0
  %9325 = vmatpush1.msra.mxu0 %v8776
  %9326 = vmatprep.subr.mxu0 0.0
  %9327 = vmatpush1.msra.mxu0 %v8851
  %9328 = vmatprep.subr.mxu0 0.0
  %9329 = vmatpush1.msra.mxu0 %v8856
  %9330 = vmatprep.subr.mxu0 0.0
  %9331 = vmatpush1.msra.mxu0 %v8861
  %9332 = vmatprep.subr.mxu0 0.0
  %9333 = vmatpush1.msra.mxu0 %v8866
  %9334 = vmatprep.subr.mxu0 0.0
  %9335 = vmatpush1.msra.mxu0 %v8871
  %9336 = vmatprep.subr.mxu0 0.0
  %9337 = vmatpush1.msra.mxu0 %v8876
  %9338 = vmatprep.subr.mxu0 0.0
  %9339 = vmatpush1.msra.mxu0 %v8881
  %9340 = vmatprep.subr.mxu0 0.0
  %9341 = vmatpush1.msra.mxu0 %v8886
  %9342 = vmatprep.subr.mxu0 0.0
  %9343 = vmatpush1.msra.mxu0 %v8961
  %9344 = vmatprep.subr.mxu0 0.0
  %9345 = vmatpush1.msra.mxu0 %v8966
  %9346 = vmatprep.subr.mxu0 0.0
  %9347 = vmatpush1.msra.mxu0 %v8971
  %9348 = vmatprep.subr.mxu0 0.0
  %9349 = vmatpush1.msra.mxu0 %v8976
  %9350 = vmatprep.subr.mxu0 0.0
  %9351 = vmatpush1.msra.mxu0 %v8981
  %9352 = vmatprep.subr.mxu0 0.0
  %9353 = vmatpush1.msra.mxu0 %v8986
  %9354 = vmatprep.subr.mxu0 0.0
  %9355 = vmatpush1.msra.mxu0 %v8991
  %9356 = vmatprep.subr.mxu0 0.0
  %9357 = vmatpush1.msra.mxu0 %v8996
  %9358 = vmatprep.subr.mxu0 0.0
  %9359 = vmatpush1.msra.mxu0 %v9071
  %9360 = vmatprep.subr.mxu0 0.0
  %9361 = vmatpush1.msra.mxu0 %v9076
  %9362 = vmatprep.subr.mxu0 0.0
  %9363 = vmatpush1.msra.mxu0 %v9081
  %9364 = vmatprep.subr.mxu0 0.0
  %9365 = vmatpush1.msra.mxu0 %v9086
  %9366 = vmatprep.subr.mxu0 0.0
  %9367 = vmatpush1.msra.mxu0 %v9091
  %9368 = vmatprep.subr.mxu0 0.0
  %9369 = vmatpush1.msra.mxu0 %v9096
  %9370 = vmatprep.subr.mxu0 0.0
  %9371 = vmatpush1.msra.mxu0 %v9101
  %9372 = vmatprep.subr.mxu0 0.0
  %9373 = vmatpush1.msra.mxu0 %v9106
  %9374 = vmatprep.mubr.f32.mxu0 %v9222
  %9375 = vmatmul.mubr.f32.gmra.mrb[0].mxu0 %v9221
  %v9376 = vpop.f32.mrb[0].mxu0
  %v9377 = vadd.f32 %v9302, %v9376
  %v9378 = vpop.f32.mrb[0].mxu0
  %9379 = vmatprep.mubr.f32.mxu0 %v9227
  %9380 = vmatmul.mubr.f32.gmra.mrb[0].mxu0 %v9226
  %v9381 = vpop.f32.mrb[0].mxu0
  %v9382 = vadd.f32 %v9307, %v9381
  %v9383 = vpop.f32.mrb[0].mxu0
  %9384 = vdwg.mxu0
  %9385 = vmatprep.subr.mxu0 0.0
  %9386 = vmatpush1.msra.mxu0 %v9181
  %9387 = vmatprep.subr.mxu0 0.0
  %9388 = vmatpush1.msra.mxu0 %v9186
  %9389 = vmatprep.subr.mxu0 0.0
  %9390 = vmatpush1.msra.mxu0 %v9191
  %9391 = vmatprep.subr.mxu0 0.0
  %9392 = vmatpush1.msra.mxu0 %v9196
  %9393 = vmatprep.subr.mxu0 0.0
  %9394 = vmatpush1.msra.mxu0 %v9201
  %9395 = vmatprep.subr.mxu0 0.0
  %9396 = vmatpush1.msra.mxu0 %v9206
  %9397 = vmatprep.subr.mxu0 0.0
  %9398 = vmatpush1.msra.mxu0 %v9211
  %9399 = vmatprep.subr.mxu0 0.0
  %9400 = vmatpush1.msra.mxu0 %v9216
  %9401 = vmatprep.subr.mxu0 0.0
  %9402 = vmatpush1.msra.mxu0 0.0
  %9403 = vmatprep.subr.mxu0 0.0
  %9404 = vmatpush1.msra.mxu0 0.0
  %9405 = vmatprep.subr.mxu0 0.0
  %9406 = vmatpush1.msra.mxu0 0.0
  %9407 = vmatprep.subr.mxu0 0.0
  %9408 = vmatpush1.msra.mxu0 0.0
  %9409 = vmatprep.subr.mxu0 0.0
  %9410 = vmatpush1.msra.mxu0 0.0
  %9411 = vmatprep.subr.mxu0 0.0
  %9412 = vmatpush1.msra.mxu0 0.0
  %9413 = vmatprep.subr.mxu0 0.0
  %9414 = vmatpush1.msra.mxu0 0.0
  %9415 = vmatprep.subr.mxu0 0.0
  %9416 = vmatpush1.msra.mxu0 0.0
  %9417 = vmatprep.subr.mxu0 0.0
  %9418 = vmatpush1.msra.mxu0 0.0
  %9419 = vmatprep.subr.mxu0 0.0
  %9420 = vmatpush1.msra.mxu0 0.0
  %9421 = vmatprep.subr.mxu0 0.0
  %9422 = vmatpush1.msra.mxu0 0.0
  %9423 = vmatprep.subr.mxu0 0.0
  %9424 = vmatpush1.msra.mxu0 0.0
  %9425 = vmatprep.subr.mxu0 0.0
  %9426 = vmatpush1.msra.mxu0 0.0
  %9427 = vmatprep.subr.mxu0 0.0
  %9428 = vmatpush1.msra.mxu0 0.0
  %9429 = vmatprep.subr.mxu0 0.0
  %9430 = vmatpush1.msra.mxu0 0.0
  %9431 = vmatprep.subr.mxu0 0.0
  %9432 = vmatpush1.msra.mxu0 0.0
  %9433 = vmatprep.subr.mxu0 0.0
  %9434 = vmatpush1.msra.mxu0 0.0
  %9435 = vmatprep.subr.mxu0 0.0
  %9436 = vmatpush1.msra.mxu0 0.0
  %9437 = vmatprep.subr.mxu0 0.0
  %9438 = vmatpush1.msra.mxu0 0.0
  %9439 = vmatprep.subr.mxu0 0.0
  %9440 = vmatpush1.msra.mxu0 0.0
  %9441 = vmatprep.subr.mxu0 0.0
  %9442 = vmatpush1.msra.mxu0 0.0
  %9443 = vmatprep.subr.mxu0 0.0
  %9444 = vmatpush1.msra.mxu0 0.0
  %9445 = vmatprep.subr.mxu0 0.0
  %9446 = vmatpush1.msra.mxu0 0.0
  %9447 = vmatprep.subr.mxu0 0.0
  %9448 = vmatpush1.msra.mxu0 0.0
  %9449 = vmatprep.mubr.f32.mxu0 0.0
  %9450 = vmatmul.mubr.f32.gmra.mrb[0].mxu0 %v9230
  %v9451 = vpop.f32.mrb[0].mxu0
  %v9452 = vadd.f32 %v9377, %v9451
  %v9453 = vpop.f32.mrb[0].mxu0
  %9454 = vmatprep.mubr.f32.mxu0 0.0
  %9455 = vmatmul.mubr.f32.gmra.mrb[0].mxu0 %v9233
  %v9456 = vpop.f32.mrb[0].mxu0
  %v9457 = vadd.f32 %v9382, %v9456
  %v9458 = vpop.f32.mrb[0].mxu0
  %9459 = vdwg.mxu0
  %v9460 = vsel %vm2428, %v9452, 0.0
  %9461 = vadd.xlane.f32.xlu0 %v9460
  %v9462 = vpop.xlane.xlu0 %9461
  %v9463 = vsel %vm2428, %v9457, 0.0
  %9464 = vadd.xlane.f32.xlu0 %v9463
  %v9465 = vpop.xlane.xlu0 %9464
  %v9466 = vmul.f32 %v9452, %v9452
  %v9467 = vmul.f32 %v9457, %v9457
  %v9468 = vsel %vm2428, %v9466, 0.0
  %9469 = vadd.xlane.f32.xlu0 %v9468
  %v9470 = vpop.xlane.xlu0 %9469
  %v9471 = vsel %vm2428, %v9467, 0.0
  %9472 = vadd.xlane.f32.xlu0 %v9471
  %v9473 = vpop.xlane.xlu0 %9472
  %v9474 = vsel %vm2443, %v9462, %v9470
  %v9475 = vsel %vm2443, %v9465, %v9473
  %v9476 = vld [vmem:[%s47] sm:$0xff]
  %v9477 = vld [vmem:[%s47 + $0x8] sm:$0xff]
  %v9479 = vsel %vm2448, %v9476, 0
  %v9482 = vsel %vm2448, %v9477, 0
  %9484 = vmatprep.subr.mxu0 0.0
  %9485 = vmatpush1.msra.mxu0 %v9474
  %9486 = vmatprep.subr.mxu0 0.0
  %9487 = vmatpush1.msra.mxu0 %v9475
  %9488 = vmatprep.subr.mxu0 0.0
  %9489 = vmatpush1.msra.mxu0 0.0
  %9490 = vmatprep.subr.mxu0 0.0
  %9491 = vmatpush1.msra.mxu0 0.0
  %9492 = vmatprep.subr.mxu0 0.0
  %9493 = vmatpush1.msra.mxu0 0.0
  %9494 = vmatprep.subr.mxu0 0.0
  %9495 = vmatpush1.msra.mxu0 0.0
  %9496 = vmatprep.subr.mxu0 0.0
  %9497 = vmatpush1.msra.mxu0 0.0
  %9498 = vmatprep.subr.mxu0 0.0
  %9499 = vmatpush1.msra.mxu0 0.0
  %9500 = vmatprep.subr.mxu0 0.0
  %9501 = vmatpush1.msra.mxu0 0.0
  %9502 = vmatprep.subr.mxu0 0.0
  %9503 = vmatpush1.msra.mxu0 0.0
  %9504 = vmatprep.subr.mxu0 0.0
  %9505 = vmatpush1.msra.mxu0 0.0
  %9506 = vmatprep.subr.mxu0 0.0
  %9507 = vmatpush1.msra.mxu0 0.0
  %9508 = vmatprep.subr.mxu0 0.0
  %9509 = vmatpush1.msra.mxu0 0.0
  %9510 = vmatprep.subr.mxu0 0.0
  %9511 = vmatpush1.msra.mxu0 0.0
  %9512 = vmatprep.subr.mxu0 0.0
  %9513 = vmatpush1.msra.mxu0 0.0
  %9514 = vmatprep.subr.mxu0 0.0
  %9515 = vmatpush1.msra.mxu0 0.0
  %9516 = vmatprep.subr.mxu0 0.0
  %9517 = vmatpush1.msra.mxu0 0.0
  %9518 = vmatprep.subr.mxu0 0.0
  %9519 = vmatpush1.msra.mxu0 0.0
  %9520 = vmatprep.subr.mxu0 0.0
  %9521 = vmatpush1.msra.mxu0 0.0
  %9522 = vmatprep.subr.mxu0 0.0
  %9523 = vmatpush1.msra.mxu0 0.0
  %9524 = vmatprep.subr.mxu0 0.0
  %9525 = vmatpush1.msra.mxu0 0.0
  %9526 = vmatprep.subr.mxu0 0.0
  %9527 = vmatpush1.msra.mxu0 0.0
  %9528 = vmatprep.subr.mxu0 0.0
  %9529 = vmatpush1.msra.mxu0 0.0
  %9530 = vmatprep.subr.mxu0 0.0
  %9531 = vmatpush1.msra.mxu0 0.0
  %9532 = vmatprep.subr.mxu0 0.0
  %9533 = vmatpush1.msra.mxu0 0.0
  %9534 = vmatprep.subr.mxu0 0.0
  %9535 = vmatpush1.msra.mxu0 0.0
  %9536 = vmatprep.subr.mxu0 0.0
  %9537 = vmatpush1.msra.mxu0 0.0
  %9538 = vmatprep.subr.mxu0 0.0
  %9539 = vmatpush1.msra.mxu0 0.0
  %9540 = vmatprep.subr.mxu0 0.0
  %9541 = vmatpush1.msra.mxu0 0.0
  %9542 = vmatprep.subr.mxu0 0.0
  %9543 = vmatpush1.msra.mxu0 0.0
  %9544 = vmatprep.subr.mxu0 0.0
  %9545 = vmatpush1.msra.mxu0 0.0
  %9546 = vmatprep.subr.mxu0 0.0
  %9547 = vmatpush1.msra.mxu0 0.0
  %9548 = vmatprep.mubr.f32.mxu0 0.0
  %9549 = vmatmul.mubr.f32.gmra.mrb[0].mxu0 %v9479
  %v9550 = vpop.f32.mrb[0].mxu0
  %v9551 = vadd.f32 0.0, %v9550
  %v9552 = vpop.f32.mrb[0].mxu0
  %9553 = vmatprep.mubr.f32.mxu0 0.0
  %9554 = vmatmul.mubr.f32.gmra.mrb[0].mxu0 %v9482
  %v9555 = vpop.f32.mrb[0].mxu0
  %v9556 = vadd.f32 0.0, %v9555
  %v9557 = vpop.f32.mrb[0].mxu0
  %9558 = vdwg.mxu0
  %v9559 = vmul.f32 %v9551, %v9551
  %v9560 = vmul.f32 %v9556, %v9556
  %9563 = vrot.lane.b32.xlu0 %v9559, 1
  %v9564 = vpop.permute.xlu0 %9563
  %9565 = vrot.lane.b32.xlu0 %v9560, 1
  %v9566 = vpop.permute.xlu0 %9565
  %v9569 = vsub.f32 %v9551, %v9564
  %v9570 = vsub.f32 %v9556, %v9566
  %v9571 = vmax.f32 %v9569, 0.0
  %v9572 = vmax.f32 %v9570, 0.0
  %9574 = vset.pattern.permute.xlu0 0
  %9575 = vperm.xlu0 %9574, %v9551
  %v9576 = vpop.permute.xlu0 %9575
  %9579 = vset.pattern.permute.xlu0 0
  %9580 = vperm.xlu0 %9579, %v9556
  %v9581 = vpop.permute.xlu0 %9580
  %v9583 = vsub.f32 %v9452, %v9576
  %v9584 = vsub.f32 %v9457, %v9581
  %v9585 = vadd.f32 %v9571, 1e-05
  %v9586 = vadd.f32 %v9572, 1e-05
  %v9587 = vrsqrt.pop %v9585
  %v9588 = vrsqrt.pop %v9586
  %9590 = vset.pattern.permute.xlu0 1
  %9591 = vperm.xlu0 %9590, %v9587
  %v9592 = vpop.permute.xlu0 %9591
  %9595 = vset.pattern.permute.xlu0 1
  %9596 = vperm.xlu0 %9595, %v9588
  %v9597 = vpop.permute.xlu0 %9596
  %v9599 = vmul.f32 %v9583, %v9592
  %v9600 = vmul.f32 %v9584, %v9597
  %v9601 = vld [vmem:[%s49] sm:$0xff]
  %v9602 = vld [vmem:[%s49 + $0x8] sm:$0xff]
  %9604 = vset.pattern.permute.xlu0 0
  %9605 = vperm.xlu0 %9604, %v9601
  %v9606 = vpop.permute.xlu0 %9605
  %9609 = vset.pattern.permute.xlu0 0
  %9610 = vperm.xlu0 %9609, %v9602
  %v9611 = vpop.permute.xlu0 %9610
  %v9613 = vmul.f32 %v9599, %v9606
  %v9614 = vmul.f32 %v9600, %v9611
  %v9615 = vld [vmem:[%s51] sm:$0xff]
  %v9616 = vld [vmem:[%s51 + $0x8] sm:$0xff]
  %9618 = vset.pattern.permute.xlu0 0
  %9619 = vperm.xlu0 %9618, %v9615
  %v9620 = vpop.permute.xlu0 %9619
  %9623 = vset.pattern.permute.xlu0 0
  %9624 = vperm.xlu0 %9623, %v9616
  %v9625 = vpop.permute.xlu0 %9624
  %v9627 = vadd.f32 %v9613, %v9620
  %v9628 = vadd.f32 %v9614, %v9625
  %v9629 = vmax.f32 %v9627, 0.0
  %v9630 = vmax.f32 %v9628, 0.0
  %v9631 = vld [vmem:[%s53] sm:$0xff]
  %v9632 = vld [vmem:[%s53 + $0x8] sm:$0xff]
  %v9633 = vld [vmem:[%s53 + $0x10] sm:$0xff]
  %v9634 = vld [vmem:[%s53 + $0x18] sm:$0xff]
  %v9635 = vld [vmem:[%s53 + $0x20] sm:$0xff]
  %v9636 = vld [vmem:[%s53 + $0x28] sm:$0xff]
  %v9637 = vld [vmem:[%s53 + $0x30] sm:$0xff]
  %v9638 = vld [vmem:[%s53 + $0x38] sm:$0xff]
  %v9639 = vunpack.c.l.bf16 %v9631
  %v9640 = vunpack.c.h.bf16 %v9631
  %v9641 = vunpack.c.l.bf16 %v9632
  %v9642 = vunpack.c.h.bf16 %v9632
  %v9643 = vunpack.c.l.bf16 %v9633
  %v9644 = vunpack.c.h.bf16 %v9633
  %v9645 = vunpack.c.l.bf16 %v9634
  %v9646 = vunpack.c.h.bf16 %v9634
  %v9647 = vunpack.c.l.bf16 %v9635
  %v9648 = vunpack.c.h.bf16 %v9635
  %v9649 = vunpack.c.l.bf16 %v9636
  %v9650 = vunpack.c.h.bf16 %v9636
  %v9651 = vunpack.c.l.bf16 %v9637
  %v9652 = vunpack.c.h.bf16 %v9637
  %v9653 = vunpack.c.l.bf16 %v9638
  %v9654 = vunpack.c.h.bf16 %v9638
  %v9656 = vsel %vm2428, %v9629, 0
  %v9659 = vsel %vm2428, %v9630, 0
  %9661 = vmatprep.subr.mxu0 %v9640
  %9662 = vmatpush1.msra.mxu0 %v9639
  %9663 = vmatprep.subr.mxu0 %v9642
  %9664 = vmatpush1.msra.mxu0 %v9641
  %9665 = vmatprep.subr.mxu0 %v9644
  %9666 = vmatpush1.msra.mxu0 %v9643
  %9667 = vmatprep.subr.mxu0 %v9646
  %9668 = vmatpush1.msra.mxu0 %v9645
  %9669 = vmatprep.subr.mxu0 %v9648
  %9670 = vmatpush1.msra.mxu0 %v9647
  %9671 = vmatprep.subr.mxu0 %v9650
  %9672 = vmatpush1.msra.mxu0 %v9649
  %9673 = vmatprep.subr.mxu0 %v9652
  %9674 = vmatpush1.msra.mxu0 %v9651
  %9675 = vmatprep.subr.mxu0 %v9654
  %9676 = vmatpush1.msra.mxu0 %v9653
  %9677 = vmatprep.subr.mxu0 0.0
  %9678 = vmatpush1.msra.mxu0 0.0
  %9679 = vmatprep.subr.mxu0 0.0
  %9680 = vmatpush1.msra.mxu0 0.0
  %9681 = vmatprep.subr.mxu0 0.0
  %9682 = vmatpush1.msra.mxu0 0.0
  %9683 = vmatprep.subr.mxu0 0.0
  %9684 = vmatpush1.msra.mxu0 0.0
  %9685 = vmatprep.subr.mxu0 0.0
  %9686 = vmatpush1.msra.mxu0 0.0
  %9687 = vmatprep.subr.mxu0 0.0
  %9688 = vmatpush1.msra.mxu0 0.0
  %9689 = vmatprep.subr.mxu0 0.0
  %9690 = vmatpush1.msra.mxu0 0.0
  %9691 = vmatprep.subr.mxu0 0.0
  %9692 = vmatpush1.msra.mxu0 0.0
  %9693 = vmatprep.subr.mxu0 0.0
  %9694 = vmatpush1.msra.mxu0 0.0
  %9695 = vmatprep.subr.mxu0 0.0
  %9696 = vmatpush1.msra.mxu0 0.0
  %9697 = vmatprep.subr.mxu0 0.0
  %9698 = vmatpush1.msra.mxu0 0.0
  %9699 = vmatprep.subr.mxu0 0.0
  %9700 = vmatpush1.msra.mxu0 0.0
  %9701 = vmatprep.subr.mxu0 0.0
  %9702 = vmatpush1.msra.mxu0 0.0
  %9703 = vmatprep.subr.mxu0 0.0
  %9704 = vmatpush1.msra.mxu0 0.0
  %9705 = vmatprep.subr.mxu0 0.0
  %9706 = vmatpush1.msra.mxu0 0.0
  %9707 = vmatprep.subr.mxu0 0.0
  %9708 = vmatpush1.msra.mxu0 0.0
  %9709 = vmatprep.subr.mxu0 0.0
  %9710 = vmatpush1.msra.mxu0 0.0
  %9711 = vmatprep.subr.mxu0 0.0
  %9712 = vmatpush1.msra.mxu0 0.0
  %9713 = vmatprep.subr.mxu0 0.0
  %9714 = vmatpush1.msra.mxu0 0.0
  %9715 = vmatprep.subr.mxu0 0.0
  %9716 = vmatpush1.msra.mxu0 0.0
  %9717 = vmatprep.subr.mxu0 0.0
  %9718 = vmatpush1.msra.mxu0 0.0
  %9719 = vmatprep.subr.mxu0 0.0
  %9720 = vmatpush1.msra.mxu0 0.0
  %9721 = vmatprep.subr.mxu0 0.0
  %9722 = vmatpush1.msra.mxu0 0.0
  %9723 = vmatprep.subr.mxu0 0.0
  %9724 = vmatpush1.msra.mxu0 0.0
  %9725 = vmatprep.mubr.f32.mxu0 0.0
  %9726 = vmatmul.mubr.f32.gmra.mrb[0].mxu0 %v9656
  %v9727 = vpop.f32.mrb[0].mxu0
  %v9728 = vadd.f32 0.0, %v9727
  %v9729 = vpop.f32.mrb[0].mxu0
  %v9730 = vadd.f32 0.0, %v9729
  %9731 = vmatprep.mubr.f32.mxu0 0.0
  %9732 = vmatmul.mubr.f32.gmra.mrb[0].mxu0 %v9659
  %v9733 = vpop.f32.mrb[0].mxu0
  %v9734 = vadd.f32 0.0, %v9733
  %v9735 = vpop.f32.mrb[0].mxu0
  %v9736 = vadd.f32 0.0, %v9735
  %9737 = vmatprep.mubr.f32.mxu0 0.0
  %9738 = vmatmul.mubr.f32.gmra.mrb[0].mxu0 %v2619
  %v9739 = vpop.f32.mrb[0].mxu0
  %v9740 = vadd.f32 0.0, %v9739
  %v9741 = vpop.f32.mrb[0].mxu0
  %v9742 = vadd.f32 0.0, %v9741
  %9743 = vmatprep.mubr.f32.mxu0 0.0
  %9744 = vmatmul.mubr.f32.gmra.mrb[0].mxu0 %v2622
  %v9745 = vpop.f32.mrb[0].mxu0
  %v9746 = vadd.f32 0.0, %v9745
  %v9747 = vpop.f32.mrb[0].mxu0
  %v9748 = vadd.f32 0.0, %v9747
  %9749 = vdwg.mxu0
  %s9750 = scalar_lea.vmem %s53, 64
  %v9751 = vld [vmem:[%s9750] sm:$0xff]
  %v9752 = vld [vmem:[%s9750 + $0x8] sm:$0xff]
  %v9753 = vld [vmem:[%s9750 + $0x10] sm:$0xff]
  %v9754 = vld [vmem:[%s9750 + $0x18] sm:$0xff]
  %v9755 = vld [vmem:[%s9750 + $0x20] sm:$0xff]
  %v9756 = vld [vmem:[%s9750 + $0x28] sm:$0xff]
  %v9757 = vld [vmem:[%s9750 + $0x30] sm:$0xff]
  %v9758 = vld [vmem:[%s9750 + $0x38] sm:$0xff]
  %v9759 = vunpack.c.l.bf16 %v9751
  %v9760 = vunpack.c.h.bf16 %v9751
  %v9761 = vunpack.c.l.bf16 %v9752
  %v9762 = vunpack.c.h.bf16 %v9752
  %v9763 = vunpack.c.l.bf16 %v9753
  %v9764 = vunpack.c.h.bf16 %v9753
  %v9765 = vunpack.c.l.bf16 %v9754
  %v9766 = vunpack.c.h.bf16 %v9754
  %v9767 = vunpack.c.l.bf16 %v9755
  %v9768 = vunpack.c.h.bf16 %v9755
  %v9769 = vunpack.c.l.bf16 %v9756
  %v9770 = vunpack.c.h.bf16 %v9756
  %v9771 = vunpack.c.l.bf16 %v9757
  %v9772 = vunpack.c.h.bf16 %v9757
  %v9773 = vunpack.c.l.bf16 %v9758
  %v9774 = vunpack.c.h.bf16 %v9758
  %9775 = vmatprep.subr.mxu0 %v9760
  %9776 = vmatpush1.msra.mxu0 %v9759
  %9777 = vmatprep.subr.mxu0 %v9762
  %9778 = vmatpush1.msra.mxu0 %v9761
  %9779 = vmatprep.subr.mxu0 %v9764
  %9780 = vmatpush1.msra.mxu0 %v9763
  %9781 = vmatprep.subr.mxu0 %v9766
  %9782 = vmatpush1.msra.mxu0 %v9765
  %9783 = vmatprep.subr.mxu0 %v9768
  %9784 = vmatpush1.msra.mxu0 %v9767
  %9785 = vmatprep.subr.mxu0 %v9770
  %9786 = vmatpush1.msra.mxu0 %v9769
  %9787 = vmatprep.subr.mxu0 %v9772
  %9788 = vmatpush1.msra.mxu0 %v9771
  %9789 = vmatprep.subr.mxu0 %v9774
  %9790 = vmatpush1.msra.mxu0 %v9773
  %9791 = vmatprep.subr.mxu0 0.0
  %9792 = vmatpush1.msra.mxu0 0.0
  %9793 = vmatprep.subr.mxu0 0.0
  %9794 = vmatpush1.msra.mxu0 0.0
  %9795 = vmatprep.subr.mxu0 0.0
  %9796 = vmatpush1.msra.mxu0 0.0
  %9797 = vmatprep.subr.mxu0 0.0
  %9798 = vmatpush1.msra.mxu0 0.0
  %9799 = vmatprep.subr.mxu0 0.0
  %9800 = vmatpush1.msra.mxu0 0.0
  %9801 = vmatprep.subr.mxu0 0.0
  %9802 = vmatpush1.msra.mxu0 0.0
  %9803 = vmatprep.subr.mxu0 0.0
  %9804 = vmatpush1.msra.mxu0 0.0
  %9805 = vmatprep.subr.mxu0 0.0
  %9806 = vmatpush1.msra.mxu0 0.0
  %9807 = vmatprep.subr.mxu0 0.0
  %9808 = vmatpush1.msra.mxu0 0.0
  %9809 = vmatprep.subr.mxu0 0.0
  %9810 = vmatpush1.msra.mxu0 0.0
  %9811 = vmatprep.subr.mxu0 0.0
  %9812 = vmatpush1.msra.mxu0 0.0
  %9813 = vmatprep.subr.mxu0 0.0
  %9814 = vmatpush1.msra.mxu0 0.0
  %9815 = vmatprep.subr.mxu0 0.0
  %9816 = vmatpush1.msra.mxu0 0.0
  %9817 = vmatprep.subr.mxu0 0.0
  %9818 = vmatpush1.msra.mxu0 0.0
  %9819 = vmatprep.subr.mxu0 0.0
  %9820 = vmatpush1.msra.mxu0 0.0
  %9821 = vmatprep.subr.mxu0 0.0
  %9822 = vmatpush1.msra.mxu0 0.0
  %9823 = vmatprep.subr.mxu0 0.0
  %9824 = vmatpush1.msra.mxu0 0.0
  %9825 = vmatprep.subr.mxu0 0.0
  %9826 = vmatpush1.msra.mxu0 0.0
  %9827 = vmatprep.subr.mxu0 0.0
  %9828 = vmatpush1.msra.mxu0 0.0
  %9829 = vmatprep.subr.mxu0 0.0
  %9830 = vmatpush1.msra.mxu0 0.0
  %9831 = vmatprep.subr.mxu0 0.0
  %9832 = vmatpush1.msra.mxu0 0.0
  %9833 = vmatprep.subr.mxu0 0.0
  %9834 = vmatpush1.msra.mxu0 0.0
  %9835 = vmatprep.subr.mxu0 0.0
  %9836 = vmatpush1.msra.mxu0 0.0
  %9837 = vmatprep.subr.mxu0 0.0
  %9838 = vmatpush1.msra.mxu0 0.0
  %9839 = vmatprep.mubr.f32.mxu0 0.0
  %9840 = vmatmul.mubr.f32.gmra.mrb[0].mxu0 %v9656
  %v9841 = vpop.f32.mrb[0].mxu0
  %v9842 = vadd.f32 0.0, %v9841
  %v9843 = vpop.f32.mrb[0].mxu0
  %v9844 = vadd.f32 0.0, %v9843
  %9845 = vmatprep.mubr.f32.mxu0 0.0
  %9846 = vmatmul.mubr.f32.gmra.mrb[0].mxu0 %v9659
  %v9847 = vpop.f32.mrb[0].mxu0
  %v9848 = vadd.f32 0.0, %v9847
  %v9849 = vpop.f32.mrb[0].mxu0
  %v9850 = vadd.f32 0.0, %v9849
  %9851 = vmatprep.mubr.f32.mxu0 0.0
  %9852 = vmatmul.mubr.f32.gmra.mrb[0].mxu0 %v2619
  %v9853 = vpop.f32.mrb[0].mxu0
  %v9854 = vadd.f32 0.0, %v9853
  %v9855 = vpop.f32.mrb[0].mxu0
  %v9856 = vadd.f32 0.0, %v9855
  %9857 = vmatprep.mubr.f32.mxu0 0.0
  %9858 = vmatmul.mubr.f32.gmra.mrb[0].mxu0 %v2622
  %v9859 = vpop.f32.mrb[0].mxu0
  %v9860 = vadd.f32 0.0, %v9859
  %v9861 = vpop.f32.mrb[0].mxu0
  %v9862 = vadd.f32 0.0, %v9861
  %9863 = vdwg.mxu0
  %s9864 = scalar_lea.vmem %s53, 128
  %v9865 = vld [vmem:[%s9864] sm:$0xff]
  %v9866 = vld [vmem:[%s9864 + $0x8] sm:$0xff]
  %v9867 = vld [vmem:[%s9864 + $0x10] sm:$0xff]
  %v9868 = vld [vmem:[%s9864 + $0x18] sm:$0xff]
  %v9869 = vld [vmem:[%s9864 + $0x20] sm:$0xff]
  %v9870 = vld [vmem:[%s9864 + $0x28] sm:$0xff]
  %v9871 = vld [vmem:[%s9864 + $0x30] sm:$0xff]
  %v9872 = vld [vmem:[%s9864 + $0x38] sm:$0xff]
  %v9873 = vunpack.c.l.bf16 %v9865
  %v9874 = vunpack.c.h.bf16 %v9865
  %v9875 = vunpack.c.l.bf16 %v9866
  %v9876 = vunpack.c.h.bf16 %v9866
  %v9877 = vunpack.c.l.bf16 %v9867
  %v9878 = vunpack.c.h.bf16 %v9867
  %v9879 = vunpack.c.l.bf16 %v9868
  %v9880 = vunpack.c.h.bf16 %v9868
  %v9881 = vunpack.c.l.bf16 %v9869
  %v9882 = vunpack.c.h.bf16 %v9869
  %v9883 = vunpack.c.l.bf16 %v9870
  %v9884 = vunpack.c.h.bf16 %v9870
  %v9885 = vunpack.c.l.bf16 %v9871
  %v9886 = vunpack.c.h.bf16 %v9871
  %v9887 = vunpack.c.l.bf16 %v9872
  %v9888 = vunpack.c.h.bf16 %v9872
  %9889 = vmatprep.subr.mxu0 %v9874
  %9890 = vmatpush1.msra.mxu0 %v9873
  %9891 = vmatprep.subr.mxu0 %v9876
  %9892 = vmatpush1.msra.mxu0 %v9875
  %9893 = vmatprep.subr.mxu0 %v9878
  %9894 = vmatpush1.msra.mxu0 %v9877
  %9895 = vmatprep.subr.mxu0 %v9880
  %9896 = vmatpush1.msra.mxu0 %v9879
  %9897 = vmatprep.subr.mxu0 %v9882
  %9898 = vmatpush1.msra.mxu0 %v9881
  %9899 = vmatprep.subr.mxu0 %v9884
  %9900 = vmatpush1.msra.mxu0 %v9883
  %9901 = vmatprep.subr.mxu0 %v9886
  %9902 = vmatpush1.msra.mxu0 %v9885
  %9903 = vmatprep.subr.mxu0 %v9888
  %9904 = vmatpush1.msra.mxu0 %v9887
  %9905 = vmatprep.subr.mxu0 0.0
  %9906 = vmatpush1.msra.mxu0 0.0
  %9907 = vmatprep.subr.mxu0 0.0
  %9908 = vmatpush1.msra.mxu0 0.0
  %9909 = vmatprep.subr.mxu0 0.0
  %9910 = vmatpush1.msra.mxu0 0.0
  %9911 = vmatprep.subr.mxu0 0.0
  %9912 = vmatpush1.msra.mxu0 0.0
  %9913 = vmatprep.subr.mxu0 0.0
  %9914 = vmatpush1.msra.mxu0 0.0
  %9915 = vmatprep.subr.mxu0 0.0
  %9916 = vmatpush1.msra.mxu0 0.0
  %9917 = vmatprep.subr.mxu0 0.0
  %9918 = vmatpush1.msra.mxu0 0.0
  %9919 = vmatprep.subr.mxu0 0.0
  %9920 = vmatpush1.msra.mxu0 0.0
  %9921 = vmatprep.subr.mxu0 0.0
  %9922 = vmatpush1.msra.mxu0 0.0
  %9923 = vmatprep.subr.mxu0 0.0
  %9924 = vmatpush1.msra.mxu0 0.0
  %9925 = vmatprep.subr.mxu0 0.0
  %9926 = vmatpush1.msra.mxu0 0.0
  %9927 = vmatprep.subr.mxu0 0.0
  %9928 = vmatpush1.msra.mxu0 0.0
  %9929 = vmatprep.subr.mxu0 0.0
  %9930 = vmatpush1.msra.mxu0 0.0
  %9931 = vmatprep.subr.mxu0 0.0
  %9932 = vmatpush1.msra.mxu0 0.0
  %9933 = vmatprep.subr.mxu0 0.0
  %9934 = vmatpush1.msra.mxu0 0.0
  %9935 = vmatprep.subr.mxu0 0.0
  %9936 = vmatpush1.msra.mxu0 0.0
  %9937 = vmatprep.subr.mxu0 0.0
  %9938 = vmatpush1.msra.mxu0 0.0
  %9939 = vmatprep.subr.mxu0 0.0
  %9940 = vmatpush1.msra.mxu0 0.0
  %9941 = vmatprep.subr.mxu0 0.0
  %9942 = vmatpush1.msra.mxu0 0.0
  %9943 = vmatprep.subr.mxu0 0.0
  %9944 = vmatpush1.msra.mxu0 0.0
  %9945 = vmatprep.subr.mxu0 0.0
  %9946 = vmatpush1.msra.mxu0 0.0
  %9947 = vmatprep.subr.mxu0 0.0
  %9948 = vmatpush1.msra.mxu0 0.0
  %9949 = vmatprep.subr.mxu0 0.0
  %9950 = vmatpush1.msra.mxu0 0.0
  %9951 = vmatprep.subr.mxu0 0.0
  %9952 = vmatpush1.msra.mxu0 0.0
  %9953 = vmatprep.mubr.f32.mxu0 0.0
  %9954 = vmatmul.mubr.f32.gmra.mrb[0].mxu0 %v9656
  %v9955 = vpop.f32.mrb[0].mxu0
  %v9956 = vadd.f32 0.0, %v9955
  %v9957 = vpop.f32.mrb[0].mxu0
  %v9958 = vadd.f32 0.0, %v9957
  %9959 = vmatprep.mubr.f32.mxu0 0.0
  %9960 = vmatmul.mubr.f32.gmra.mrb[0].mxu0 %v9659
  %v9961 = vpop.f32.mrb[0].mxu0
  %v9962 = vadd.f32 0.0, %v9961
  %v9963 = vpop.f32.mrb[0].mxu0
  %v9964 = vadd.f32 0.0, %v9963
  %9965 = vmatprep.mubr.f32.mxu0 0.0
  %9966 = vmatmul.mubr.f32.gmra.mrb[0].mxu0 %v2619
  %v9967 = vpop.f32.mrb[0].mxu0
  %v9968 = vadd.f32 0.0, %v9967
  %v9969 = vpop.f32.mrb[0].mxu0
  %v9970 = vadd.f32 0.0, %v9969
  %9971 = vmatprep.mubr.f32.mxu0 0.0
  %9972 = vmatmul.mubr.f32.gmra.mrb[0].mxu0 %v2622
  %v9973 = vpop.f32.mrb[0].mxu0
  %v9974 = vadd.f32 0.0, %v9973
  %v9975 = vpop.f32.mrb[0].mxu0
  %v9976 = vadd.f32 0.0, %v9975
  %9977 = vdwg.mxu0
  %s9978 = scalar_lea.vmem %s53, 192
  %v9979 = vld [vmem:[%s9978] sm:$0xff]
  %v9980 = vld [vmem:[%s9978 + $0x8] sm:$0xff]
  %v9981 = vld [vmem:[%s9978 + $0x10] sm:$0xff]
  %v9982 = vld [vmem:[%s9978 + $0x18] sm:$0xff]
  %v9983 = vld [vmem:[%s9978 + $0x20] sm:$0xff]
  %v9984 = vld [vmem:[%s9978 + $0x28] sm:$0xff]
  %v9985 = vld [vmem:[%s9978 + $0x30] sm:$0xff]
  %v9986 = vld [vmem:[%s9978 + $0x38] sm:$0xff]
  %v9987 = vunpack.c.l.bf16 %v9979
  %v9988 = vunpack.c.h.bf16 %v9979
  %v9989 = vunpack.c.l.bf16 %v9980
  %v9990 = vunpack.c.h.bf16 %v9980
  %v9991 = vunpack.c.l.bf16 %v9981
  %v9992 = vunpack.c.h.bf16 %v9981
  %v9993 = vunpack.c.l.bf16 %v9982
  %v9994 = vunpack.c.h.bf16 %v9982
  %v9995 = vunpack.c.l.bf16 %v9983
  %v9996 = vunpack.c.h.bf16 %v9983
  %v9997 = vunpack.c.l.bf16 %v9984
  %v9998 = vunpack.c.h.bf16 %v9984
  %v9999 = vunpack.c.l.bf16 %v9985
  %v10000 = vunpack.c.h.bf16 %v9985
  %v10001 = vunpack.c.l.bf16 %v9986
  %v10002 = vunpack.c.h.bf16 %v9986
  %10003 = vmatprep.subr.mxu0 %v9988
  %10004 = vmatpush1.msra.mxu0 %v9987
  %10005 = vmatprep.subr.mxu0 %v9990
  %10006 = vmatpush1.msra.mxu0 %v9989
  %10007 = vmatprep.subr.mxu0 %v9992
  %10008 = vmatpush1.msra.mxu0 %v9991
  %10009 = vmatprep.subr.mxu0 %v9994
  %10010 = vmatpush1.msra.mxu0 %v9993
  %10011 = vmatprep.subr.mxu0 %v9996
  %10012 = vmatpush1.msra.mxu0 %v9995
  %10013 = vmatprep.subr.mxu0 %v9998
  %10014 = vmatpush1.msra.mxu0 %v9997
  %10015 = vmatprep.subr.mxu0 %v10000
  %10016 = vmatpush1.msra.mxu0 %v9999
  %10017 = vmatprep.subr.mxu0 %v10002
  %10018 = vmatpush1.msra.mxu0 %v10001
  %10019 = vmatprep.subr.mxu0 0.0
  %10020 = vmatpush1.msra.mxu0 0.0
  %10021 = vmatprep.subr.mxu0 0.0
  %10022 = vmatpush1.msra.mxu0 0.0
  %10023 = vmatprep.subr.mxu0 0.0
  %10024 = vmatpush1.msra.mxu0 0.0
  %10025 = vmatprep.subr.mxu0 0.0
  %10026 = vmatpush1.msra.mxu0 0.0
  %10027 = vmatprep.subr.mxu0 0.0
  %10028 = vmatpush1.msra.mxu0 0.0
  %10029 = vmatprep.subr.mxu0 0.0
  %10030 = vmatpush1.msra.mxu0 0.0
  %10031 = vmatprep.subr.mxu0 0.0
  %10032 = vmatpush1.msra.mxu0 0.0
  %10033 = vmatprep.subr.mxu0 0.0
  %10034 = vmatpush1.msra.mxu0 0.0
  %10035 = vmatprep.subr.mxu0 0.0
  %10036 = vmatpush1.msra.mxu0 0.0
  %10037 = vmatprep.subr.mxu0 0.0
  %10038 = vmatpush1.msra.mxu0 0.0
  %10039 = vmatprep.subr.mxu0 0.0
  %10040 = vmatpush1.msra.mxu0 0.0
  %10041 = vmatprep.subr.mxu0 0.0
  %10042 = vmatpush1.msra.mxu0 0.0
  %10043 = vmatprep.subr.mxu0 0.0
  %10044 = vmatpush1.msra.mxu0 0.0
  %10045 = vmatprep.subr.mxu0 0.0
  %10046 = vmatpush1.msra.mxu0 0.0
  %10047 = vmatprep.subr.mxu0 0.0
  %10048 = vmatpush1.msra.mxu0 0.0
  %10049 = vmatprep.subr.mxu0 0.0
  %10050 = vmatpush1.msra.mxu0 0.0
  %10051 = vmatprep.subr.mxu0 0.0
  %10052 = vmatpush1.msra.mxu0 0.0
  %10053 = vmatprep.subr.mxu0 0.0
  %10054 = vmatpush1.msra.mxu0 0.0
  %10055 = vmatprep.subr.mxu0 0.0
  %10056 = vmatpush1.msra.mxu0 0.0
  %10057 = vmatprep.subr.mxu0 0.0
  %10058 = vmatpush1.msra.mxu0 0.0
  %10059 = vmatprep.subr.mxu0 0.0
  %10060 = vmatpush1.msra.mxu0 0.0
  %10061 = vmatprep.subr.mxu0 0.0
  %10062 = vmatpush1.msra.mxu0 0.0
  %10063 = vmatprep.subr.mxu0 0.0
  %10064 = vmatpush1.msra.mxu0 0.0
  %10065 = vmatprep.subr.mxu0 0.0
  %10066 = vmatpush1.msra.mxu0 0.0
  %10067 = vmatprep.mubr.f32.mxu0 0.0
  %10068 = vmatmul.mubr.f32.gmra.mrb[0].mxu0 %v9656
  %v10069 = vpop.f32.mrb[0].mxu0
  %v10070 = vadd.f32 0.0, %v10069
  %v10071 = vpop.f32.mrb[0].mxu0
  %v10072 = vadd.f32 0.0, %v10071
  %10073 = vmatprep.mubr.f32.mxu0 0.0
  %10074 = vmatmul.mubr.f32.gmra.mrb[0].mxu0 %v9659
  %v10075 = vpop.f32.mrb[0].mxu0
  %v10076 = vadd.f32 0.0, %v10075
  %v10077 = vpop.f32.mrb[0].mxu0
  %v10078 = vadd.f32 0.0, %v10077
  %10079 = vmatprep.mubr.f32.mxu0 0.0
  %10080 = vmatmul.mubr.f32.gmra.mrb[0].mxu0 %v2619
  %v10081 = vpop.f32.mrb[0].mxu0
  %v10082 = vadd.f32 0.0, %v10081
  %v10083 = vpop.f32.mrb[0].mxu0
  %v10084 = vadd.f32 0.0, %v10083
  %10085 = vmatprep.mubr.f32.mxu0 0.0
  %10086 = vmatmul.mubr.f32.gmra.mrb[0].mxu0 %v2622
  %v10087 = vpop.f32.mrb[0].mxu0
  %v10088 = vadd.f32 0.0, %v10087
  %v10089 = vpop.f32.mrb[0].mxu0
  %v10090 = vadd.f32 0.0, %v10089
  %10091 = vdwg.mxu0
  %s10092 = scalar_lea.vmem %s53, 256
  %v10093 = vld [vmem:[%s10092] sm:$0xff]
  %v10094 = vld [vmem:[%s10092 + $0x8] sm:$0xff]
  %v10095 = vld [vmem:[%s10092 + $0x10] sm:$0xff]
  %v10096 = vld [vmem:[%s10092 + $0x18] sm:$0xff]
  %v10097 = vld [vmem:[%s10092 + $0x20] sm:$0xff]
  %v10098 = vld [vmem:[%s10092 + $0x28] sm:$0xff]
  %v10099 = vld [vmem:[%s10092 + $0x30] sm:$0xff]
  %v10100 = vld [vmem:[%s10092 + $0x38] sm:$0xff]
  %v10101 = vunpack.c.l.bf16 %v10093
  %v10102 = vunpack.c.h.bf16 %v10093
  %v10103 = vunpack.c.l.bf16 %v10094
  %v10104 = vunpack.c.h.bf16 %v10094
  %v10105 = vunpack.c.l.bf16 %v10095
  %v10106 = vunpack.c.h.bf16 %v10095
  %v10107 = vunpack.c.l.bf16 %v10096
  %v10108 = vunpack.c.h.bf16 %v10096
  %v10109 = vunpack.c.l.bf16 %v10097
  %v10110 = vunpack.c.h.bf16 %v10097
  %v10111 = vunpack.c.l.bf16 %v10098
  %v10112 = vunpack.c.h.bf16 %v10098
  %v10113 = vunpack.c.l.bf16 %v10099
  %v10114 = vunpack.c.h.bf16 %v10099
  %v10115 = vunpack.c.l.bf16 %v10100
  %v10116 = vunpack.c.h.bf16 %v10100
  %10117 = vmatprep.subr.mxu0 %v10102
  %10118 = vmatpush1.msra.mxu0 %v10101
  %10119 = vmatprep.subr.mxu0 %v10104
  %10120 = vmatpush1.msra.mxu0 %v10103
  %10121 = vmatprep.subr.mxu0 %v10106
  %10122 = vmatpush1.msra.mxu0 %v10105
  %10123 = vmatprep.subr.mxu0 %v10108
  %10124 = vmatpush1.msra.mxu0 %v10107
  %10125 = vmatprep.subr.mxu0 %v10110
  %10126 = vmatpush1.msra.mxu0 %v10109
  %10127 = vmatprep.subr.mxu0 %v10112
  %10128 = vmatpush1.msra.mxu0 %v10111
  %10129 = vmatprep.subr.mxu0 %v10114
  %10130 = vmatpush1.msra.mxu0 %v10113
  %10131 = vmatprep.subr.mxu0 %v10116
  %10132 = vmatpush1.msra.mxu0 %v10115
  %10133 = vmatprep.subr.mxu0 0.0
  %10134 = vmatpush1.msra.mxu0 0.0
  %10135 = vmatprep.subr.mxu0 0.0
  %10136 = vmatpush1.msra.mxu0 0.0
  %10137 = vmatprep.subr.mxu0 0.0
  %10138 = vmatpush1.msra.mxu0 0.0
  %10139 = vmatprep.subr.mxu0 0.0
  %10140 = vmatpush1.msra.mxu0 0.0
  %10141 = vmatprep.subr.mxu0 0.0
  %10142 = vmatpush1.msra.mxu0 0.0
  %10143 = vmatprep.subr.mxu0 0.0
  %10144 = vmatpush1.msra.mxu0 0.0
  %10145 = vmatprep.subr.mxu0 0.0
  %10146 = vmatpush1.msra.mxu0 0.0
  %10147 = vmatprep.subr.mxu0 0.0
  %10148 = vmatpush1.msra.mxu0 0.0
  %10149 = vmatprep.subr.mxu0 0.0
  %10150 = vmatpush1.msra.mxu0 0.0
  %10151 = vmatprep.subr.mxu0 0.0
  %10152 = vmatpush1.msra.mxu0 0.0
  %10153 = vmatprep.subr.mxu0 0.0
  %10154 = vmatpush1.msra.mxu0 0.0
  %10155 = vmatprep.subr.mxu0 0.0
  %10156 = vmatpush1.msra.mxu0 0.0
  %10157 = vmatprep.subr.mxu0 0.0
  %10158 = vmatpush1.msra.mxu0 0.0
  %10159 = vmatprep.subr.mxu0 0.0
  %10160 = vmatpush1.msra.mxu0 0.0
  %10161 = vmatprep.subr.mxu0 0.0
  %10162 = vmatpush1.msra.mxu0 0.0
  %10163 = vmatprep.subr.mxu0 0.0
  %10164 = vmatpush1.msra.mxu0 0.0
  %10165 = vmatprep.subr.mxu0 0.0
  %10166 = vmatpush1.msra.mxu0 0.0
  %10167 = vmatprep.subr.mxu0 0.0
  %10168 = vmatpush1.msra.mxu0 0.0
  %10169 = vmatprep.subr.mxu0 0.0
  %10170 = vmatpush1.msra.mxu0 0.0
  %10171 = vmatprep.subr.mxu0 0.0
  %10172 = vmatpush1.msra.mxu0 0.0
  %10173 = vmatprep.subr.mxu0 0.0
  %10174 = vmatpush1.msra.mxu0 0.0
  %10175 = vmatprep.subr.mxu0 0.0
  %10176 = vmatpush1.msra.mxu0 0.0
  %10177 = vmatprep.subr.mxu0 0.0
  %10178 = vmatpush1.msra.mxu0 0.0
  %10179 = vmatprep.subr.mxu0 0.0
  %10180 = vmatpush1.msra.mxu0 0.0
  %10181 = vmatprep.mubr.f32.mxu0 0.0
  %10182 = vmatmul.mubr.f32.gmra.mrb[0].mxu0 %v9656
  %v10183 = vpop.f32.mrb[0].mxu0
  %v10184 = vadd.f32 0.0, %v10183
  %v10185 = vpop.f32.mrb[0].mxu0
  %v10186 = vadd.f32 0.0, %v10185
  %10187 = vmatprep.mubr.f32.mxu0 0.0
  %10188 = vmatmul.mubr.f32.gmra.mrb[0].mxu0 %v9659
  %v10189 = vpop.f32.mrb[0].mxu0
  %v10190 = vadd.f32 0.0, %v10189
  %v10191 = vpop.f32.mrb[0].mxu0
  %v10192 = vadd.f32 0.0, %v10191
  %10193 = vmatprep.mubr.f32.mxu0 0.0
  %10194 = vmatmul.mubr.f32.gmra.mrb[0].mxu0 %v2619
  %v10195 = vpop.f32.mrb[0].mxu0
  %v10196 = vadd.f32 0.0, %v10195
  %v10197 = vpop.f32.mrb[0].mxu0
  %v10198 = vadd.f32 0.0, %v10197
  %10199 = vmatprep.mubr.f32.mxu0 0.0
  %10200 = vmatmul.mubr.f32.gmra.mrb[0].mxu0 %v2622
  %v10201 = vpop.f32.mrb[0].mxu0
  %v10202 = vadd.f32 0.0, %v10201
  %v10203 = vpop.f32.mrb[0].mxu0
  %v10204 = vadd.f32 0.0, %v10203
  %10205 = vdwg.mxu0
  %s10206 = scalar_lea.vmem %s53, 320
  %v10207 = vld [vmem:[%s10206] sm:$0xff]
  %v10208 = vld [vmem:[%s10206 + $0x8] sm:$0xff]
  %v10209 = vld [vmem:[%s10206 + $0x10] sm:$0xff]
  %v10210 = vld [vmem:[%s10206 + $0x18] sm:$0xff]
  %v10211 = vld [vmem:[%s10206 + $0x20] sm:$0xff]
  %v10212 = vld [vmem:[%s10206 + $0x28] sm:$0xff]
  %v10213 = vld [vmem:[%s10206 + $0x30] sm:$0xff]
  %v10214 = vld [vmem:[%s10206 + $0x38] sm:$0xff]
  %v10215 = vunpack.c.l.bf16 %v10207
  %v10216 = vunpack.c.h.bf16 %v10207
  %v10217 = vunpack.c.l.bf16 %v10208
  %v10218 = vunpack.c.h.bf16 %v10208
  %v10219 = vunpack.c.l.bf16 %v10209
  %v10220 = vunpack.c.h.bf16 %v10209
  %v10221 = vunpack.c.l.bf16 %v10210
  %v10222 = vunpack.c.h.bf16 %v10210
  %v10223 = vunpack.c.l.bf16 %v10211
  %v10224 = vunpack.c.h.bf16 %v10211
  %v10225 = vunpack.c.l.bf16 %v10212
  %v10226 = vunpack.c.h.bf16 %v10212
  %v10227 = vunpack.c.l.bf16 %v10213
  %v10228 = vunpack.c.h.bf16 %v10213
  %v10229 = vunpack.c.l.bf16 %v10214
  %v10230 = vunpack.c.h.bf16 %v10214
  %10231 = vmatprep.subr.mxu0 %v10216
  %10232 = vmatpush1.msra.mxu0 %v10215
  %10233 = vmatprep.subr.mxu0 %v10218
  %10234 = vmatpush1.msra.mxu0 %v10217
  %10235 = vmatprep.subr.mxu0 %v10220
  %10236 = vmatpush1.msra.mxu0 %v10219
  %10237 = vmatprep.subr.mxu0 %v10222
  %10238 = vmatpush1.msra.mxu0 %v10221
  %10239 = vmatprep.subr.mxu0 %v10224
  %10240 = vmatpush1.msra.mxu0 %v10223
  %10241 = vmatprep.subr.mxu0 %v10226
  %10242 = vmatpush1.msra.mxu0 %v10225
  %10243 = vmatprep.subr.mxu0 %v10228
  %10244 = vmatpush1.msra.mxu0 %v10227
  %10245 = vmatprep.subr.mxu0 %v10230
  %10246 = vmatpush1.msra.mxu0 %v10229
  %10247 = vmatprep.subr.mxu0 0.0
  %10248 = vmatpush1.msra.mxu0 0.0
  %10249 = vmatprep.subr.mxu0 0.0
  %10250 = vmatpush1.msra.mxu0 0.0
  %10251 = vmatprep.subr.mxu0 0.0
  %10252 = vmatpush1.msra.mxu0 0.0
  %10253 = vmatprep.subr.mxu0 0.0
  %10254 = vmatpush1.msra.mxu0 0.0
  %10255 = vmatprep.subr.mxu0 0.0
  %10256 = vmatpush1.msra.mxu0 0.0
  %10257 = vmatprep.subr.mxu0 0.0
  %10258 = vmatpush1.msra.mxu0 0.0
  %10259 = vmatprep.subr.mxu0 0.0
  %10260 = vmatpush1.msra.mxu0 0.0
  %10261 = vmatprep.subr.mxu0 0.0
  %10262 = vmatpush1.msra.mxu0 0.0
  %10263 = vmatprep.subr.mxu0 0.0
  %10264 = vmatpush1.msra.mxu0 0.0
  %10265 = vmatprep.subr.mxu0 0.0
  %10266 = vmatpush1.msra.mxu0 0.0
  %10267 = vmatprep.subr.mxu0 0.0
  %10268 = vmatpush1.msra.mxu0 0.0
  %10269 = vmatprep.subr.mxu0 0.0
  %10270 = vmatpush1.msra.mxu0 0.0
  %10271 = vmatprep.subr.mxu0 0.0
  %10272 = vmatpush1.msra.mxu0 0.0
  %10273 = vmatprep.subr.mxu0 0.0
  %10274 = vmatpush1.msra.mxu0 0.0
  %10275 = vmatprep.subr.mxu0 0.0
  %10276 = vmatpush1.msra.mxu0 0.0
  %10277 = vmatprep.subr.mxu0 0.0
  %10278 = vmatpush1.msra.mxu0 0.0
  %10279 = vmatprep.subr.mxu0 0.0
  %10280 = vmatpush1.msra.mxu0 0.0
  %10281 = vmatprep.subr.mxu0 0.0
  %10282 = vmatpush1.msra.mxu0 0.0
  %10283 = vmatprep.subr.mxu0 0.0
  %10284 = vmatpush1.msra.mxu0 0.0
  %10285 = vmatprep.subr.mxu0 0.0
  %10286 = vmatpush1.msra.mxu0 0.0
  %10287 = vmatprep.subr.mxu0 0.0
  %10288 = vmatpush1.msra.mxu0 0.0
  %10289 = vmatprep.subr.mxu0 0.0
  %10290 = vmatpush1.msra.mxu0 0.0
  %10291 = vmatprep.subr.mxu0 0.0
  %10292 = vmatpush1.msra.mxu0 0.0
  %10293 = vmatprep.subr.mxu0 0.0
  %10294 = vmatpush1.msra.mxu0 0.0
  %10295 = vmatprep.mubr.f32.mxu0 0.0
  %10296 = vmatmul.mubr.f32.gmra.mrb[0].mxu0 %v9656
  %v10297 = vpop.f32.mrb[0].mxu0
  %v10298 = vadd.f32 0.0, %v10297
  %v10299 = vpop.f32.mrb[0].mxu0
  %v10300 = vadd.f32 0.0, %v10299
  %10301 = vmatprep.mubr.f32.mxu0 0.0
  %10302 = vmatmul.mubr.f32.gmra.mrb[0].mxu0 %v9659
  %v10303 = vpop.f32.mrb[0].mxu0
  %v10304 = vadd.f32 0.0, %v10303
  %v10305 = vpop.f32.mrb[0].mxu0
  %v10306 = vadd.f32 0.0, %v10305
  %10307 = vmatprep.mubr.f32.mxu0 0.0
  %10308 = vmatmul.mubr.f32.gmra.mrb[0].mxu0 %v2619
  %v10309 = vpop.f32.mrb[0].mxu0
  %v10310 = vadd.f32 0.0, %v10309
  %v10311 = vpop.f32.mrb[0].mxu0
  %v10312 = vadd.f32 0.0, %v10311
  %10313 = vmatprep.mubr.f32.mxu0 0.0
  %10314 = vmatmul.mubr.f32.gmra.mrb[0].mxu0 %v2622
  %v10315 = vpop.f32.mrb[0].mxu0
  %v10316 = vadd.f32 0.0, %v10315
  %v10317 = vpop.f32.mrb[0].mxu0
  %v10318 = vadd.f32 0.0, %v10317
  %10319 = vdwg.mxu0
  %s10320 = scalar_lea.vmem %s53, 384
  %v10321 = vld [vmem:[%s10320] sm:$0xff]
  %v10322 = vld [vmem:[%s10320 + $0x8] sm:$0xff]
  %v10323 = vld [vmem:[%s10320 + $0x10] sm:$0xff]
  %v10324 = vld [vmem:[%s10320 + $0x18] sm:$0xff]
  %v10325 = vld [vmem:[%s10320 + $0x20] sm:$0xff]
  %v10326 = vld [vmem:[%s10320 + $0x28] sm:$0xff]
  %v10327 = vld [vmem:[%s10320 + $0x30] sm:$0xff]
  %v10328 = vld [vmem:[%s10320 + $0x38] sm:$0xff]
  %v10329 = vunpack.c.l.bf16 %v10321
  %v10330 = vunpack.c.h.bf16 %v10321
  %v10331 = vunpack.c.l.bf16 %v10322
  %v10332 = vunpack.c.h.bf16 %v10322
  %v10333 = vunpack.c.l.bf16 %v10323
  %v10334 = vunpack.c.h.bf16 %v10323
  %v10335 = vunpack.c.l.bf16 %v10324
  %v10336 = vunpack.c.h.bf16 %v10324
  %v10337 = vunpack.c.l.bf16 %v10325
  %v10338 = vunpack.c.h.bf16 %v10325
  %v10339 = vunpack.c.l.bf16 %v10326
  %v10340 = vunpack.c.h.bf16 %v10326
  %v10341 = vunpack.c.l.bf16 %v10327
  %v10342 = vunpack.c.h.bf16 %v10327
  %v10343 = vunpack.c.l.bf16 %v10328
  %v10344 = vunpack.c.h.bf16 %v10328
  %10345 = vmatprep.subr.mxu0 %v10330
  %10346 = vmatpush1.msra.mxu0 %v10329
  %10347 = vmatprep.subr.mxu0 %v10332
  %10348 = vmatpush1.msra.mxu0 %v10331
  %10349 = vmatprep.subr.mxu0 %v10334
  %10350 = vmatpush1.msra.mxu0 %v10333
  %10351 = vmatprep.subr.mxu0 %v10336
  %10352 = vmatpush1.msra.mxu0 %v10335
  %10353 = vmatprep.subr.mxu0 %v10338
  %10354 = vmatpush1.msra.mxu0 %v10337
  %10355 = vmatprep.subr.mxu0 %v10340
  %10356 = vmatpush1.msra.mxu0 %v10339
  %10357 = vmatprep.subr.mxu0 %v10342
  %10358 = vmatpush1.msra.mxu0 %v10341
  %10359 = vmatprep.subr.mxu0 %v10344
  %10360 = vmatpush1.msra.mxu0 %v10343
  %10361 = vmatprep.subr.mxu0 0.0
  %10362 = vmatpush1.msra.mxu0 0.0
  %10363 = vmatprep.subr.mxu0 0.0
  %10364 = vmatpush1.msra.mxu0 0.0
  %10365 = vmatprep.subr.mxu0 0.0
  %10366 = vmatpush1.msra.mxu0 0.0
  %10367 = vmatprep.subr.mxu0 0.0
  %10368 = vmatpush1.msra.mxu0 0.0
  %10369 = vmatprep.subr.mxu0 0.0
  %10370 = vmatpush1.msra.mxu0 0.0
  %10371 = vmatprep.subr.mxu0 0.0
  %10372 = vmatpush1.msra.mxu0 0.0
  %10373 = vmatprep.subr.mxu0 0.0
  %10374 = vmatpush1.msra.mxu0 0.0
  %10375 = vmatprep.subr.mxu0 0.0
  %10376 = vmatpush1.msra.mxu0 0.0
  %10377 = vmatprep.subr.mxu0 0.0
  %10378 = vmatpush1.msra.mxu0 0.0
  %10379 = vmatprep.subr.mxu0 0.0
  %10380 = vmatpush1.msra.mxu0 0.0
  %10381 = vmatprep.subr.mxu0 0.0
  %10382 = vmatpush1.msra.mxu0 0.0
  %10383 = vmatprep.subr.mxu0 0.0
  %10384 = vmatpush1.msra.mxu0 0.0
  %10385 = vmatprep.subr.mxu0 0.0
  %10386 = vmatpush1.msra.mxu0 0.0
  %10387 = vmatprep.subr.mxu0 0.0
  %10388 = vmatpush1.msra.mxu0 0.0
  %10389 = vmatprep.subr.mxu0 0.0
  %10390 = vmatpush1.msra.mxu0 0.0
  %10391 = vmatprep.subr.mxu0 0.0
  %10392 = vmatpush1.msra.mxu0 0.0
  %10393 = vmatprep.subr.mxu0 0.0
  %10394 = vmatpush1.msra.mxu0 0.0
  %10395 = vmatprep.subr.mxu0 0.0
  %10396 = vmatpush1.msra.mxu0 0.0
  %10397 = vmatprep.subr.mxu0 0.0
  %10398 = vmatpush1.msra.mxu0 0.0
  %10399 = vmatprep.subr.mxu0 0.0
  %10400 = vmatpush1.msra.mxu0 0.0
  %10401 = vmatprep.subr.mxu0 0.0
  %10402 = vmatpush1.msra.mxu0 0.0
  %10403 = vmatprep.subr.mxu0 0.0
  %10404 = vmatpush1.msra.mxu0 0.0
  %10405 = vmatprep.subr.mxu0 0.0
  %10406 = vmatpush1.msra.mxu0 0.0
  %10407 = vmatprep.subr.mxu0 0.0
  %10408 = vmatpush1.msra.mxu0 0.0
  %10409 = vmatprep.mubr.f32.mxu0 0.0
  %10410 = vmatmul.mubr.f32.gmra.mrb[0].mxu0 %v9656
  %v10411 = vpop.f32.mrb[0].mxu0
  %v10412 = vadd.f32 0.0, %v10411
  %v10413 = vpop.f32.mrb[0].mxu0
  %v10414 = vadd.f32 0.0, %v10413
  %10415 = vmatprep.mubr.f32.mxu0 0.0
  %10416 = vmatmul.mubr.f32.gmra.mrb[0].mxu0 %v9659
  %v10417 = vpop.f32.mrb[0].mxu0
  %v10418 = vadd.f32 0.0, %v10417
  %v10419 = vpop.f32.mrb[0].mxu0
  %v10420 = vadd.f32 0.0, %v10419
  %10421 = vmatprep.mubr.f32.mxu0 0.0
  %10422 = vmatmul.mubr.f32.gmra.mrb[0].mxu0 %v2619
  %v10423 = vpop.f32.mrb[0].mxu0
  %v10424 = vadd.f32 0.0, %v10423
  %v10425 = vpop.f32.mrb[0].mxu0
  %v10426 = vadd.f32 0.0, %v10425
  %10427 = vmatprep.mubr.f32.mxu0 0.0
  %10428 = vmatmul.mubr.f32.gmra.mrb[0].mxu0 %v2622
  %v10429 = vpop.f32.mrb[0].mxu0
  %v10430 = vadd.f32 0.0, %v10429
  %v10431 = vpop.f32.mrb[0].mxu0
  %v10432 = vadd.f32 0.0, %v10431
  %10433 = vdwg.mxu0
  %s10434 = scalar_lea.vmem %s53, 448
  %v10435 = vld [vmem:[%s10434] sm:$0xff]
  %v10436 = vld [vmem:[%s10434 + $0x8] sm:$0xff]
  %v10437 = vld [vmem:[%s10434 + $0x10] sm:$0xff]
  %v10438 = vld [vmem:[%s10434 + $0x18] sm:$0xff]
  %v10439 = vld [vmem:[%s10434 + $0x20] sm:$0xff]
  %v10440 = vld [vmem:[%s10434 + $0x28] sm:$0xff]
  %v10441 = vld [vmem:[%s10434 + $0x30] sm:$0xff]
  %v10442 = vld [vmem:[%s10434 + $0x38] sm:$0xff]
  %v10443 = vunpack.c.l.bf16 %v10435
  %v10444 = vunpack.c.h.bf16 %v10435
  %v10445 = vunpack.c.l.bf16 %v10436
  %v10446 = vunpack.c.h.bf16 %v10436
  %v10447 = vunpack.c.l.bf16 %v10437
  %v10448 = vunpack.c.h.bf16 %v10437
  %v10449 = vunpack.c.l.bf16 %v10438
  %v10450 = vunpack.c.h.bf16 %v10438
  %v10451 = vunpack.c.l.bf16 %v10439
  %v10452 = vunpack.c.h.bf16 %v10439
  %v10453 = vunpack.c.l.bf16 %v10440
  %v10454 = vunpack.c.h.bf16 %v10440
  %v10455 = vunpack.c.l.bf16 %v10441
  %v10456 = vunpack.c.h.bf16 %v10441
  %v10457 = vunpack.c.l.bf16 %v10442
  %v10458 = vunpack.c.h.bf16 %v10442
  %10459 = vmatprep.subr.mxu0 %v10444
  %10460 = vmatpush1.msra.mxu0 %v10443
  %10461 = vmatprep.subr.mxu0 %v10446
  %10462 = vmatpush1.msra.mxu0 %v10445
  %10463 = vmatprep.subr.mxu0 %v10448
  %10464 = vmatpush1.msra.mxu0 %v10447
  %10465 = vmatprep.subr.mxu0 %v10450
  %10466 = vmatpush1.msra.mxu0 %v10449
  %10467 = vmatprep.subr.mxu0 %v10452
  %10468 = vmatpush1.msra.mxu0 %v10451
  %10469 = vmatprep.subr.mxu0 %v10454
  %10470 = vmatpush1.msra.mxu0 %v10453
  %10471 = vmatprep.subr.mxu0 %v10456
  %10472 = vmatpush1.msra.mxu0 %v10455
  %10473 = vmatprep.subr.mxu0 %v10458
  %10474 = vmatpush1.msra.mxu0 %v10457
  %10475 = vmatprep.subr.mxu0 0.0
  %10476 = vmatpush1.msra.mxu0 0.0
  %10477 = vmatprep.subr.mxu0 0.0
  %10478 = vmatpush1.msra.mxu0 0.0
  %10479 = vmatprep.subr.mxu0 0.0
  %10480 = vmatpush1.msra.mxu0 0.0
  %10481 = vmatprep.subr.mxu0 0.0
  %10482 = vmatpush1.msra.mxu0 0.0
  %10483 = vmatprep.subr.mxu0 0.0
  %10484 = vmatpush1.msra.mxu0 0.0
  %10485 = vmatprep.subr.mxu0 0.0
  %10486 = vmatpush1.msra.mxu0 0.0
  %10487 = vmatprep.subr.mxu0 0.0
  %10488 = vmatpush1.msra.mxu0 0.0
  %10489 = vmatprep.subr.mxu0 0.0
  %10490 = vmatpush1.msra.mxu0 0.0
  %10491 = vmatprep.subr.mxu0 0.0
  %10492 = vmatpush1.msra.mxu0 0.0
  %10493 = vmatprep.subr.mxu0 0.0
  %10494 = vmatpush1.msra.mxu0 0.0
  %10495 = vmatprep.subr.mxu0 0.0
  %10496 = vmatpush1.msra.mxu0 0.0
  %10497 = vmatprep.subr.mxu0 0.0
  %10498 = vmatpush1.msra.mxu0 0.0
  %10499 = vmatprep.subr.mxu0 0.0
  %10500 = vmatpush1.msra.mxu0 0.0
  %10501 = vmatprep.subr.mxu0 0.0
  %10502 = vmatpush1.msra.mxu0 0.0
  %10503 = vmatprep.subr.mxu0 0.0
  %10504 = vmatpush1.msra.mxu0 0.0
  %10505 = vmatprep.subr.mxu0 0.0
  %10506 = vmatpush1.msra.mxu0 0.0
  %10507 = vmatprep.subr.mxu0 0.0
  %10508 = vmatpush1.msra.mxu0 0.0
  %10509 = vmatprep.subr.mxu0 0.0
  %10510 = vmatpush1.msra.mxu0 0.0
  %10511 = vmatprep.subr.mxu0 0.0
  %10512 = vmatpush1.msra.mxu0 0.0
  %10513 = vmatprep.subr.mxu0 0.0
  %10514 = vmatpush1.msra.mxu0 0.0
  %10515 = vmatprep.subr.mxu0 0.0
  %10516 = vmatpush1.msra.mxu0 0.0
  %10517 = vmatprep.subr.mxu0 0.0
  %10518 = vmatpush1.msra.mxu0 0.0
  %10519 = vmatprep.subr.mxu0 0.0
  %10520 = vmatpush1.msra.mxu0 0.0
  %10521 = vmatprep.subr.mxu0 0.0
  %10522 = vmatpush1.msra.mxu0 0.0
  %10523 = vmatprep.mubr.f32.mxu0 0.0
  %10524 = vmatmul.mubr.f32.gmra.mrb[0].mxu0 %v9656
  %v10525 = vpop.f32.mrb[0].mxu0
  %v10526 = vadd.f32 0.0, %v10525
  %v10527 = vpop.f32.mrb[0].mxu0
  %v10528 = vadd.f32 0.0, %v10527
  %10529 = vmatprep.mubr.f32.mxu0 0.0
  %10530 = vmatmul.mubr.f32.gmra.mrb[0].mxu0 %v9659
  %v10531 = vpop.f32.mrb[0].mxu0
  %v10532 = vadd.f32 0.0, %v10531
  %v10533 = vpop.f32.mrb[0].mxu0
  %v10534 = vadd.f32 0.0, %v10533
  %10535 = vmatprep.mubr.f32.mxu0 0.0
  %10536 = vmatmul.mubr.f32.gmra.mrb[0].mxu0 %v2619
  %v10537 = vpop.f32.mrb[0].mxu0
  %v10538 = vadd.f32 0.0, %v10537
  %v10539 = vpop.f32.mrb[0].mxu0
  %v10540 = vadd.f32 0.0, %v10539
  %10541 = vmatprep.mubr.f32.mxu0 0.0
  %10542 = vmatmul.mubr.f32.gmra.mrb[0].mxu0 %v2622
  %v10543 = vpop.f32.mrb[0].mxu0
  %v10544 = vadd.f32 0.0, %v10543
  %v10545 = vpop.f32.mrb[0].mxu0
  %v10546 = vadd.f32 0.0, %v10545
  %10547 = vdwg.mxu0
  %s10548 = scalar_lea.vmem %s53, 512
  %v10549 = vld [vmem:[%s10548] sm:$0xff]
  %v10550 = vld [vmem:[%s10548 + $0x8] sm:$0xff]
  %v10551 = vld [vmem:[%s10548 + $0x10] sm:$0xff]
  %v10552 = vld [vmem:[%s10548 + $0x18] sm:$0xff]
  %v10553 = vld [vmem:[%s10548 + $0x20] sm:$0xff]
  %v10554 = vld [vmem:[%s10548 + $0x28] sm:$0xff]
  %v10555 = vld [vmem:[%s10548 + $0x30] sm:$0xff]
  %v10556 = vld [vmem:[%s10548 + $0x38] sm:$0xff]
  %v10557 = vunpack.c.l.bf16 %v10549
  %v10558 = vunpack.c.h.bf16 %v10549
  %v10559 = vunpack.c.l.bf16 %v10550
  %v10560 = vunpack.c.h.bf16 %v10550
  %v10561 = vunpack.c.l.bf16 %v10551
  %v10562 = vunpack.c.h.bf16 %v10551
  %v10563 = vunpack.c.l.bf16 %v10552
  %v10564 = vunpack.c.h.bf16 %v10552
  %v10565 = vunpack.c.l.bf16 %v10553
  %v10566 = vunpack.c.h.bf16 %v10553
  %v10567 = vunpack.c.l.bf16 %v10554
  %v10568 = vunpack.c.h.bf16 %v10554
  %v10569 = vunpack.c.l.bf16 %v10555
  %v10570 = vunpack.c.h.bf16 %v10555
  %v10571 = vunpack.c.l.bf16 %v10556
  %v10572 = vunpack.c.h.bf16 %v10556
  %10573 = vmatprep.subr.mxu0 %v10558
  %10574 = vmatpush1.msra.mxu0 %v10557
  %10575 = vmatprep.subr.mxu0 %v10560
  %10576 = vmatpush1.msra.mxu0 %v10559
  %10577 = vmatprep.subr.mxu0 %v10562
  %10578 = vmatpush1.msra.mxu0 %v10561
  %10579 = vmatprep.subr.mxu0 %v10564
  %10580 = vmatpush1.msra.mxu0 %v10563
  %10581 = vmatprep.subr.mxu0 %v10566
  %10582 = vmatpush1.msra.mxu0 %v10565
  %10583 = vmatprep.subr.mxu0 %v10568
  %10584 = vmatpush1.msra.mxu0 %v10567
  %10585 = vmatprep.subr.mxu0 %v10570
  %10586 = vmatpush1.msra.mxu0 %v10569
  %10587 = vmatprep.subr.mxu0 %v10572
  %10588 = vmatpush1.msra.mxu0 %v10571
  %10589 = vmatprep.subr.mxu0 0.0
  %10590 = vmatpush1.msra.mxu0 0.0
  %10591 = vmatprep.subr.mxu0 0.0
  %10592 = vmatpush1.msra.mxu0 0.0
  %10593 = vmatprep.subr.mxu0 0.0
  %10594 = vmatpush1.msra.mxu0 0.0
  %10595 = vmatprep.subr.mxu0 0.0
  %10596 = vmatpush1.msra.mxu0 0.0
  %10597 = vmatprep.subr.mxu0 0.0
  %10598 = vmatpush1.msra.mxu0 0.0
  %10599 = vmatprep.subr.mxu0 0.0
  %10600 = vmatpush1.msra.mxu0 0.0
  %10601 = vmatprep.subr.mxu0 0.0
  %10602 = vmatpush1.msra.mxu0 0.0
  %10603 = vmatprep.subr.mxu0 0.0
  %10604 = vmatpush1.msra.mxu0 0.0
  %10605 = vmatprep.subr.mxu0 0.0
  %10606 = vmatpush1.msra.mxu0 0.0
  %10607 = vmatprep.subr.mxu0 0.0
  %10608 = vmatpush1.msra.mxu0 0.0
  %10609 = vmatprep.subr.mxu0 0.0
  %10610 = vmatpush1.msra.mxu0 0.0
  %10611 = vmatprep.subr.mxu0 0.0
  %10612 = vmatpush1.msra.mxu0 0.0
  %10613 = vmatprep.subr.mxu0 0.0
  %10614 = vmatpush1.msra.mxu0 0.0
  %10615 = vmatprep.subr.mxu0 0.0
  %10616 = vmatpush1.msra.mxu0 0.0
  %10617 = vmatprep.subr.mxu0 0.0
  %10618 = vmatpush1.msra.mxu0 0.0
  %10619 = vmatprep.subr.mxu0 0.0
  %10620 = vmatpush1.msra.mxu0 0.0
  %10621 = vmatprep.subr.mxu0 0.0
  %10622 = vmatpush1.msra.mxu0 0.0
  %10623 = vmatprep.subr.mxu0 0.0
  %10624 = vmatpush1.msra.mxu0 0.0
  %10625 = vmatprep.subr.mxu0 0.0
  %10626 = vmatpush1.msra.mxu0 0.0
  %10627 = vmatprep.subr.mxu0 0.0
  %10628 = vmatpush1.msra.mxu0 0.0
  %10629 = vmatprep.subr.mxu0 0.0
  %10630 = vmatpush1.msra.mxu0 0.0
  %10631 = vmatprep.subr.mxu0 0.0
  %10632 = vmatpush1.msra.mxu0 0.0
  %10633 = vmatprep.subr.mxu0 0.0
  %10634 = vmatpush1.msra.mxu0 0.0
  %10635 = vmatprep.subr.mxu0 0.0
  %10636 = vmatpush1.msra.mxu0 0.0
  %10637 = vmatprep.mubr.f32.mxu0 0.0
  %10638 = vmatmul.mubr.f32.gmra.mrb[0].mxu0 %v9656
  %v10639 = vpop.f32.mrb[0].mxu0
  %v10640 = vadd.f32 0.0, %v10639
  %v10641 = vpop.f32.mrb[0].mxu0
  %v10642 = vadd.f32 0.0, %v10641
  %10643 = vmatprep.mubr.f32.mxu0 0.0
  %10644 = vmatmul.mubr.f32.gmra.mrb[0].mxu0 %v9659
  %v10645 = vpop.f32.mrb[0].mxu0
  %v10646 = vadd.f32 0.0, %v10645
  %v10647 = vpop.f32.mrb[0].mxu0
  %v10648 = vadd.f32 0.0, %v10647
  %10649 = vmatprep.mubr.f32.mxu0 0.0
  %10650 = vmatmul.mubr.f32.gmra.mrb[0].mxu0 %v2619
  %v10651 = vpop.f32.mrb[0].mxu0
  %v10652 = vadd.f32 0.0, %v10651
  %v10653 = vpop.f32.mrb[0].mxu0
  %v10654 = vadd.f32 0.0, %v10653
  %10655 = vmatprep.mubr.f32.mxu0 0.0
  %10656 = vmatmul.mubr.f32.gmra.mrb[0].mxu0 %v2622
  %v10657 = vpop.f32.mrb[0].mxu0
  %v10658 = vadd.f32 0.0, %v10657
  %v10659 = vpop.f32.mrb[0].mxu0
  %v10660 = vadd.f32 0.0, %v10659
  %10661 = vdwg.mxu0
  %v10662 = vld [vmem:[%s55] sm:$0x3f]
  %v10663 = vld [vmem:[%s57] sm:$0x3]
  %10665 = vset.pattern.permute.xlu0 0
  %10666 = vperm.xlu0 %10665, %v10663
  %v10667 = vpop.permute.xlu0 %10666
  %v10670 = vcombine.high %v10662, %v10662
  %v10672 = vunpack.c.l.s4 1983009808
  %v10673 = vunpack.c.0.s8 %v10672
  %v10674 = vlaneseq
  %v10675 = vshrl.u32 %v10674, 7
  %v10676 = vsub.s32 %v10673, %v10675
  %v10677 = vrot.slane %v10662, %v10676
  %v10679 = vunpack.c.l.s4 1983009808
  %v10680 = vunpack.c.0.s8 %v10679
  %v10681 = vlaneseq
  %v10682 = vshrl.u32 %v10681, 7
  %v10683 = vsub.s32 %v10680, %v10682
  %v10684 = vrot.slane %v10670, %v10683
  %v10685 = vcombine.high %v10677, %v10677
  %v10688 = vsel %vm2346, %v10684, 0
  %10690 = vmatprep.subr.mxu0 %v9730
  %10691 = vmatpush1.msra.mxu0 %v9728
  %10692 = vmatprep.subr.mxu0 %v9736
  %10693 = vmatpush1.msra.mxu0 %v9734
  %10694 = vmatprep.subr.mxu0 %v9742
  %10695 = vmatpush1.msra.mxu0 %v9740
  %10696 = vmatprep.subr.mxu0 %v9748
  %10697 = vmatpush1.msra.mxu0 %v9746
  %10698 = vmatprep.subr.mxu0 %v9844
  %10699 = vmatpush1.msra.mxu0 %v9842
  %10700 = vmatprep.subr.mxu0 %v9850
  %10701 = vmatpush1.msra.mxu0 %v9848
  %10702 = vmatprep.subr.mxu0 %v9856
  %10703 = vmatpush1.msra.mxu0 %v9854
  %10704 = vmatprep.subr.mxu0 %v9862
  %10705 = vmatpush1.msra.mxu0 %v9860
  %10706 = vmatprep.subr.mxu0 %v9958
  %10707 = vmatpush1.msra.mxu0 %v9956
  %10708 = vmatprep.subr.mxu0 %v9964
  %10709 = vmatpush1.msra.mxu0 %v9962
  %10710 = vmatprep.subr.mxu0 %v9970
  %10711 = vmatpush1.msra.mxu0 %v9968
  %10712 = vmatprep.subr.mxu0 %v9976
  %10713 = vmatpush1.msra.mxu0 %v9974
  %10714 = vmatprep.subr.mxu0 %v10072
  %10715 = vmatpush1.msra.mxu0 %v10070
  %10716 = vmatprep.subr.mxu0 %v10078
  %10717 = vmatpush1.msra.mxu0 %v10076
  %10718 = vmatprep.subr.mxu0 %v10084
  %10719 = vmatpush1.msra.mxu0 %v10082
  %10720 = vmatprep.subr.mxu0 %v10090
  %10721 = vmatpush1.msra.mxu0 %v10088
  %10722 = vmatprep.subr.mxu0 %v10186
  %10723 = vmatpush1.msra.mxu0 %v10184
  %10724 = vmatprep.subr.mxu0 %v10192
  %10725 = vmatpush1.msra.mxu0 %v10190
  %10726 = vmatprep.subr.mxu0 %v10198
  %10727 = vmatpush1.msra.mxu0 %v10196
  %10728 = vmatprep.subr.mxu0 %v10204
  %10729 = vmatpush1.msra.mxu0 %v10202
  %10730 = vmatprep.subr.mxu0 %v10300
  %10731 = vmatpush1.msra.mxu0 %v10298
  %10732 = vmatprep.subr.mxu0 %v10306
  %10733 = vmatpush1.msra.mxu0 %v10304
  %10734 = vmatprep.subr.mxu0 %v10312
  %10735 = vmatpush1.msra.mxu0 %v10310
  %10736 = vmatprep.subr.mxu0 %v10318
  %10737 = vmatpush1.msra.mxu0 %v10316
  %10738 = vmatprep.subr.mxu0 %v10414
  %10739 = vmatpush1.msra.mxu0 %v10412
  %10740 = vmatprep.subr.mxu0 %v10420
  %10741 = vmatpush1.msra.mxu0 %v10418
  %10742 = vmatprep.subr.mxu0 %v10426
  %10743 = vmatpush1.msra.mxu0 %v10424
  %10744 = vmatprep.subr.mxu0 %v10432
  %10745 = vmatpush1.msra.mxu0 %v10430
  %10746 = vmatprep.subr.mxu0 %v10528
  %10747 = vmatpush1.msra.mxu0 %v10526
  %10748 = vmatprep.subr.mxu0 %v10534
  %10749 = vmatpush1.msra.mxu0 %v10532
  %10750 = vmatprep.subr.mxu0 %v10540
  %10751 = vmatpush1.msra.mxu0 %v10538
  %10752 = vmatprep.subr.mxu0 %v10546
  %10753 = vmatpush1.msra.mxu0 %v10544
  %10754 = vmatprep.mubr.f32.mxu0 %v10685
  %10755 = vmatmul.mubr.f32.gmra.mrb[0].mxu0 %v10677
  %v10756 = vpop.f32.mrb[0].mxu0
  %v10757 = vadd.f32 %v10667, %v10756
  %v10758 = vpop.f32.mrb[0].mxu0
  %v10759 = vadd.f32 %v10667, %v10758
  %10760 = vdwg.mxu0
  %10761 = vmatprep.subr.mxu0 %v10642
  %10762 = vmatpush1.msra.mxu0 %v10640
  %10763 = vmatprep.subr.mxu0 %v10648
  %10764 = vmatpush1.msra.mxu0 %v10646
  %10765 = vmatprep.subr.mxu0 %v10654
  %10766 = vmatpush1.msra.mxu0 %v10652
  %10767 = vmatprep.subr.mxu0 %v10660
  %10768 = vmatpush1.msra.mxu0 %v10658
  %10769 = vmatprep.subr.mxu0 0.0
  %10770 = vmatpush1.msra.mxu0 0.0
  %10771 = vmatprep.subr.mxu0 0.0
  %10772 = vmatpush1.msra.mxu0 0.0
  %10773 = vmatprep.subr.mxu0 0.0
  %10774 = vmatpush1.msra.mxu0 0.0
  %10775 = vmatprep.subr.mxu0 0.0
  %10776 = vmatpush1.msra.mxu0 0.0
  %10777 = vmatprep.subr.mxu0 0.0
  %10778 = vmatpush1.msra.mxu0 0.0
  %10779 = vmatprep.subr.mxu0 0.0
  %10780 = vmatpush1.msra.mxu0 0.0
  %10781 = vmatprep.subr.mxu0 0.0
  %10782 = vmatpush1.msra.mxu0 0.0
  %10783 = vmatprep.subr.mxu0 0.0
  %10784 = vmatpush1.msra.mxu0 0.0
  %10785 = vmatprep.subr.mxu0 0.0
  %10786 = vmatpush1.msra.mxu0 0.0
  %10787 = vmatprep.subr.mxu0 0.0
  %10788 = vmatpush1.msra.mxu0 0.0
  %10789 = vmatprep.subr.mxu0 0.0
  %10790 = vmatpush1.msra.mxu0 0.0
  %10791 = vmatprep.subr.mxu0 0.0
  %10792 = vmatpush1.msra.mxu0 0.0
  %10793 = vmatprep.subr.mxu0 0.0
  %10794 = vmatpush1.msra.mxu0 0.0
  %10795 = vmatprep.subr.mxu0 0.0
  %10796 = vmatpush1.msra.mxu0 0.0
  %10797 = vmatprep.subr.mxu0 0.0
  %10798 = vmatpush1.msra.mxu0 0.0
  %10799 = vmatprep.subr.mxu0 0.0
  %10800 = vmatpush1.msra.mxu0 0.0
  %10801 = vmatprep.subr.mxu0 0.0
  %10802 = vmatpush1.msra.mxu0 0.0
  %10803 = vmatprep.subr.mxu0 0.0
  %10804 = vmatpush1.msra.mxu0 0.0
  %10805 = vmatprep.subr.mxu0 0.0
  %10806 = vmatpush1.msra.mxu0 0.0
  %10807 = vmatprep.subr.mxu0 0.0
  %10808 = vmatpush1.msra.mxu0 0.0
  %10809 = vmatprep.subr.mxu0 0.0
  %10810 = vmatpush1.msra.mxu0 0.0
  %10811 = vmatprep.subr.mxu0 0.0
  %10812 = vmatpush1.msra.mxu0 0.0
  %10813 = vmatprep.subr.mxu0 0.0
  %10814 = vmatpush1.msra.mxu0 0.0
  %10815 = vmatprep.subr.mxu0 0.0
  %10816 = vmatpush1.msra.mxu0 0.0
  %10817 = vmatprep.subr.mxu0 0.0
  %10818 = vmatpush1.msra.mxu0 0.0
  %10819 = vmatprep.subr.mxu0 0.0
  %10820 = vmatpush1.msra.mxu0 0.0
  %10821 = vmatprep.subr.mxu0 0.0
  %10822 = vmatpush1.msra.mxu0 0.0
  %10823 = vmatprep.subr.mxu0 0.0
  %10824 = vmatpush1.msra.mxu0 0.0
  %10825 = vmatprep.mubr.f32.mxu0 0.0
  %10826 = vmatmul.mubr.f32.gmra.mrb[0].mxu0 %v10688
  %v10827 = vpop.f32.mrb[0].mxu0
  %v10828 = vadd.f32 %v10757, %v10827
  %v10829 = vpop.f32.mrb[0].mxu0
  %v10830 = vadd.f32 %v10759, %v10829
  %10831 = vdwg.mxu0
  %v10832 = vtanh.pop %v10828
  %v10833 = vtanh.pop %v10830
  %v10836 = vcombine.low %v10832, %v10833
  %v10838 = vunpack.c.l.s4 1983009808
  %v10839 = vunpack.c.0.s8 %v10838
  %v10840 = vlaneseq
  %v10841 = vshrl.u32 %v10840, 7
  %v10842 = vsub.s32 %v10839, %v10841
  %v10843 = vrot.slane %v10836, %v10842
  %10845 = vst [vmem:[%s59] sm:$0xf] %v10843
  // Predicated region
  $region118: #{generator_forward.1} parent=0 // pred_check
    _
  $region119: #{generator_forward.1} parent=0 // pred_check_branch
    %10847 = sbr.rel (0) target = $region121
  $region120: #{generator_forward.1} parent=0 // pred_region
    _
  $region121: #{generator_forward.1} parent=0 // pred_fallthru
    _
  // Predicated region
  $region122: #{generator_forward.1} parent=0 // pred_check
    _
  $region123: #{generator_forward.1} parent=0 // pred_check_branch
    %10849 = sbr.rel (0) target = $region125
  $region124: #{generator_forward.1} parent=0 // pred_region
    _
  $region125: #{generator_forward.1} parent=0 // pred_fallthru
    _

</llo_original>
